<compile_context>
chip_gen: v5e
topology: v5e:2x2
jax: 0.10.0
libtpu: 0.0.40
codegen_flags: <defaults>
</compile_context>

<pallas_src>
import jax
import jax.numpy as jnp
from jax.experimental import pallas as pl
from jax.experimental.pallas import tpu as pltpu


# ---------------------------------------------------------------------------
# Fused Pallas kernel: conv1+ReLU -> conv2+ReLU -> conv3+ReLU -> flatten -> FC
# ---------------------------------------------------------------------------
def make_fused_cnn_kernel(C0, C1, C2, C3, K1, K2, K3, H, W, NCLS):
    P2, P3 = K2 // 2, K3 // 2
    A3 = P3          # zero margin kept around a2 (input of conv3)
    A2 = P2 + A3     # zero margin kept around a1 (input of conv2)

    def kernel(x_ref, w1_ref, b1_ref, w2_ref, b2_ref, w3_ref, b3_ref,
               w4_ref, b4_ref, o_ref, a1_ref, a2_ref):

        def conv_relu_to_scratch(src_ref, w_ref, b_ref, cin, ksz, dst_ref,
                                 margin):
            """'same' conv + bias + ReLU, channels-outer, shifted VPU FMAs.

            The accumulator covers the destination's full padded domain; the
            `margin`-wide ring is masked to zero so it acts as the next
            layer's zero padding and the store stays a full aligned block.
            """
            cout, dh, dw = dst_ref.shape
            rows = jax.lax.broadcasted_iota(jnp.int32, (dh, dw), 0)
            cols = jax.lax.broadcasted_iota(jnp.int32, (dh, dw), 1)
            valid = ((rows >= margin) & (rows < dh - margin) &
                     (cols >= margin) & (cols < dw - margin))

            @pl.loop(0, cout)
            def _(o):
                acc = jnp.full((dh, dw), b_ref[o], jnp.float32)
                for c in range(cin):                     # static unroll
                    for kh in range(ksz):
                        for kw in range(ksz):
                            w_sc = w_ref[((o * cin + c) * ksz + kh) * ksz + kw]
                            acc = acc + w_sc * src_ref[c, kh:kh + dh,
                                                       kw:kw + dw]
                dst_ref[o] = jnp.where(valid, jnp.maximum(acc, 0.0), 0.0)

        # conv1 -> a1 (carries conv2's zero margin A2)
        conv_relu_to_scratch(x_ref, w1_ref, b1_ref, C0, K1, a1_ref, A2)
        # conv2 -> a2 (carries conv3's zero margin A3)
        conv_relu_to_scratch(a1_ref, w2_ref, b2_ref, C1, K2, a2_ref, A3)

        # conv3 + ReLU fused with the fully connected layer: each conv3 output
        # channel is contracted against the matching (H, W) slab of the fc
        # weight (torch flatten order is (c, h, w), so w4[k, c] matches it).
        lane = jax.lax.broadcasted_iota(jnp.int32, (1, NCLS), 1)

        def conv3_fc(o, out_row):
            acc = jnp.full((H, W), b3_ref[o], jnp.float32)
            for c in range(C2):
                for kh in range(K3):
                    for kw in range(K3):
                        w_sc = w3_ref[((o * C2 + c) * K3 + kh) * K3 + kw]
                        acc = acc + w_sc * a2_ref[c, kh:kh + H, kw:kw + W]
            act = jnp.maximum(acc, 0.0)
            for k in range(NCLS):
                prod = act * w4_ref[k, o]
                s = jnp.sum(jnp.sum(prod, axis=1, keepdims=True),
                            axis=0, keepdims=True)               # (1, 1)
                out_row = out_row + jnp.where(lane == k, s, 0.0)
            return out_row

        out_row = jax.lax.fori_loop(0, C3, conv3_fc, b4_ref[...])
        o_ref[...] = out_row.astype(o_ref.dtype)

    return kernel


# ---------------------------------------------------------------------------
# Wrapper: layout prep (free reshapes / one small pad) + pallas_call
# ---------------------------------------------------------------------------
def simple_cnn_forward(params, x_nchw):
    """Matches SimpleCNN.forward (use_batchnormalization=False, ReLU)."""
    N, C0, H, W = x_nchw.shape
    w1, b1 = params["conv1_w"], params["conv1_b"]
    w2, b2 = params["conv2_w"], params["conv2_b"]
    w3, b3 = params["conv3_w"], params["conv3_b"]
    fcw, fcb = params["fc_w"], params["fc_b"]

    C1, C0_w, K1, _ = w1.shape
    C2, _, K2, _ = w2.shape
    C3, _, K3, _ = w3.shape
    NCLS, F = fcw.shape
    assert C0_w == C0 and F == C3 * H * W
    assert K1 % 2 == 1 and K2 % 2 == 1 and K3 % 2 == 1, "odd 'same' kernels"

    P1, P2, P3 = K1 // 2, K2 // 2, K3 // 2
    A3 = P3
    A2 = P2 + A3
    A1 = P1 + A2                        # zero margin required on the input
    Hp, Wp = H + 2 * A1, W + 2 * A1
    H1, W1 = H + 2 * A2, W + 2 * A2     # a1 scratch domain
    H2, W2 = H + 2 * A3, W + 2 * A3     # a2 scratch domain

    f32 = jnp.float32
    x_pad = jnp.pad(x_nchw.astype(f32),
                    ((0, 0), (0, 0), (A1, A1), (A1, A1)))

    # Conv weights flattened (torch OIHW order) for scalar SMEM reads; the fc
    # weight stays in torch (num_classes, F) layout (contiguous reshape only).
    w1f, w2f, w3f = (w.reshape(-1).astype(f32) for w in (w1, w2, w3))
    w4 = fcw.reshape(NCLS, C3, H, W).astype(f32)
    b4 = fcb.reshape(1, NCLS).astype(f32)

    kernel = make_fused_cnn_kernel(C0, C1, C2, C3, K1, K2, K3, H, W, NCLS)

    def smem_spec():
        return pl.BlockSpec(memory_space=pltpu.MemorySpace.SMEM)

    out = pl.pallas_call(
        kernel,
        out_shape=jax.ShapeDtypeStruct((N, 1, NCLS), f32),
        grid=(N,),
        in_specs=[
            pl.BlockSpec((None, C0, Hp, Wp), lambda n: (n, 0, 0, 0)),
            smem_spec(), smem_spec(),          # conv1 weight / bias
            smem_spec(), smem_spec(),          # conv2 weight / bias
            smem_spec(), smem_spec(),          # conv3 weight / bias
            pl.BlockSpec((NCLS, C3, H, W), lambda n: (0, 0, 0, 0)),
            pl.BlockSpec((1, NCLS), lambda n: (0, 0)),
        ],
        out_specs=pl.BlockSpec((None, 1, NCLS), lambda n: (n, 0, 0)),
        scratch_shapes=[
            pltpu.VMEM((C1, H1, W1), f32),     # conv1 activations (padded)
            pltpu.VMEM((C2, H2, W2), f32),     # conv2 activations (padded)
        ],
        compiler_params=pltpu.CompilerParams(
            dimension_semantics=("parallel",)),
    )(x_pad, w1f, b1.astype(f32), w2f, b2.astype(f32), w3f, b3.astype(f32),
      w4, b4)

    return out.reshape(N, NCLS)


# ---------------------------------------------------------------------------
# Pure-JAX reference (correctness check for the Pallas kernel)
# ---------------------------------------------------------------------------
def reference_forward(params, x_nchw):
    hi = jax.lax.Precision.HIGHEST

    def conv_relu(x, w, b):
        y = jax.lax.conv_general_dilated(
            x, w, window_strides=(1, 1), padding="SAME",
            dimension_numbers=("NCHW", "OIHW", "NCHW"), precision=hi)
        return jax.nn.relu(y + b[None, :, None, None])

    x = conv_relu(x_nchw, params["conv1_w"], params["conv1_b"])
    x = conv_relu(x, params["conv2_w"], params["conv2_b"])
    x = conv_relu(x, params["conv3_w"], params["conv3_b"])
    x = x.reshape(x.shape[0], -1)
    return jnp.dot(x, params["fc_w"].T, precision=hi) + params["fc_b"]


# ---------------------------------------------------------------------------
# Deterministic parameter init (shapes follow SimpleCNN.__init__)
# ---------------------------------------------------------------------------
def init_params(key, input_channels, hidden_channels, kernel_sizes,
                num_classes):
    params = {}
    keys = jax.random.split(key, 8)
    chans = [input_channels] + list(hidden_channels)
    for i in range(3):
        cout, cin, k = chans[i + 1], chans[i], kernel_sizes[i]
        bound = float(cin * k * k) ** -0.5
        params[f"conv{i+1}_w"] = jax.random.uniform(
            keys[2 * i], (cout, cin, k, k), jnp.float32, -bound, bound)
        params[f"conv{i+1}_b"] = jax.random.uniform(
            keys[2 * i + 1], (cout,), jnp.float32, -bound, bound)
    feat = hidden_channels[2] * 70 * 100        # hardcoded in SimpleCNN.fc
    bound = float(feat) ** -0.5
    params["fc_w"] = jax.random.uniform(
        keys[6], (num_classes, feat), jnp.float32, -bound, bound)
    params["fc_b"] = jax.random.uniform(
        keys[7], (num_classes,), jnp.float32, -bound, bound)
    return params


if __name__ == "__main__":
    key = jax.random.PRNGKey(0)
    pkey, xkey = jax.random.split(key)

    input_channels = 3
    hidden_channels = [4, 8, 4]
    kernel_sizes = [3, 3, 3]
    num_classes = 10
    H, W = 70, 100   # required by the module's fc: hidden_channels[2]*70*100

    params = init_params(pkey, input_channels, hidden_channels,
                         kernel_sizes, num_classes)
    x = jax.random.normal(xkey, (2, input_channels, H, W), jnp.float32)

    out = jax.block_until_ready(jax.jit(simple_cnn_forward)(params, x))
    assert out.shape == (2, num_classes), out.shape

    ref = jax.block_until_ready(jax.jit(reference_forward)(params, x))
    assert jnp.allclose(out, ref, atol=2e-3, rtol=2e-3), (
        float(jnp.max(jnp.abs(out - ref))))

    print("KERNEL_OK")
</pallas_src>

<mosaic_0001>
module attributes {stable_mosaic.version = 11 : i64} {
  func.func @kernel(%arg0: i32, %arg1: memref<1x3x76x106xf32, #tpu.memory_space<vmem>>, %arg2: memref<108xf32, #tpu.memory_space<smem>>, %arg3: memref<4xf32, #tpu.memory_space<smem>>, %arg4: memref<288xf32, #tpu.memory_space<smem>>, %arg5: memref<8xf32, #tpu.memory_space<smem>>, %arg6: memref<288xf32, #tpu.memory_space<smem>>, %arg7: memref<4xf32, #tpu.memory_space<smem>>, %arg8: memref<10x4x70x100xf32, #tpu.memory_space<vmem>>, %arg9: memref<1x10xf32, #tpu.memory_space<vmem>>, %arg10: memref<1x1x10xf32, #tpu.memory_space<vmem>>, %arg11: memref<4x74x104xf32, #tpu.memory_space<vmem>>, %arg12: memref<8x72x102xf32, #tpu.memory_space<vmem>>) attributes {dimension_semantics = [#tpu.dimension_semantics<parallel>], iteration_bounds = array<i64: 2>, scalar_prefetch = 0 : i64, scratch_operands = 2 : i64, tpu.core_type = #tpu.core_type<tc>, window_params = [{transform_indices = @transform_0, window_bounds = array<i64: 1, 3, 76, 106>}, {transform_indices = @transform_1, window_bounds = array<i64: 108>}, {transform_indices = @transform_2, window_bounds = array<i64: 4>}, {transform_indices = @transform_3, window_bounds = array<i64: 288>}, {transform_indices = @transform_4, window_bounds = array<i64: 8>}, {transform_indices = @transform_5, window_bounds = array<i64: 288>}, {transform_indices = @transform_6, window_bounds = array<i64: 4>}, {pipeline_mode = #tpu.pipeline_mode<synchronous>, transform_indices = @transform_7, window_bounds = array<i64: 10, 4, 70, 100>}, {pipeline_mode = #tpu.pipeline_mode<synchronous>, transform_indices = @transform_8, window_bounds = array<i64: 1, 10>}, {transform_indices = @transform_9, window_bounds = array<i64: 1, 1, 10>}]} {
    %0 = tpu.iota {dimensions = array<i32: 0>} : vector<74x104xi32>
    %1 = tpu.iota {dimensions = array<i32: 1>} : vector<74x104xi32>
    %c2_i32 = arith.constant 2 : i32
    %2 = vector.broadcast %c2_i32 : i32 to vector<74x104xi32>
    %3 = arith.cmpi sge, %0, %2 : vector<74x104xi32>
    %c72_i32 = arith.constant 72 : i32
    %4 = vector.broadcast %c72_i32 : i32 to vector<74x104xi32>
    %5 = arith.cmpi slt, %0, %4 : vector<74x104xi32>
    %6 = arith.andi %3, %5 : vector<74x104xi1>
    %c2_i32_0 = arith.constant 2 : i32
    %7 = vector.broadcast %c2_i32_0 : i32 to vector<74x104xi32>
    %8 = arith.cmpi sge, %1, %7 : vector<74x104xi32>
    %9 = arith.andi %6, %8 : vector<74x104xi1>
    %c102_i32 = arith.constant 102 : i32
    %10 = vector.broadcast %c102_i32 : i32 to vector<74x104xi32>
    %11 = arith.cmpi slt, %1, %10 : vector<74x104xi32>
    %12 = arith.andi %9, %11 : vector<74x104xi1>
    %c0_i32 = arith.constant 0 : i32
    %c4_i32 = arith.constant 4 : i32
    %13 = arith.addi %c0_i32, %c4_i32 : i32
    %c1_i32 = arith.constant 1 : i32
    scf.for %arg13 = %c0_i32 to %13 step %c1_i32  : i32 {
      %c1_i32_15 = arith.constant 1 : i32
      %35 = arith.muli %arg13, %c1_i32_15 : i32
      %c0_i32_16 = arith.constant 0 : i32
      %36 = arith.addi %c0_i32_16, %35 : i32
      %37 = arith.index_cast %36 : i32 to index
      %38 = memref.load %arg3[%37] : memref<4xf32, #tpu.memory_space<smem>>
      %39 = vector.broadcast %38 : f32 to vector<74x104xf32>
      %c3_i32 = arith.constant 3 : i32
      %40 = arith.muli %36, %c3_i32 : i32
      %c0_i32_17 = arith.constant 0 : i32
      %41 = arith.addi %40, %c0_i32_17 : i32
      %c3_i32_18 = arith.constant 3 : i32
      %42 = arith.muli %41, %c3_i32_18 : i32
      %c0_i32_19 = arith.constant 0 : i32
      %43 = arith.addi %42, %c0_i32_19 : i32
      %c3_i32_20 = arith.constant 3 : i32
      %44 = arith.muli %43, %c3_i32_20 : i32
      %c0_i32_21 = arith.constant 0 : i32
      %45 = arith.addi %44, %c0_i32_21 : i32
      %46 = arith.index_cast %45 : i32 to index
      %47 = memref.load %arg2[%46] : memref<108xf32, #tpu.memory_space<smem>>
      %c0_22 = arith.constant 0 : index
      %c0_23 = arith.constant 0 : index
      %c0_24 = arith.constant 0 : index
      %c0_25 = arith.constant 0 : index
      %48 = vector.load %arg1[%c0_22, %c0_23, %c0_24, %c0_25] : memref<1x3x76x106xf32, #tpu.memory_space<vmem>>, vector<1x1x74x104xf32>
      %49 = vector.shape_cast %48 : vector<1x1x74x104xf32> to vector<74x104xf32>
      %50 = vector.broadcast %47 : f32 to vector<74x104xf32>
      %51 = arith.mulf %50, %49 : vector<74x104xf32>
      %52 = arith.addf %39, %51 : vector<74x104xf32>
      %c3_i32_26 = arith.constant 3 : i32
      %53 = arith.muli %36, %c3_i32_26 : i32
      %c0_i32_27 = arith.constant 0 : i32
      %54 = arith.addi %53, %c0_i32_27 : i32
      %c3_i32_28 = arith.constant 3 : i32
      %55 = arith.muli %54, %c3_i32_28 : i32
      %c0_i32_29 = arith.constant 0 : i32
      %56 = arith.addi %55, %c0_i32_29 : i32
      %c3_i32_30 = arith.constant 3 : i32
      %57 = arith.muli %56, %c3_i32_30 : i32
      %c1_i32_31 = arith.constant 1 : i32
      %58 = arith.addi %57, %c1_i32_31 : i32
      %59 = arith.index_cast %58 : i32 to index
      %60 = memref.load %arg2[%59] : memref<108xf32, #tpu.memory_space<smem>>
      %c0_32 = arith.constant 0 : index
      %c0_33 = arith.constant 0 : index
      %c0_34 = arith.constant 0 : index
      %c1 = arith.constant 1 : index
      %61 = vector.load %arg1[%c0_32, %c0_33, %c0_34, %c1] : memref<1x3x76x106xf32, #tpu.memory_space<vmem>>, vector<1x1x74x104xf32>
      %62 = vector.shape_cast %61 : vector<1x1x74x104xf32> to vector<74x104xf32>
      %63 = vector.broadcast %60 : f32 to vector<74x104xf32>
      %64 = arith.mulf %63, %62 : vector<74x104xf32>
      %65 = arith.addf %52, %64 : vector<74x104xf32>
      %c3_i32_35 = arith.constant 3 : i32
      %66 = arith.muli %36, %c3_i32_35 : i32
      %c0_i32_36 = arith.constant 0 : i32
      %67 = arith.addi %66, %c0_i32_36 : i32
      %c3_i32_37 = arith.constant 3 : i32
      %68 = arith.muli %67, %c3_i32_37 : i32
      %c0_i32_38 = arith.constant 0 : i32
      %69 = arith.addi %68, %c0_i32_38 : i32
      %c3_i32_39 = arith.constant 3 : i32
      %70 = arith.muli %69, %c3_i32_39 : i32
      %c2_i32_40 = arith.constant 2 : i32
      %71 = arith.addi %70, %c2_i32_40 : i32
      %72 = arith.index_cast %71 : i32 to index
      %73 = memref.load %arg2[%72] : memref<108xf32, #tpu.memory_space<smem>>
      %c0_41 = arith.constant 0 : index
      %c0_42 = arith.constant 0 : index
      %c0_43 = arith.constant 0 : index
      %c2 = arith.constant 2 : index
      %74 = vector.load %arg1[%c0_41, %c0_42, %c0_43, %c2] : memref<1x3x76x106xf32, #tpu.memory_space<vmem>>, vector<1x1x74x104xf32>
      %75 = vector.shape_cast %74 : vector<1x1x74x104xf32> to vector<74x104xf32>
      %76 = vector.broadcast %73 : f32 to vector<74x104xf32>
      %77 = arith.mulf %76, %75 : vector<74x104xf32>
      %78 = arith.addf %65, %77 : vector<74x104xf32>
      %c3_i32_44 = arith.constant 3 : i32
      %79 = arith.muli %36, %c3_i32_44 : i32
      %c0_i32_45 = arith.constant 0 : i32
      %80 = arith.addi %79, %c0_i32_45 : i32
      %c3_i32_46 = arith.constant 3 : i32
      %81 = arith.muli %80, %c3_i32_46 : i32
      %c1_i32_47 = arith.constant 1 : i32
      %82 = arith.addi %81, %c1_i32_47 : i32
      %c3_i32_48 = arith.constant 3 : i32
      %83 = arith.muli %82, %c3_i32_48 : i32
      %c0_i32_49 = arith.constant 0 : i32
      %84 = arith.addi %83, %c0_i32_49 : i32
      %85 = arith.index_cast %84 : i32 to index
      %86 = memref.load %arg2[%85] : memref<108xf32, #tpu.memory_space<smem>>
      %c0_50 = arith.constant 0 : index
      %c0_51 = arith.constant 0 : index
      %c1_52 = arith.constant 1 : index
      %c0_53 = arith.constant 0 : index
      %87 = vector.load %arg1[%c0_50, %c0_51, %c1_52, %c0_53] : memref<1x3x76x106xf32, #tpu.memory_space<vmem>>, vector<1x1x74x104xf32>
      %88 = vector.shape_cast %87 : vector<1x1x74x104xf32> to vector<74x104xf32>
      %89 = vector.broadcast %86 : f32 to vector<74x104xf32>
      %90 = arith.mulf %89, %88 : vector<74x104xf32>
      %91 = arith.addf %78, %90 : vector<74x104xf32>
      %c3_i32_54 = arith.constant 3 : i32
      %92 = arith.muli %36, %c3_i32_54 : i32
      %c0_i32_55 = arith.constant 0 : i32
      %93 = arith.addi %92, %c0_i32_55 : i32
      %c3_i32_56 = arith.constant 3 : i32
      %94 = arith.muli %93, %c3_i32_56 : i32
      %c1_i32_57 = arith.constant 1 : i32
      %95 = arith.addi %94, %c1_i32_57 : i32
      %c3_i32_58 = arith.constant 3 : i32
      %96 = arith.muli %95, %c3_i32_58 : i32
      %c1_i32_59 = arith.constant 1 : i32
      %97 = arith.addi %96, %c1_i32_59 : i32
      %98 = arith.index_cast %97 : i32 to index
      %99 = memref.load %arg2[%98] : memref<108xf32, #tpu.memory_space<smem>>
      %c0_60 = arith.constant 0 : index
      %c0_61 = arith.constant 0 : index
      %c1_62 = arith.constant 1 : index
      %c1_63 = arith.constant 1 : index
      %100 = vector.load %arg1[%c0_60, %c0_61, %c1_62, %c1_63] : memref<1x3x76x106xf32, #tpu.memory_space<vmem>>, vector<1x1x74x104xf32>
      %101 = vector.shape_cast %100 : vector<1x1x74x104xf32> to vector<74x104xf32>
      %102 = vector.broadcast %99 : f32 to vector<74x104xf32>
      %103 = arith.mulf %102, %101 : vector<74x104xf32>
      %104 = arith.addf %91, %103 : vector<74x104xf32>
      %c3_i32_64 = arith.constant 3 : i32
      %105 = arith.muli %36, %c3_i32_64 : i32
      %c0_i32_65 = arith.constant 0 : i32
      %106 = arith.addi %105, %c0_i32_65 : i32
      %c3_i32_66 = arith.constant 3 : i32
      %107 = arith.muli %106, %c3_i32_66 : i32
      %c1_i32_67 = arith.constant 1 : i32
      %108 = arith.addi %107, %c1_i32_67 : i32
      %c3_i32_68 = arith.constant 3 : i32
      %109 = arith.muli %108, %c3_i32_68 : i32
      %c2_i32_69 = arith.constant 2 : i32
      %110 = arith.addi %109, %c2_i32_69 : i32
      %111 = arith.index_cast %110 : i32 to index
      %112 = memref.load %arg2[%111] : memref<108xf32, #tpu.memory_space<smem>>
      %c0_70 = arith.constant 0 : index
      %c0_71 = arith.constant 0 : index
      %c1_72 = arith.constant 1 : index
      %c2_73 = arith.constant 2 : index
      %113 = vector.load %arg1[%c0_70, %c0_71, %c1_72, %c2_73] : memref<1x3x76x106xf32, #tpu.memory_space<vmem>>, vector<1x1x74x104xf32>
      %114 = vector.shape_cast %113 : vector<1x1x74x104xf32> to vector<74x104xf32>
      %115 = vector.broadcast %112 : f32 to vector<74x104xf32>
      %116 = arith.mulf %115, %114 : vector<74x104xf32>
      %117 = arith.addf %104, %116 : vector<74x104xf32>
      %c3_i32_74 = arith.constant 3 : i32
      %118 = arith.muli %36, %c3_i32_74 : i32
      %c0_i32_75 = arith.constant 0 : i32
      %119 = arith.addi %118, %c0_i32_75 : i32
      %c3_i32_76 = arith.constant 3 : i32
      %120 = arith.muli %119, %c3_i32_76 : i32
      %c2_i32_77 = arith.constant 2 : i32
      %121 = arith.addi %120, %c2_i32_77 : i32
      %c3_i32_78 = arith.constant 3 : i32
      %122 = arith.muli %121, %c3_i32_78 : i32
      %c0_i32_79 = arith.constant 0 : i32
      %123 = arith.addi %122, %c0_i32_79 : i32
      %124 = arith.index_cast %123 : i32 to index
      %125 = memref.load %arg2[%124] : memref<108xf32, #tpu.memory_space<smem>>
      %c0_80 = arith.constant 0 : index
      %c0_81 = arith.constant 0 : index
      %c2_82 = arith.constant 2 : index
      %c0_83 = arith.constant 0 : index
      %126 = vector.load %arg1[%c0_80, %c0_81, %c2_82, %c0_83] : memref<1x3x76x106xf32, #tpu.memory_space<vmem>>, vector<1x1x74x104xf32>
      %127 = vector.shape_cast %126 : vector<1x1x74x104xf32> to vector<74x104xf32>
      %128 = vector.broadcast %125 : f32 to vector<74x104xf32>
      %129 = arith.mulf %128, %127 : vector<74x104xf32>
      %130 = arith.addf %117, %129 : vector<74x104xf32>
      %c3_i32_84 = arith.constant 3 : i32
      %131 = arith.muli %36, %c3_i32_84 : i32
      %c0_i32_85 = arith.constant 0 : i32
      %132 = arith.addi %131, %c0_i32_85 : i32
      %c3_i32_86 = arith.constant 3 : i32
      %133 = arith.muli %132, %c3_i32_86 : i32
      %c2_i32_87 = arith.constant 2 : i32
      %134 = arith.addi %133, %c2_i32_87 : i32
      %c3_i32_88 = arith.constant 3 : i32
      %135 = arith.muli %134, %c3_i32_88 : i32
      %c1_i32_89 = arith.constant 1 : i32
      %136 = arith.addi %135, %c1_i32_89 : i32
      %137 = arith.index_cast %136 : i32 to index
      %138 = memref.load %arg2[%137] : memref<108xf32, #tpu.memory_space<smem>>
      %c0_90 = arith.constant 0 : index
      %c0_91 = arith.constant 0 : index
      %c2_92 = arith.constant 2 : index
      %c1_93 = arith.constant 1 : index
      %139 = vector.load %arg1[%c0_90, %c0_91, %c2_92, %c1_93] : memref<1x3x76x106xf32, #tpu.memory_space<vmem>>, vector<1x1x74x104xf32>
      %140 = vector.shape_cast %139 : vector<1x1x74x104xf32> to vector<74x104xf32>
      %141 = vector.broadcast %138 : f32 to vector<74x104xf32>
      %142 = arith.mulf %141, %140 : vector<74x104xf32>
      %143 = arith.addf %130, %142 : vector<74x104xf32>
      %c3_i32_94 = arith.constant 3 : i32
      %144 = arith.muli %36, %c3_i32_94 : i32
      %c0_i32_95 = arith.constant 0 : i32
      %145 = arith.addi %144, %c0_i32_95 : i32
      %c3_i32_96 = arith.constant 3 : i32
      %146 = arith.muli %145, %c3_i32_96 : i32
      %c2_i32_97 = arith.constant 2 : i32
      %147 = arith.addi %146, %c2_i32_97 : i32
      %c3_i32_98 = arith.constant 3 : i32
      %148 = arith.muli %147, %c3_i32_98 : i32
      %c2_i32_99 = arith.constant 2 : i32
      %149 = arith.addi %148, %c2_i32_99 : i32
      %150 = arith.index_cast %149 : i32 to index
      %151 = memref.load %arg2[%150] : memref<108xf32, #tpu.memory_space<smem>>
      %c0_100 = arith.constant 0 : index
      %c0_101 = arith.constant 0 : index
      %c2_102 = arith.constant 2 : index
      %c2_103 = arith.constant 2 : index
      %152 = vector.load %arg1[%c0_100, %c0_101, %c2_102, %c2_103] : memref<1x3x76x106xf32, #tpu.memory_space<vmem>>, vector<1x1x74x104xf32>
      %153 = vector.shape_cast %152 : vector<1x1x74x104xf32> to vector<74x104xf32>
      %154 = vector.broadcast %151 : f32 to vector<74x104xf32>
      %155 = arith.mulf %154, %153 : vector<74x104xf32>
      %156 = arith.addf %143, %155 : vector<74x104xf32>
      %c3_i32_104 = arith.constant 3 : i32
      %157 = arith.muli %36, %c3_i32_104 : i32
      %c1_i32_105 = arith.constant 1 : i32
      %158 = arith.addi %157, %c1_i32_105 : i32
      %c3_i32_106 = arith.constant 3 : i32
      %159 = arith.muli %158, %c3_i32_106 : i32
      %c0_i32_107 = arith.constant 0 : i32
      %160 = arith.addi %159, %c0_i32_107 : i32
      %c3_i32_108 = arith.constant 3 : i32
      %161 = arith.muli %160, %c3_i32_108 : i32
      %c0_i32_109 = arith.constant 0 : i32
      %162 = arith.addi %161, %c0_i32_109 : i32
      %163 = arith.index_cast %162 : i32 to index
      %164 = memref.load %arg2[%163] : memref<108xf32, #tpu.memory_space<smem>>
      %c0_110 = arith.constant 0 : index
      %c1_111 = arith.constant 1 : index
      %c0_112 = arith.constant 0 : index
      %c0_113 = arith.constant 0 : index
      %165 = vector.load %arg1[%c0_110, %c1_111, %c0_112, %c0_113] : memref<1x3x76x106xf32, #tpu.memory_space<vmem>>, vector<1x1x74x104xf32>
      %166 = vector.shape_cast %165 : vector<1x1x74x104xf32> to vector<74x104xf32>
      %167 = vector.broadcast %164 : f32 to vector<74x104xf32>
      %168 = arith.mulf %167, %166 : vector<74x104xf32>
      %169 = arith.addf %156, %168 : vector<74x104xf32>
      %c3_i32_114 = arith.constant 3 : i32
      %170 = arith.muli %36, %c3_i32_114 : i32
      %c1_i32_115 = arith.constant 1 : i32
      %171 = arith.addi %170, %c1_i32_115 : i32
      %c3_i32_116 = arith.constant 3 : i32
      %172 = arith.muli %171, %c3_i32_116 : i32
      %c0_i32_117 = arith.constant 0 : i32
      %173 = arith.addi %172, %c0_i32_117 : i32
      %c3_i32_118 = arith.constant 3 : i32
      %174 = arith.muli %173, %c3_i32_118 : i32
      %c1_i32_119 = arith.constant 1 : i32
      %175 = arith.addi %174, %c1_i32_119 : i32
      %176 = arith.index_cast %175 : i32 to index
      %177 = memref.load %arg2[%176] : memref<108xf32, #tpu.memory_space<smem>>
      %c0_120 = arith.constant 0 : index
      %c1_121 = arith.constant 1 : index
      %c0_122 = arith.constant 0 : index
      %c1_123 = arith.constant 1 : index
      %178 = vector.load %arg1[%c0_120, %c1_121, %c0_122, %c1_123] : memref<1x3x76x106xf32, #tpu.memory_space<vmem>>, vector<1x1x74x104xf32>
      %179 = vector.shape_cast %178 : vector<1x1x74x104xf32> to vector<74x104xf32>
      %180 = vector.broadcast %177 : f32 to vector<74x104xf32>
      %181 = arith.mulf %180, %179 : vector<74x104xf32>
      %182 = arith.addf %169, %181 : vector<74x104xf32>
      %c3_i32_124 = arith.constant 3 : i32
      %183 = arith.muli %36, %c3_i32_124 : i32
      %c1_i32_125 = arith.constant 1 : i32
      %184 = arith.addi %183, %c1_i32_125 : i32
      %c3_i32_126 = arith.constant 3 : i32
      %185 = arith.muli %184, %c3_i32_126 : i32
      %c0_i32_127 = arith.constant 0 : i32
      %186 = arith.addi %185, %c0_i32_127 : i32
      %c3_i32_128 = arith.constant 3 : i32
      %187 = arith.muli %186, %c3_i32_128 : i32
      %c2_i32_129 = arith.constant 2 : i32
      %188 = arith.addi %187, %c2_i32_129 : i32
      %189 = arith.index_cast %188 : i32 to index
      %190 = memref.load %arg2[%189] : memref<108xf32, #tpu.memory_space<smem>>
      %c0_130 = arith.constant 0 : index
      %c1_131 = arith.constant 1 : index
      %c0_132 = arith.constant 0 : index
      %c2_133 = arith.constant 2 : index
      %191 = vector.load %arg1[%c0_130, %c1_131, %c0_132, %c2_133] : memref<1x3x76x106xf32, #tpu.memory_space<vmem>>, vector<1x1x74x104xf32>
      %192 = vector.shape_cast %191 : vector<1x1x74x104xf32> to vector<74x104xf32>
      %193 = vector.broadcast %190 : f32 to vector<74x104xf32>
      %194 = arith.mulf %193, %192 : vector<74x104xf32>
      %195 = arith.addf %182, %194 : vector<74x104xf32>
      %c3_i32_134 = arith.constant 3 : i32
      %196 = arith.muli %36, %c3_i32_134 : i32
      %c1_i32_135 = arith.constant 1 : i32
      %197 = arith.addi %196, %c1_i32_135 : i32
      %c3_i32_136 = arith.constant 3 : i32
      %198 = arith.muli %197, %c3_i32_136 : i32
      %c1_i32_137 = arith.constant 1 : i32
      %199 = arith.addi %198, %c1_i32_137 : i32
      %c3_i32_138 = arith.constant 3 : i32
      %200 = arith.muli %199, %c3_i32_138 : i32
      %c0_i32_139 = arith.constant 0 : i32
      %201 = arith.addi %200, %c0_i32_139 : i32
      %202 = arith.index_cast %201 : i32 to index
      %203 = memref.load %arg2[%202] : memref<108xf32, #tpu.memory_space<smem>>
      %c0_140 = arith.constant 0 : index
      %c1_141 = arith.constant 1 : index
      %c1_142 = arith.constant 1 : index
      %c0_143 = arith.constant 0 : index
      %204 = vector.load %arg1[%c0_140, %c1_141, %c1_142, %c0_143] : memref<1x3x76x106xf32, #tpu.memory_space<vmem>>, vector<1x1x74x104xf32>
      %205 = vector.shape_cast %204 : vector<1x1x74x104xf32> to vector<74x104xf32>
      %206 = vector.broadcast %203 : f32 to vector<74x104xf32>
      %207 = arith.mulf %206, %205 : vector<74x104xf32>
      %208 = arith.addf %195, %207 : vector<74x104xf32>
      %c3_i32_144 = arith.constant 3 : i32
      %209 = arith.muli %36, %c3_i32_144 : i32
      %c1_i32_145 = arith.constant 1 : i32
      %210 = arith.addi %209, %c1_i32_145 : i32
      %c3_i32_146 = arith.constant 3 : i32
      %211 = arith.muli %210, %c3_i32_146 : i32
      %c1_i32_147 = arith.constant 1 : i32
      %212 = arith.addi %211, %c1_i32_147 : i32
      %c3_i32_148 = arith.constant 3 : i32
      %213 = arith.muli %212, %c3_i32_148 : i32
      %c1_i32_149 = arith.constant 1 : i32
      %214 = arith.addi %213, %c1_i32_149 : i32
      %215 = arith.index_cast %214 : i32 to index
      %216 = memref.load %arg2[%215] : memref<108xf32, #tpu.memory_space<smem>>
      %c0_150 = arith.constant 0 : index
      %c1_151 = arith.constant 1 : index
      %c1_152 = arith.constant 1 : index
      %c1_153 = arith.constant 1 : index
      %217 = vector.load %arg1[%c0_150, %c1_151, %c1_152, %c1_153] : memref<1x3x76x106xf32, #tpu.memory_space<vmem>>, vector<1x1x74x104xf32>
      %218 = vector.shape_cast %217 : vector<1x1x74x104xf32> to vector<74x104xf32>
      %219 = vector.broadcast %216 : f32 to vector<74x104xf32>
      %220 = arith.mulf %219, %218 : vector<74x104xf32>
      %221 = arith.addf %208, %220 : vector<74x104xf32>
      %c3_i32_154 = arith.constant 3 : i32
      %222 = arith.muli %36, %c3_i32_154 : i32
      %c1_i32_155 = arith.constant 1 : i32
      %223 = arith.addi %222, %c1_i32_155 : i32
      %c3_i32_156 = arith.constant 3 : i32
      %224 = arith.muli %223, %c3_i32_156 : i32
      %c1_i32_157 = arith.constant 1 : i32
      %225 = arith.addi %224, %c1_i32_157 : i32
      %c3_i32_158 = arith.constant 3 : i32
      %226 = arith.muli %225, %c3_i32_158 : i32
      %c2_i32_159 = arith.constant 2 : i32
      %227 = arith.addi %226, %c2_i32_159 : i32
      %228 = arith.index_cast %227 : i32 to index
      %229 = memref.load %arg2[%228] : memref<108xf32, #tpu.memory_space<smem>>
      %c0_160 = arith.constant 0 : index
      %c1_161 = arith.constant 1 : index
      %c1_162 = arith.constant 1 : index
      %c2_163 = arith.constant 2 : index
      %230 = vector.load %arg1[%c0_160, %c1_161, %c1_162, %c2_163] : memref<1x3x76x106xf32, #tpu.memory_space<vmem>>, vector<1x1x74x104xf32>
      %231 = vector.shape_cast %230 : vector<1x1x74x104xf32> to vector<74x104xf32>
      %232 = vector.broadcast %229 : f32 to vector<74x104xf32>
      %233 = arith.mulf %232, %231 : vector<74x104xf32>
      %234 = arith.addf %221, %233 : vector<74x104xf32>
      %c3_i32_164 = arith.constant 3 : i32
      %235 = arith.muli %36, %c3_i32_164 : i32
      %c1_i32_165 = arith.constant 1 : i32
      %236 = arith.addi %235, %c1_i32_165 : i32
      %c3_i32_166 = arith.constant 3 : i32
      %237 = arith.muli %236, %c3_i32_166 : i32
      %c2_i32_167 = arith.constant 2 : i32
      %238 = arith.addi %237, %c2_i32_167 : i32
      %c3_i32_168 = arith.constant 3 : i32
      %239 = arith.muli %238, %c3_i32_168 : i32
      %c0_i32_169 = arith.constant 0 : i32
      %240 = arith.addi %239, %c0_i32_169 : i32
      %241 = arith.index_cast %240 : i32 to index
      %242 = memref.load %arg2[%241] : memref<108xf32, #tpu.memory_space<smem>>
      %c0_170 = arith.constant 0 : index
      %c1_171 = arith.constant 1 : index
      %c2_172 = arith.constant 2 : index
      %c0_173 = arith.constant 0 : index
      %243 = vector.load %arg1[%c0_170, %c1_171, %c2_172, %c0_173] : memref<1x3x76x106xf32, #tpu.memory_space<vmem>>, vector<1x1x74x104xf32>
      %244 = vector.shape_cast %243 : vector<1x1x74x104xf32> to vector<74x104xf32>
      %245 = vector.broadcast %242 : f32 to vector<74x104xf32>
      %246 = arith.mulf %245, %244 : vector<74x104xf32>
      %247 = arith.addf %234, %246 : vector<74x104xf32>
      %c3_i32_174 = arith.constant 3 : i32
      %248 = arith.muli %36, %c3_i32_174 : i32
      %c1_i32_175 = arith.constant 1 : i32
      %249 = arith.addi %248, %c1_i32_175 : i32
      %c3_i32_176 = arith.constant 3 : i32
      %250 = arith.muli %249, %c3_i32_176 : i32
      %c2_i32_177 = arith.constant 2 : i32
      %251 = arith.addi %250, %c2_i32_177 : i32
      %c3_i32_178 = arith.constant 3 : i32
      %252 = arith.muli %251, %c3_i32_178 : i32
      %c1_i32_179 = arith.constant 1 : i32
      %253 = arith.addi %252, %c1_i32_179 : i32
      %254 = arith.index_cast %253 : i32 to index
      %255 = memref.load %arg2[%254] : memref<108xf32, #tpu.memory_space<smem>>
      %c0_180 = arith.constant 0 : index
      %c1_181 = arith.constant 1 : index
      %c2_182 = arith.constant 2 : index
      %c1_183 = arith.constant 1 : index
      %256 = vector.load %arg1[%c0_180, %c1_181, %c2_182, %c1_183] : memref<1x3x76x106xf32, #tpu.memory_space<vmem>>, vector<1x1x74x104xf32>
      %257 = vector.shape_cast %256 : vector<1x1x74x104xf32> to vector<74x104xf32>
      %258 = vector.broadcast %255 : f32 to vector<74x104xf32>
      %259 = arith.mulf %258, %257 : vector<74x104xf32>
      %260 = arith.addf %247, %259 : vector<74x104xf32>
      %c3_i32_184 = arith.constant 3 : i32
      %261 = arith.muli %36, %c3_i32_184 : i32
      %c1_i32_185 = arith.constant 1 : i32
      %262 = arith.addi %261, %c1_i32_185 : i32
      %c3_i32_186 = arith.constant 3 : i32
      %263 = arith.muli %262, %c3_i32_186 : i32
      %c2_i32_187 = arith.constant 2 : i32
      %264 = arith.addi %263, %c2_i32_187 : i32
      %c3_i32_188 = arith.constant 3 : i32
      %265 = arith.muli %264, %c3_i32_188 : i32
      %c2_i32_189 = arith.constant 2 : i32
      %266 = arith.addi %265, %c2_i32_189 : i32
      %267 = arith.index_cast %266 : i32 to index
      %268 = memref.load %arg2[%267] : memref<108xf32, #tpu.memory_space<smem>>
      %c0_190 = arith.constant 0 : index
      %c1_191 = arith.constant 1 : index
      %c2_192 = arith.constant 2 : index
      %c2_193 = arith.constant 2 : index
      %269 = vector.load %arg1[%c0_190, %c1_191, %c2_192, %c2_193] : memref<1x3x76x106xf32, #tpu.memory_space<vmem>>, vector<1x1x74x104xf32>
      %270 = vector.shape_cast %269 : vector<1x1x74x104xf32> to vector<74x104xf32>
      %271 = vector.broadcast %268 : f32 to vector<74x104xf32>
      %272 = arith.mulf %271, %270 : vector<74x104xf32>
      %273 = arith.addf %260, %272 : vector<74x104xf32>
      %c3_i32_194 = arith.constant 3 : i32
      %274 = arith.muli %36, %c3_i32_194 : i32
      %c2_i32_195 = arith.constant 2 : i32
      %275 = arith.addi %274, %c2_i32_195 : i32
      %c3_i32_196 = arith.constant 3 : i32
      %276 = arith.muli %275, %c3_i32_196 : i32
      %c0_i32_197 = arith.constant 0 : i32
      %277 = arith.addi %276, %c0_i32_197 : i32
      %c3_i32_198 = arith.constant 3 : i32
      %278 = arith.muli %277, %c3_i32_198 : i32
      %c0_i32_199 = arith.constant 0 : i32
      %279 = arith.addi %278, %c0_i32_199 : i32
      %280 = arith.index_cast %279 : i32 to index
      %281 = memref.load %arg2[%280] : memref<108xf32, #tpu.memory_space<smem>>
      %c0_200 = arith.constant 0 : index
      %c2_201 = arith.constant 2 : index
      %c0_202 = arith.constant 0 : index
      %c0_203 = arith.constant 0 : index
      %282 = vector.load %arg1[%c0_200, %c2_201, %c0_202, %c0_203] : memref<1x3x76x106xf32, #tpu.memory_space<vmem>>, vector<1x1x74x104xf32>
      %283 = vector.shape_cast %282 : vector<1x1x74x104xf32> to vector<74x104xf32>
      %284 = vector.broadcast %281 : f32 to vector<74x104xf32>
      %285 = arith.mulf %284, %283 : vector<74x104xf32>
      %286 = arith.addf %273, %285 : vector<74x104xf32>
      %c3_i32_204 = arith.constant 3 : i32
      %287 = arith.muli %36, %c3_i32_204 : i32
      %c2_i32_205 = arith.constant 2 : i32
      %288 = arith.addi %287, %c2_i32_205 : i32
      %c3_i32_206 = arith.constant 3 : i32
      %289 = arith.muli %288, %c3_i32_206 : i32
      %c0_i32_207 = arith.constant 0 : i32
      %290 = arith.addi %289, %c0_i32_207 : i32
      %c3_i32_208 = arith.constant 3 : i32
      %291 = arith.muli %290, %c3_i32_208 : i32
      %c1_i32_209 = arith.constant 1 : i32
      %292 = arith.addi %291, %c1_i32_209 : i32
      %293 = arith.index_cast %292 : i32 to index
      %294 = memref.load %arg2[%293] : memref<108xf32, #tpu.memory_space<smem>>
      %c0_210 = arith.constant 0 : index
      %c2_211 = arith.constant 2 : index
      %c0_212 = arith.constant 0 : index
      %c1_213 = arith.constant 1 : index
      %295 = vector.load %arg1[%c0_210, %c2_211, %c0_212, %c1_213] : memref<1x3x76x106xf32, #tpu.memory_space<vmem>>, vector<1x1x74x104xf32>
      %296 = vector.shape_cast %295 : vector<1x1x74x104xf32> to vector<74x104xf32>
      %297 = vector.broadcast %294 : f32 to vector<74x104xf32>
      %298 = arith.mulf %297, %296 : vector<74x104xf32>
      %299 = arith.addf %286, %298 : vector<74x104xf32>
      %c3_i32_214 = arith.constant 3 : i32
      %300 = arith.muli %36, %c3_i32_214 : i32
      %c2_i32_215 = arith.constant 2 : i32
      %301 = arith.addi %300, %c2_i32_215 : i32
      %c3_i32_216 = arith.constant 3 : i32
      %302 = arith.muli %301, %c3_i32_216 : i32
      %c0_i32_217 = arith.constant 0 : i32
      %303 = arith.addi %302, %c0_i32_217 : i32
      %c3_i32_218 = arith.constant 3 : i32
      %304 = arith.muli %303, %c3_i32_218 : i32
      %c2_i32_219 = arith.constant 2 : i32
      %305 = arith.addi %304, %c2_i32_219 : i32
      %306 = arith.index_cast %305 : i32 to index
      %307 = memref.load %arg2[%306] : memref<108xf32, #tpu.memory_space<smem>>
      %c0_220 = arith.constant 0 : index
      %c2_221 = arith.constant 2 : index
      %c0_222 = arith.constant 0 : index
      %c2_223 = arith.constant 2 : index
      %308 = vector.load %arg1[%c0_220, %c2_221, %c0_222, %c2_223] : memref<1x3x76x106xf32, #tpu.memory_space<vmem>>, vector<1x1x74x104xf32>
      %309 = vector.shape_cast %308 : vector<1x1x74x104xf32> to vector<74x104xf32>
      %310 = vector.broadcast %307 : f32 to vector<74x104xf32>
      %311 = arith.mulf %310, %309 : vector<74x104xf32>
      %312 = arith.addf %299, %311 : vector<74x104xf32>
      %c3_i32_224 = arith.constant 3 : i32
      %313 = arith.muli %36, %c3_i32_224 : i32
      %c2_i32_225 = arith.constant 2 : i32
      %314 = arith.addi %313, %c2_i32_225 : i32
      %c3_i32_226 = arith.constant 3 : i32
      %315 = arith.muli %314, %c3_i32_226 : i32
      %c1_i32_227 = arith.constant 1 : i32
      %316 = arith.addi %315, %c1_i32_227 : i32
      %c3_i32_228 = arith.constant 3 : i32
      %317 = arith.muli %316, %c3_i32_228 : i32
      %c0_i32_229 = arith.constant 0 : i32
      %318 = arith.addi %317, %c0_i32_229 : i32
      %319 = arith.index_cast %318 : i32 to index
      %320 = memref.load %arg2[%319] : memref<108xf32, #tpu.memory_space<smem>>
      %c0_230 = arith.constant 0 : index
      %c2_231 = arith.constant 2 : index
      %c1_232 = arith.constant 1 : index
      %c0_233 = arith.constant 0 : index
      %321 = vector.load %arg1[%c0_230, %c2_231, %c1_232, %c0_233] : memref<1x3x76x106xf32, #tpu.memory_space<vmem>>, vector<1x1x74x104xf32>
      %322 = vector.shape_cast %321 : vector<1x1x74x104xf32> to vector<74x104xf32>
      %323 = vector.broadcast %320 : f32 to vector<74x104xf32>
      %324 = arith.mulf %323, %322 : vector<74x104xf32>
      %325 = arith.addf %312, %324 : vector<74x104xf32>
      %c3_i32_234 = arith.constant 3 : i32
      %326 = arith.muli %36, %c3_i32_234 : i32
      %c2_i32_235 = arith.constant 2 : i32
      %327 = arith.addi %326, %c2_i32_235 : i32
      %c3_i32_236 = arith.constant 3 : i32
      %328 = arith.muli %327, %c3_i32_236 : i32
      %c1_i32_237 = arith.constant 1 : i32
      %329 = arith.addi %328, %c1_i32_237 : i32
      %c3_i32_238 = arith.constant 3 : i32
      %330 = arith.muli %329, %c3_i32_238 : i32
      %c1_i32_239 = arith.constant 1 : i32
      %331 = arith.addi %330, %c1_i32_239 : i32
      %332 = arith.index_cast %331 : i32 to index
      %333 = memref.load %arg2[%332] : memref<108xf32, #tpu.memory_space<smem>>
      %c0_240 = arith.constant 0 : index
      %c2_241 = arith.constant 2 : index
      %c1_242 = arith.constant 1 : index
      %c1_243 = arith.constant 1 : index
      %334 = vector.load %arg1[%c0_240, %c2_241, %c1_242, %c1_243] : memref<1x3x76x106xf32, #tpu.memory_space<vmem>>, vector<1x1x74x104xf32>
      %335 = vector.shape_cast %334 : vector<1x1x74x104xf32> to vector<74x104xf32>
      %336 = vector.broadcast %333 : f32 to vector<74x104xf32>
      %337 = arith.mulf %336, %335 : vector<74x104xf32>
      %338 = arith.addf %325, %337 : vector<74x104xf32>
      %c3_i32_244 = arith.constant 3 : i32
      %339 = arith.muli %36, %c3_i32_244 : i32
      %c2_i32_245 = arith.constant 2 : i32
      %340 = arith.addi %339, %c2_i32_245 : i32
      %c3_i32_246 = arith.constant 3 : i32
      %341 = arith.muli %340, %c3_i32_246 : i32
      %c1_i32_247 = arith.constant 1 : i32
      %342 = arith.addi %341, %c1_i32_247 : i32
      %c3_i32_248 = arith.constant 3 : i32
      %343 = arith.muli %342, %c3_i32_248 : i32
      %c2_i32_249 = arith.constant 2 : i32
      %344 = arith.addi %343, %c2_i32_249 : i32
      %345 = arith.index_cast %344 : i32 to index
      %346 = memref.load %arg2[%345] : memref<108xf32, #tpu.memory_space<smem>>
      %c0_250 = arith.constant 0 : index
      %c2_251 = arith.constant 2 : index
      %c1_252 = arith.constant 1 : index
      %c2_253 = arith.constant 2 : index
      %347 = vector.load %arg1[%c0_250, %c2_251, %c1_252, %c2_253] : memref<1x3x76x106xf32, #tpu.memory_space<vmem>>, vector<1x1x74x104xf32>
      %348 = vector.shape_cast %347 : vector<1x1x74x104xf32> to vector<74x104xf32>
      %349 = vector.broadcast %346 : f32 to vector<74x104xf32>
      %350 = arith.mulf %349, %348 : vector<74x104xf32>
      %351 = arith.addf %338, %350 : vector<74x104xf32>
      %c3_i32_254 = arith.constant 3 : i32
      %352 = arith.muli %36, %c3_i32_254 : i32
      %c2_i32_255 = arith.constant 2 : i32
      %353 = arith.addi %352, %c2_i32_255 : i32
      %c3_i32_256 = arith.constant 3 : i32
      %354 = arith.muli %353, %c3_i32_256 : i32
      %c2_i32_257 = arith.constant 2 : i32
      %355 = arith.addi %354, %c2_i32_257 : i32
      %c3_i32_258 = arith.constant 3 : i32
      %356 = arith.muli %355, %c3_i32_258 : i32
      %c0_i32_259 = arith.constant 0 : i32
      %357 = arith.addi %356, %c0_i32_259 : i32
      %358 = arith.index_cast %357 : i32 to index
      %359 = memref.load %arg2[%358] : memref<108xf32, #tpu.memory_space<smem>>
      %c0_260 = arith.constant 0 : index
      %c2_261 = arith.constant 2 : index
      %c2_262 = arith.constant 2 : index
      %c0_263 = arith.constant 0 : index
      %360 = vector.load %arg1[%c0_260, %c2_261, %c2_262, %c0_263] : memref<1x3x76x106xf32, #tpu.memory_space<vmem>>, vector<1x1x74x104xf32>
      %361 = vector.shape_cast %360 : vector<1x1x74x104xf32> to vector<74x104xf32>
      %362 = vector.broadcast %359 : f32 to vector<74x104xf32>
      %363 = arith.mulf %362, %361 : vector<74x104xf32>
      %364 = arith.addf %351, %363 : vector<74x104xf32>
      %c3_i32_264 = arith.constant 3 : i32
      %365 = arith.muli %36, %c3_i32_264 : i32
      %c2_i32_265 = arith.constant 2 : i32
      %366 = arith.addi %365, %c2_i32_265 : i32
      %c3_i32_266 = arith.constant 3 : i32
      %367 = arith.muli %366, %c3_i32_266 : i32
      %c2_i32_267 = arith.constant 2 : i32
      %368 = arith.addi %367, %c2_i32_267 : i32
      %c3_i32_268 = arith.constant 3 : i32
      %369 = arith.muli %368, %c3_i32_268 : i32
      %c1_i32_269 = arith.constant 1 : i32
      %370 = arith.addi %369, %c1_i32_269 : i32
      %371 = arith.index_cast %370 : i32 to index
      %372 = memref.load %arg2[%371] : memref<108xf32, #tpu.memory_space<smem>>
      %c0_270 = arith.constant 0 : index
      %c2_271 = arith.constant 2 : index
      %c2_272 = arith.constant 2 : index
      %c1_273 = arith.constant 1 : index
      %373 = vector.load %arg1[%c0_270, %c2_271, %c2_272, %c1_273] : memref<1x3x76x106xf32, #tpu.memory_space<vmem>>, vector<1x1x74x104xf32>
      %374 = vector.shape_cast %373 : vector<1x1x74x104xf32> to vector<74x104xf32>
      %375 = vector.broadcast %372 : f32 to vector<74x104xf32>
      %376 = arith.mulf %375, %374 : vector<74x104xf32>
      %377 = arith.addf %364, %376 : vector<74x104xf32>
      %c3_i32_274 = arith.constant 3 : i32
      %378 = arith.muli %36, %c3_i32_274 : i32
      %c2_i32_275 = arith.constant 2 : i32
      %379 = arith.addi %378, %c2_i32_275 : i32
      %c3_i32_276 = arith.constant 3 : i32
      %380 = arith.muli %379, %c3_i32_276 : i32
      %c2_i32_277 = arith.constant 2 : i32
      %381 = arith.addi %380, %c2_i32_277 : i32
      %c3_i32_278 = arith.constant 3 : i32
      %382 = arith.muli %381, %c3_i32_278 : i32
      %c2_i32_279 = arith.constant 2 : i32
      %383 = arith.addi %382, %c2_i32_279 : i32
      %384 = arith.index_cast %383 : i32 to index
      %385 = memref.load %arg2[%384] : memref<108xf32, #tpu.memory_space<smem>>
      %c0_280 = arith.constant 0 : index
      %c2_281 = arith.constant 2 : index
      %c2_282 = arith.constant 2 : index
      %c2_283 = arith.constant 2 : index
      %386 = vector.load %arg1[%c0_280, %c2_281, %c2_282, %c2_283] : memref<1x3x76x106xf32, #tpu.memory_space<vmem>>, vector<1x1x74x104xf32>
      %387 = vector.shape_cast %386 : vector<1x1x74x104xf32> to vector<74x104xf32>
      %388 = vector.broadcast %385 : f32 to vector<74x104xf32>
      %389 = arith.mulf %388, %387 : vector<74x104xf32>
      %390 = arith.addf %377, %389 : vector<74x104xf32>
      %cst = arith.constant 0.000000e+00 : f32
      %391 = vector.broadcast %cst : f32 to vector<74x104xf32>
      %392 = arith.maximumf %390, %391 : vector<74x104xf32>
      %cst_284 = arith.constant 0.000000e+00 : f32
      %393 = vector.broadcast %cst_284 : f32 to vector<74x104xf32>
      %394 = arith.select %12, %392, %393 : vector<74x104xi1>, vector<74x104xf32>
      %395 = arith.index_cast %36 : i32 to index
      %c0_285 = arith.constant 0 : index
      %c0_286 = arith.constant 0 : index
      %396 = vector.load %arg11[%395, %c0_285, %c0_286] : memref<4x74x104xf32, #tpu.memory_space<vmem>>, vector<1x74x104xf32>
      %397 = vector.shape_cast %396 : vector<1x74x104xf32> to vector<74x104xf32>
      %398 = vector.shape_cast %394 : vector<74x104xf32> to vector<1x74x104xf32>
      tpu.vector_store %arg11[%395, %c0_285, %c0_286], %398 {strides = array<i32>} : memref<4x74x104xf32, #tpu.memory_space<vmem>>, vector<1x74x104xf32>,
    }
    %c4_i32_1 = arith.constant 4 : i32
    %14 = tpu.iota {dimensions = array<i32: 0>} : vector<72x102xi32>
    %15 = tpu.iota {dimensions = array<i32: 1>} : vector<72x102xi32>
    %c1_i32_2 = arith.constant 1 : i32
    %16 = vector.broadcast %c1_i32_2 : i32 to vector<72x102xi32>
    %17 = arith.cmpi sge, %14, %16 : vector<72x102xi32>
    %c71_i32 = arith.constant 71 : i32
    %18 = vector.broadcast %c71_i32 : i32 to vector<72x102xi32>
    %19 = arith.cmpi slt, %14, %18 : vector<72x102xi32>
    %20 = arith.andi %17, %19 : vector<72x102xi1>
    %c1_i32_3 = arith.constant 1 : i32
    %21 = vector.broadcast %c1_i32_3 : i32 to vector<72x102xi32>
    %22 = arith.cmpi sge, %15, %21 : vector<72x102xi32>
    %23 = arith.andi %20, %22 : vector<72x102xi1>
    %c101_i32 = arith.constant 101 : i32
    %24 = vector.broadcast %c101_i32 : i32 to vector<72x102xi32>
    %25 = arith.cmpi slt, %15, %24 : vector<72x102xi32>
    %26 = arith.andi %23, %25 : vector<72x102xi1>
    %c0_i32_4 = arith.constant 0 : i32
    %c8_i32 = arith.constant 8 : i32
    %27 = arith.addi %c0_i32_4, %c8_i32 : i32
    %c1_i32_5 = arith.constant 1 : i32
    scf.for %arg13 = %c0_i32_4 to %27 step %c1_i32_5  : i32 {
      %c1_i32_15 = arith.constant 1 : i32
      %35 = arith.muli %arg13, %c1_i32_15 : i32
      %c0_i32_16 = arith.constant 0 : i32
      %36 = arith.addi %c0_i32_16, %35 : i32
      %37 = arith.index_cast %36 : i32 to index
      %38 = memref.load %arg5[%37] : memref<8xf32, #tpu.memory_space<smem>>
      %39 = vector.broadcast %38 : f32 to vector<72x102xf32>
      %c4_i32_17 = arith.constant 4 : i32
      %40 = arith.muli %36, %c4_i32_17 : i32
      %c0_i32_18 = arith.constant 0 : i32
      %41 = arith.addi %40, %c0_i32_18 : i32
      %c3_i32 = arith.constant 3 : i32
      %42 = arith.muli %41, %c3_i32 : i32
      %c0_i32_19 = arith.constant 0 : i32
      %43 = arith.addi %42, %c0_i32_19 : i32
      %c3_i32_20 = arith.constant 3 : i32
      %44 = arith.muli %43, %c3_i32_20 : i32
      %c0_i32_21 = arith.constant 0 : i32
      %45 = arith.addi %44, %c0_i32_21 : i32
      %46 = arith.index_cast %45 : i32 to index
      %47 = memref.load %arg4[%46] : memref<288xf32, #tpu.memory_space<smem>>
      %c0_22 = arith.constant 0 : index
      %c0_23 = arith.constant 0 : index
      %c0_24 = arith.constant 0 : index
      %48 = vector.load %arg11[%c0_22, %c0_23, %c0_24] : memref<4x74x104xf32, #tpu.memory_space<vmem>>, vector<1x72x102xf32>
      %49 = vector.shape_cast %48 : vector<1x72x102xf32> to vector<72x102xf32>
      %50 = vector.broadcast %47 : f32 to vector<72x102xf32>
      %51 = arith.mulf %50, %49 : vector<72x102xf32>
      %52 = arith.addf %39, %51 : vector<72x102xf32>
      %c4_i32_25 = arith.constant 4 : i32
      %53 = arith.muli %36, %c4_i32_25 : i32
      %c0_i32_26 = arith.constant 0 : i32
      %54 = arith.addi %53, %c0_i32_26 : i32
      %c3_i32_27 = arith.constant 3 : i32
      %55 = arith.muli %54, %c3_i32_27 : i32
      %c0_i32_28 = arith.constant 0 : i32
      %56 = arith.addi %55, %c0_i32_28 : i32
      %c3_i32_29 = arith.constant 3 : i32
      %57 = arith.muli %56, %c3_i32_29 : i32
      %c1_i32_30 = arith.constant 1 : i32
      %58 = arith.addi %57, %c1_i32_30 : i32
      %59 = arith.index_cast %58 : i32 to index
      %60 = memref.load %arg4[%59] : memref<288xf32, #tpu.memory_space<smem>>
      %c0_31 = arith.constant 0 : index
      %c0_32 = arith.constant 0 : index
      %c1 = arith.constant 1 : index
      %61 = vector.load %arg11[%c0_31, %c0_32, %c1] : memref<4x74x104xf32, #tpu.memory_space<vmem>>, vector<1x72x102xf32>
      %62 = vector.shape_cast %61 : vector<1x72x102xf32> to vector<72x102xf32>
      %63 = vector.broadcast %60 : f32 to vector<72x102xf32>
      %64 = arith.mulf %63, %62 : vector<72x102xf32>
      %65 = arith.addf %52, %64 : vector<72x102xf32>
      %c4_i32_33 = arith.constant 4 : i32
      %66 = arith.muli %36, %c4_i32_33 : i32
      %c0_i32_34 = arith.constant 0 : i32
      %67 = arith.addi %66, %c0_i32_34 : i32
      %c3_i32_35 = arith.constant 3 : i32
      %68 = arith.muli %67, %c3_i32_35 : i32
      %c0_i32_36 = arith.constant 0 : i32
      %69 = arith.addi %68, %c0_i32_36 : i32
      %c3_i32_37 = arith.constant 3 : i32
      %70 = arith.muli %69, %c3_i32_37 : i32
      %c2_i32_38 = arith.constant 2 : i32
      %71 = arith.addi %70, %c2_i32_38 : i32
      %72 = arith.index_cast %71 : i32 to index
      %73 = memref.load %arg4[%72] : memref<288xf32, #tpu.memory_space<smem>>
      %c0_39 = arith.constant 0 : index
      %c0_40 = arith.constant 0 : index
      %c2 = arith.constant 2 : index
      %74 = vector.load %arg11[%c0_39, %c0_40, %c2] : memref<4x74x104xf32, #tpu.memory_space<vmem>>, vector<1x72x102xf32>
      %75 = vector.shape_cast %74 : vector<1x72x102xf32> to vector<72x102xf32>
      %76 = vector.broadcast %73 : f32 to vector<72x102xf32>
      %77 = arith.mulf %76, %75 : vector<72x102xf32>
      %78 = arith.addf %65, %77 : vector<72x102xf32>
      %c4_i32_41 = arith.constant 4 : i32
      %79 = arith.muli %36, %c4_i32_41 : i32
      %c0_i32_42 = arith.constant 0 : i32
      %80 = arith.addi %79, %c0_i32_42 : i32
      %c3_i32_43 = arith.constant 3 : i32
      %81 = arith.muli %80, %c3_i32_43 : i32
      %c1_i32_44 = arith.constant 1 : i32
      %82 = arith.addi %81, %c1_i32_44 : i32
      %c3_i32_45 = arith.constant 3 : i32
      %83 = arith.muli %82, %c3_i32_45 : i32
      %c0_i32_46 = arith.constant 0 : i32
      %84 = arith.addi %83, %c0_i32_46 : i32
      %85 = arith.index_cast %84 : i32 to index
      %86 = memref.load %arg4[%85] : memref<288xf32, #tpu.memory_space<smem>>
      %c0_47 = arith.constant 0 : index
      %c1_48 = arith.constant 1 : index
      %c0_49 = arith.constant 0 : index
      %87 = vector.load %arg11[%c0_47, %c1_48, %c0_49] : memref<4x74x104xf32, #tpu.memory_space<vmem>>, vector<1x72x102xf32>
      %88 = vector.shape_cast %87 : vector<1x72x102xf32> to vector<72x102xf32>
      %89 = vector.broadcast %86 : f32 to vector<72x102xf32>
      %90 = arith.mulf %89, %88 : vector<72x102xf32>
      %91 = arith.addf %78, %90 : vector<72x102xf32>
      %c4_i32_50 = arith.constant 4 : i32
      %92 = arith.muli %36, %c4_i32_50 : i32
      %c0_i32_51 = arith.constant 0 : i32
      %93 = arith.addi %92, %c0_i32_51 : i32
      %c3_i32_52 = arith.constant 3 : i32
      %94 = arith.muli %93, %c3_i32_52 : i32
      %c1_i32_53 = arith.constant 1 : i32
      %95 = arith.addi %94, %c1_i32_53 : i32
      %c3_i32_54 = arith.constant 3 : i32
      %96 = arith.muli %95, %c3_i32_54 : i32
      %c1_i32_55 = arith.constant 1 : i32
      %97 = arith.addi %96, %c1_i32_55 : i32
      %98 = arith.index_cast %97 : i32 to index
      %99 = memref.load %arg4[%98] : memref<288xf32, #tpu.memory_space<smem>>
      %c0_56 = arith.constant 0 : index
      %c1_57 = arith.constant 1 : index
      %c1_58 = arith.constant 1 : index
      %100 = vector.load %arg11[%c0_56, %c1_57, %c1_58] : memref<4x74x104xf32, #tpu.memory_space<vmem>>, vector<1x72x102xf32>
      %101 = vector.shape_cast %100 : vector<1x72x102xf32> to vector<72x102xf32>
      %102 = vector.broadcast %99 : f32 to vector<72x102xf32>
      %103 = arith.mulf %102, %101 : vector<72x102xf32>
      %104 = arith.addf %91, %103 : vector<72x102xf32>
      %c4_i32_59 = arith.constant 4 : i32
      %105 = arith.muli %36, %c4_i32_59 : i32
      %c0_i32_60 = arith.constant 0 : i32
      %106 = arith.addi %105, %c0_i32_60 : i32
      %c3_i32_61 = arith.constant 3 : i32
      %107 = arith.muli %106, %c3_i32_61 : i32
      %c1_i32_62 = arith.constant 1 : i32
      %108 = arith.addi %107, %c1_i32_62 : i32
      %c3_i32_63 = arith.constant 3 : i32
      %109 = arith.muli %108, %c3_i32_63 : i32
      %c2_i32_64 = arith.constant 2 : i32
      %110 = arith.addi %109, %c2_i32_64 : i32
      %111 = arith.index_cast %110 : i32 to index
      %112 = memref.load %arg4[%111] : memref<288xf32, #tpu.memory_space<smem>>
      %c0_65 = arith.constant 0 : index
      %c1_66 = arith.constant 1 : index
      %c2_67 = arith.constant 2 : index
      %113 = vector.load %arg11[%c0_65, %c1_66, %c2_67] : memref<4x74x104xf32, #tpu.memory_space<vmem>>, vector<1x72x102xf32>
      %114 = vector.shape_cast %113 : vector<1x72x102xf32> to vector<72x102xf32>
      %115 = vector.broadcast %112 : f32 to vector<72x102xf32>
      %116 = arith.mulf %115, %114 : vector<72x102xf32>
      %117 = arith.addf %104, %116 : vector<72x102xf32>
      %c4_i32_68 = arith.constant 4 : i32
      %118 = arith.muli %36, %c4_i32_68 : i32
      %c0_i32_69 = arith.constant 0 : i32
      %119 = arith.addi %118, %c0_i32_69 : i32
      %c3_i32_70 = arith.constant 3 : i32
      %120 = arith.muli %119, %c3_i32_70 : i32
      %c2_i32_71 = arith.constant 2 : i32
      %121 = arith.addi %120, %c2_i32_71 : i32
      %c3_i32_72 = arith.constant 3 : i32
      %122 = arith.muli %121, %c3_i32_72 : i32
      %c0_i32_73 = arith.constant 0 : i32
      %123 = arith.addi %122, %c0_i32_73 : i32
      %124 = arith.index_cast %123 : i32 to index
      %125 = memref.load %arg4[%124] : memref<288xf32, #tpu.memory_space<smem>>
      %c0_74 = arith.constant 0 : index
      %c2_75 = arith.constant 2 : index
      %c0_76 = arith.constant 0 : index
      %126 = vector.load %arg11[%c0_74, %c2_75, %c0_76] : memref<4x74x104xf32, #tpu.memory_space<vmem>>, vector<1x72x102xf32>
      %127 = vector.shape_cast %126 : vector<1x72x102xf32> to vector<72x102xf32>
      %128 = vector.broadcast %125 : f32 to vector<72x102xf32>
      %129 = arith.mulf %128, %127 : vector<72x102xf32>
      %130 = arith.addf %117, %129 : vector<72x102xf32>
      %c4_i32_77 = arith.constant 4 : i32
      %131 = arith.muli %36, %c4_i32_77 : i32
      %c0_i32_78 = arith.constant 0 : i32
      %132 = arith.addi %131, %c0_i32_78 : i32
      %c3_i32_79 = arith.constant 3 : i32
      %133 = arith.muli %132, %c3_i32_79 : i32
      %c2_i32_80 = arith.constant 2 : i32
      %134 = arith.addi %133, %c2_i32_80 : i32
      %c3_i32_81 = arith.constant 3 : i32
      %135 = arith.muli %134, %c3_i32_81 : i32
      %c1_i32_82 = arith.constant 1 : i32
      %136 = arith.addi %135, %c1_i32_82 : i32
      %137 = arith.index_cast %136 : i32 to index
      %138 = memref.load %arg4[%137] : memref<288xf32, #tpu.memory_space<smem>>
      %c0_83 = arith.constant 0 : index
      %c2_84 = arith.constant 2 : index
      %c1_85 = arith.constant 1 : index
      %139 = vector.load %arg11[%c0_83, %c2_84, %c1_85] : memref<4x74x104xf32, #tpu.memory_space<vmem>>, vector<1x72x102xf32>
      %140 = vector.shape_cast %139 : vector<1x72x102xf32> to vector<72x102xf32>
      %141 = vector.broadcast %138 : f32 to vector<72x102xf32>
      %142 = arith.mulf %141, %140 : vector<72x102xf32>
      %143 = arith.addf %130, %142 : vector<72x102xf32>
      %c4_i32_86 = arith.constant 4 : i32
      %144 = arith.muli %36, %c4_i32_86 : i32
      %c0_i32_87 = arith.constant 0 : i32
      %145 = arith.addi %144, %c0_i32_87 : i32
      %c3_i32_88 = arith.constant 3 : i32
      %146 = arith.muli %145, %c3_i32_88 : i32
      %c2_i32_89 = arith.constant 2 : i32
      %147 = arith.addi %146, %c2_i32_89 : i32
      %c3_i32_90 = arith.constant 3 : i32
      %148 = arith.muli %147, %c3_i32_90 : i32
      %c2_i32_91 = arith.constant 2 : i32
      %149 = arith.addi %148, %c2_i32_91 : i32
      %150 = arith.index_cast %149 : i32 to index
      %151 = memref.load %arg4[%150] : memref<288xf32, #tpu.memory_space<smem>>
      %c0_92 = arith.constant 0 : index
      %c2_93 = arith.constant 2 : index
      %c2_94 = arith.constant 2 : index
      %152 = vector.load %arg11[%c0_92, %c2_93, %c2_94] : memref<4x74x104xf32, #tpu.memory_space<vmem>>, vector<1x72x102xf32>
      %153 = vector.shape_cast %152 : vector<1x72x102xf32> to vector<72x102xf32>
      %154 = vector.broadcast %151 : f32 to vector<72x102xf32>
      %155 = arith.mulf %154, %153 : vector<72x102xf32>
      %156 = arith.addf %143, %155 : vector<72x102xf32>
      %c4_i32_95 = arith.constant 4 : i32
      %157 = arith.muli %36, %c4_i32_95 : i32
      %c1_i32_96 = arith.constant 1 : i32
      %158 = arith.addi %157, %c1_i32_96 : i32
      %c3_i32_97 = arith.constant 3 : i32
      %159 = arith.muli %158, %c3_i32_97 : i32
      %c0_i32_98 = arith.constant 0 : i32
      %160 = arith.addi %159, %c0_i32_98 : i32
      %c3_i32_99 = arith.constant 3 : i32
      %161 = arith.muli %160, %c3_i32_99 : i32
      %c0_i32_100 = arith.constant 0 : i32
      %162 = arith.addi %161, %c0_i32_100 : i32
      %163 = arith.index_cast %162 : i32 to index
      %164 = memref.load %arg4[%163] : memref<288xf32, #tpu.memory_space<smem>>
      %c1_101 = arith.constant 1 : index
      %c0_102 = arith.constant 0 : index
      %c0_103 = arith.constant 0 : index
      %165 = vector.load %arg11[%c1_101, %c0_102, %c0_103] : memref<4x74x104xf32, #tpu.memory_space<vmem>>, vector<1x72x102xf32>
      %166 = vector.shape_cast %165 : vector<1x72x102xf32> to vector<72x102xf32>
      %167 = vector.broadcast %164 : f32 to vector<72x102xf32>
      %168 = arith.mulf %167, %166 : vector<72x102xf32>
      %169 = arith.addf %156, %168 : vector<72x102xf32>
      %c4_i32_104 = arith.constant 4 : i32
      %170 = arith.muli %36, %c4_i32_104 : i32
      %c1_i32_105 = arith.constant 1 : i32
      %171 = arith.addi %170, %c1_i32_105 : i32
      %c3_i32_106 = arith.constant 3 : i32
      %172 = arith.muli %171, %c3_i32_106 : i32
      %c0_i32_107 = arith.constant 0 : i32
      %173 = arith.addi %172, %c0_i32_107 : i32
      %c3_i32_108 = arith.constant 3 : i32
      %174 = arith.muli %173, %c3_i32_108 : i32
      %c1_i32_109 = arith.constant 1 : i32
      %175 = arith.addi %174, %c1_i32_109 : i32
      %176 = arith.index_cast %175 : i32 to index
      %177 = memref.load %arg4[%176] : memref<288xf32, #tpu.memory_space<smem>>
      %c1_110 = arith.constant 1 : index
      %c0_111 = arith.constant 0 : index
      %c1_112 = arith.constant 1 : index
      %178 = vector.load %arg11[%c1_110, %c0_111, %c1_112] : memref<4x74x104xf32, #tpu.memory_space<vmem>>, vector<1x72x102xf32>
      %179 = vector.shape_cast %178 : vector<1x72x102xf32> to vector<72x102xf32>
      %180 = vector.broadcast %177 : f32 to vector<72x102xf32>
      %181 = arith.mulf %180, %179 : vector<72x102xf32>
      %182 = arith.addf %169, %181 : vector<72x102xf32>
      %c4_i32_113 = arith.constant 4 : i32
      %183 = arith.muli %36, %c4_i32_113 : i32
      %c1_i32_114 = arith.constant 1 : i32
      %184 = arith.addi %183, %c1_i32_114 : i32
      %c3_i32_115 = arith.constant 3 : i32
      %185 = arith.muli %184, %c3_i32_115 : i32
      %c0_i32_116 = arith.constant 0 : i32
      %186 = arith.addi %185, %c0_i32_116 : i32
      %c3_i32_117 = arith.constant 3 : i32
      %187 = arith.muli %186, %c3_i32_117 : i32
      %c2_i32_118 = arith.constant 2 : i32
      %188 = arith.addi %187, %c2_i32_118 : i32
      %189 = arith.index_cast %188 : i32 to index
      %190 = memref.load %arg4[%189] : memref<288xf32, #tpu.memory_space<smem>>
      %c1_119 = arith.constant 1 : index
      %c0_120 = arith.constant 0 : index
      %c2_121 = arith.constant 2 : index
      %191 = vector.load %arg11[%c1_119, %c0_120, %c2_121] : memref<4x74x104xf32, #tpu.memory_space<vmem>>, vector<1x72x102xf32>
      %192 = vector.shape_cast %191 : vector<1x72x102xf32> to vector<72x102xf32>
      %193 = vector.broadcast %190 : f32 to vector<72x102xf32>
      %194 = arith.mulf %193, %192 : vector<72x102xf32>
      %195 = arith.addf %182, %194 : vector<72x102xf32>
      %c4_i32_122 = arith.constant 4 : i32
      %196 = arith.muli %36, %c4_i32_122 : i32
      %c1_i32_123 = arith.constant 1 : i32
      %197 = arith.addi %196, %c1_i32_123 : i32
      %c3_i32_124 = arith.constant 3 : i32
      %198 = arith.muli %197, %c3_i32_124 : i32
      %c1_i32_125 = arith.constant 1 : i32
      %199 = arith.addi %198, %c1_i32_125 : i32
      %c3_i32_126 = arith.constant 3 : i32
      %200 = arith.muli %199, %c3_i32_126 : i32
      %c0_i32_127 = arith.constant 0 : i32
      %201 = arith.addi %200, %c0_i32_127 : i32
      %202 = arith.index_cast %201 : i32 to index
      %203 = memref.load %arg4[%202] : memref<288xf32, #tpu.memory_space<smem>>
      %c1_128 = arith.constant 1 : index
      %c1_129 = arith.constant 1 : index
      %c0_130 = arith.constant 0 : index
      %204 = vector.load %arg11[%c1_128, %c1_129, %c0_130] : memref<4x74x104xf32, #tpu.memory_space<vmem>>, vector<1x72x102xf32>
      %205 = vector.shape_cast %204 : vector<1x72x102xf32> to vector<72x102xf32>
      %206 = vector.broadcast %203 : f32 to vector<72x102xf32>
      %207 = arith.mulf %206, %205 : vector<72x102xf32>
      %208 = arith.addf %195, %207 : vector<72x102xf32>
      %c4_i32_131 = arith.constant 4 : i32
      %209 = arith.muli %36, %c4_i32_131 : i32
      %c1_i32_132 = arith.constant 1 : i32
      %210 = arith.addi %209, %c1_i32_132 : i32
      %c3_i32_133 = arith.constant 3 : i32
      %211 = arith.muli %210, %c3_i32_133 : i32
      %c1_i32_134 = arith.constant 1 : i32
      %212 = arith.addi %211, %c1_i32_134 : i32
      %c3_i32_135 = arith.constant 3 : i32
      %213 = arith.muli %212, %c3_i32_135 : i32
      %c1_i32_136 = arith.constant 1 : i32
      %214 = arith.addi %213, %c1_i32_136 : i32
      %215 = arith.index_cast %214 : i32 to index
      %216 = memref.load %arg4[%215] : memref<288xf32, #tpu.memory_space<smem>>
      %c1_137 = arith.constant 1 : index
      %c1_138 = arith.constant 1 : index
      %c1_139 = arith.constant 1 : index
      %217 = vector.load %arg11[%c1_137, %c1_138, %c1_139] : memref<4x74x104xf32, #tpu.memory_space<vmem>>, vector<1x72x102xf32>
      %218 = vector.shape_cast %217 : vector<1x72x102xf32> to vector<72x102xf32>
      %219 = vector.broadcast %216 : f32 to vector<72x102xf32>
      %220 = arith.mulf %219, %218 : vector<72x102xf32>
      %221 = arith.addf %208, %220 : vector<72x102xf32>
      %c4_i32_140 = arith.constant 4 : i32
      %222 = arith.muli %36, %c4_i32_140 : i32
      %c1_i32_141 = arith.constant 1 : i32
      %223 = arith.addi %222, %c1_i32_141 : i32
      %c3_i32_142 = arith.constant 3 : i32
      %224 = arith.muli %223, %c3_i32_142 : i32
      %c1_i32_143 = arith.constant 1 : i32
      %225 = arith.addi %224, %c1_i32_143 : i32
      %c3_i32_144 = arith.constant 3 : i32
      %226 = arith.muli %225, %c3_i32_144 : i32
      %c2_i32_145 = arith.constant 2 : i32
      %227 = arith.addi %226, %c2_i32_145 : i32
      %228 = arith.index_cast %227 : i32 to index
      %229 = memref.load %arg4[%228] : memref<288xf32, #tpu.memory_space<smem>>
      %c1_146 = arith.constant 1 : index
      %c1_147 = arith.constant 1 : index
      %c2_148 = arith.constant 2 : index
      %230 = vector.load %arg11[%c1_146, %c1_147, %c2_148] : memref<4x74x104xf32, #tpu.memory_space<vmem>>, vector<1x72x102xf32>
      %231 = vector.shape_cast %230 : vector<1x72x102xf32> to vector<72x102xf32>
      %232 = vector.broadcast %229 : f32 to vector<72x102xf32>
      %233 = arith.mulf %232, %231 : vector<72x102xf32>
      %234 = arith.addf %221, %233 : vector<72x102xf32>
      %c4_i32_149 = arith.constant 4 : i32
      %235 = arith.muli %36, %c4_i32_149 : i32
      %c1_i32_150 = arith.constant 1 : i32
      %236 = arith.addi %235, %c1_i32_150 : i32
      %c3_i32_151 = arith.constant 3 : i32
      %237 = arith.muli %236, %c3_i32_151 : i32
      %c2_i32_152 = arith.constant 2 : i32
      %238 = arith.addi %237, %c2_i32_152 : i32
      %c3_i32_153 = arith.constant 3 : i32
      %239 = arith.muli %238, %c3_i32_153 : i32
      %c0_i32_154 = arith.constant 0 : i32
      %240 = arith.addi %239, %c0_i32_154 : i32
      %241 = arith.index_cast %240 : i32 to index
      %242 = memref.load %arg4[%241] : memref<288xf32, #tpu.memory_space<smem>>
      %c1_155 = arith.constant 1 : index
      %c2_156 = arith.constant 2 : index
      %c0_157 = arith.constant 0 : index
      %243 = vector.load %arg11[%c1_155, %c2_156, %c0_157] : memref<4x74x104xf32, #tpu.memory_space<vmem>>, vector<1x72x102xf32>
      %244 = vector.shape_cast %243 : vector<1x72x102xf32> to vector<72x102xf32>
      %245 = vector.broadcast %242 : f32 to vector<72x102xf32>
      %246 = arith.mulf %245, %244 : vector<72x102xf32>
      %247 = arith.addf %234, %246 : vector<72x102xf32>
      %c4_i32_158 = arith.constant 4 : i32
      %248 = arith.muli %36, %c4_i32_158 : i32
      %c1_i32_159 = arith.constant 1 : i32
      %249 = arith.addi %248, %c1_i32_159 : i32
      %c3_i32_160 = arith.constant 3 : i32
      %250 = arith.muli %249, %c3_i32_160 : i32
      %c2_i32_161 = arith.constant 2 : i32
      %251 = arith.addi %250, %c2_i32_161 : i32
      %c3_i32_162 = arith.constant 3 : i32
      %252 = arith.muli %251, %c3_i32_162 : i32
      %c1_i32_163 = arith.constant 1 : i32
      %253 = arith.addi %252, %c1_i32_163 : i32
      %254 = arith.index_cast %253 : i32 to index
      %255 = memref.load %arg4[%254] : memref<288xf32, #tpu.memory_space<smem>>
      %c1_164 = arith.constant 1 : index
      %c2_165 = arith.constant 2 : index
      %c1_166 = arith.constant 1 : index
      %256 = vector.load %arg11[%c1_164, %c2_165, %c1_166] : memref<4x74x104xf32, #tpu.memory_space<vmem>>, vector<1x72x102xf32>
      %257 = vector.shape_cast %256 : vector<1x72x102xf32> to vector<72x102xf32>
      %258 = vector.broadcast %255 : f32 to vector<72x102xf32>
      %259 = arith.mulf %258, %257 : vector<72x102xf32>
      %260 = arith.addf %247, %259 : vector<72x102xf32>
      %c4_i32_167 = arith.constant 4 : i32
      %261 = arith.muli %36, %c4_i32_167 : i32
      %c1_i32_168 = arith.constant 1 : i32
      %262 = arith.addi %261, %c1_i32_168 : i32
      %c3_i32_169 = arith.constant 3 : i32
      %263 = arith.muli %262, %c3_i32_169 : i32
      %c2_i32_170 = arith.constant 2 : i32
      %264 = arith.addi %263, %c2_i32_170 : i32
      %c3_i32_171 = arith.constant 3 : i32
      %265 = arith.muli %264, %c3_i32_171 : i32
      %c2_i32_172 = arith.constant 2 : i32
      %266 = arith.addi %265, %c2_i32_172 : i32
      %267 = arith.index_cast %266 : i32 to index
      %268 = memref.load %arg4[%267] : memref<288xf32, #tpu.memory_space<smem>>
      %c1_173 = arith.constant 1 : index
      %c2_174 = arith.constant 2 : index
      %c2_175 = arith.constant 2 : index
      %269 = vector.load %arg11[%c1_173, %c2_174, %c2_175] : memref<4x74x104xf32, #tpu.memory_space<vmem>>, vector<1x72x102xf32>
      %270 = vector.shape_cast %269 : vector<1x72x102xf32> to vector<72x102xf32>
      %271 = vector.broadcast %268 : f32 to vector<72x102xf32>
      %272 = arith.mulf %271, %270 : vector<72x102xf32>
      %273 = arith.addf %260, %272 : vector<72x102xf32>
      %c4_i32_176 = arith.constant 4 : i32
      %274 = arith.muli %36, %c4_i32_176 : i32
      %c2_i32_177 = arith.constant 2 : i32
      %275 = arith.addi %274, %c2_i32_177 : i32
      %c3_i32_178 = arith.constant 3 : i32
      %276 = arith.muli %275, %c3_i32_178 : i32
      %c0_i32_179 = arith.constant 0 : i32
      %277 = arith.addi %276, %c0_i32_179 : i32
      %c3_i32_180 = arith.constant 3 : i32
      %278 = arith.muli %277, %c3_i32_180 : i32
      %c0_i32_181 = arith.constant 0 : i32
      %279 = arith.addi %278, %c0_i32_181 : i32
      %280 = arith.index_cast %279 : i32 to index
      %281 = memref.load %arg4[%280] : memref<288xf32, #tpu.memory_space<smem>>
      %c2_182 = arith.constant 2 : index
      %c0_183 = arith.constant 0 : index
      %c0_184 = arith.constant 0 : index
      %282 = vector.load %arg11[%c2_182, %c0_183, %c0_184] : memref<4x74x104xf32, #tpu.memory_space<vmem>>, vector<1x72x102xf32>
      %283 = vector.shape_cast %282 : vector<1x72x102xf32> to vector<72x102xf32>
      %284 = vector.broadcast %281 : f32 to vector<72x102xf32>
      %285 = arith.mulf %284, %283 : vector<72x102xf32>
      %286 = arith.addf %273, %285 : vector<72x102xf32>
      %c4_i32_185 = arith.constant 4 : i32
      %287 = arith.muli %36, %c4_i32_185 : i32
      %c2_i32_186 = arith.constant 2 : i32
      %288 = arith.addi %287, %c2_i32_186 : i32
      %c3_i32_187 = arith.constant 3 : i32
      %289 = arith.muli %288, %c3_i32_187 : i32
      %c0_i32_188 = arith.constant 0 : i32
      %290 = arith.addi %289, %c0_i32_188 : i32
      %c3_i32_189 = arith.constant 3 : i32
      %291 = arith.muli %290, %c3_i32_189 : i32
      %c1_i32_190 = arith.constant 1 : i32
      %292 = arith.addi %291, %c1_i32_190 : i32
      %293 = arith.index_cast %292 : i32 to index
      %294 = memref.load %arg4[%293] : memref<288xf32, #tpu.memory_space<smem>>
      %c2_191 = arith.constant 2 : index
      %c0_192 = arith.constant 0 : index
      %c1_193 = arith.constant 1 : index
      %295 = vector.load %arg11[%c2_191, %c0_192, %c1_193] : memref<4x74x104xf32, #tpu.memory_space<vmem>>, vector<1x72x102xf32>
      %296 = vector.shape_cast %295 : vector<1x72x102xf32> to vector<72x102xf32>
      %297 = vector.broadcast %294 : f32 to vector<72x102xf32>
      %298 = arith.mulf %297, %296 : vector<72x102xf32>
      %299 = arith.addf %286, %298 : vector<72x102xf32>
      %c4_i32_194 = arith.constant 4 : i32
      %300 = arith.muli %36, %c4_i32_194 : i32
      %c2_i32_195 = arith.constant 2 : i32
      %301 = arith.addi %300, %c2_i32_195 : i32
      %c3_i32_196 = arith.constant 3 : i32
      %302 = arith.muli %301, %c3_i32_196 : i32
      %c0_i32_197 = arith.constant 0 : i32
      %303 = arith.addi %302, %c0_i32_197 : i32
      %c3_i32_198 = arith.constant 3 : i32
      %304 = arith.muli %303, %c3_i32_198 : i32
      %c2_i32_199 = arith.constant 2 : i32
      %305 = arith.addi %304, %c2_i32_199 : i32
      %306 = arith.index_cast %305 : i32 to index
      %307 = memref.load %arg4[%306] : memref<288xf32, #tpu.memory_space<smem>>
      %c2_200 = arith.constant 2 : index
      %c0_201 = arith.constant 0 : index
      %c2_202 = arith.constant 2 : index
      %308 = vector.load %arg11[%c2_200, %c0_201, %c2_202] : memref<4x74x104xf32, #tpu.memory_space<vmem>>, vector<1x72x102xf32>
      %309 = vector.shape_cast %308 : vector<1x72x102xf32> to vector<72x102xf32>
      %310 = vector.broadcast %307 : f32 to vector<72x102xf32>
      %311 = arith.mulf %310, %309 : vector<72x102xf32>
      %312 = arith.addf %299, %311 : vector<72x102xf32>
      %c4_i32_203 = arith.constant 4 : i32
      %313 = arith.muli %36, %c4_i32_203 : i32
      %c2_i32_204 = arith.constant 2 : i32
      %314 = arith.addi %313, %c2_i32_204 : i32
      %c3_i32_205 = arith.constant 3 : i32
      %315 = arith.muli %314, %c3_i32_205 : i32
      %c1_i32_206 = arith.constant 1 : i32
      %316 = arith.addi %315, %c1_i32_206 : i32
      %c3_i32_207 = arith.constant 3 : i32
      %317 = arith.muli %316, %c3_i32_207 : i32
      %c0_i32_208 = arith.constant 0 : i32
      %318 = arith.addi %317, %c0_i32_208 : i32
      %319 = arith.index_cast %318 : i32 to index
      %320 = memref.load %arg4[%319] : memref<288xf32, #tpu.memory_space<smem>>
      %c2_209 = arith.constant 2 : index
      %c1_210 = arith.constant 1 : index
      %c0_211 = arith.constant 0 : index
      %321 = vector.load %arg11[%c2_209, %c1_210, %c0_211] : memref<4x74x104xf32, #tpu.memory_space<vmem>>, vector<1x72x102xf32>
      %322 = vector.shape_cast %321 : vector<1x72x102xf32> to vector<72x102xf32>
      %323 = vector.broadcast %320 : f32 to vector<72x102xf32>
      %324 = arith.mulf %323, %322 : vector<72x102xf32>
      %325 = arith.addf %312, %324 : vector<72x102xf32>
      %c4_i32_212 = arith.constant 4 : i32
      %326 = arith.muli %36, %c4_i32_212 : i32
      %c2_i32_213 = arith.constant 2 : i32
      %327 = arith.addi %326, %c2_i32_213 : i32
      %c3_i32_214 = arith.constant 3 : i32
      %328 = arith.muli %327, %c3_i32_214 : i32
      %c1_i32_215 = arith.constant 1 : i32
      %329 = arith.addi %328, %c1_i32_215 : i32
      %c3_i32_216 = arith.constant 3 : i32
      %330 = arith.muli %329, %c3_i32_216 : i32
      %c1_i32_217 = arith.constant 1 : i32
      %331 = arith.addi %330, %c1_i32_217 : i32
      %332 = arith.index_cast %331 : i32 to index
      %333 = memref.load %arg4[%332] : memref<288xf32, #tpu.memory_space<smem>>
      %c2_218 = arith.constant 2 : index
      %c1_219 = arith.constant 1 : index
      %c1_220 = arith.constant 1 : index
      %334 = vector.load %arg11[%c2_218, %c1_219, %c1_220] : memref<4x74x104xf32, #tpu.memory_space<vmem>>, vector<1x72x102xf32>
      %335 = vector.shape_cast %334 : vector<1x72x102xf32> to vector<72x102xf32>
      %336 = vector.broadcast %333 : f32 to vector<72x102xf32>
      %337 = arith.mulf %336, %335 : vector<72x102xf32>
      %338 = arith.addf %325, %337 : vector<72x102xf32>
      %c4_i32_221 = arith.constant 4 : i32
      %339 = arith.muli %36, %c4_i32_221 : i32
      %c2_i32_222 = arith.constant 2 : i32
      %340 = arith.addi %339, %c2_i32_222 : i32
      %c3_i32_223 = arith.constant 3 : i32
      %341 = arith.muli %340, %c3_i32_223 : i32
      %c1_i32_224 = arith.constant 1 : i32
      %342 = arith.addi %341, %c1_i32_224 : i32
      %c3_i32_225 = arith.constant 3 : i32
      %343 = arith.muli %342, %c3_i32_225 : i32
      %c2_i32_226 = arith.constant 2 : i32
      %344 = arith.addi %343, %c2_i32_226 : i32
      %345 = arith.index_cast %344 : i32 to index
      %346 = memref.load %arg4[%345] : memref<288xf32, #tpu.memory_space<smem>>
      %c2_227 = arith.constant 2 : index
      %c1_228 = arith.constant 1 : index
      %c2_229 = arith.constant 2 : index
      %347 = vector.load %arg11[%c2_227, %c1_228, %c2_229] : memref<4x74x104xf32, #tpu.memory_space<vmem>>, vector<1x72x102xf32>
      %348 = vector.shape_cast %347 : vector<1x72x102xf32> to vector<72x102xf32>
      %349 = vector.broadcast %346 : f32 to vector<72x102xf32>
      %350 = arith.mulf %349, %348 : vector<72x102xf32>
      %351 = arith.addf %338, %350 : vector<72x102xf32>
      %c4_i32_230 = arith.constant 4 : i32
      %352 = arith.muli %36, %c4_i32_230 : i32
      %c2_i32_231 = arith.constant 2 : i32
      %353 = arith.addi %352, %c2_i32_231 : i32
      %c3_i32_232 = arith.constant 3 : i32
      %354 = arith.muli %353, %c3_i32_232 : i32
      %c2_i32_233 = arith.constant 2 : i32
      %355 = arith.addi %354, %c2_i32_233 : i32
      %c3_i32_234 = arith.constant 3 : i32
      %356 = arith.muli %355, %c3_i32_234 : i32
      %c0_i32_235 = arith.constant 0 : i32
      %357 = arith.addi %356, %c0_i32_235 : i32
      %358 = arith.index_cast %357 : i32 to index
      %359 = memref.load %arg4[%358] : memref<288xf32, #tpu.memory_space<smem>>
      %c2_236 = arith.constant 2 : index
      %c2_237 = arith.constant 2 : index
      %c0_238 = arith.constant 0 : index
      %360 = vector.load %arg11[%c2_236, %c2_237, %c0_238] : memref<4x74x104xf32, #tpu.memory_space<vmem>>, vector<1x72x102xf32>
      %361 = vector.shape_cast %360 : vector<1x72x102xf32> to vector<72x102xf32>
      %362 = vector.broadcast %359 : f32 to vector<72x102xf32>
      %363 = arith.mulf %362, %361 : vector<72x102xf32>
      %364 = arith.addf %351, %363 : vector<72x102xf32>
      %c4_i32_239 = arith.constant 4 : i32
      %365 = arith.muli %36, %c4_i32_239 : i32
      %c2_i32_240 = arith.constant 2 : i32
      %366 = arith.addi %365, %c2_i32_240 : i32
      %c3_i32_241 = arith.constant 3 : i32
      %367 = arith.muli %366, %c3_i32_241 : i32
      %c2_i32_242 = arith.constant 2 : i32
      %368 = arith.addi %367, %c2_i32_242 : i32
      %c3_i32_243 = arith.constant 3 : i32
      %369 = arith.muli %368, %c3_i32_243 : i32
      %c1_i32_244 = arith.constant 1 : i32
      %370 = arith.addi %369, %c1_i32_244 : i32
      %371 = arith.index_cast %370 : i32 to index
      %372 = memref.load %arg4[%371] : memref<288xf32, #tpu.memory_space<smem>>
      %c2_245 = arith.constant 2 : index
      %c2_246 = arith.constant 2 : index
      %c1_247 = arith.constant 1 : index
      %373 = vector.load %arg11[%c2_245, %c2_246, %c1_247] : memref<4x74x104xf32, #tpu.memory_space<vmem>>, vector<1x72x102xf32>
      %374 = vector.shape_cast %373 : vector<1x72x102xf32> to vector<72x102xf32>
      %375 = vector.broadcast %372 : f32 to vector<72x102xf32>
      %376 = arith.mulf %375, %374 : vector<72x102xf32>
      %377 = arith.addf %364, %376 : vector<72x102xf32>
      %c4_i32_248 = arith.constant 4 : i32
      %378 = arith.muli %36, %c4_i32_248 : i32
      %c2_i32_249 = arith.constant 2 : i32
      %379 = arith.addi %378, %c2_i32_249 : i32
      %c3_i32_250 = arith.constant 3 : i32
      %380 = arith.muli %379, %c3_i32_250 : i32
      %c2_i32_251 = arith.constant 2 : i32
      %381 = arith.addi %380, %c2_i32_251 : i32
      %c3_i32_252 = arith.constant 3 : i32
      %382 = arith.muli %381, %c3_i32_252 : i32
      %c2_i32_253 = arith.constant 2 : i32
      %383 = arith.addi %382, %c2_i32_253 : i32
      %384 = arith.index_cast %383 : i32 to index
      %385 = memref.load %arg4[%384] : memref<288xf32, #tpu.memory_space<smem>>
      %c2_254 = arith.constant 2 : index
      %c2_255 = arith.constant 2 : index
      %c2_256 = arith.constant 2 : index
      %386 = vector.load %arg11[%c2_254, %c2_255, %c2_256] : memref<4x74x104xf32, #tpu.memory_space<vmem>>, vector<1x72x102xf32>
      %387 = vector.shape_cast %386 : vector<1x72x102xf32> to vector<72x102xf32>
      %388 = vector.broadcast %385 : f32 to vector<72x102xf32>
      %389 = arith.mulf %388, %387 : vector<72x102xf32>
      %390 = arith.addf %377, %389 : vector<72x102xf32>
      %c4_i32_257 = arith.constant 4 : i32
      %391 = arith.muli %36, %c4_i32_257 : i32
      %c3_i32_258 = arith.constant 3 : i32
      %392 = arith.addi %391, %c3_i32_258 : i32
      %c3_i32_259 = arith.constant 3 : i32
      %393 = arith.muli %392, %c3_i32_259 : i32
      %c0_i32_260 = arith.constant 0 : i32
      %394 = arith.addi %393, %c0_i32_260 : i32
      %c3_i32_261 = arith.constant 3 : i32
      %395 = arith.muli %394, %c3_i32_261 : i32
      %c0_i32_262 = arith.constant 0 : i32
      %396 = arith.addi %395, %c0_i32_262 : i32
      %397 = arith.index_cast %396 : i32 to index
      %398 = memref.load %arg4[%397] : memref<288xf32, #tpu.memory_space<smem>>
      %c3 = arith.constant 3 : index
      %c0_263 = arith.constant 0 : index
      %c0_264 = arith.constant 0 : index
      %399 = vector.load %arg11[%c3, %c0_263, %c0_264] : memref<4x74x104xf32, #tpu.memory_space<vmem>>, vector<1x72x102xf32>
      %400 = vector.shape_cast %399 : vector<1x72x102xf32> to vector<72x102xf32>
      %401 = vector.broadcast %398 : f32 to vector<72x102xf32>
      %402 = arith.mulf %401, %400 : vector<72x102xf32>
      %403 = arith.addf %390, %402 : vector<72x102xf32>
      %c4_i32_265 = arith.constant 4 : i32
      %404 = arith.muli %36, %c4_i32_265 : i32
      %c3_i32_266 = arith.constant 3 : i32
      %405 = arith.addi %404, %c3_i32_266 : i32
      %c3_i32_267 = arith.constant 3 : i32
      %406 = arith.muli %405, %c3_i32_267 : i32
      %c0_i32_268 = arith.constant 0 : i32
      %407 = arith.addi %406, %c0_i32_268 : i32
      %c3_i32_269 = arith.constant 3 : i32
      %408 = arith.muli %407, %c3_i32_269 : i32
      %c1_i32_270 = arith.constant 1 : i32
      %409 = arith.addi %408, %c1_i32_270 : i32
      %410 = arith.index_cast %409 : i32 to index
      %411 = memref.load %arg4[%410] : memref<288xf32, #tpu.memory_space<smem>>
      %c3_271 = arith.constant 3 : index
      %c0_272 = arith.constant 0 : index
      %c1_273 = arith.constant 1 : index
      %412 = vector.load %arg11[%c3_271, %c0_272, %c1_273] : memref<4x74x104xf32, #tpu.memory_space<vmem>>, vector<1x72x102xf32>
      %413 = vector.shape_cast %412 : vector<1x72x102xf32> to vector<72x102xf32>
      %414 = vector.broadcast %411 : f32 to vector<72x102xf32>
      %415 = arith.mulf %414, %413 : vector<72x102xf32>
      %416 = arith.addf %403, %415 : vector<72x102xf32>
      %c4_i32_274 = arith.constant 4 : i32
      %417 = arith.muli %36, %c4_i32_274 : i32
      %c3_i32_275 = arith.constant 3 : i32
      %418 = arith.addi %417, %c3_i32_275 : i32
      %c3_i32_276 = arith.constant 3 : i32
      %419 = arith.muli %418, %c3_i32_276 : i32
      %c0_i32_277 = arith.constant 0 : i32
      %420 = arith.addi %419, %c0_i32_277 : i32
      %c3_i32_278 = arith.constant 3 : i32
      %421 = arith.muli %420, %c3_i32_278 : i32
      %c2_i32_279 = arith.constant 2 : i32
      %422 = arith.addi %421, %c2_i32_279 : i32
      %423 = arith.index_cast %422 : i32 to index
      %424 = memref.load %arg4[%423] : memref<288xf32, #tpu.memory_space<smem>>
      %c3_280 = arith.constant 3 : index
      %c0_281 = arith.constant 0 : index
      %c2_282 = arith.constant 2 : index
      %425 = vector.load %arg11[%c3_280, %c0_281, %c2_282] : memref<4x74x104xf32, #tpu.memory_space<vmem>>, vector<1x72x102xf32>
      %426 = vector.shape_cast %425 : vector<1x72x102xf32> to vector<72x102xf32>
      %427 = vector.broadcast %424 : f32 to vector<72x102xf32>
      %428 = arith.mulf %427, %426 : vector<72x102xf32>
      %429 = arith.addf %416, %428 : vector<72x102xf32>
      %c4_i32_283 = arith.constant 4 : i32
      %430 = arith.muli %36, %c4_i32_283 : i32
      %c3_i32_284 = arith.constant 3 : i32
      %431 = arith.addi %430, %c3_i32_284 : i32
      %c3_i32_285 = arith.constant 3 : i32
      %432 = arith.muli %431, %c3_i32_285 : i32
      %c1_i32_286 = arith.constant 1 : i32
      %433 = arith.addi %432, %c1_i32_286 : i32
      %c3_i32_287 = arith.constant 3 : i32
      %434 = arith.muli %433, %c3_i32_287 : i32
      %c0_i32_288 = arith.constant 0 : i32
      %435 = arith.addi %434, %c0_i32_288 : i32
      %436 = arith.index_cast %435 : i32 to index
      %437 = memref.load %arg4[%436] : memref<288xf32, #tpu.memory_space<smem>>
      %c3_289 = arith.constant 3 : index
      %c1_290 = arith.constant 1 : index
      %c0_291 = arith.constant 0 : index
      %438 = vector.load %arg11[%c3_289, %c1_290, %c0_291] : memref<4x74x104xf32, #tpu.memory_space<vmem>>, vector<1x72x102xf32>
      %439 = vector.shape_cast %438 : vector<1x72x102xf32> to vector<72x102xf32>
      %440 = vector.broadcast %437 : f32 to vector<72x102xf32>
      %441 = arith.mulf %440, %439 : vector<72x102xf32>
      %442 = arith.addf %429, %441 : vector<72x102xf32>
      %c4_i32_292 = arith.constant 4 : i32
      %443 = arith.muli %36, %c4_i32_292 : i32
      %c3_i32_293 = arith.constant 3 : i32
      %444 = arith.addi %443, %c3_i32_293 : i32
      %c3_i32_294 = arith.constant 3 : i32
      %445 = arith.muli %444, %c3_i32_294 : i32
      %c1_i32_295 = arith.constant 1 : i32
      %446 = arith.addi %445, %c1_i32_295 : i32
      %c3_i32_296 = arith.constant 3 : i32
      %447 = arith.muli %446, %c3_i32_296 : i32
      %c1_i32_297 = arith.constant 1 : i32
      %448 = arith.addi %447, %c1_i32_297 : i32
      %449 = arith.index_cast %448 : i32 to index
      %450 = memref.load %arg4[%449] : memref<288xf32, #tpu.memory_space<smem>>
      %c3_298 = arith.constant 3 : index
      %c1_299 = arith.constant 1 : index
      %c1_300 = arith.constant 1 : index
      %451 = vector.load %arg11[%c3_298, %c1_299, %c1_300] : memref<4x74x104xf32, #tpu.memory_space<vmem>>, vector<1x72x102xf32>
      %452 = vector.shape_cast %451 : vector<1x72x102xf32> to vector<72x102xf32>
      %453 = vector.broadcast %450 : f32 to vector<72x102xf32>
      %454 = arith.mulf %453, %452 : vector<72x102xf32>
      %455 = arith.addf %442, %454 : vector<72x102xf32>
      %c4_i32_301 = arith.constant 4 : i32
      %456 = arith.muli %36, %c4_i32_301 : i32
      %c3_i32_302 = arith.constant 3 : i32
      %457 = arith.addi %456, %c3_i32_302 : i32
      %c3_i32_303 = arith.constant 3 : i32
      %458 = arith.muli %457, %c3_i32_303 : i32
      %c1_i32_304 = arith.constant 1 : i32
      %459 = arith.addi %458, %c1_i32_304 : i32
      %c3_i32_305 = arith.constant 3 : i32
      %460 = arith.muli %459, %c3_i32_305 : i32
      %c2_i32_306 = arith.constant 2 : i32
      %461 = arith.addi %460, %c2_i32_306 : i32
      %462 = arith.index_cast %461 : i32 to index
      %463 = memref.load %arg4[%462] : memref<288xf32, #tpu.memory_space<smem>>
      %c3_307 = arith.constant 3 : index
      %c1_308 = arith.constant 1 : index
      %c2_309 = arith.constant 2 : index
      %464 = vector.load %arg11[%c3_307, %c1_308, %c2_309] : memref<4x74x104xf32, #tpu.memory_space<vmem>>, vector<1x72x102xf32>
      %465 = vector.shape_cast %464 : vector<1x72x102xf32> to vector<72x102xf32>
      %466 = vector.broadcast %463 : f32 to vector<72x102xf32>
      %467 = arith.mulf %466, %465 : vector<72x102xf32>
      %468 = arith.addf %455, %467 : vector<72x102xf32>
      %c4_i32_310 = arith.constant 4 : i32
      %469 = arith.muli %36, %c4_i32_310 : i32
      %c3_i32_311 = arith.constant 3 : i32
      %470 = arith.addi %469, %c3_i32_311 : i32
      %c3_i32_312 = arith.constant 3 : i32
      %471 = arith.muli %470, %c3_i32_312 : i32
      %c2_i32_313 = arith.constant 2 : i32
      %472 = arith.addi %471, %c2_i32_313 : i32
      %c3_i32_314 = arith.constant 3 : i32
      %473 = arith.muli %472, %c3_i32_314 : i32
      %c0_i32_315 = arith.constant 0 : i32
      %474 = arith.addi %473, %c0_i32_315 : i32
      %475 = arith.index_cast %474 : i32 to index
      %476 = memref.load %arg4[%475] : memref<288xf32, #tpu.memory_space<smem>>
      %c3_316 = arith.constant 3 : index
      %c2_317 = arith.constant 2 : index
      %c0_318 = arith.constant 0 : index
      %477 = vector.load %arg11[%c3_316, %c2_317, %c0_318] : memref<4x74x104xf32, #tpu.memory_space<vmem>>, vector<1x72x102xf32>
      %478 = vector.shape_cast %477 : vector<1x72x102xf32> to vector<72x102xf32>
      %479 = vector.broadcast %476 : f32 to vector<72x102xf32>
      %480 = arith.mulf %479, %478 : vector<72x102xf32>
      %481 = arith.addf %468, %480 : vector<72x102xf32>
      %c4_i32_319 = arith.constant 4 : i32
      %482 = arith.muli %36, %c4_i32_319 : i32
      %c3_i32_320 = arith.constant 3 : i32
      %483 = arith.addi %482, %c3_i32_320 : i32
      %c3_i32_321 = arith.constant 3 : i32
      %484 = arith.muli %483, %c3_i32_321 : i32
      %c2_i32_322 = arith.constant 2 : i32
      %485 = arith.addi %484, %c2_i32_322 : i32
      %c3_i32_323 = arith.constant 3 : i32
      %486 = arith.muli %485, %c3_i32_323 : i32
      %c1_i32_324 = arith.constant 1 : i32
      %487 = arith.addi %486, %c1_i32_324 : i32
      %488 = arith.index_cast %487 : i32 to index
      %489 = memref.load %arg4[%488] : memref<288xf32, #tpu.memory_space<smem>>
      %c3_325 = arith.constant 3 : index
      %c2_326 = arith.constant 2 : index
      %c1_327 = arith.constant 1 : index
      %490 = vector.load %arg11[%c3_325, %c2_326, %c1_327] : memref<4x74x104xf32, #tpu.memory_space<vmem>>, vector<1x72x102xf32>
      %491 = vector.shape_cast %490 : vector<1x72x102xf32> to vector<72x102xf32>
      %492 = vector.broadcast %489 : f32 to vector<72x102xf32>
      %493 = arith.mulf %492, %491 : vector<72x102xf32>
      %494 = arith.addf %481, %493 : vector<72x102xf32>
      %c4_i32_328 = arith.constant 4 : i32
      %495 = arith.muli %36, %c4_i32_328 : i32
      %c3_i32_329 = arith.constant 3 : i32
      %496 = arith.addi %495, %c3_i32_329 : i32
      %c3_i32_330 = arith.constant 3 : i32
      %497 = arith.muli %496, %c3_i32_330 : i32
      %c2_i32_331 = arith.constant 2 : i32
      %498 = arith.addi %497, %c2_i32_331 : i32
      %c3_i32_332 = arith.constant 3 : i32
      %499 = arith.muli %498, %c3_i32_332 : i32
      %c2_i32_333 = arith.constant 2 : i32
      %500 = arith.addi %499, %c2_i32_333 : i32
      %501 = arith.index_cast %500 : i32 to index
      %502 = memref.load %arg4[%501] : memref<288xf32, #tpu.memory_space<smem>>
      %c3_334 = arith.constant 3 : index
      %c2_335 = arith.constant 2 : index
      %c2_336 = arith.constant 2 : index
      %503 = vector.load %arg11[%c3_334, %c2_335, %c2_336] : memref<4x74x104xf32, #tpu.memory_space<vmem>>, vector<1x72x102xf32>
      %504 = vector.shape_cast %503 : vector<1x72x102xf32> to vector<72x102xf32>
      %505 = vector.broadcast %502 : f32 to vector<72x102xf32>
      %506 = arith.mulf %505, %504 : vector<72x102xf32>
      %507 = arith.addf %494, %506 : vector<72x102xf32>
      %cst = arith.constant 0.000000e+00 : f32
      %508 = vector.broadcast %cst : f32 to vector<72x102xf32>
      %509 = arith.maximumf %507, %508 : vector<72x102xf32>
      %cst_337 = arith.constant 0.000000e+00 : f32
      %510 = vector.broadcast %cst_337 : f32 to vector<72x102xf32>
      %511 = arith.select %26, %509, %510 : vector<72x102xi1>, vector<72x102xf32>
      %512 = arith.index_cast %36 : i32 to index
      %c0_338 = arith.constant 0 : index
      %c0_339 = arith.constant 0 : index
      %513 = vector.load %arg12[%512, %c0_338, %c0_339] : memref<8x72x102xf32, #tpu.memory_space<vmem>>, vector<1x72x102xf32>
      %514 = vector.shape_cast %513 : vector<1x72x102xf32> to vector<72x102xf32>
      %515 = vector.shape_cast %511 : vector<72x102xf32> to vector<1x72x102xf32>
      tpu.vector_store %arg12[%512, %c0_338, %c0_339], %515 {strides = array<i32>} : memref<8x72x102xf32, #tpu.memory_space<vmem>>, vector<1x72x102xf32>,
    }
    %c8_i32_6 = arith.constant 8 : i32
    %28 = tpu.iota {dimensions = array<i32: 1>} : vector<1x10xi32>
    %c0 = arith.constant 0 : index
    %c0_7 = arith.constant 0 : index
    %29 = vector.load %arg9[%c0, %c0_7] : memref<1x10xf32, #tpu.memory_space<vmem>>, vector<1x10xf32>
    %c0_i32_8 = arith.constant 0 : i32
    %c4_i32_9 = arith.constant 4 : i32
    %30 = arith.addi %c0_i32_8, %c4_i32_9 : i32
    %c1_i32_10 = arith.constant 1 : i32
    %31 = scf.for %arg13 = %c0_i32_8 to %30 step %c1_i32_10 iter_args(%arg14 = %29) -> (vector<1x10xf32>)  : i32 {
      %35 = arith.index_cast %arg13 : i32 to index
      %36 = memref.load %arg7[%35] : memref<4xf32, #tpu.memory_space<smem>>
      %37 = vector.broadcast %36 : f32 to vector<70x100xf32>
      %c8_i32_15 = arith.constant 8 : i32
      %38 = arith.muli %arg13, %c8_i32_15 : i32
      %c0_i32_16 = arith.constant 0 : i32
      %39 = arith.addi %38, %c0_i32_16 : i32
      %c3_i32 = arith.constant 3 : i32
      %40 = arith.muli %39, %c3_i32 : i32
      %c0_i32_17 = arith.constant 0 : i32
      %41 = arith.addi %40, %c0_i32_17 : i32
      %c3_i32_18 = arith.constant 3 : i32
      %42 = arith.muli %41, %c3_i32_18 : i32
      %c0_i32_19 = arith.constant 0 : i32
      %43 = arith.addi %42, %c0_i32_19 : i32
      %44 = arith.index_cast %43 : i32 to index
      %45 = memref.load %arg6[%44] : memref<288xf32, #tpu.memory_space<smem>>
      %c0_20 = arith.constant 0 : index
      %c0_21 = arith.constant 0 : index
      %c0_22 = arith.constant 0 : index
      %46 = vector.load %arg12[%c0_20, %c0_21, %c0_22] : memref<8x72x102xf32, #tpu.memory_space<vmem>>, vector<1x70x100xf32>
      %47 = vector.shape_cast %46 : vector<1x70x100xf32> to vector<70x100xf32>
      %48 = vector.broadcast %45 : f32 to vector<70x100xf32>
      %49 = arith.mulf %48, %47 : vector<70x100xf32>
      %50 = arith.addf %37, %49 : vector<70x100xf32>
      %c8_i32_23 = arith.constant 8 : i32
      %51 = arith.muli %arg13, %c8_i32_23 : i32
      %c0_i32_24 = arith.constant 0 : i32
      %52 = arith.addi %51, %c0_i32_24 : i32
      %c3_i32_25 = arith.constant 3 : i32
      %53 = arith.muli %52, %c3_i32_25 : i32
      %c0_i32_26 = arith.constant 0 : i32
      %54 = arith.addi %53, %c0_i32_26 : i32
      %c3_i32_27 = arith.constant 3 : i32
      %55 = arith.muli %54, %c3_i32_27 : i32
      %c1_i32_28 = arith.constant 1 : i32
      %56 = arith.addi %55, %c1_i32_28 : i32
      %57 = arith.index_cast %56 : i32 to index
      %58 = memref.load %arg6[%57] : memref<288xf32, #tpu.memory_space<smem>>
      %c0_29 = arith.constant 0 : index
      %c0_30 = arith.constant 0 : index
      %c1 = arith.constant 1 : index
      %59 = vector.load %arg12[%c0_29, %c0_30, %c1] : memref<8x72x102xf32, #tpu.memory_space<vmem>>, vector<1x70x100xf32>
      %60 = vector.shape_cast %59 : vector<1x70x100xf32> to vector<70x100xf32>
      %61 = vector.broadcast %58 : f32 to vector<70x100xf32>
      %62 = arith.mulf %61, %60 : vector<70x100xf32>
      %63 = arith.addf %50, %62 : vector<70x100xf32>
      %c8_i32_31 = arith.constant 8 : i32
      %64 = arith.muli %arg13, %c8_i32_31 : i32
      %c0_i32_32 = arith.constant 0 : i32
      %65 = arith.addi %64, %c0_i32_32 : i32
      %c3_i32_33 = arith.constant 3 : i32
      %66 = arith.muli %65, %c3_i32_33 : i32
      %c0_i32_34 = arith.constant 0 : i32
      %67 = arith.addi %66, %c0_i32_34 : i32
      %c3_i32_35 = arith.constant 3 : i32
      %68 = arith.muli %67, %c3_i32_35 : i32
      %c2_i32_36 = arith.constant 2 : i32
      %69 = arith.addi %68, %c2_i32_36 : i32
      %70 = arith.index_cast %69 : i32 to index
      %71 = memref.load %arg6[%70] : memref<288xf32, #tpu.memory_space<smem>>
      %c0_37 = arith.constant 0 : index
      %c0_38 = arith.constant 0 : index
      %c2 = arith.constant 2 : index
      %72 = vector.load %arg12[%c0_37, %c0_38, %c2] : memref<8x72x102xf32, #tpu.memory_space<vmem>>, vector<1x70x100xf32>
      %73 = vector.shape_cast %72 : vector<1x70x100xf32> to vector<70x100xf32>
      %74 = vector.broadcast %71 : f32 to vector<70x100xf32>
      %75 = arith.mulf %74, %73 : vector<70x100xf32>
      %76 = arith.addf %63, %75 : vector<70x100xf32>
      %c8_i32_39 = arith.constant 8 : i32
      %77 = arith.muli %arg13, %c8_i32_39 : i32
      %c0_i32_40 = arith.constant 0 : i32
      %78 = arith.addi %77, %c0_i32_40 : i32
      %c3_i32_41 = arith.constant 3 : i32
      %79 = arith.muli %78, %c3_i32_41 : i32
      %c1_i32_42 = arith.constant 1 : i32
      %80 = arith.addi %79, %c1_i32_42 : i32
      %c3_i32_43 = arith.constant 3 : i32
      %81 = arith.muli %80, %c3_i32_43 : i32
      %c0_i32_44 = arith.constant 0 : i32
      %82 = arith.addi %81, %c0_i32_44 : i32
      %83 = arith.index_cast %82 : i32 to index
      %84 = memref.load %arg6[%83] : memref<288xf32, #tpu.memory_space<smem>>
      %c0_45 = arith.constant 0 : index
      %c1_46 = arith.constant 1 : index
      %c0_47 = arith.constant 0 : index
      %85 = vector.load %arg12[%c0_45, %c1_46, %c0_47] : memref<8x72x102xf32, #tpu.memory_space<vmem>>, vector<1x70x100xf32>
      %86 = vector.shape_cast %85 : vector<1x70x100xf32> to vector<70x100xf32>
      %87 = vector.broadcast %84 : f32 to vector<70x100xf32>
      %88 = arith.mulf %87, %86 : vector<70x100xf32>
      %89 = arith.addf %76, %88 : vector<70x100xf32>
      %c8_i32_48 = arith.constant 8 : i32
      %90 = arith.muli %arg13, %c8_i32_48 : i32
      %c0_i32_49 = arith.constant 0 : i32
      %91 = arith.addi %90, %c0_i32_49 : i32
      %c3_i32_50 = arith.constant 3 : i32
      %92 = arith.muli %91, %c3_i32_50 : i32
      %c1_i32_51 = arith.constant 1 : i32
      %93 = arith.addi %92, %c1_i32_51 : i32
      %c3_i32_52 = arith.constant 3 : i32
      %94 = arith.muli %93, %c3_i32_52 : i32
      %c1_i32_53 = arith.constant 1 : i32
      %95 = arith.addi %94, %c1_i32_53 : i32
      %96 = arith.index_cast %95 : i32 to index
      %97 = memref.load %arg6[%96] : memref<288xf32, #tpu.memory_space<smem>>
      %c0_54 = arith.constant 0 : index
      %c1_55 = arith.constant 1 : index
      %c1_56 = arith.constant 1 : index
      %98 = vector.load %arg12[%c0_54, %c1_55, %c1_56] : memref<8x72x102xf32, #tpu.memory_space<vmem>>, vector<1x70x100xf32>
      %99 = vector.shape_cast %98 : vector<1x70x100xf32> to vector<70x100xf32>
      %100 = vector.broadcast %97 : f32 to vector<70x100xf32>
      %101 = arith.mulf %100, %99 : vector<70x100xf32>
      %102 = arith.addf %89, %101 : vector<70x100xf32>
      %c8_i32_57 = arith.constant 8 : i32
      %103 = arith.muli %arg13, %c8_i32_57 : i32
      %c0_i32_58 = arith.constant 0 : i32
      %104 = arith.addi %103, %c0_i32_58 : i32
      %c3_i32_59 = arith.constant 3 : i32
      %105 = arith.muli %104, %c3_i32_59 : i32
      %c1_i32_60 = arith.constant 1 : i32
      %106 = arith.addi %105, %c1_i32_60 : i32
      %c3_i32_61 = arith.constant 3 : i32
      %107 = arith.muli %106, %c3_i32_61 : i32
      %c2_i32_62 = arith.constant 2 : i32
      %108 = arith.addi %107, %c2_i32_62 : i32
      %109 = arith.index_cast %108 : i32 to index
      %110 = memref.load %arg6[%109] : memref<288xf32, #tpu.memory_space<smem>>
      %c0_63 = arith.constant 0 : index
      %c1_64 = arith.constant 1 : index
      %c2_65 = arith.constant 2 : index
      %111 = vector.load %arg12[%c0_63, %c1_64, %c2_65] : memref<8x72x102xf32, #tpu.memory_space<vmem>>, vector<1x70x100xf32>
      %112 = vector.shape_cast %111 : vector<1x70x100xf32> to vector<70x100xf32>
      %113 = vector.broadcast %110 : f32 to vector<70x100xf32>
      %114 = arith.mulf %113, %112 : vector<70x100xf32>
      %115 = arith.addf %102, %114 : vector<70x100xf32>
      %c8_i32_66 = arith.constant 8 : i32
      %116 = arith.muli %arg13, %c8_i32_66 : i32
      %c0_i32_67 = arith.constant 0 : i32
      %117 = arith.addi %116, %c0_i32_67 : i32
      %c3_i32_68 = arith.constant 3 : i32
      %118 = arith.muli %117, %c3_i32_68 : i32
      %c2_i32_69 = arith.constant 2 : i32
      %119 = arith.addi %118, %c2_i32_69 : i32
      %c3_i32_70 = arith.constant 3 : i32
      %120 = arith.muli %119, %c3_i32_70 : i32
      %c0_i32_71 = arith.constant 0 : i32
      %121 = arith.addi %120, %c0_i32_71 : i32
      %122 = arith.index_cast %121 : i32 to index
      %123 = memref.load %arg6[%122] : memref<288xf32, #tpu.memory_space<smem>>
      %c0_72 = arith.constant 0 : index
      %c2_73 = arith.constant 2 : index
      %c0_74 = arith.constant 0 : index
      %124 = vector.load %arg12[%c0_72, %c2_73, %c0_74] : memref<8x72x102xf32, #tpu.memory_space<vmem>>, vector<1x70x100xf32>
      %125 = vector.shape_cast %124 : vector<1x70x100xf32> to vector<70x100xf32>
      %126 = vector.broadcast %123 : f32 to vector<70x100xf32>
      %127 = arith.mulf %126, %125 : vector<70x100xf32>
      %128 = arith.addf %115, %127 : vector<70x100xf32>
      %c8_i32_75 = arith.constant 8 : i32
      %129 = arith.muli %arg13, %c8_i32_75 : i32
      %c0_i32_76 = arith.constant 0 : i32
      %130 = arith.addi %129, %c0_i32_76 : i32
      %c3_i32_77 = arith.constant 3 : i32
      %131 = arith.muli %130, %c3_i32_77 : i32
      %c2_i32_78 = arith.constant 2 : i32
      %132 = arith.addi %131, %c2_i32_78 : i32
      %c3_i32_79 = arith.constant 3 : i32
      %133 = arith.muli %132, %c3_i32_79 : i32
      %c1_i32_80 = arith.constant 1 : i32
      %134 = arith.addi %133, %c1_i32_80 : i32
      %135 = arith.index_cast %134 : i32 to index
      %136 = memref.load %arg6[%135] : memref<288xf32, #tpu.memory_space<smem>>
      %c0_81 = arith.constant 0 : index
      %c2_82 = arith.constant 2 : index
      %c1_83 = arith.constant 1 : index
      %137 = vector.load %arg12[%c0_81, %c2_82, %c1_83] : memref<8x72x102xf32, #tpu.memory_space<vmem>>, vector<1x70x100xf32>
      %138 = vector.shape_cast %137 : vector<1x70x100xf32> to vector<70x100xf32>
      %139 = vector.broadcast %136 : f32 to vector<70x100xf32>
      %140 = arith.mulf %139, %138 : vector<70x100xf32>
      %141 = arith.addf %128, %140 : vector<70x100xf32>
      %c8_i32_84 = arith.constant 8 : i32
      %142 = arith.muli %arg13, %c8_i32_84 : i32
      %c0_i32_85 = arith.constant 0 : i32
      %143 = arith.addi %142, %c0_i32_85 : i32
      %c3_i32_86 = arith.constant 3 : i32
      %144 = arith.muli %143, %c3_i32_86 : i32
      %c2_i32_87 = arith.constant 2 : i32
      %145 = arith.addi %144, %c2_i32_87 : i32
      %c3_i32_88 = arith.constant 3 : i32
      %146 = arith.muli %145, %c3_i32_88 : i32
      %c2_i32_89 = arith.constant 2 : i32
      %147 = arith.addi %146, %c2_i32_89 : i32
      %148 = arith.index_cast %147 : i32 to index
      %149 = memref.load %arg6[%148] : memref<288xf32, #tpu.memory_space<smem>>
      %c0_90 = arith.constant 0 : index
      %c2_91 = arith.constant 2 : index
      %c2_92 = arith.constant 2 : index
      %150 = vector.load %arg12[%c0_90, %c2_91, %c2_92] : memref<8x72x102xf32, #tpu.memory_space<vmem>>, vector<1x70x100xf32>
      %151 = vector.shape_cast %150 : vector<1x70x100xf32> to vector<70x100xf32>
      %152 = vector.broadcast %149 : f32 to vector<70x100xf32>
      %153 = arith.mulf %152, %151 : vector<70x100xf32>
      %154 = arith.addf %141, %153 : vector<70x100xf32>
      %c8_i32_93 = arith.constant 8 : i32
      %155 = arith.muli %arg13, %c8_i32_93 : i32
      %c1_i32_94 = arith.constant 1 : i32
      %156 = arith.addi %155, %c1_i32_94 : i32
      %c3_i32_95 = arith.constant 3 : i32
      %157 = arith.muli %156, %c3_i32_95 : i32
      %c0_i32_96 = arith.constant 0 : i32
      %158 = arith.addi %157, %c0_i32_96 : i32
      %c3_i32_97 = arith.constant 3 : i32
      %159 = arith.muli %158, %c3_i32_97 : i32
      %c0_i32_98 = arith.constant 0 : i32
      %160 = arith.addi %159, %c0_i32_98 : i32
      %161 = arith.index_cast %160 : i32 to index
      %162 = memref.load %arg6[%161] : memref<288xf32, #tpu.memory_space<smem>>
      %c1_99 = arith.constant 1 : index
      %c0_100 = arith.constant 0 : index
      %c0_101 = arith.constant 0 : index
      %163 = vector.load %arg12[%c1_99, %c0_100, %c0_101] : memref<8x72x102xf32, #tpu.memory_space<vmem>>, vector<1x70x100xf32>
      %164 = vector.shape_cast %163 : vector<1x70x100xf32> to vector<70x100xf32>
      %165 = vector.broadcast %162 : f32 to vector<70x100xf32>
      %166 = arith.mulf %165, %164 : vector<70x100xf32>
      %167 = arith.addf %154, %166 : vector<70x100xf32>
      %c8_i32_102 = arith.constant 8 : i32
      %168 = arith.muli %arg13, %c8_i32_102 : i32
      %c1_i32_103 = arith.constant 1 : i32
      %169 = arith.addi %168, %c1_i32_103 : i32
      %c3_i32_104 = arith.constant 3 : i32
      %170 = arith.muli %169, %c3_i32_104 : i32
      %c0_i32_105 = arith.constant 0 : i32
      %171 = arith.addi %170, %c0_i32_105 : i32
      %c3_i32_106 = arith.constant 3 : i32
      %172 = arith.muli %171, %c3_i32_106 : i32
      %c1_i32_107 = arith.constant 1 : i32
      %173 = arith.addi %172, %c1_i32_107 : i32
      %174 = arith.index_cast %173 : i32 to index
      %175 = memref.load %arg6[%174] : memref<288xf32, #tpu.memory_space<smem>>
      %c1_108 = arith.constant 1 : index
      %c0_109 = arith.constant 0 : index
      %c1_110 = arith.constant 1 : index
      %176 = vector.load %arg12[%c1_108, %c0_109, %c1_110] : memref<8x72x102xf32, #tpu.memory_space<vmem>>, vector<1x70x100xf32>
      %177 = vector.shape_cast %176 : vector<1x70x100xf32> to vector<70x100xf32>
      %178 = vector.broadcast %175 : f32 to vector<70x100xf32>
      %179 = arith.mulf %178, %177 : vector<70x100xf32>
      %180 = arith.addf %167, %179 : vector<70x100xf32>
      %c8_i32_111 = arith.constant 8 : i32
      %181 = arith.muli %arg13, %c8_i32_111 : i32
      %c1_i32_112 = arith.constant 1 : i32
      %182 = arith.addi %181, %c1_i32_112 : i32
      %c3_i32_113 = arith.constant 3 : i32
      %183 = arith.muli %182, %c3_i32_113 : i32
      %c0_i32_114 = arith.constant 0 : i32
      %184 = arith.addi %183, %c0_i32_114 : i32
      %c3_i32_115 = arith.constant 3 : i32
      %185 = arith.muli %184, %c3_i32_115 : i32
      %c2_i32_116 = arith.constant 2 : i32
      %186 = arith.addi %185, %c2_i32_116 : i32
      %187 = arith.index_cast %186 : i32 to index
      %188 = memref.load %arg6[%187] : memref<288xf32, #tpu.memory_space<smem>>
      %c1_117 = arith.constant 1 : index
      %c0_118 = arith.constant 0 : index
      %c2_119 = arith.constant 2 : index
      %189 = vector.load %arg12[%c1_117, %c0_118, %c2_119] : memref<8x72x102xf32, #tpu.memory_space<vmem>>, vector<1x70x100xf32>
      %190 = vector.shape_cast %189 : vector<1x70x100xf32> to vector<70x100xf32>
      %191 = vector.broadcast %188 : f32 to vector<70x100xf32>
      %192 = arith.mulf %191, %190 : vector<70x100xf32>
      %193 = arith.addf %180, %192 : vector<70x100xf32>
      %c8_i32_120 = arith.constant 8 : i32
      %194 = arith.muli %arg13, %c8_i32_120 : i32
      %c1_i32_121 = arith.constant 1 : i32
      %195 = arith.addi %194, %c1_i32_121 : i32
      %c3_i32_122 = arith.constant 3 : i32
      %196 = arith.muli %195, %c3_i32_122 : i32
      %c1_i32_123 = arith.constant 1 : i32
      %197 = arith.addi %196, %c1_i32_123 : i32
      %c3_i32_124 = arith.constant 3 : i32
      %198 = arith.muli %197, %c3_i32_124 : i32
      %c0_i32_125 = arith.constant 0 : i32
      %199 = arith.addi %198, %c0_i32_125 : i32
      %200 = arith.index_cast %199 : i32 to index
      %201 = memref.load %arg6[%200] : memref<288xf32, #tpu.memory_space<smem>>
      %c1_126 = arith.constant 1 : index
      %c1_127 = arith.constant 1 : index
      %c0_128 = arith.constant 0 : index
      %202 = vector.load %arg12[%c1_126, %c1_127, %c0_128] : memref<8x72x102xf32, #tpu.memory_space<vmem>>, vector<1x70x100xf32>
      %203 = vector.shape_cast %202 : vector<1x70x100xf32> to vector<70x100xf32>
      %204 = vector.broadcast %201 : f32 to vector<70x100xf32>
      %205 = arith.mulf %204, %203 : vector<70x100xf32>
      %206 = arith.addf %193, %205 : vector<70x100xf32>
      %c8_i32_129 = arith.constant 8 : i32
      %207 = arith.muli %arg13, %c8_i32_129 : i32
      %c1_i32_130 = arith.constant 1 : i32
      %208 = arith.addi %207, %c1_i32_130 : i32
      %c3_i32_131 = arith.constant 3 : i32
      %209 = arith.muli %208, %c3_i32_131 : i32
      %c1_i32_132 = arith.constant 1 : i32
      %210 = arith.addi %209, %c1_i32_132 : i32
      %c3_i32_133 = arith.constant 3 : i32
      %211 = arith.muli %210, %c3_i32_133 : i32
      %c1_i32_134 = arith.constant 1 : i32
      %212 = arith.addi %211, %c1_i32_134 : i32
      %213 = arith.index_cast %212 : i32 to index
      %214 = memref.load %arg6[%213] : memref<288xf32, #tpu.memory_space<smem>>
      %c1_135 = arith.constant 1 : index
      %c1_136 = arith.constant 1 : index
      %c1_137 = arith.constant 1 : index
      %215 = vector.load %arg12[%c1_135, %c1_136, %c1_137] : memref<8x72x102xf32, #tpu.memory_space<vmem>>, vector<1x70x100xf32>
      %216 = vector.shape_cast %215 : vector<1x70x100xf32> to vector<70x100xf32>
      %217 = vector.broadcast %214 : f32 to vector<70x100xf32>
      %218 = arith.mulf %217, %216 : vector<70x100xf32>
      %219 = arith.addf %206, %218 : vector<70x100xf32>
      %c8_i32_138 = arith.constant 8 : i32
      %220 = arith.muli %arg13, %c8_i32_138 : i32
      %c1_i32_139 = arith.constant 1 : i32
      %221 = arith.addi %220, %c1_i32_139 : i32
      %c3_i32_140 = arith.constant 3 : i32
      %222 = arith.muli %221, %c3_i32_140 : i32
      %c1_i32_141 = arith.constant 1 : i32
      %223 = arith.addi %222, %c1_i32_141 : i32
      %c3_i32_142 = arith.constant 3 : i32
      %224 = arith.muli %223, %c3_i32_142 : i32
      %c2_i32_143 = arith.constant 2 : i32
      %225 = arith.addi %224, %c2_i32_143 : i32
      %226 = arith.index_cast %225 : i32 to index
      %227 = memref.load %arg6[%226] : memref<288xf32, #tpu.memory_space<smem>>
      %c1_144 = arith.constant 1 : index
      %c1_145 = arith.constant 1 : index
      %c2_146 = arith.constant 2 : index
      %228 = vector.load %arg12[%c1_144, %c1_145, %c2_146] : memref<8x72x102xf32, #tpu.memory_space<vmem>>, vector<1x70x100xf32>
      %229 = vector.shape_cast %228 : vector<1x70x100xf32> to vector<70x100xf32>
      %230 = vector.broadcast %227 : f32 to vector<70x100xf32>
      %231 = arith.mulf %230, %229 : vector<70x100xf32>
      %232 = arith.addf %219, %231 : vector<70x100xf32>
      %c8_i32_147 = arith.constant 8 : i32
      %233 = arith.muli %arg13, %c8_i32_147 : i32
      %c1_i32_148 = arith.constant 1 : i32
      %234 = arith.addi %233, %c1_i32_148 : i32
      %c3_i32_149 = arith.constant 3 : i32
      %235 = arith.muli %234, %c3_i32_149 : i32
      %c2_i32_150 = arith.constant 2 : i32
      %236 = arith.addi %235, %c2_i32_150 : i32
      %c3_i32_151 = arith.constant 3 : i32
      %237 = arith.muli %236, %c3_i32_151 : i32
      %c0_i32_152 = arith.constant 0 : i32
      %238 = arith.addi %237, %c0_i32_152 : i32
      %239 = arith.index_cast %238 : i32 to index
      %240 = memref.load %arg6[%239] : memref<288xf32, #tpu.memory_space<smem>>
      %c1_153 = arith.constant 1 : index
      %c2_154 = arith.constant 2 : index
      %c0_155 = arith.constant 0 : index
      %241 = vector.load %arg12[%c1_153, %c2_154, %c0_155] : memref<8x72x102xf32, #tpu.memory_space<vmem>>, vector<1x70x100xf32>
      %242 = vector.shape_cast %241 : vector<1x70x100xf32> to vector<70x100xf32>
      %243 = vector.broadcast %240 : f32 to vector<70x100xf32>
      %244 = arith.mulf %243, %242 : vector<70x100xf32>
      %245 = arith.addf %232, %244 : vector<70x100xf32>
      %c8_i32_156 = arith.constant 8 : i32
      %246 = arith.muli %arg13, %c8_i32_156 : i32
      %c1_i32_157 = arith.constant 1 : i32
      %247 = arith.addi %246, %c1_i32_157 : i32
      %c3_i32_158 = arith.constant 3 : i32
      %248 = arith.muli %247, %c3_i32_158 : i32
      %c2_i32_159 = arith.constant 2 : i32
      %249 = arith.addi %248, %c2_i32_159 : i32
      %c3_i32_160 = arith.constant 3 : i32
      %250 = arith.muli %249, %c3_i32_160 : i32
      %c1_i32_161 = arith.constant 1 : i32
      %251 = arith.addi %250, %c1_i32_161 : i32
      %252 = arith.index_cast %251 : i32 to index
      %253 = memref.load %arg6[%252] : memref<288xf32, #tpu.memory_space<smem>>
      %c1_162 = arith.constant 1 : index
      %c2_163 = arith.constant 2 : index
      %c1_164 = arith.constant 1 : index
      %254 = vector.load %arg12[%c1_162, %c2_163, %c1_164] : memref<8x72x102xf32, #tpu.memory_space<vmem>>, vector<1x70x100xf32>
      %255 = vector.shape_cast %254 : vector<1x70x100xf32> to vector<70x100xf32>
      %256 = vector.broadcast %253 : f32 to vector<70x100xf32>
      %257 = arith.mulf %256, %255 : vector<70x100xf32>
      %258 = arith.addf %245, %257 : vector<70x100xf32>
      %c8_i32_165 = arith.constant 8 : i32
      %259 = arith.muli %arg13, %c8_i32_165 : i32
      %c1_i32_166 = arith.constant 1 : i32
      %260 = arith.addi %259, %c1_i32_166 : i32
      %c3_i32_167 = arith.constant 3 : i32
      %261 = arith.muli %260, %c3_i32_167 : i32
      %c2_i32_168 = arith.constant 2 : i32
      %262 = arith.addi %261, %c2_i32_168 : i32
      %c3_i32_169 = arith.constant 3 : i32
      %263 = arith.muli %262, %c3_i32_169 : i32
      %c2_i32_170 = arith.constant 2 : i32
      %264 = arith.addi %263, %c2_i32_170 : i32
      %265 = arith.index_cast %264 : i32 to index
      %266 = memref.load %arg6[%265] : memref<288xf32, #tpu.memory_space<smem>>
      %c1_171 = arith.constant 1 : index
      %c2_172 = arith.constant 2 : index
      %c2_173 = arith.constant 2 : index
      %267 = vector.load %arg12[%c1_171, %c2_172, %c2_173] : memref<8x72x102xf32, #tpu.memory_space<vmem>>, vector<1x70x100xf32>
      %268 = vector.shape_cast %267 : vector<1x70x100xf32> to vector<70x100xf32>
      %269 = vector.broadcast %266 : f32 to vector<70x100xf32>
      %270 = arith.mulf %269, %268 : vector<70x100xf32>
      %271 = arith.addf %258, %270 : vector<70x100xf32>
      %c8_i32_174 = arith.constant 8 : i32
      %272 = arith.muli %arg13, %c8_i32_174 : i32
      %c2_i32_175 = arith.constant 2 : i32
      %273 = arith.addi %272, %c2_i32_175 : i32
      %c3_i32_176 = arith.constant 3 : i32
      %274 = arith.muli %273, %c3_i32_176 : i32
      %c0_i32_177 = arith.constant 0 : i32
      %275 = arith.addi %274, %c0_i32_177 : i32
      %c3_i32_178 = arith.constant 3 : i32
      %276 = arith.muli %275, %c3_i32_178 : i32
      %c0_i32_179 = arith.constant 0 : i32
      %277 = arith.addi %276, %c0_i32_179 : i32
      %278 = arith.index_cast %277 : i32 to index
      %279 = memref.load %arg6[%278] : memref<288xf32, #tpu.memory_space<smem>>
      %c2_180 = arith.constant 2 : index
      %c0_181 = arith.constant 0 : index
      %c0_182 = arith.constant 0 : index
      %280 = vector.load %arg12[%c2_180, %c0_181, %c0_182] : memref<8x72x102xf32, #tpu.memory_space<vmem>>, vector<1x70x100xf32>
      %281 = vector.shape_cast %280 : vector<1x70x100xf32> to vector<70x100xf32>
      %282 = vector.broadcast %279 : f32 to vector<70x100xf32>
      %283 = arith.mulf %282, %281 : vector<70x100xf32>
      %284 = arith.addf %271, %283 : vector<70x100xf32>
      %c8_i32_183 = arith.constant 8 : i32
      %285 = arith.muli %arg13, %c8_i32_183 : i32
      %c2_i32_184 = arith.constant 2 : i32
      %286 = arith.addi %285, %c2_i32_184 : i32
      %c3_i32_185 = arith.constant 3 : i32
      %287 = arith.muli %286, %c3_i32_185 : i32
      %c0_i32_186 = arith.constant 0 : i32
      %288 = arith.addi %287, %c0_i32_186 : i32
      %c3_i32_187 = arith.constant 3 : i32
      %289 = arith.muli %288, %c3_i32_187 : i32
      %c1_i32_188 = arith.constant 1 : i32
      %290 = arith.addi %289, %c1_i32_188 : i32
      %291 = arith.index_cast %290 : i32 to index
      %292 = memref.load %arg6[%291] : memref<288xf32, #tpu.memory_space<smem>>
      %c2_189 = arith.constant 2 : index
      %c0_190 = arith.constant 0 : index
      %c1_191 = arith.constant 1 : index
      %293 = vector.load %arg12[%c2_189, %c0_190, %c1_191] : memref<8x72x102xf32, #tpu.memory_space<vmem>>, vector<1x70x100xf32>
      %294 = vector.shape_cast %293 : vector<1x70x100xf32> to vector<70x100xf32>
      %295 = vector.broadcast %292 : f32 to vector<70x100xf32>
      %296 = arith.mulf %295, %294 : vector<70x100xf32>
      %297 = arith.addf %284, %296 : vector<70x100xf32>
      %c8_i32_192 = arith.constant 8 : i32
      %298 = arith.muli %arg13, %c8_i32_192 : i32
      %c2_i32_193 = arith.constant 2 : i32
      %299 = arith.addi %298, %c2_i32_193 : i32
      %c3_i32_194 = arith.constant 3 : i32
      %300 = arith.muli %299, %c3_i32_194 : i32
      %c0_i32_195 = arith.constant 0 : i32
      %301 = arith.addi %300, %c0_i32_195 : i32
      %c3_i32_196 = arith.constant 3 : i32
      %302 = arith.muli %301, %c3_i32_196 : i32
      %c2_i32_197 = arith.constant 2 : i32
      %303 = arith.addi %302, %c2_i32_197 : i32
      %304 = arith.index_cast %303 : i32 to index
      %305 = memref.load %arg6[%304] : memref<288xf32, #tpu.memory_space<smem>>
      %c2_198 = arith.constant 2 : index
      %c0_199 = arith.constant 0 : index
      %c2_200 = arith.constant 2 : index
      %306 = vector.load %arg12[%c2_198, %c0_199, %c2_200] : memref<8x72x102xf32, #tpu.memory_space<vmem>>, vector<1x70x100xf32>
      %307 = vector.shape_cast %306 : vector<1x70x100xf32> to vector<70x100xf32>
      %308 = vector.broadcast %305 : f32 to vector<70x100xf32>
      %309 = arith.mulf %308, %307 : vector<70x100xf32>
      %310 = arith.addf %297, %309 : vector<70x100xf32>
      %c8_i32_201 = arith.constant 8 : i32
      %311 = arith.muli %arg13, %c8_i32_201 : i32
      %c2_i32_202 = arith.constant 2 : i32
      %312 = arith.addi %311, %c2_i32_202 : i32
      %c3_i32_203 = arith.constant 3 : i32
      %313 = arith.muli %312, %c3_i32_203 : i32
      %c1_i32_204 = arith.constant 1 : i32
      %314 = arith.addi %313, %c1_i32_204 : i32
      %c3_i32_205 = arith.constant 3 : i32
      %315 = arith.muli %314, %c3_i32_205 : i32
      %c0_i32_206 = arith.constant 0 : i32
      %316 = arith.addi %315, %c0_i32_206 : i32
      %317 = arith.index_cast %316 : i32 to index
      %318 = memref.load %arg6[%317] : memref<288xf32, #tpu.memory_space<smem>>
      %c2_207 = arith.constant 2 : index
      %c1_208 = arith.constant 1 : index
      %c0_209 = arith.constant 0 : index
      %319 = vector.load %arg12[%c2_207, %c1_208, %c0_209] : memref<8x72x102xf32, #tpu.memory_space<vmem>>, vector<1x70x100xf32>
      %320 = vector.shape_cast %319 : vector<1x70x100xf32> to vector<70x100xf32>
      %321 = vector.broadcast %318 : f32 to vector<70x100xf32>
      %322 = arith.mulf %321, %320 : vector<70x100xf32>
      %323 = arith.addf %310, %322 : vector<70x100xf32>
      %c8_i32_210 = arith.constant 8 : i32
      %324 = arith.muli %arg13, %c8_i32_210 : i32
      %c2_i32_211 = arith.constant 2 : i32
      %325 = arith.addi %324, %c2_i32_211 : i32
      %c3_i32_212 = arith.constant 3 : i32
      %326 = arith.muli %325, %c3_i32_212 : i32
      %c1_i32_213 = arith.constant 1 : i32
      %327 = arith.addi %326, %c1_i32_213 : i32
      %c3_i32_214 = arith.constant 3 : i32
      %328 = arith.muli %327, %c3_i32_214 : i32
      %c1_i32_215 = arith.constant 1 : i32
      %329 = arith.addi %328, %c1_i32_215 : i32
      %330 = arith.index_cast %329 : i32 to index
      %331 = memref.load %arg6[%330] : memref<288xf32, #tpu.memory_space<smem>>
      %c2_216 = arith.constant 2 : index
      %c1_217 = arith.constant 1 : index
      %c1_218 = arith.constant 1 : index
      %332 = vector.load %arg12[%c2_216, %c1_217, %c1_218] : memref<8x72x102xf32, #tpu.memory_space<vmem>>, vector<1x70x100xf32>
      %333 = vector.shape_cast %332 : vector<1x70x100xf32> to vector<70x100xf32>
      %334 = vector.broadcast %331 : f32 to vector<70x100xf32>
      %335 = arith.mulf %334, %333 : vector<70x100xf32>
      %336 = arith.addf %323, %335 : vector<70x100xf32>
      %c8_i32_219 = arith.constant 8 : i32
      %337 = arith.muli %arg13, %c8_i32_219 : i32
      %c2_i32_220 = arith.constant 2 : i32
      %338 = arith.addi %337, %c2_i32_220 : i32
      %c3_i32_221 = arith.constant 3 : i32
      %339 = arith.muli %338, %c3_i32_221 : i32
      %c1_i32_222 = arith.constant 1 : i32
      %340 = arith.addi %339, %c1_i32_222 : i32
      %c3_i32_223 = arith.constant 3 : i32
      %341 = arith.muli %340, %c3_i32_223 : i32
      %c2_i32_224 = arith.constant 2 : i32
      %342 = arith.addi %341, %c2_i32_224 : i32
      %343 = arith.index_cast %342 : i32 to index
      %344 = memref.load %arg6[%343] : memref<288xf32, #tpu.memory_space<smem>>
      %c2_225 = arith.constant 2 : index
      %c1_226 = arith.constant 1 : index
      %c2_227 = arith.constant 2 : index
      %345 = vector.load %arg12[%c2_225, %c1_226, %c2_227] : memref<8x72x102xf32, #tpu.memory_space<vmem>>, vector<1x70x100xf32>
      %346 = vector.shape_cast %345 : vector<1x70x100xf32> to vector<70x100xf32>
      %347 = vector.broadcast %344 : f32 to vector<70x100xf32>
      %348 = arith.mulf %347, %346 : vector<70x100xf32>
      %349 = arith.addf %336, %348 : vector<70x100xf32>
      %c8_i32_228 = arith.constant 8 : i32
      %350 = arith.muli %arg13, %c8_i32_228 : i32
      %c2_i32_229 = arith.constant 2 : i32
      %351 = arith.addi %350, %c2_i32_229 : i32
      %c3_i32_230 = arith.constant 3 : i32
      %352 = arith.muli %351, %c3_i32_230 : i32
      %c2_i32_231 = arith.constant 2 : i32
      %353 = arith.addi %352, %c2_i32_231 : i32
      %c3_i32_232 = arith.constant 3 : i32
      %354 = arith.muli %353, %c3_i32_232 : i32
      %c0_i32_233 = arith.constant 0 : i32
      %355 = arith.addi %354, %c0_i32_233 : i32
      %356 = arith.index_cast %355 : i32 to index
      %357 = memref.load %arg6[%356] : memref<288xf32, #tpu.memory_space<smem>>
      %c2_234 = arith.constant 2 : index
      %c2_235 = arith.constant 2 : index
      %c0_236 = arith.constant 0 : index
      %358 = vector.load %arg12[%c2_234, %c2_235, %c0_236] : memref<8x72x102xf32, #tpu.memory_space<vmem>>, vector<1x70x100xf32>
      %359 = vector.shape_cast %358 : vector<1x70x100xf32> to vector<70x100xf32>
      %360 = vector.broadcast %357 : f32 to vector<70x100xf32>
      %361 = arith.mulf %360, %359 : vector<70x100xf32>
      %362 = arith.addf %349, %361 : vector<70x100xf32>
      %c8_i32_237 = arith.constant 8 : i32
      %363 = arith.muli %arg13, %c8_i32_237 : i32
      %c2_i32_238 = arith.constant 2 : i32
      %364 = arith.addi %363, %c2_i32_238 : i32
      %c3_i32_239 = arith.constant 3 : i32
      %365 = arith.muli %364, %c3_i32_239 : i32
      %c2_i32_240 = arith.constant 2 : i32
      %366 = arith.addi %365, %c2_i32_240 : i32
      %c3_i32_241 = arith.constant 3 : i32
      %367 = arith.muli %366, %c3_i32_241 : i32
      %c1_i32_242 = arith.constant 1 : i32
      %368 = arith.addi %367, %c1_i32_242 : i32
      %369 = arith.index_cast %368 : i32 to index
      %370 = memref.load %arg6[%369] : memref<288xf32, #tpu.memory_space<smem>>
      %c2_243 = arith.constant 2 : index
      %c2_244 = arith.constant 2 : index
      %c1_245 = arith.constant 1 : index
      %371 = vector.load %arg12[%c2_243, %c2_244, %c1_245] : memref<8x72x102xf32, #tpu.memory_space<vmem>>, vector<1x70x100xf32>
      %372 = vector.shape_cast %371 : vector<1x70x100xf32> to vector<70x100xf32>
      %373 = vector.broadcast %370 : f32 to vector<70x100xf32>
      %374 = arith.mulf %373, %372 : vector<70x100xf32>
      %375 = arith.addf %362, %374 : vector<70x100xf32>
      %c8_i32_246 = arith.constant 8 : i32
      %376 = arith.muli %arg13, %c8_i32_246 : i32
      %c2_i32_247 = arith.constant 2 : i32
      %377 = arith.addi %376, %c2_i32_247 : i32
      %c3_i32_248 = arith.constant 3 : i32
      %378 = arith.muli %377, %c3_i32_248 : i32
      %c2_i32_249 = arith.constant 2 : i32
      %379 = arith.addi %378, %c2_i32_249 : i32
      %c3_i32_250 = arith.constant 3 : i32
      %380 = arith.muli %379, %c3_i32_250 : i32
      %c2_i32_251 = arith.constant 2 : i32
      %381 = arith.addi %380, %c2_i32_251 : i32
      %382 = arith.index_cast %381 : i32 to index
      %383 = memref.load %arg6[%382] : memref<288xf32, #tpu.memory_space<smem>>
      %c2_252 = arith.constant 2 : index
      %c2_253 = arith.constant 2 : index
      %c2_254 = arith.constant 2 : index
      %384 = vector.load %arg12[%c2_252, %c2_253, %c2_254] : memref<8x72x102xf32, #tpu.memory_space<vmem>>, vector<1x70x100xf32>
      %385 = vector.shape_cast %384 : vector<1x70x100xf32> to vector<70x100xf32>
      %386 = vector.broadcast %383 : f32 to vector<70x100xf32>
      %387 = arith.mulf %386, %385 : vector<70x100xf32>
      %388 = arith.addf %375, %387 : vector<70x100xf32>
      %c8_i32_255 = arith.constant 8 : i32
      %389 = arith.muli %arg13, %c8_i32_255 : i32
      %c3_i32_256 = arith.constant 3 : i32
      %390 = arith.addi %389, %c3_i32_256 : i32
      %c3_i32_257 = arith.constant 3 : i32
      %391 = arith.muli %390, %c3_i32_257 : i32
      %c0_i32_258 = arith.constant 0 : i32
      %392 = arith.addi %391, %c0_i32_258 : i32
      %c3_i32_259 = arith.constant 3 : i32
      %393 = arith.muli %392, %c3_i32_259 : i32
      %c0_i32_260 = arith.constant 0 : i32
      %394 = arith.addi %393, %c0_i32_260 : i32
      %395 = arith.index_cast %394 : i32 to index
      %396 = memref.load %arg6[%395] : memref<288xf32, #tpu.memory_space<smem>>
      %c3 = arith.constant 3 : index
      %c0_261 = arith.constant 0 : index
      %c0_262 = arith.constant 0 : index
      %397 = vector.load %arg12[%c3, %c0_261, %c0_262] : memref<8x72x102xf32, #tpu.memory_space<vmem>>, vector<1x70x100xf32>
      %398 = vector.shape_cast %397 : vector<1x70x100xf32> to vector<70x100xf32>
      %399 = vector.broadcast %396 : f32 to vector<70x100xf32>
      %400 = arith.mulf %399, %398 : vector<70x100xf32>
      %401 = arith.addf %388, %400 : vector<70x100xf32>
      %c8_i32_263 = arith.constant 8 : i32
      %402 = arith.muli %arg13, %c8_i32_263 : i32
      %c3_i32_264 = arith.constant 3 : i32
      %403 = arith.addi %402, %c3_i32_264 : i32
      %c3_i32_265 = arith.constant 3 : i32
      %404 = arith.muli %403, %c3_i32_265 : i32
      %c0_i32_266 = arith.constant 0 : i32
      %405 = arith.addi %404, %c0_i32_266 : i32
      %c3_i32_267 = arith.constant 3 : i32
      %406 = arith.muli %405, %c3_i32_267 : i32
      %c1_i32_268 = arith.constant 1 : i32
      %407 = arith.addi %406, %c1_i32_268 : i32
      %408 = arith.index_cast %407 : i32 to index
      %409 = memref.load %arg6[%408] : memref<288xf32, #tpu.memory_space<smem>>
      %c3_269 = arith.constant 3 : index
      %c0_270 = arith.constant 0 : index
      %c1_271 = arith.constant 1 : index
      %410 = vector.load %arg12[%c3_269, %c0_270, %c1_271] : memref<8x72x102xf32, #tpu.memory_space<vmem>>, vector<1x70x100xf32>
      %411 = vector.shape_cast %410 : vector<1x70x100xf32> to vector<70x100xf32>
      %412 = vector.broadcast %409 : f32 to vector<70x100xf32>
      %413 = arith.mulf %412, %411 : vector<70x100xf32>
      %414 = arith.addf %401, %413 : vector<70x100xf32>
      %c8_i32_272 = arith.constant 8 : i32
      %415 = arith.muli %arg13, %c8_i32_272 : i32
      %c3_i32_273 = arith.constant 3 : i32
      %416 = arith.addi %415, %c3_i32_273 : i32
      %c3_i32_274 = arith.constant 3 : i32
      %417 = arith.muli %416, %c3_i32_274 : i32
      %c0_i32_275 = arith.constant 0 : i32
      %418 = arith.addi %417, %c0_i32_275 : i32
      %c3_i32_276 = arith.constant 3 : i32
      %419 = arith.muli %418, %c3_i32_276 : i32
      %c2_i32_277 = arith.constant 2 : i32
      %420 = arith.addi %419, %c2_i32_277 : i32
      %421 = arith.index_cast %420 : i32 to index
      %422 = memref.load %arg6[%421] : memref<288xf32, #tpu.memory_space<smem>>
      %c3_278 = arith.constant 3 : index
      %c0_279 = arith.constant 0 : index
      %c2_280 = arith.constant 2 : index
      %423 = vector.load %arg12[%c3_278, %c0_279, %c2_280] : memref<8x72x102xf32, #tpu.memory_space<vmem>>, vector<1x70x100xf32>
      %424 = vector.shape_cast %423 : vector<1x70x100xf32> to vector<70x100xf32>
      %425 = vector.broadcast %422 : f32 to vector<70x100xf32>
      %426 = arith.mulf %425, %424 : vector<70x100xf32>
      %427 = arith.addf %414, %426 : vector<70x100xf32>
      %c8_i32_281 = arith.constant 8 : i32
      %428 = arith.muli %arg13, %c8_i32_281 : i32
      %c3_i32_282 = arith.constant 3 : i32
      %429 = arith.addi %428, %c3_i32_282 : i32
      %c3_i32_283 = arith.constant 3 : i32
      %430 = arith.muli %429, %c3_i32_283 : i32
      %c1_i32_284 = arith.constant 1 : i32
      %431 = arith.addi %430, %c1_i32_284 : i32
      %c3_i32_285 = arith.constant 3 : i32
      %432 = arith.muli %431, %c3_i32_285 : i32
      %c0_i32_286 = arith.constant 0 : i32
      %433 = arith.addi %432, %c0_i32_286 : i32
      %434 = arith.index_cast %433 : i32 to index
      %435 = memref.load %arg6[%434] : memref<288xf32, #tpu.memory_space<smem>>
      %c3_287 = arith.constant 3 : index
      %c1_288 = arith.constant 1 : index
      %c0_289 = arith.constant 0 : index
      %436 = vector.load %arg12[%c3_287, %c1_288, %c0_289] : memref<8x72x102xf32, #tpu.memory_space<vmem>>, vector<1x70x100xf32>
      %437 = vector.shape_cast %436 : vector<1x70x100xf32> to vector<70x100xf32>
      %438 = vector.broadcast %435 : f32 to vector<70x100xf32>
      %439 = arith.mulf %438, %437 : vector<70x100xf32>
      %440 = arith.addf %427, %439 : vector<70x100xf32>
      %c8_i32_290 = arith.constant 8 : i32
      %441 = arith.muli %arg13, %c8_i32_290 : i32
      %c3_i32_291 = arith.constant 3 : i32
      %442 = arith.addi %441, %c3_i32_291 : i32
      %c3_i32_292 = arith.constant 3 : i32
      %443 = arith.muli %442, %c3_i32_292 : i32
      %c1_i32_293 = arith.constant 1 : i32
      %444 = arith.addi %443, %c1_i32_293 : i32
      %c3_i32_294 = arith.constant 3 : i32
      %445 = arith.muli %444, %c3_i32_294 : i32
      %c1_i32_295 = arith.constant 1 : i32
      %446 = arith.addi %445, %c1_i32_295 : i32
      %447 = arith.index_cast %446 : i32 to index
      %448 = memref.load %arg6[%447] : memref<288xf32, #tpu.memory_space<smem>>
      %c3_296 = arith.constant 3 : index
      %c1_297 = arith.constant 1 : index
      %c1_298 = arith.constant 1 : index
      %449 = vector.load %arg12[%c3_296, %c1_297, %c1_298] : memref<8x72x102xf32, #tpu.memory_space<vmem>>, vector<1x70x100xf32>
      %450 = vector.shape_cast %449 : vector<1x70x100xf32> to vector<70x100xf32>
      %451 = vector.broadcast %448 : f32 to vector<70x100xf32>
      %452 = arith.mulf %451, %450 : vector<70x100xf32>
      %453 = arith.addf %440, %452 : vector<70x100xf32>
      %c8_i32_299 = arith.constant 8 : i32
      %454 = arith.muli %arg13, %c8_i32_299 : i32
      %c3_i32_300 = arith.constant 3 : i32
      %455 = arith.addi %454, %c3_i32_300 : i32
      %c3_i32_301 = arith.constant 3 : i32
      %456 = arith.muli %455, %c3_i32_301 : i32
      %c1_i32_302 = arith.constant 1 : i32
      %457 = arith.addi %456, %c1_i32_302 : i32
      %c3_i32_303 = arith.constant 3 : i32
      %458 = arith.muli %457, %c3_i32_303 : i32
      %c2_i32_304 = arith.constant 2 : i32
      %459 = arith.addi %458, %c2_i32_304 : i32
      %460 = arith.index_cast %459 : i32 to index
      %461 = memref.load %arg6[%460] : memref<288xf32, #tpu.memory_space<smem>>
      %c3_305 = arith.constant 3 : index
      %c1_306 = arith.constant 1 : index
      %c2_307 = arith.constant 2 : index
      %462 = vector.load %arg12[%c3_305, %c1_306, %c2_307] : memref<8x72x102xf32, #tpu.memory_space<vmem>>, vector<1x70x100xf32>
      %463 = vector.shape_cast %462 : vector<1x70x100xf32> to vector<70x100xf32>
      %464 = vector.broadcast %461 : f32 to vector<70x100xf32>
      %465 = arith.mulf %464, %463 : vector<70x100xf32>
      %466 = arith.addf %453, %465 : vector<70x100xf32>
      %c8_i32_308 = arith.constant 8 : i32
      %467 = arith.muli %arg13, %c8_i32_308 : i32
      %c3_i32_309 = arith.constant 3 : i32
      %468 = arith.addi %467, %c3_i32_309 : i32
      %c3_i32_310 = arith.constant 3 : i32
      %469 = arith.muli %468, %c3_i32_310 : i32
      %c2_i32_311 = arith.constant 2 : i32
      %470 = arith.addi %469, %c2_i32_311 : i32
      %c3_i32_312 = arith.constant 3 : i32
      %471 = arith.muli %470, %c3_i32_312 : i32
      %c0_i32_313 = arith.constant 0 : i32
      %472 = arith.addi %471, %c0_i32_313 : i32
      %473 = arith.index_cast %472 : i32 to index
      %474 = memref.load %arg6[%473] : memref<288xf32, #tpu.memory_space<smem>>
      %c3_314 = arith.constant 3 : index
      %c2_315 = arith.constant 2 : index
      %c0_316 = arith.constant 0 : index
      %475 = vector.load %arg12[%c3_314, %c2_315, %c0_316] : memref<8x72x102xf32, #tpu.memory_space<vmem>>, vector<1x70x100xf32>
      %476 = vector.shape_cast %475 : vector<1x70x100xf32> to vector<70x100xf32>
      %477 = vector.broadcast %474 : f32 to vector<70x100xf32>
      %478 = arith.mulf %477, %476 : vector<70x100xf32>
      %479 = arith.addf %466, %478 : vector<70x100xf32>
      %c8_i32_317 = arith.constant 8 : i32
      %480 = arith.muli %arg13, %c8_i32_317 : i32
      %c3_i32_318 = arith.constant 3 : i32
      %481 = arith.addi %480, %c3_i32_318 : i32
      %c3_i32_319 = arith.constant 3 : i32
      %482 = arith.muli %481, %c3_i32_319 : i32
      %c2_i32_320 = arith.constant 2 : i32
      %483 = arith.addi %482, %c2_i32_320 : i32
      %c3_i32_321 = arith.constant 3 : i32
      %484 = arith.muli %483, %c3_i32_321 : i32
      %c1_i32_322 = arith.constant 1 : i32
      %485 = arith.addi %484, %c1_i32_322 : i32
      %486 = arith.index_cast %485 : i32 to index
      %487 = memref.load %arg6[%486] : memref<288xf32, #tpu.memory_space<smem>>
      %c3_323 = arith.constant 3 : index
      %c2_324 = arith.constant 2 : index
      %c1_325 = arith.constant 1 : index
      %488 = vector.load %arg12[%c3_323, %c2_324, %c1_325] : memref<8x72x102xf32, #tpu.memory_space<vmem>>, vector<1x70x100xf32>
      %489 = vector.shape_cast %488 : vector<1x70x100xf32> to vector<70x100xf32>
      %490 = vector.broadcast %487 : f32 to vector<70x100xf32>
      %491 = arith.mulf %490, %489 : vector<70x100xf32>
      %492 = arith.addf %479, %491 : vector<70x100xf32>
      %c8_i32_326 = arith.constant 8 : i32
      %493 = arith.muli %arg13, %c8_i32_326 : i32
      %c3_i32_327 = arith.constant 3 : i32
      %494 = arith.addi %493, %c3_i32_327 : i32
      %c3_i32_328 = arith.constant 3 : i32
      %495 = arith.muli %494, %c3_i32_328 : i32
      %c2_i32_329 = arith.constant 2 : i32
      %496 = arith.addi %495, %c2_i32_329 : i32
      %c3_i32_330 = arith.constant 3 : i32
      %497 = arith.muli %496, %c3_i32_330 : i32
      %c2_i32_331 = arith.constant 2 : i32
      %498 = arith.addi %497, %c2_i32_331 : i32
      %499 = arith.index_cast %498 : i32 to index
      %500 = memref.load %arg6[%499] : memref<288xf32, #tpu.memory_space<smem>>
      %c3_332 = arith.constant 3 : index
      %c2_333 = arith.constant 2 : index
      %c2_334 = arith.constant 2 : index
      %501 = vector.load %arg12[%c3_332, %c2_333, %c2_334] : memref<8x72x102xf32, #tpu.memory_space<vmem>>, vector<1x70x100xf32>
      %502 = vector.shape_cast %501 : vector<1x70x100xf32> to vector<70x100xf32>
      %503 = vector.broadcast %500 : f32 to vector<70x100xf32>
      %504 = arith.mulf %503, %502 : vector<70x100xf32>
      %505 = arith.addf %492, %504 : vector<70x100xf32>
      %c8_i32_335 = arith.constant 8 : i32
      %506 = arith.muli %arg13, %c8_i32_335 : i32
      %c4_i32_336 = arith.constant 4 : i32
      %507 = arith.addi %506, %c4_i32_336 : i32
      %c3_i32_337 = arith.constant 3 : i32
      %508 = arith.muli %507, %c3_i32_337 : i32
      %c0_i32_338 = arith.constant 0 : i32
      %509 = arith.addi %508, %c0_i32_338 : i32
      %c3_i32_339 = arith.constant 3 : i32
      %510 = arith.muli %509, %c3_i32_339 : i32
      %c0_i32_340 = arith.constant 0 : i32
      %511 = arith.addi %510, %c0_i32_340 : i32
      %512 = arith.index_cast %511 : i32 to index
      %513 = memref.load %arg6[%512] : memref<288xf32, #tpu.memory_space<smem>>
      %c4 = arith.constant 4 : index
      %c0_341 = arith.constant 0 : index
      %c0_342 = arith.constant 0 : index
      %514 = vector.load %arg12[%c4, %c0_341, %c0_342] : memref<8x72x102xf32, #tpu.memory_space<vmem>>, vector<1x70x100xf32>
      %515 = vector.shape_cast %514 : vector<1x70x100xf32> to vector<70x100xf32>
      %516 = vector.broadcast %513 : f32 to vector<70x100xf32>
      %517 = arith.mulf %516, %515 : vector<70x100xf32>
      %518 = arith.addf %505, %517 : vector<70x100xf32>
      %c8_i32_343 = arith.constant 8 : i32
      %519 = arith.muli %arg13, %c8_i32_343 : i32
      %c4_i32_344 = arith.constant 4 : i32
      %520 = arith.addi %519, %c4_i32_344 : i32
      %c3_i32_345 = arith.constant 3 : i32
      %521 = arith.muli %520, %c3_i32_345 : i32
      %c0_i32_346 = arith.constant 0 : i32
      %522 = arith.addi %521, %c0_i32_346 : i32
      %c3_i32_347 = arith.constant 3 : i32
      %523 = arith.muli %522, %c3_i32_347 : i32
      %c1_i32_348 = arith.constant 1 : i32
      %524 = arith.addi %523, %c1_i32_348 : i32
      %525 = arith.index_cast %524 : i32 to index
      %526 = memref.load %arg6[%525] : memref<288xf32, #tpu.memory_space<smem>>
      %c4_349 = arith.constant 4 : index
      %c0_350 = arith.constant 0 : index
      %c1_351 = arith.constant 1 : index
      %527 = vector.load %arg12[%c4_349, %c0_350, %c1_351] : memref<8x72x102xf32, #tpu.memory_space<vmem>>, vector<1x70x100xf32>
      %528 = vector.shape_cast %527 : vector<1x70x100xf32> to vector<70x100xf32>
      %529 = vector.broadcast %526 : f32 to vector<70x100xf32>
      %530 = arith.mulf %529, %528 : vector<70x100xf32>
      %531 = arith.addf %518, %530 : vector<70x100xf32>
      %c8_i32_352 = arith.constant 8 : i32
      %532 = arith.muli %arg13, %c8_i32_352 : i32
      %c4_i32_353 = arith.constant 4 : i32
      %533 = arith.addi %532, %c4_i32_353 : i32
      %c3_i32_354 = arith.constant 3 : i32
      %534 = arith.muli %533, %c3_i32_354 : i32
      %c0_i32_355 = arith.constant 0 : i32
      %535 = arith.addi %534, %c0_i32_355 : i32
      %c3_i32_356 = arith.constant 3 : i32
      %536 = arith.muli %535, %c3_i32_356 : i32
      %c2_i32_357 = arith.constant 2 : i32
      %537 = arith.addi %536, %c2_i32_357 : i32
      %538 = arith.index_cast %537 : i32 to index
      %539 = memref.load %arg6[%538] : memref<288xf32, #tpu.memory_space<smem>>
      %c4_358 = arith.constant 4 : index
      %c0_359 = arith.constant 0 : index
      %c2_360 = arith.constant 2 : index
      %540 = vector.load %arg12[%c4_358, %c0_359, %c2_360] : memref<8x72x102xf32, #tpu.memory_space<vmem>>, vector<1x70x100xf32>
      %541 = vector.shape_cast %540 : vector<1x70x100xf32> to vector<70x100xf32>
      %542 = vector.broadcast %539 : f32 to vector<70x100xf32>
      %543 = arith.mulf %542, %541 : vector<70x100xf32>
      %544 = arith.addf %531, %543 : vector<70x100xf32>
      %c8_i32_361 = arith.constant 8 : i32
      %545 = arith.muli %arg13, %c8_i32_361 : i32
      %c4_i32_362 = arith.constant 4 : i32
      %546 = arith.addi %545, %c4_i32_362 : i32
      %c3_i32_363 = arith.constant 3 : i32
      %547 = arith.muli %546, %c3_i32_363 : i32
      %c1_i32_364 = arith.constant 1 : i32
      %548 = arith.addi %547, %c1_i32_364 : i32
      %c3_i32_365 = arith.constant 3 : i32
      %549 = arith.muli %548, %c3_i32_365 : i32
      %c0_i32_366 = arith.constant 0 : i32
      %550 = arith.addi %549, %c0_i32_366 : i32
      %551 = arith.index_cast %550 : i32 to index
      %552 = memref.load %arg6[%551] : memref<288xf32, #tpu.memory_space<smem>>
      %c4_367 = arith.constant 4 : index
      %c1_368 = arith.constant 1 : index
      %c0_369 = arith.constant 0 : index
      %553 = vector.load %arg12[%c4_367, %c1_368, %c0_369] : memref<8x72x102xf32, #tpu.memory_space<vmem>>, vector<1x70x100xf32>
      %554 = vector.shape_cast %553 : vector<1x70x100xf32> to vector<70x100xf32>
      %555 = vector.broadcast %552 : f32 to vector<70x100xf32>
      %556 = arith.mulf %555, %554 : vector<70x100xf32>
      %557 = arith.addf %544, %556 : vector<70x100xf32>
      %c8_i32_370 = arith.constant 8 : i32
      %558 = arith.muli %arg13, %c8_i32_370 : i32
      %c4_i32_371 = arith.constant 4 : i32
      %559 = arith.addi %558, %c4_i32_371 : i32
      %c3_i32_372 = arith.constant 3 : i32
      %560 = arith.muli %559, %c3_i32_372 : i32
      %c1_i32_373 = arith.constant 1 : i32
      %561 = arith.addi %560, %c1_i32_373 : i32
      %c3_i32_374 = arith.constant 3 : i32
      %562 = arith.muli %561, %c3_i32_374 : i32
      %c1_i32_375 = arith.constant 1 : i32
      %563 = arith.addi %562, %c1_i32_375 : i32
      %564 = arith.index_cast %563 : i32 to index
      %565 = memref.load %arg6[%564] : memref<288xf32, #tpu.memory_space<smem>>
      %c4_376 = arith.constant 4 : index
      %c1_377 = arith.constant 1 : index
      %c1_378 = arith.constant 1 : index
      %566 = vector.load %arg12[%c4_376, %c1_377, %c1_378] : memref<8x72x102xf32, #tpu.memory_space<vmem>>, vector<1x70x100xf32>
      %567 = vector.shape_cast %566 : vector<1x70x100xf32> to vector<70x100xf32>
      %568 = vector.broadcast %565 : f32 to vector<70x100xf32>
      %569 = arith.mulf %568, %567 : vector<70x100xf32>
      %570 = arith.addf %557, %569 : vector<70x100xf32>
      %c8_i32_379 = arith.constant 8 : i32
      %571 = arith.muli %arg13, %c8_i32_379 : i32
      %c4_i32_380 = arith.constant 4 : i32
      %572 = arith.addi %571, %c4_i32_380 : i32
      %c3_i32_381 = arith.constant 3 : i32
      %573 = arith.muli %572, %c3_i32_381 : i32
      %c1_i32_382 = arith.constant 1 : i32
      %574 = arith.addi %573, %c1_i32_382 : i32
      %c3_i32_383 = arith.constant 3 : i32
      %575 = arith.muli %574, %c3_i32_383 : i32
      %c2_i32_384 = arith.constant 2 : i32
      %576 = arith.addi %575, %c2_i32_384 : i32
      %577 = arith.index_cast %576 : i32 to index
      %578 = memref.load %arg6[%577] : memref<288xf32, #tpu.memory_space<smem>>
      %c4_385 = arith.constant 4 : index
      %c1_386 = arith.constant 1 : index
      %c2_387 = arith.constant 2 : index
      %579 = vector.load %arg12[%c4_385, %c1_386, %c2_387] : memref<8x72x102xf32, #tpu.memory_space<vmem>>, vector<1x70x100xf32>
      %580 = vector.shape_cast %579 : vector<1x70x100xf32> to vector<70x100xf32>
      %581 = vector.broadcast %578 : f32 to vector<70x100xf32>
      %582 = arith.mulf %581, %580 : vector<70x100xf32>
      %583 = arith.addf %570, %582 : vector<70x100xf32>
      %c8_i32_388 = arith.constant 8 : i32
      %584 = arith.muli %arg13, %c8_i32_388 : i32
      %c4_i32_389 = arith.constant 4 : i32
      %585 = arith.addi %584, %c4_i32_389 : i32
      %c3_i32_390 = arith.constant 3 : i32
      %586 = arith.muli %585, %c3_i32_390 : i32
      %c2_i32_391 = arith.constant 2 : i32
      %587 = arith.addi %586, %c2_i32_391 : i32
      %c3_i32_392 = arith.constant 3 : i32
      %588 = arith.muli %587, %c3_i32_392 : i32
      %c0_i32_393 = arith.constant 0 : i32
      %589 = arith.addi %588, %c0_i32_393 : i32
      %590 = arith.index_cast %589 : i32 to index
      %591 = memref.load %arg6[%590] : memref<288xf32, #tpu.memory_space<smem>>
      %c4_394 = arith.constant 4 : index
      %c2_395 = arith.constant 2 : index
      %c0_396 = arith.constant 0 : index
      %592 = vector.load %arg12[%c4_394, %c2_395, %c0_396] : memref<8x72x102xf32, #tpu.memory_space<vmem>>, vector<1x70x100xf32>
      %593 = vector.shape_cast %592 : vector<1x70x100xf32> to vector<70x100xf32>
      %594 = vector.broadcast %591 : f32 to vector<70x100xf32>
      %595 = arith.mulf %594, %593 : vector<70x100xf32>
      %596 = arith.addf %583, %595 : vector<70x100xf32>
      %c8_i32_397 = arith.constant 8 : i32
      %597 = arith.muli %arg13, %c8_i32_397 : i32
      %c4_i32_398 = arith.constant 4 : i32
      %598 = arith.addi %597, %c4_i32_398 : i32
      %c3_i32_399 = arith.constant 3 : i32
      %599 = arith.muli %598, %c3_i32_399 : i32
      %c2_i32_400 = arith.constant 2 : i32
      %600 = arith.addi %599, %c2_i32_400 : i32
      %c3_i32_401 = arith.constant 3 : i32
      %601 = arith.muli %600, %c3_i32_401 : i32
      %c1_i32_402 = arith.constant 1 : i32
      %602 = arith.addi %601, %c1_i32_402 : i32
      %603 = arith.index_cast %602 : i32 to index
      %604 = memref.load %arg6[%603] : memref<288xf32, #tpu.memory_space<smem>>
      %c4_403 = arith.constant 4 : index
      %c2_404 = arith.constant 2 : index
      %c1_405 = arith.constant 1 : index
      %605 = vector.load %arg12[%c4_403, %c2_404, %c1_405] : memref<8x72x102xf32, #tpu.memory_space<vmem>>, vector<1x70x100xf32>
      %606 = vector.shape_cast %605 : vector<1x70x100xf32> to vector<70x100xf32>
      %607 = vector.broadcast %604 : f32 to vector<70x100xf32>
      %608 = arith.mulf %607, %606 : vector<70x100xf32>
      %609 = arith.addf %596, %608 : vector<70x100xf32>
      %c8_i32_406 = arith.constant 8 : i32
      %610 = arith.muli %arg13, %c8_i32_406 : i32
      %c4_i32_407 = arith.constant 4 : i32
      %611 = arith.addi %610, %c4_i32_407 : i32
      %c3_i32_408 = arith.constant 3 : i32
      %612 = arith.muli %611, %c3_i32_408 : i32
      %c2_i32_409 = arith.constant 2 : i32
      %613 = arith.addi %612, %c2_i32_409 : i32
      %c3_i32_410 = arith.constant 3 : i32
      %614 = arith.muli %613, %c3_i32_410 : i32
      %c2_i32_411 = arith.constant 2 : i32
      %615 = arith.addi %614, %c2_i32_411 : i32
      %616 = arith.index_cast %615 : i32 to index
      %617 = memref.load %arg6[%616] : memref<288xf32, #tpu.memory_space<smem>>
      %c4_412 = arith.constant 4 : index
      %c2_413 = arith.constant 2 : index
      %c2_414 = arith.constant 2 : index
      %618 = vector.load %arg12[%c4_412, %c2_413, %c2_414] : memref<8x72x102xf32, #tpu.memory_space<vmem>>, vector<1x70x100xf32>
      %619 = vector.shape_cast %618 : vector<1x70x100xf32> to vector<70x100xf32>
      %620 = vector.broadcast %617 : f32 to vector<70x100xf32>
      %621 = arith.mulf %620, %619 : vector<70x100xf32>
      %622 = arith.addf %609, %621 : vector<70x100xf32>
      %c8_i32_415 = arith.constant 8 : i32
      %623 = arith.muli %arg13, %c8_i32_415 : i32
      %c5_i32 = arith.constant 5 : i32
      %624 = arith.addi %623, %c5_i32 : i32
      %c3_i32_416 = arith.constant 3 : i32
      %625 = arith.muli %624, %c3_i32_416 : i32
      %c0_i32_417 = arith.constant 0 : i32
      %626 = arith.addi %625, %c0_i32_417 : i32
      %c3_i32_418 = arith.constant 3 : i32
      %627 = arith.muli %626, %c3_i32_418 : i32
      %c0_i32_419 = arith.constant 0 : i32
      %628 = arith.addi %627, %c0_i32_419 : i32
      %629 = arith.index_cast %628 : i32 to index
      %630 = memref.load %arg6[%629] : memref<288xf32, #tpu.memory_space<smem>>
      %c5 = arith.constant 5 : index
      %c0_420 = arith.constant 0 : index
      %c0_421 = arith.constant 0 : index
      %631 = vector.load %arg12[%c5, %c0_420, %c0_421] : memref<8x72x102xf32, #tpu.memory_space<vmem>>, vector<1x70x100xf32>
      %632 = vector.shape_cast %631 : vector<1x70x100xf32> to vector<70x100xf32>
      %633 = vector.broadcast %630 : f32 to vector<70x100xf32>
      %634 = arith.mulf %633, %632 : vector<70x100xf32>
      %635 = arith.addf %622, %634 : vector<70x100xf32>
      %c8_i32_422 = arith.constant 8 : i32
      %636 = arith.muli %arg13, %c8_i32_422 : i32
      %c5_i32_423 = arith.constant 5 : i32
      %637 = arith.addi %636, %c5_i32_423 : i32
      %c3_i32_424 = arith.constant 3 : i32
      %638 = arith.muli %637, %c3_i32_424 : i32
      %c0_i32_425 = arith.constant 0 : i32
      %639 = arith.addi %638, %c0_i32_425 : i32
      %c3_i32_426 = arith.constant 3 : i32
      %640 = arith.muli %639, %c3_i32_426 : i32
      %c1_i32_427 = arith.constant 1 : i32
      %641 = arith.addi %640, %c1_i32_427 : i32
      %642 = arith.index_cast %641 : i32 to index
      %643 = memref.load %arg6[%642] : memref<288xf32, #tpu.memory_space<smem>>
      %c5_428 = arith.constant 5 : index
      %c0_429 = arith.constant 0 : index
      %c1_430 = arith.constant 1 : index
      %644 = vector.load %arg12[%c5_428, %c0_429, %c1_430] : memref<8x72x102xf32, #tpu.memory_space<vmem>>, vector<1x70x100xf32>
      %645 = vector.shape_cast %644 : vector<1x70x100xf32> to vector<70x100xf32>
      %646 = vector.broadcast %643 : f32 to vector<70x100xf32>
      %647 = arith.mulf %646, %645 : vector<70x100xf32>
      %648 = arith.addf %635, %647 : vector<70x100xf32>
      %c8_i32_431 = arith.constant 8 : i32
      %649 = arith.muli %arg13, %c8_i32_431 : i32
      %c5_i32_432 = arith.constant 5 : i32
      %650 = arith.addi %649, %c5_i32_432 : i32
      %c3_i32_433 = arith.constant 3 : i32
      %651 = arith.muli %650, %c3_i32_433 : i32
      %c0_i32_434 = arith.constant 0 : i32
      %652 = arith.addi %651, %c0_i32_434 : i32
      %c3_i32_435 = arith.constant 3 : i32
      %653 = arith.muli %652, %c3_i32_435 : i32
      %c2_i32_436 = arith.constant 2 : i32
      %654 = arith.addi %653, %c2_i32_436 : i32
      %655 = arith.index_cast %654 : i32 to index
      %656 = memref.load %arg6[%655] : memref<288xf32, #tpu.memory_space<smem>>
      %c5_437 = arith.constant 5 : index
      %c0_438 = arith.constant 0 : index
      %c2_439 = arith.constant 2 : index
      %657 = vector.load %arg12[%c5_437, %c0_438, %c2_439] : memref<8x72x102xf32, #tpu.memory_space<vmem>>, vector<1x70x100xf32>
      %658 = vector.shape_cast %657 : vector<1x70x100xf32> to vector<70x100xf32>
      %659 = vector.broadcast %656 : f32 to vector<70x100xf32>
      %660 = arith.mulf %659, %658 : vector<70x100xf32>
      %661 = arith.addf %648, %660 : vector<70x100xf32>
      %c8_i32_440 = arith.constant 8 : i32
      %662 = arith.muli %arg13, %c8_i32_440 : i32
      %c5_i32_441 = arith.constant 5 : i32
      %663 = arith.addi %662, %c5_i32_441 : i32
      %c3_i32_442 = arith.constant 3 : i32
      %664 = arith.muli %663, %c3_i32_442 : i32
      %c1_i32_443 = arith.constant 1 : i32
      %665 = arith.addi %664, %c1_i32_443 : i32
      %c3_i32_444 = arith.constant 3 : i32
      %666 = arith.muli %665, %c3_i32_444 : i32
      %c0_i32_445 = arith.constant 0 : i32
      %667 = arith.addi %666, %c0_i32_445 : i32
      %668 = arith.index_cast %667 : i32 to index
      %669 = memref.load %arg6[%668] : memref<288xf32, #tpu.memory_space<smem>>
      %c5_446 = arith.constant 5 : index
      %c1_447 = arith.constant 1 : index
      %c0_448 = arith.constant 0 : index
      %670 = vector.load %arg12[%c5_446, %c1_447, %c0_448] : memref<8x72x102xf32, #tpu.memory_space<vmem>>, vector<1x70x100xf32>
      %671 = vector.shape_cast %670 : vector<1x70x100xf32> to vector<70x100xf32>
      %672 = vector.broadcast %669 : f32 to vector<70x100xf32>
      %673 = arith.mulf %672, %671 : vector<70x100xf32>
      %674 = arith.addf %661, %673 : vector<70x100xf32>
      %c8_i32_449 = arith.constant 8 : i32
      %675 = arith.muli %arg13, %c8_i32_449 : i32
      %c5_i32_450 = arith.constant 5 : i32
      %676 = arith.addi %675, %c5_i32_450 : i32
      %c3_i32_451 = arith.constant 3 : i32
      %677 = arith.muli %676, %c3_i32_451 : i32
      %c1_i32_452 = arith.constant 1 : i32
      %678 = arith.addi %677, %c1_i32_452 : i32
      %c3_i32_453 = arith.constant 3 : i32
      %679 = arith.muli %678, %c3_i32_453 : i32
      %c1_i32_454 = arith.constant 1 : i32
      %680 = arith.addi %679, %c1_i32_454 : i32
      %681 = arith.index_cast %680 : i32 to index
      %682 = memref.load %arg6[%681] : memref<288xf32, #tpu.memory_space<smem>>
      %c5_455 = arith.constant 5 : index
      %c1_456 = arith.constant 1 : index
      %c1_457 = arith.constant 1 : index
      %683 = vector.load %arg12[%c5_455, %c1_456, %c1_457] : memref<8x72x102xf32, #tpu.memory_space<vmem>>, vector<1x70x100xf32>
      %684 = vector.shape_cast %683 : vector<1x70x100xf32> to vector<70x100xf32>
      %685 = vector.broadcast %682 : f32 to vector<70x100xf32>
      %686 = arith.mulf %685, %684 : vector<70x100xf32>
      %687 = arith.addf %674, %686 : vector<70x100xf32>
      %c8_i32_458 = arith.constant 8 : i32
      %688 = arith.muli %arg13, %c8_i32_458 : i32
      %c5_i32_459 = arith.constant 5 : i32
      %689 = arith.addi %688, %c5_i32_459 : i32
      %c3_i32_460 = arith.constant 3 : i32
      %690 = arith.muli %689, %c3_i32_460 : i32
      %c1_i32_461 = arith.constant 1 : i32
      %691 = arith.addi %690, %c1_i32_461 : i32
      %c3_i32_462 = arith.constant 3 : i32
      %692 = arith.muli %691, %c3_i32_462 : i32
      %c2_i32_463 = arith.constant 2 : i32
      %693 = arith.addi %692, %c2_i32_463 : i32
      %694 = arith.index_cast %693 : i32 to index
      %695 = memref.load %arg6[%694] : memref<288xf32, #tpu.memory_space<smem>>
      %c5_464 = arith.constant 5 : index
      %c1_465 = arith.constant 1 : index
      %c2_466 = arith.constant 2 : index
      %696 = vector.load %arg12[%c5_464, %c1_465, %c2_466] : memref<8x72x102xf32, #tpu.memory_space<vmem>>, vector<1x70x100xf32>
      %697 = vector.shape_cast %696 : vector<1x70x100xf32> to vector<70x100xf32>
      %698 = vector.broadcast %695 : f32 to vector<70x100xf32>
      %699 = arith.mulf %698, %697 : vector<70x100xf32>
      %700 = arith.addf %687, %699 : vector<70x100xf32>
      %c8_i32_467 = arith.constant 8 : i32
      %701 = arith.muli %arg13, %c8_i32_467 : i32
      %c5_i32_468 = arith.constant 5 : i32
      %702 = arith.addi %701, %c5_i32_468 : i32
      %c3_i32_469 = arith.constant 3 : i32
      %703 = arith.muli %702, %c3_i32_469 : i32
      %c2_i32_470 = arith.constant 2 : i32
      %704 = arith.addi %703, %c2_i32_470 : i32
      %c3_i32_471 = arith.constant 3 : i32
      %705 = arith.muli %704, %c3_i32_471 : i32
      %c0_i32_472 = arith.constant 0 : i32
      %706 = arith.addi %705, %c0_i32_472 : i32
      %707 = arith.index_cast %706 : i32 to index
      %708 = memref.load %arg6[%707] : memref<288xf32, #tpu.memory_space<smem>>
      %c5_473 = arith.constant 5 : index
      %c2_474 = arith.constant 2 : index
      %c0_475 = arith.constant 0 : index
      %709 = vector.load %arg12[%c5_473, %c2_474, %c0_475] : memref<8x72x102xf32, #tpu.memory_space<vmem>>, vector<1x70x100xf32>
      %710 = vector.shape_cast %709 : vector<1x70x100xf32> to vector<70x100xf32>
      %711 = vector.broadcast %708 : f32 to vector<70x100xf32>
      %712 = arith.mulf %711, %710 : vector<70x100xf32>
      %713 = arith.addf %700, %712 : vector<70x100xf32>
      %c8_i32_476 = arith.constant 8 : i32
      %714 = arith.muli %arg13, %c8_i32_476 : i32
      %c5_i32_477 = arith.constant 5 : i32
      %715 = arith.addi %714, %c5_i32_477 : i32
      %c3_i32_478 = arith.constant 3 : i32
      %716 = arith.muli %715, %c3_i32_478 : i32
      %c2_i32_479 = arith.constant 2 : i32
      %717 = arith.addi %716, %c2_i32_479 : i32
      %c3_i32_480 = arith.constant 3 : i32
      %718 = arith.muli %717, %c3_i32_480 : i32
      %c1_i32_481 = arith.constant 1 : i32
      %719 = arith.addi %718, %c1_i32_481 : i32
      %720 = arith.index_cast %719 : i32 to index
      %721 = memref.load %arg6[%720] : memref<288xf32, #tpu.memory_space<smem>>
      %c5_482 = arith.constant 5 : index
      %c2_483 = arith.constant 2 : index
      %c1_484 = arith.constant 1 : index
      %722 = vector.load %arg12[%c5_482, %c2_483, %c1_484] : memref<8x72x102xf32, #tpu.memory_space<vmem>>, vector<1x70x100xf32>
      %723 = vector.shape_cast %722 : vector<1x70x100xf32> to vector<70x100xf32>
      %724 = vector.broadcast %721 : f32 to vector<70x100xf32>
      %725 = arith.mulf %724, %723 : vector<70x100xf32>
      %726 = arith.addf %713, %725 : vector<70x100xf32>
      %c8_i32_485 = arith.constant 8 : i32
      %727 = arith.muli %arg13, %c8_i32_485 : i32
      %c5_i32_486 = arith.constant 5 : i32
      %728 = arith.addi %727, %c5_i32_486 : i32
      %c3_i32_487 = arith.constant 3 : i32
      %729 = arith.muli %728, %c3_i32_487 : i32
      %c2_i32_488 = arith.constant 2 : i32
      %730 = arith.addi %729, %c2_i32_488 : i32
      %c3_i32_489 = arith.constant 3 : i32
      %731 = arith.muli %730, %c3_i32_489 : i32
      %c2_i32_490 = arith.constant 2 : i32
      %732 = arith.addi %731, %c2_i32_490 : i32
      %733 = arith.index_cast %732 : i32 to index
      %734 = memref.load %arg6[%733] : memref<288xf32, #tpu.memory_space<smem>>
      %c5_491 = arith.constant 5 : index
      %c2_492 = arith.constant 2 : index
      %c2_493 = arith.constant 2 : index
      %735 = vector.load %arg12[%c5_491, %c2_492, %c2_493] : memref<8x72x102xf32, #tpu.memory_space<vmem>>, vector<1x70x100xf32>
      %736 = vector.shape_cast %735 : vector<1x70x100xf32> to vector<70x100xf32>
      %737 = vector.broadcast %734 : f32 to vector<70x100xf32>
      %738 = arith.mulf %737, %736 : vector<70x100xf32>
      %739 = arith.addf %726, %738 : vector<70x100xf32>
      %c8_i32_494 = arith.constant 8 : i32
      %740 = arith.muli %arg13, %c8_i32_494 : i32
      %c6_i32 = arith.constant 6 : i32
      %741 = arith.addi %740, %c6_i32 : i32
      %c3_i32_495 = arith.constant 3 : i32
      %742 = arith.muli %741, %c3_i32_495 : i32
      %c0_i32_496 = arith.constant 0 : i32
      %743 = arith.addi %742, %c0_i32_496 : i32
      %c3_i32_497 = arith.constant 3 : i32
      %744 = arith.muli %743, %c3_i32_497 : i32
      %c0_i32_498 = arith.constant 0 : i32
      %745 = arith.addi %744, %c0_i32_498 : i32
      %746 = arith.index_cast %745 : i32 to index
      %747 = memref.load %arg6[%746] : memref<288xf32, #tpu.memory_space<smem>>
      %c6 = arith.constant 6 : index
      %c0_499 = arith.constant 0 : index
      %c0_500 = arith.constant 0 : index
      %748 = vector.load %arg12[%c6, %c0_499, %c0_500] : memref<8x72x102xf32, #tpu.memory_space<vmem>>, vector<1x70x100xf32>
      %749 = vector.shape_cast %748 : vector<1x70x100xf32> to vector<70x100xf32>
      %750 = vector.broadcast %747 : f32 to vector<70x100xf32>
      %751 = arith.mulf %750, %749 : vector<70x100xf32>
      %752 = arith.addf %739, %751 : vector<70x100xf32>
      %c8_i32_501 = arith.constant 8 : i32
      %753 = arith.muli %arg13, %c8_i32_501 : i32
      %c6_i32_502 = arith.constant 6 : i32
      %754 = arith.addi %753, %c6_i32_502 : i32
      %c3_i32_503 = arith.constant 3 : i32
      %755 = arith.muli %754, %c3_i32_503 : i32
      %c0_i32_504 = arith.constant 0 : i32
      %756 = arith.addi %755, %c0_i32_504 : i32
      %c3_i32_505 = arith.constant 3 : i32
      %757 = arith.muli %756, %c3_i32_505 : i32
      %c1_i32_506 = arith.constant 1 : i32
      %758 = arith.addi %757, %c1_i32_506 : i32
      %759 = arith.index_cast %758 : i32 to index
      %760 = memref.load %arg6[%759] : memref<288xf32, #tpu.memory_space<smem>>
      %c6_507 = arith.constant 6 : index
      %c0_508 = arith.constant 0 : index
      %c1_509 = arith.constant 1 : index
      %761 = vector.load %arg12[%c6_507, %c0_508, %c1_509] : memref<8x72x102xf32, #tpu.memory_space<vmem>>, vector<1x70x100xf32>
      %762 = vector.shape_cast %761 : vector<1x70x100xf32> to vector<70x100xf32>
      %763 = vector.broadcast %760 : f32 to vector<70x100xf32>
      %764 = arith.mulf %763, %762 : vector<70x100xf32>
      %765 = arith.addf %752, %764 : vector<70x100xf32>
      %c8_i32_510 = arith.constant 8 : i32
      %766 = arith.muli %arg13, %c8_i32_510 : i32
      %c6_i32_511 = arith.constant 6 : i32
      %767 = arith.addi %766, %c6_i32_511 : i32
      %c3_i32_512 = arith.constant 3 : i32
      %768 = arith.muli %767, %c3_i32_512 : i32
      %c0_i32_513 = arith.constant 0 : i32
      %769 = arith.addi %768, %c0_i32_513 : i32
      %c3_i32_514 = arith.constant 3 : i32
      %770 = arith.muli %769, %c3_i32_514 : i32
      %c2_i32_515 = arith.constant 2 : i32
      %771 = arith.addi %770, %c2_i32_515 : i32
      %772 = arith.index_cast %771 : i32 to index
      %773 = memref.load %arg6[%772] : memref<288xf32, #tpu.memory_space<smem>>
      %c6_516 = arith.constant 6 : index
      %c0_517 = arith.constant 0 : index
      %c2_518 = arith.constant 2 : index
      %774 = vector.load %arg12[%c6_516, %c0_517, %c2_518] : memref<8x72x102xf32, #tpu.memory_space<vmem>>, vector<1x70x100xf32>
      %775 = vector.shape_cast %774 : vector<1x70x100xf32> to vector<70x100xf32>
      %776 = vector.broadcast %773 : f32 to vector<70x100xf32>
      %777 = arith.mulf %776, %775 : vector<70x100xf32>
      %778 = arith.addf %765, %777 : vector<70x100xf32>
      %c8_i32_519 = arith.constant 8 : i32
      %779 = arith.muli %arg13, %c8_i32_519 : i32
      %c6_i32_520 = arith.constant 6 : i32
      %780 = arith.addi %779, %c6_i32_520 : i32
      %c3_i32_521 = arith.constant 3 : i32
      %781 = arith.muli %780, %c3_i32_521 : i32
      %c1_i32_522 = arith.constant 1 : i32
      %782 = arith.addi %781, %c1_i32_522 : i32
      %c3_i32_523 = arith.constant 3 : i32
      %783 = arith.muli %782, %c3_i32_523 : i32
      %c0_i32_524 = arith.constant 0 : i32
      %784 = arith.addi %783, %c0_i32_524 : i32
      %785 = arith.index_cast %784 : i32 to index
      %786 = memref.load %arg6[%785] : memref<288xf32, #tpu.memory_space<smem>>
      %c6_525 = arith.constant 6 : index
      %c1_526 = arith.constant 1 : index
      %c0_527 = arith.constant 0 : index
      %787 = vector.load %arg12[%c6_525, %c1_526, %c0_527] : memref<8x72x102xf32, #tpu.memory_space<vmem>>, vector<1x70x100xf32>
      %788 = vector.shape_cast %787 : vector<1x70x100xf32> to vector<70x100xf32>
      %789 = vector.broadcast %786 : f32 to vector<70x100xf32>
      %790 = arith.mulf %789, %788 : vector<70x100xf32>
      %791 = arith.addf %778, %790 : vector<70x100xf32>
      %c8_i32_528 = arith.constant 8 : i32
      %792 = arith.muli %arg13, %c8_i32_528 : i32
      %c6_i32_529 = arith.constant 6 : i32
      %793 = arith.addi %792, %c6_i32_529 : i32
      %c3_i32_530 = arith.constant 3 : i32
      %794 = arith.muli %793, %c3_i32_530 : i32
      %c1_i32_531 = arith.constant 1 : i32
      %795 = arith.addi %794, %c1_i32_531 : i32
      %c3_i32_532 = arith.constant 3 : i32
      %796 = arith.muli %795, %c3_i32_532 : i32
      %c1_i32_533 = arith.constant 1 : i32
      %797 = arith.addi %796, %c1_i32_533 : i32
      %798 = arith.index_cast %797 : i32 to index
      %799 = memref.load %arg6[%798] : memref<288xf32, #tpu.memory_space<smem>>
      %c6_534 = arith.constant 6 : index
      %c1_535 = arith.constant 1 : index
      %c1_536 = arith.constant 1 : index
      %800 = vector.load %arg12[%c6_534, %c1_535, %c1_536] : memref<8x72x102xf32, #tpu.memory_space<vmem>>, vector<1x70x100xf32>
      %801 = vector.shape_cast %800 : vector<1x70x100xf32> to vector<70x100xf32>
      %802 = vector.broadcast %799 : f32 to vector<70x100xf32>
      %803 = arith.mulf %802, %801 : vector<70x100xf32>
      %804 = arith.addf %791, %803 : vector<70x100xf32>
      %c8_i32_537 = arith.constant 8 : i32
      %805 = arith.muli %arg13, %c8_i32_537 : i32
      %c6_i32_538 = arith.constant 6 : i32
      %806 = arith.addi %805, %c6_i32_538 : i32
      %c3_i32_539 = arith.constant 3 : i32
      %807 = arith.muli %806, %c3_i32_539 : i32
      %c1_i32_540 = arith.constant 1 : i32
      %808 = arith.addi %807, %c1_i32_540 : i32
      %c3_i32_541 = arith.constant 3 : i32
      %809 = arith.muli %808, %c3_i32_541 : i32
      %c2_i32_542 = arith.constant 2 : i32
      %810 = arith.addi %809, %c2_i32_542 : i32
      %811 = arith.index_cast %810 : i32 to index
      %812 = memref.load %arg6[%811] : memref<288xf32, #tpu.memory_space<smem>>
      %c6_543 = arith.constant 6 : index
      %c1_544 = arith.constant 1 : index
      %c2_545 = arith.constant 2 : index
      %813 = vector.load %arg12[%c6_543, %c1_544, %c2_545] : memref<8x72x102xf32, #tpu.memory_space<vmem>>, vector<1x70x100xf32>
      %814 = vector.shape_cast %813 : vector<1x70x100xf32> to vector<70x100xf32>
      %815 = vector.broadcast %812 : f32 to vector<70x100xf32>
      %816 = arith.mulf %815, %814 : vector<70x100xf32>
      %817 = arith.addf %804, %816 : vector<70x100xf32>
      %c8_i32_546 = arith.constant 8 : i32
      %818 = arith.muli %arg13, %c8_i32_546 : i32
      %c6_i32_547 = arith.constant 6 : i32
      %819 = arith.addi %818, %c6_i32_547 : i32
      %c3_i32_548 = arith.constant 3 : i32
      %820 = arith.muli %819, %c3_i32_548 : i32
      %c2_i32_549 = arith.constant 2 : i32
      %821 = arith.addi %820, %c2_i32_549 : i32
      %c3_i32_550 = arith.constant 3 : i32
      %822 = arith.muli %821, %c3_i32_550 : i32
      %c0_i32_551 = arith.constant 0 : i32
      %823 = arith.addi %822, %c0_i32_551 : i32
      %824 = arith.index_cast %823 : i32 to index
      %825 = memref.load %arg6[%824] : memref<288xf32, #tpu.memory_space<smem>>
      %c6_552 = arith.constant 6 : index
      %c2_553 = arith.constant 2 : index
      %c0_554 = arith.constant 0 : index
      %826 = vector.load %arg12[%c6_552, %c2_553, %c0_554] : memref<8x72x102xf32, #tpu.memory_space<vmem>>, vector<1x70x100xf32>
      %827 = vector.shape_cast %826 : vector<1x70x100xf32> to vector<70x100xf32>
      %828 = vector.broadcast %825 : f32 to vector<70x100xf32>
      %829 = arith.mulf %828, %827 : vector<70x100xf32>
      %830 = arith.addf %817, %829 : vector<70x100xf32>
      %c8_i32_555 = arith.constant 8 : i32
      %831 = arith.muli %arg13, %c8_i32_555 : i32
      %c6_i32_556 = arith.constant 6 : i32
      %832 = arith.addi %831, %c6_i32_556 : i32
      %c3_i32_557 = arith.constant 3 : i32
      %833 = arith.muli %832, %c3_i32_557 : i32
      %c2_i32_558 = arith.constant 2 : i32
      %834 = arith.addi %833, %c2_i32_558 : i32
      %c3_i32_559 = arith.constant 3 : i32
      %835 = arith.muli %834, %c3_i32_559 : i32
      %c1_i32_560 = arith.constant 1 : i32
      %836 = arith.addi %835, %c1_i32_560 : i32
      %837 = arith.index_cast %836 : i32 to index
      %838 = memref.load %arg6[%837] : memref<288xf32, #tpu.memory_space<smem>>
      %c6_561 = arith.constant 6 : index
      %c2_562 = arith.constant 2 : index
      %c1_563 = arith.constant 1 : index
      %839 = vector.load %arg12[%c6_561, %c2_562, %c1_563] : memref<8x72x102xf32, #tpu.memory_space<vmem>>, vector<1x70x100xf32>
      %840 = vector.shape_cast %839 : vector<1x70x100xf32> to vector<70x100xf32>
      %841 = vector.broadcast %838 : f32 to vector<70x100xf32>
      %842 = arith.mulf %841, %840 : vector<70x100xf32>
      %843 = arith.addf %830, %842 : vector<70x100xf32>
      %c8_i32_564 = arith.constant 8 : i32
      %844 = arith.muli %arg13, %c8_i32_564 : i32
      %c6_i32_565 = arith.constant 6 : i32
      %845 = arith.addi %844, %c6_i32_565 : i32
      %c3_i32_566 = arith.constant 3 : i32
      %846 = arith.muli %845, %c3_i32_566 : i32
      %c2_i32_567 = arith.constant 2 : i32
      %847 = arith.addi %846, %c2_i32_567 : i32
      %c3_i32_568 = arith.constant 3 : i32
      %848 = arith.muli %847, %c3_i32_568 : i32
      %c2_i32_569 = arith.constant 2 : i32
      %849 = arith.addi %848, %c2_i32_569 : i32
      %850 = arith.index_cast %849 : i32 to index
      %851 = memref.load %arg6[%850] : memref<288xf32, #tpu.memory_space<smem>>
      %c6_570 = arith.constant 6 : index
      %c2_571 = arith.constant 2 : index
      %c2_572 = arith.constant 2 : index
      %852 = vector.load %arg12[%c6_570, %c2_571, %c2_572] : memref<8x72x102xf32, #tpu.memory_space<vmem>>, vector<1x70x100xf32>
      %853 = vector.shape_cast %852 : vector<1x70x100xf32> to vector<70x100xf32>
      %854 = vector.broadcast %851 : f32 to vector<70x100xf32>
      %855 = arith.mulf %854, %853 : vector<70x100xf32>
      %856 = arith.addf %843, %855 : vector<70x100xf32>
      %c8_i32_573 = arith.constant 8 : i32
      %857 = arith.muli %arg13, %c8_i32_573 : i32
      %c7_i32 = arith.constant 7 : i32
      %858 = arith.addi %857, %c7_i32 : i32
      %c3_i32_574 = arith.constant 3 : i32
      %859 = arith.muli %858, %c3_i32_574 : i32
      %c0_i32_575 = arith.constant 0 : i32
      %860 = arith.addi %859, %c0_i32_575 : i32
      %c3_i32_576 = arith.constant 3 : i32
      %861 = arith.muli %860, %c3_i32_576 : i32
      %c0_i32_577 = arith.constant 0 : i32
      %862 = arith.addi %861, %c0_i32_577 : i32
      %863 = arith.index_cast %862 : i32 to index
      %864 = memref.load %arg6[%863] : memref<288xf32, #tpu.memory_space<smem>>
      %c7 = arith.constant 7 : index
      %c0_578 = arith.constant 0 : index
      %c0_579 = arith.constant 0 : index
      %865 = vector.load %arg12[%c7, %c0_578, %c0_579] : memref<8x72x102xf32, #tpu.memory_space<vmem>>, vector<1x70x100xf32>
      %866 = vector.shape_cast %865 : vector<1x70x100xf32> to vector<70x100xf32>
      %867 = vector.broadcast %864 : f32 to vector<70x100xf32>
      %868 = arith.mulf %867, %866 : vector<70x100xf32>
      %869 = arith.addf %856, %868 : vector<70x100xf32>
      %c8_i32_580 = arith.constant 8 : i32
      %870 = arith.muli %arg13, %c8_i32_580 : i32
      %c7_i32_581 = arith.constant 7 : i32
      %871 = arith.addi %870, %c7_i32_581 : i32
      %c3_i32_582 = arith.constant 3 : i32
      %872 = arith.muli %871, %c3_i32_582 : i32
      %c0_i32_583 = arith.constant 0 : i32
      %873 = arith.addi %872, %c0_i32_583 : i32
      %c3_i32_584 = arith.constant 3 : i32
      %874 = arith.muli %873, %c3_i32_584 : i32
      %c1_i32_585 = arith.constant 1 : i32
      %875 = arith.addi %874, %c1_i32_585 : i32
      %876 = arith.index_cast %875 : i32 to index
      %877 = memref.load %arg6[%876] : memref<288xf32, #tpu.memory_space<smem>>
      %c7_586 = arith.constant 7 : index
      %c0_587 = arith.constant 0 : index
      %c1_588 = arith.constant 1 : index
      %878 = vector.load %arg12[%c7_586, %c0_587, %c1_588] : memref<8x72x102xf32, #tpu.memory_space<vmem>>, vector<1x70x100xf32>
      %879 = vector.shape_cast %878 : vector<1x70x100xf32> to vector<70x100xf32>
      %880 = vector.broadcast %877 : f32 to vector<70x100xf32>
      %881 = arith.mulf %880, %879 : vector<70x100xf32>
      %882 = arith.addf %869, %881 : vector<70x100xf32>
      %c8_i32_589 = arith.constant 8 : i32
      %883 = arith.muli %arg13, %c8_i32_589 : i32
      %c7_i32_590 = arith.constant 7 : i32
      %884 = arith.addi %883, %c7_i32_590 : i32
      %c3_i32_591 = arith.constant 3 : i32
      %885 = arith.muli %884, %c3_i32_591 : i32
      %c0_i32_592 = arith.constant 0 : i32
      %886 = arith.addi %885, %c0_i32_592 : i32
      %c3_i32_593 = arith.constant 3 : i32
      %887 = arith.muli %886, %c3_i32_593 : i32
      %c2_i32_594 = arith.constant 2 : i32
      %888 = arith.addi %887, %c2_i32_594 : i32
      %889 = arith.index_cast %888 : i32 to index
      %890 = memref.load %arg6[%889] : memref<288xf32, #tpu.memory_space<smem>>
      %c7_595 = arith.constant 7 : index
      %c0_596 = arith.constant 0 : index
      %c2_597 = arith.constant 2 : index
      %891 = vector.load %arg12[%c7_595, %c0_596, %c2_597] : memref<8x72x102xf32, #tpu.memory_space<vmem>>, vector<1x70x100xf32>
      %892 = vector.shape_cast %891 : vector<1x70x100xf32> to vector<70x100xf32>
      %893 = vector.broadcast %890 : f32 to vector<70x100xf32>
      %894 = arith.mulf %893, %892 : vector<70x100xf32>
      %895 = arith.addf %882, %894 : vector<70x100xf32>
      %c8_i32_598 = arith.constant 8 : i32
      %896 = arith.muli %arg13, %c8_i32_598 : i32
      %c7_i32_599 = arith.constant 7 : i32
      %897 = arith.addi %896, %c7_i32_599 : i32
      %c3_i32_600 = arith.constant 3 : i32
      %898 = arith.muli %897, %c3_i32_600 : i32
      %c1_i32_601 = arith.constant 1 : i32
      %899 = arith.addi %898, %c1_i32_601 : i32
      %c3_i32_602 = arith.constant 3 : i32
      %900 = arith.muli %899, %c3_i32_602 : i32
      %c0_i32_603 = arith.constant 0 : i32
      %901 = arith.addi %900, %c0_i32_603 : i32
      %902 = arith.index_cast %901 : i32 to index
      %903 = memref.load %arg6[%902] : memref<288xf32, #tpu.memory_space<smem>>
      %c7_604 = arith.constant 7 : index
      %c1_605 = arith.constant 1 : index
      %c0_606 = arith.constant 0 : index
      %904 = vector.load %arg12[%c7_604, %c1_605, %c0_606] : memref<8x72x102xf32, #tpu.memory_space<vmem>>, vector<1x70x100xf32>
      %905 = vector.shape_cast %904 : vector<1x70x100xf32> to vector<70x100xf32>
      %906 = vector.broadcast %903 : f32 to vector<70x100xf32>
      %907 = arith.mulf %906, %905 : vector<70x100xf32>
      %908 = arith.addf %895, %907 : vector<70x100xf32>
      %c8_i32_607 = arith.constant 8 : i32
      %909 = arith.muli %arg13, %c8_i32_607 : i32
      %c7_i32_608 = arith.constant 7 : i32
      %910 = arith.addi %909, %c7_i32_608 : i32
      %c3_i32_609 = arith.constant 3 : i32
      %911 = arith.muli %910, %c3_i32_609 : i32
      %c1_i32_610 = arith.constant 1 : i32
      %912 = arith.addi %911, %c1_i32_610 : i32
      %c3_i32_611 = arith.constant 3 : i32
      %913 = arith.muli %912, %c3_i32_611 : i32
      %c1_i32_612 = arith.constant 1 : i32
      %914 = arith.addi %913, %c1_i32_612 : i32
      %915 = arith.index_cast %914 : i32 to index
      %916 = memref.load %arg6[%915] : memref<288xf32, #tpu.memory_space<smem>>
      %c7_613 = arith.constant 7 : index
      %c1_614 = arith.constant 1 : index
      %c1_615 = arith.constant 1 : index
      %917 = vector.load %arg12[%c7_613, %c1_614, %c1_615] : memref<8x72x102xf32, #tpu.memory_space<vmem>>, vector<1x70x100xf32>
      %918 = vector.shape_cast %917 : vector<1x70x100xf32> to vector<70x100xf32>
      %919 = vector.broadcast %916 : f32 to vector<70x100xf32>
      %920 = arith.mulf %919, %918 : vector<70x100xf32>
      %921 = arith.addf %908, %920 : vector<70x100xf32>
      %c8_i32_616 = arith.constant 8 : i32
      %922 = arith.muli %arg13, %c8_i32_616 : i32
      %c7_i32_617 = arith.constant 7 : i32
      %923 = arith.addi %922, %c7_i32_617 : i32
      %c3_i32_618 = arith.constant 3 : i32
      %924 = arith.muli %923, %c3_i32_618 : i32
      %c1_i32_619 = arith.constant 1 : i32
      %925 = arith.addi %924, %c1_i32_619 : i32
      %c3_i32_620 = arith.constant 3 : i32
      %926 = arith.muli %925, %c3_i32_620 : i32
      %c2_i32_621 = arith.constant 2 : i32
      %927 = arith.addi %926, %c2_i32_621 : i32
      %928 = arith.index_cast %927 : i32 to index
      %929 = memref.load %arg6[%928] : memref<288xf32, #tpu.memory_space<smem>>
      %c7_622 = arith.constant 7 : index
      %c1_623 = arith.constant 1 : index
      %c2_624 = arith.constant 2 : index
      %930 = vector.load %arg12[%c7_622, %c1_623, %c2_624] : memref<8x72x102xf32, #tpu.memory_space<vmem>>, vector<1x70x100xf32>
      %931 = vector.shape_cast %930 : vector<1x70x100xf32> to vector<70x100xf32>
      %932 = vector.broadcast %929 : f32 to vector<70x100xf32>
      %933 = arith.mulf %932, %931 : vector<70x100xf32>
      %934 = arith.addf %921, %933 : vector<70x100xf32>
      %c8_i32_625 = arith.constant 8 : i32
      %935 = arith.muli %arg13, %c8_i32_625 : i32
      %c7_i32_626 = arith.constant 7 : i32
      %936 = arith.addi %935, %c7_i32_626 : i32
      %c3_i32_627 = arith.constant 3 : i32
      %937 = arith.muli %936, %c3_i32_627 : i32
      %c2_i32_628 = arith.constant 2 : i32
      %938 = arith.addi %937, %c2_i32_628 : i32
      %c3_i32_629 = arith.constant 3 : i32
      %939 = arith.muli %938, %c3_i32_629 : i32
      %c0_i32_630 = arith.constant 0 : i32
      %940 = arith.addi %939, %c0_i32_630 : i32
      %941 = arith.index_cast %940 : i32 to index
      %942 = memref.load %arg6[%941] : memref<288xf32, #tpu.memory_space<smem>>
      %c7_631 = arith.constant 7 : index
      %c2_632 = arith.constant 2 : index
      %c0_633 = arith.constant 0 : index
      %943 = vector.load %arg12[%c7_631, %c2_632, %c0_633] : memref<8x72x102xf32, #tpu.memory_space<vmem>>, vector<1x70x100xf32>
      %944 = vector.shape_cast %943 : vector<1x70x100xf32> to vector<70x100xf32>
      %945 = vector.broadcast %942 : f32 to vector<70x100xf32>
      %946 = arith.mulf %945, %944 : vector<70x100xf32>
      %947 = arith.addf %934, %946 : vector<70x100xf32>
      %c8_i32_634 = arith.constant 8 : i32
      %948 = arith.muli %arg13, %c8_i32_634 : i32
      %c7_i32_635 = arith.constant 7 : i32
      %949 = arith.addi %948, %c7_i32_635 : i32
      %c3_i32_636 = arith.constant 3 : i32
      %950 = arith.muli %949, %c3_i32_636 : i32
      %c2_i32_637 = arith.constant 2 : i32
      %951 = arith.addi %950, %c2_i32_637 : i32
      %c3_i32_638 = arith.constant 3 : i32
      %952 = arith.muli %951, %c3_i32_638 : i32
      %c1_i32_639 = arith.constant 1 : i32
      %953 = arith.addi %952, %c1_i32_639 : i32
      %954 = arith.index_cast %953 : i32 to index
      %955 = memref.load %arg6[%954] : memref<288xf32, #tpu.memory_space<smem>>
      %c7_640 = arith.constant 7 : index
      %c2_641 = arith.constant 2 : index
      %c1_642 = arith.constant 1 : index
      %956 = vector.load %arg12[%c7_640, %c2_641, %c1_642] : memref<8x72x102xf32, #tpu.memory_space<vmem>>, vector<1x70x100xf32>
      %957 = vector.shape_cast %956 : vector<1x70x100xf32> to vector<70x100xf32>
      %958 = vector.broadcast %955 : f32 to vector<70x100xf32>
      %959 = arith.mulf %958, %957 : vector<70x100xf32>
      %960 = arith.addf %947, %959 : vector<70x100xf32>
      %c8_i32_643 = arith.constant 8 : i32
      %961 = arith.muli %arg13, %c8_i32_643 : i32
      %c7_i32_644 = arith.constant 7 : i32
      %962 = arith.addi %961, %c7_i32_644 : i32
      %c3_i32_645 = arith.constant 3 : i32
      %963 = arith.muli %962, %c3_i32_645 : i32
      %c2_i32_646 = arith.constant 2 : i32
      %964 = arith.addi %963, %c2_i32_646 : i32
      %c3_i32_647 = arith.constant 3 : i32
      %965 = arith.muli %964, %c3_i32_647 : i32
      %c2_i32_648 = arith.constant 2 : i32
      %966 = arith.addi %965, %c2_i32_648 : i32
      %967 = arith.index_cast %966 : i32 to index
      %968 = memref.load %arg6[%967] : memref<288xf32, #tpu.memory_space<smem>>
      %c7_649 = arith.constant 7 : index
      %c2_650 = arith.constant 2 : index
      %c2_651 = arith.constant 2 : index
      %969 = vector.load %arg12[%c7_649, %c2_650, %c2_651] : memref<8x72x102xf32, #tpu.memory_space<vmem>>, vector<1x70x100xf32>
      %970 = vector.shape_cast %969 : vector<1x70x100xf32> to vector<70x100xf32>
      %971 = vector.broadcast %968 : f32 to vector<70x100xf32>
      %972 = arith.mulf %971, %970 : vector<70x100xf32>
      %973 = arith.addf %960, %972 : vector<70x100xf32>
      %cst = arith.constant 0.000000e+00 : f32
      %974 = vector.broadcast %cst : f32 to vector<70x100xf32>
      %975 = arith.maximumf %973, %974 : vector<70x100xf32>
      %c0_652 = arith.constant 0 : index
      %976 = arith.index_cast %arg13 : i32 to index
      %c0_653 = arith.constant 0 : index
      %c0_654 = arith.constant 0 : index
      %977 = vector.load %arg8[%c0_652, %976, %c0_653, %c0_654] : memref<10x4x70x100xf32, #tpu.memory_space<vmem>>, vector<1x1x70x100xf32>
      %978 = vector.shape_cast %977 : vector<1x1x70x100xf32> to vector<70x100xf32>
      %979 = arith.mulf %975, %978 : vector<70x100xf32>
      %cst_655 = arith.constant dense<0.000000e+00> : vector<70xf32>
      %980 = vector.multi_reduction <add>, %979, %cst_655 [1] : vector<70x100xf32> to vector<70xf32>
      %981 = vector.shape_cast %980 : vector<70xf32> to vector<70x1xf32>
      %cst_656 = arith.constant dense<0.000000e+00> : vector<1xf32>
      %982 = vector.multi_reduction <add>, %981, %cst_656 [0] : vector<70x1xf32> to vector<1xf32>
      %983 = vector.shape_cast %982 : vector<1xf32> to vector<1x1xf32>
      %c0_i32_657 = arith.constant 0 : i32
      %984 = vector.broadcast %c0_i32_657 : i32 to vector<1x10xi32>
      %985 = arith.cmpi eq, %28, %984 : vector<1x10xi32>
      %cst_658 = arith.constant 0.000000e+00 : f32
      %986 = vector.shape_cast %983 : vector<1x1xf32> to vector<1x1xf32>
      %987 = vector.broadcast %986 : vector<1x1xf32> to vector<1x10xf32>
      %988 = vector.broadcast %cst_658 : f32 to vector<1x10xf32>
      %989 = arith.select %985, %987, %988 : vector<1x10xi1>, vector<1x10xf32>
      %990 = arith.addf %arg14, %989 : vector<1x10xf32>
      %c1_659 = arith.constant 1 : index
      %991 = arith.index_cast %arg13 : i32 to index
      %c0_660 = arith.constant 0 : index
      %c0_661 = arith.constant 0 : index
      %992 = vector.load %arg8[%c1_659, %991, %c0_660, %c0_661] : memref<10x4x70x100xf32, #tpu.memory_space<vmem>>, vector<1x1x70x100xf32>
      %993 = vector.shape_cast %992 : vector<1x1x70x100xf32> to vector<70x100xf32>
      %994 = arith.mulf %975, %993 : vector<70x100xf32>
      %cst_662 = arith.constant dense<0.000000e+00> : vector<70xf32>
      %995 = vector.multi_reduction <add>, %994, %cst_662 [1] : vector<70x100xf32> to vector<70xf32>
      %996 = vector.shape_cast %995 : vector<70xf32> to vector<70x1xf32>
      %cst_663 = arith.constant dense<0.000000e+00> : vector<1xf32>
      %997 = vector.multi_reduction <add>, %996, %cst_663 [0] : vector<70x1xf32> to vector<1xf32>
      %998 = vector.shape_cast %997 : vector<1xf32> to vector<1x1xf32>
      %c1_i32_664 = arith.constant 1 : i32
      %999 = vector.broadcast %c1_i32_664 : i32 to vector<1x10xi32>
      %1000 = arith.cmpi eq, %28, %999 : vector<1x10xi32>
      %cst_665 = arith.constant 0.000000e+00 : f32
      %1001 = vector.shape_cast %998 : vector<1x1xf32> to vector<1x1xf32>
      %1002 = vector.broadcast %1001 : vector<1x1xf32> to vector<1x10xf32>
      %1003 = vector.broadcast %cst_665 : f32 to vector<1x10xf32>
      %1004 = arith.select %1000, %1002, %1003 : vector<1x10xi1>, vector<1x10xf32>
      %1005 = arith.addf %990, %1004 : vector<1x10xf32>
      %c2_666 = arith.constant 2 : index
      %1006 = arith.index_cast %arg13 : i32 to index
      %c0_667 = arith.constant 0 : index
      %c0_668 = arith.constant 0 : index
      %1007 = vector.load %arg8[%c2_666, %1006, %c0_667, %c0_668] : memref<10x4x70x100xf32, #tpu.memory_space<vmem>>, vector<1x1x70x100xf32>
      %1008 = vector.shape_cast %1007 : vector<1x1x70x100xf32> to vector<70x100xf32>
      %1009 = arith.mulf %975, %1008 : vector<70x100xf32>
      %cst_669 = arith.constant dense<0.000000e+00> : vector<70xf32>
      %1010 = vector.multi_reduction <add>, %1009, %cst_669 [1] : vector<70x100xf32> to vector<70xf32>
      %1011 = vector.shape_cast %1010 : vector<70xf32> to vector<70x1xf32>
      %cst_670 = arith.constant dense<0.000000e+00> : vector<1xf32>
      %1012 = vector.multi_reduction <add>, %1011, %cst_670 [0] : vector<70x1xf32> to vector<1xf32>
      %1013 = vector.shape_cast %1012 : vector<1xf32> to vector<1x1xf32>
      %c2_i32_671 = arith.constant 2 : i32
      %1014 = vector.broadcast %c2_i32_671 : i32 to vector<1x10xi32>
      %1015 = arith.cmpi eq, %28, %1014 : vector<1x10xi32>
      %cst_672 = arith.constant 0.000000e+00 : f32
      %1016 = vector.shape_cast %1013 : vector<1x1xf32> to vector<1x1xf32>
      %1017 = vector.broadcast %1016 : vector<1x1xf32> to vector<1x10xf32>
      %1018 = vector.broadcast %cst_672 : f32 to vector<1x10xf32>
      %1019 = arith.select %1015, %1017, %1018 : vector<1x10xi1>, vector<1x10xf32>
      %1020 = arith.addf %1005, %1019 : vector<1x10xf32>
      %c3_673 = arith.constant 3 : index
      %1021 = arith.index_cast %arg13 : i32 to index
      %c0_674 = arith.constant 0 : index
      %c0_675 = arith.constant 0 : index
      %1022 = vector.load %arg8[%c3_673, %1021, %c0_674, %c0_675] : memref<10x4x70x100xf32, #tpu.memory_space<vmem>>, vector<1x1x70x100xf32>
      %1023 = vector.shape_cast %1022 : vector<1x1x70x100xf32> to vector<70x100xf32>
      %1024 = arith.mulf %975, %1023 : vector<70x100xf32>
      %cst_676 = arith.constant dense<0.000000e+00> : vector<70xf32>
      %1025 = vector.multi_reduction <add>, %1024, %cst_676 [1] : vector<70x100xf32> to vector<70xf32>
      %1026 = vector.shape_cast %1025 : vector<70xf32> to vector<70x1xf32>
      %cst_677 = arith.constant dense<0.000000e+00> : vector<1xf32>
      %1027 = vector.multi_reduction <add>, %1026, %cst_677 [0] : vector<70x1xf32> to vector<1xf32>
      %1028 = vector.shape_cast %1027 : vector<1xf32> to vector<1x1xf32>
      %c3_i32_678 = arith.constant 3 : i32
      %1029 = vector.broadcast %c3_i32_678 : i32 to vector<1x10xi32>
      %1030 = arith.cmpi eq, %28, %1029 : vector<1x10xi32>
      %cst_679 = arith.constant 0.000000e+00 : f32
      %1031 = vector.shape_cast %1028 : vector<1x1xf32> to vector<1x1xf32>
      %1032 = vector.broadcast %1031 : vector<1x1xf32> to vector<1x10xf32>
      %1033 = vector.broadcast %cst_679 : f32 to vector<1x10xf32>
      %1034 = arith.select %1030, %1032, %1033 : vector<1x10xi1>, vector<1x10xf32>
      %1035 = arith.addf %1020, %1034 : vector<1x10xf32>
      %c4_680 = arith.constant 4 : index
      %1036 = arith.index_cast %arg13 : i32 to index
      %c0_681 = arith.constant 0 : index
      %c0_682 = arith.constant 0 : index
      %1037 = vector.load %arg8[%c4_680, %1036, %c0_681, %c0_682] : memref<10x4x70x100xf32, #tpu.memory_space<vmem>>, vector<1x1x70x100xf32>
      %1038 = vector.shape_cast %1037 : vector<1x1x70x100xf32> to vector<70x100xf32>
      %1039 = arith.mulf %975, %1038 : vector<70x100xf32>
      %cst_683 = arith.constant dense<0.000000e+00> : vector<70xf32>
      %1040 = vector.multi_reduction <add>, %1039, %cst_683 [1] : vector<70x100xf32> to vector<70xf32>
      %1041 = vector.shape_cast %1040 : vector<70xf32> to vector<70x1xf32>
      %cst_684 = arith.constant dense<0.000000e+00> : vector<1xf32>
      %1042 = vector.multi_reduction <add>, %1041, %cst_684 [0] : vector<70x1xf32> to vector<1xf32>
      %1043 = vector.shape_cast %1042 : vector<1xf32> to vector<1x1xf32>
      %c4_i32_685 = arith.constant 4 : i32
      %1044 = vector.broadcast %c4_i32_685 : i32 to vector<1x10xi32>
      %1045 = arith.cmpi eq, %28, %1044 : vector<1x10xi32>
      %cst_686 = arith.constant 0.000000e+00 : f32
      %1046 = vector.shape_cast %1043 : vector<1x1xf32> to vector<1x1xf32>
      %1047 = vector.broadcast %1046 : vector<1x1xf32> to vector<1x10xf32>
      %1048 = vector.broadcast %cst_686 : f32 to vector<1x10xf32>
      %1049 = arith.select %1045, %1047, %1048 : vector<1x10xi1>, vector<1x10xf32>
      %1050 = arith.addf %1035, %1049 : vector<1x10xf32>
      %c5_687 = arith.constant 5 : index
      %1051 = arith.index_cast %arg13 : i32 to index
      %c0_688 = arith.constant 0 : index
      %c0_689 = arith.constant 0 : index
      %1052 = vector.load %arg8[%c5_687, %1051, %c0_688, %c0_689] : memref<10x4x70x100xf32, #tpu.memory_space<vmem>>, vector<1x1x70x100xf32>
      %1053 = vector.shape_cast %1052 : vector<1x1x70x100xf32> to vector<70x100xf32>
      %1054 = arith.mulf %975, %1053 : vector<70x100xf32>
      %cst_690 = arith.constant dense<0.000000e+00> : vector<70xf32>
      %1055 = vector.multi_reduction <add>, %1054, %cst_690 [1] : vector<70x100xf32> to vector<70xf32>
      %1056 = vector.shape_cast %1055 : vector<70xf32> to vector<70x1xf32>
      %cst_691 = arith.constant dense<0.000000e+00> : vector<1xf32>
      %1057 = vector.multi_reduction <add>, %1056, %cst_691 [0] : vector<70x1xf32> to vector<1xf32>
      %1058 = vector.shape_cast %1057 : vector<1xf32> to vector<1x1xf32>
      %c5_i32_692 = arith.constant 5 : i32
      %1059 = vector.broadcast %c5_i32_692 : i32 to vector<1x10xi32>
      %1060 = arith.cmpi eq, %28, %1059 : vector<1x10xi32>
      %cst_693 = arith.constant 0.000000e+00 : f32
      %1061 = vector.shape_cast %1058 : vector<1x1xf32> to vector<1x1xf32>
      %1062 = vector.broadcast %1061 : vector<1x1xf32> to vector<1x10xf32>
      %1063 = vector.broadcast %cst_693 : f32 to vector<1x10xf32>
      %1064 = arith.select %1060, %1062, %1063 : vector<1x10xi1>, vector<1x10xf32>
      %1065 = arith.addf %1050, %1064 : vector<1x10xf32>
      %c6_694 = arith.constant 6 : index
      %1066 = arith.index_cast %arg13 : i32 to index
      %c0_695 = arith.constant 0 : index
      %c0_696 = arith.constant 0 : index
      %1067 = vector.load %arg8[%c6_694, %1066, %c0_695, %c0_696] : memref<10x4x70x100xf32, #tpu.memory_space<vmem>>, vector<1x1x70x100xf32>
      %1068 = vector.shape_cast %1067 : vector<1x1x70x100xf32> to vector<70x100xf32>
      %1069 = arith.mulf %975, %1068 : vector<70x100xf32>
      %cst_697 = arith.constant dense<0.000000e+00> : vector<70xf32>
      %1070 = vector.multi_reduction <add>, %1069, %cst_697 [1] : vector<70x100xf32> to vector<70xf32>
      %1071 = vector.shape_cast %1070 : vector<70xf32> to vector<70x1xf32>
      %cst_698 = arith.constant dense<0.000000e+00> : vector<1xf32>
      %1072 = vector.multi_reduction <add>, %1071, %cst_698 [0] : vector<70x1xf32> to vector<1xf32>
      %1073 = vector.shape_cast %1072 : vector<1xf32> to vector<1x1xf32>
      %c6_i32_699 = arith.constant 6 : i32
      %1074 = vector.broadcast %c6_i32_699 : i32 to vector<1x10xi32>
      %1075 = arith.cmpi eq, %28, %1074 : vector<1x10xi32>
      %cst_700 = arith.constant 0.000000e+00 : f32
      %1076 = vector.shape_cast %1073 : vector<1x1xf32> to vector<1x1xf32>
      %1077 = vector.broadcast %1076 : vector<1x1xf32> to vector<1x10xf32>
      %1078 = vector.broadcast %cst_700 : f32 to vector<1x10xf32>
      %1079 = arith.select %1075, %1077, %1078 : vector<1x10xi1>, vector<1x10xf32>
      %1080 = arith.addf %1065, %1079 : vector<1x10xf32>
      %c7_701 = arith.constant 7 : index
      %1081 = arith.index_cast %arg13 : i32 to index
      %c0_702 = arith.constant 0 : index
      %c0_703 = arith.constant 0 : index
      %1082 = vector.load %arg8[%c7_701, %1081, %c0_702, %c0_703] : memref<10x4x70x100xf32, #tpu.memory_space<vmem>>, vector<1x1x70x100xf32>
      %1083 = vector.shape_cast %1082 : vector<1x1x70x100xf32> to vector<70x100xf32>
      %1084 = arith.mulf %975, %1083 : vector<70x100xf32>
      %cst_704 = arith.constant dense<0.000000e+00> : vector<70xf32>
      %1085 = vector.multi_reduction <add>, %1084, %cst_704 [1] : vector<70x100xf32> to vector<70xf32>
      %1086 = vector.shape_cast %1085 : vector<70xf32> to vector<70x1xf32>
      %cst_705 = arith.constant dense<0.000000e+00> : vector<1xf32>
      %1087 = vector.multi_reduction <add>, %1086, %cst_705 [0] : vector<70x1xf32> to vector<1xf32>
      %1088 = vector.shape_cast %1087 : vector<1xf32> to vector<1x1xf32>
      %c7_i32_706 = arith.constant 7 : i32
      %1089 = vector.broadcast %c7_i32_706 : i32 to vector<1x10xi32>
      %1090 = arith.cmpi eq, %28, %1089 : vector<1x10xi32>
      %cst_707 = arith.constant 0.000000e+00 : f32
      %1091 = vector.shape_cast %1088 : vector<1x1xf32> to vector<1x1xf32>
      %1092 = vector.broadcast %1091 : vector<1x1xf32> to vector<1x10xf32>
      %1093 = vector.broadcast %cst_707 : f32 to vector<1x10xf32>
      %1094 = arith.select %1090, %1092, %1093 : vector<1x10xi1>, vector<1x10xf32>
      %1095 = arith.addf %1080, %1094 : vector<1x10xf32>
      %c8 = arith.constant 8 : index
      %1096 = arith.index_cast %arg13 : i32 to index
      %c0_708 = arith.constant 0 : index
      %c0_709 = arith.constant 0 : index
      %1097 = vector.load %arg8[%c8, %1096, %c0_708, %c0_709] : memref<10x4x70x100xf32, #tpu.memory_space<vmem>>, vector<1x1x70x100xf32>
      %1098 = vector.shape_cast %1097 : vector<1x1x70x100xf32> to vector<70x100xf32>
      %1099 = arith.mulf %975, %1098 : vector<70x100xf32>
      %cst_710 = arith.constant dense<0.000000e+00> : vector<70xf32>
      %1100 = vector.multi_reduction <add>, %1099, %cst_710 [1] : vector<70x100xf32> to vector<70xf32>
      %1101 = vector.shape_cast %1100 : vector<70xf32> to vector<70x1xf32>
      %cst_711 = arith.constant dense<0.000000e+00> : vector<1xf32>
      %1102 = vector.multi_reduction <add>, %1101, %cst_711 [0] : vector<70x1xf32> to vector<1xf32>
      %1103 = vector.shape_cast %1102 : vector<1xf32> to vector<1x1xf32>
      %c8_i32_712 = arith.constant 8 : i32
      %1104 = vector.broadcast %c8_i32_712 : i32 to vector<1x10xi32>
      %1105 = arith.cmpi eq, %28, %1104 : vector<1x10xi32>
      %cst_713 = arith.constant 0.000000e+00 : f32
      %1106 = vector.shape_cast %1103 : vector<1x1xf32> to vector<1x1xf32>
      %1107 = vector.broadcast %1106 : vector<1x1xf32> to vector<1x10xf32>
      %1108 = vector.broadcast %cst_713 : f32 to vector<1x10xf32>
      %1109 = arith.select %1105, %1107, %1108 : vector<1x10xi1>, vector<1x10xf32>
      %1110 = arith.addf %1095, %1109 : vector<1x10xf32>
      %c9 = arith.constant 9 : index
      %1111 = arith.index_cast %arg13 : i32 to index
      %c0_714 = arith.constant 0 : index
      %c0_715 = arith.constant 0 : index
      %1112 = vector.load %arg8[%c9, %1111, %c0_714, %c0_715] : memref<10x4x70x100xf32, #tpu.memory_space<vmem>>, vector<1x1x70x100xf32>
      %1113 = vector.shape_cast %1112 : vector<1x1x70x100xf32> to vector<70x100xf32>
      %1114 = arith.mulf %975, %1113 : vector<70x100xf32>
      %cst_716 = arith.constant dense<0.000000e+00> : vector<70xf32>
      %1115 = vector.multi_reduction <add>, %1114, %cst_716 [1] : vector<70x100xf32> to vector<70xf32>
      %1116 = vector.shape_cast %1115 : vector<70xf32> to vector<70x1xf32>
      %cst_717 = arith.constant dense<0.000000e+00> : vector<1xf32>
      %1117 = vector.multi_reduction <add>, %1116, %cst_717 [0] : vector<70x1xf32> to vector<1xf32>
      %1118 = vector.shape_cast %1117 : vector<1xf32> to vector<1x1xf32>
      %c9_i32 = arith.constant 9 : i32
      %1119 = vector.broadcast %c9_i32 : i32 to vector<1x10xi32>
      %1120 = arith.cmpi eq, %28, %1119 : vector<1x10xi32>
      %cst_718 = arith.constant 0.000000e+00 : f32
      %1121 = vector.shape_cast %1118 : vector<1x1xf32> to vector<1x1xf32>
      %1122 = vector.broadcast %1121 : vector<1x1xf32> to vector<1x10xf32>
      %1123 = vector.broadcast %cst_718 : f32 to vector<1x10xf32>
      %1124 = arith.select %1120, %1122, %1123 : vector<1x10xi1>, vector<1x10xf32>
      %1125 = arith.addf %1110, %1124 : vector<1x10xf32>
      scf.yield %1125 : vector<1x10xf32>
    }
    %c4_i32_11 = arith.constant 4 : i32
    %c0_12 = arith.constant 0 : index
    %c0_13 = arith.constant 0 : index
    %c0_14 = arith.constant 0 : index
    %32 = vector.load %arg10[%c0_12, %c0_13, %c0_14] : memref<1x1x10xf32, #tpu.memory_space<vmem>>, vector<1x1x10xf32>
    %33 = vector.shape_cast %32 : vector<1x1x10xf32> to vector<1x10xf32>
    %34 = vector.shape_cast %31 : vector<1x10xf32> to vector<1x1x10xf32>
    tpu.vector_store %arg10[%c0_12, %c0_13, %c0_14], %34 {strides = array<i32>} : memref<1x1x10xf32, #tpu.memory_space<vmem>>, vector<1x1x10xf32>,
    return
  }
  func.func @transform_0(%arg0: i32) -> (i32, i32, i32, i32) {
    %c0_i32 = arith.constant 0 : i32
    %c0_i32_0 = arith.constant 0 : i32
    %c0_i32_1 = arith.constant 0 : i32
    %c0_i32_2 = arith.constant 0 : i32
    return %arg0, %c0_i32, %c0_i32_0, %c0_i32_1 : i32, i32, i32, i32
  }
  func.func @transform_1(%arg0: i32) -> i32 {
    %c0_i32 = arith.constant 0 : i32
    %c0_i32_0 = arith.constant 0 : i32
    return %c0_i32 : i32
  }
  func.func @transform_2(%arg0: i32) -> i32 {
    %c0_i32 = arith.constant 0 : i32
    %c0_i32_0 = arith.constant 0 : i32
    return %c0_i32 : i32
  }
  func.func @transform_3(%arg0: i32) -> i32 {
    %c0_i32 = arith.constant 0 : i32
    %c0_i32_0 = arith.constant 0 : i32
    return %c0_i32 : i32
  }
  func.func @transform_4(%arg0: i32) -> i32 {
    %c0_i32 = arith.constant 0 : i32
    %c0_i32_0 = arith.constant 0 : i32
    return %c0_i32 : i32
  }
  func.func @transform_5(%arg0: i32) -> i32 {
    %c0_i32 = arith.constant 0 : i32
    %c0_i32_0 = arith.constant 0 : i32
    return %c0_i32 : i32
  }
  func.func @transform_6(%arg0: i32) -> i32 {
    %c0_i32 = arith.constant 0 : i32
    %c0_i32_0 = arith.constant 0 : i32
    return %c0_i32 : i32
  }
  func.func @transform_7(%arg0: i32) -> (i32, i32, i32, i32) {
    %c0_i32 = arith.constant 0 : i32
    %c0_i32_0 = arith.constant 0 : i32
    %c0_i32_1 = arith.constant 0 : i32
    %c0_i32_2 = arith.constant 0 : i32
    %c0_i32_3 = arith.constant 0 : i32
    return %c0_i32, %c0_i32_0, %c0_i32_1, %c0_i32_2 : i32, i32, i32, i32
  }
  func.func @transform_8(%arg0: i32) -> (i32, i32) {
    %c0_i32 = arith.constant 0 : i32
    %c0_i32_0 = arith.constant 0 : i32
    %c0_i32_1 = arith.constant 0 : i32
    return %c0_i32, %c0_i32_0 : i32, i32
  }
  func.func @transform_9(%arg0: i32) -> (i32, i32, i32) {
    %c0_i32 = arith.constant 0 : i32
    %c0_i32_0 = arith.constant 0 : i32
    %c0_i32_1 = arith.constant 0 : i32
    return %arg0, %c0_i32, %c0_i32_0 : i32, i32, i32
  }
}

</mosaic_0001>

<llo_original>
// kernel: simple_cnn_forward.1
$region0: #{simple_cnn_forward.1}
  #allocation0 [shape = 'u32[]', space=smem, size = 0x4, offset = 0x4, fixed_abs, tag = 'smem constant byte address 0x4 - core index']
  #allocation1 [shape = 'u32[72,128]{1,0:T(1,128)}', space=vmem, size = 0x9000, scoped, tag = 'internal scratch']
  #allocation2 [shape = 'f32[4,74,104]{2,1,0:T(8,128)}', space=vmem, size = 0x28000, scoped, tag = 'scratch operand']
  #allocation3 [shape = 'f32[8,72,102]{2,1,0:T(8,128)}', space=vmem, size = 0x48000, scoped, tag = 'scratch operand']
  %s0 = inlined_call_operand.vmem [shape: f32[2,3,76,106], index: 0, kind: input, shape index: {}]
  %s1 = inlined_call_operand.vmem [shape: f32[108], index: 1, kind: input, shape index: {}]
  %s2 = inlined_call_operand.vmem [shape: f32[4], index: 2, kind: input, shape index: {}]
  %s3 = inlined_call_operand.vmem [shape: f32[288], index: 3, kind: input, shape index: {}]
  %s4 = inlined_call_operand.vmem [shape: f32[8], index: 4, kind: input, shape index: {}]
  %s5 = inlined_call_operand.vmem [shape: f32[288], index: 5, kind: input, shape index: {}]
  %s6 = inlined_call_operand.vmem [shape: f32[4], index: 6, kind: input, shape index: {}]
  %s7 = inlined_call_operand.vmem [shape: f32[10,4,70,100], index: 7, kind: input, shape index: {}]
  %s8 = inlined_call_operand.vmem [shape: f32[1,10], index: 8, kind: input, shape index: {}]
  %s9 = inlined_call_operand.hbm [shape: f32[2,1,10], index: 9, kind: output, shape index: {}]
  %s10 = sld [smem:[#allocation0]]
  $region114: #{simple_cnn_forward.1} parent=0
    _
  %s12 = ssub.s32 1, %s10
  %s13 = scalar_select 0, %s12, %s10
  $region1: #{simple_cnn_forward.1} parent=0
    #allocation4 [shape = 'u8[512]{0}', space=smem, size = 0x200, scoped, tag = 'input window, operand 1, single buffered']
    #allocation5 [shape = 's32[2]{0}', space=sflag, size = 0x8, scoped, tag = 'scoped memory for simple_cnn_forward.1']
    #allocation6 [shape = 's32[2]{0}', space=sflag, size = 0x8, scoped, tag = 'scoped memory for simple_cnn_forward.1']
    #allocation7 [shape = 'u8[512]{0}', space=smem, size = 0x200, scoped, tag = 'input window, operand 2, single buffered']
    #allocation8 [shape = 's32[1]{0}', space=sflag, size = 0x4, scoped, tag = 'scoped memory for simple_cnn_forward.1']
    #allocation9 [shape = 'u8[1536]{0}', space=smem, size = 0x600, scoped, tag = 'input window, operand 3, single buffered']
    #allocation10 [shape = 'u8[512]{0}', space=smem, size = 0x200, scoped, tag = 'input window, operand 4, single buffered']
    #allocation11 [shape = 's32[1]{0}', space=sflag, size = 0x4, scoped, tag = 'scoped memory for simple_cnn_forward.1']
    #allocation12 [shape = 'u8[1536]{0}', space=smem, size = 0x600, scoped, tag = 'input window, operand 5, single buffered']
    #allocation13 [shape = 'u8[512]{0}', space=smem, size = 0x200, scoped, tag = 'input window, operand 6, single buffered']
    #allocation14 [shape = 's32[1]{0}', space=sflag, size = 0x4, scoped, tag = 'scoped memory for simple_cnn_forward.1']
    #allocation15 [shape = 'u8[1024]{0}', space=vmem, size = 0x400, scoped, tag = 'output window, operand 0']
    %14 = vsyncpa [#allocation6], 0
    %15 = vsyncpa [#allocation8], 0
    %16 = vsyncpa [#allocation11], 0
    %17 = vsyncpa [#allocation14], 0
    %18 = vsyncpa [#allocation5], 0
    %s19 = scalar_lea.sflag [#allocation5], 1
    %20 = vsyncpa %s19, 0
    loop: start=0, step=1, limit=4
    $region2: #{simple_cnn_forward.1} parent=1 // loop_pre_header
      _
    $region3: #{simple_cnn_forward.1} parent=1 // loop_header
      %s22 = sphi 0, %s26
      %p23 = scmp.ge.s32.totalorder %s22, 4
      %s32 = sphi 0, %s34
      %s35 = sphi 0, %s32
      %s36 = sphi 0, %s35
      %s52 = sphi 0, %s36
      %s56 = sphi 0, %s56
      %s58 = sphi 0, %s56
      %s59 = sphi 0, %s58
      %s73 = sphi 0, %s59
      %s77 = sphi 0, %s77
      %s79 = sphi 0, %s77
      %s80 = sphi 0, %s79
      %s94 = sphi 0, %s80
      %s98 = sphi 0, %s98
      %s100 = sphi 0, %s98
      %s101 = sphi 0, %s100
      %s115 = sphi 0, %s101
      %s119 = sphi 0, %s119
      %s121 = sphi 0, %s119
      %s122 = sphi 0, %s121
      %s136 = sphi 0, %s122
      %s140 = sphi 0, %s140
      %s142 = sphi 0, %s140
      %s143 = sphi 0, %s142
      %s157 = sphi 0, %s143
      %s161 = sphi 0, %s161
      %s163 = sphi 0, %s161
      %s164 = sphi 0, %s163
      %s178 = sphi 0, %s164
      %s182 = sphi 0, %s182
      %s184 = sphi 0, %s182
      %s185 = sphi 0, %s184
      %s199 = sphi 0, %s185
      %s203 = sphi 0, %s203
      %s205 = sphi 0, %s203
      %s206 = sphi 0, %s205
      %s220 = sphi 0, %s206
      %s226 = sphi 0, %s228
      %s229 = sphi 0, %s226
      %s230 = sphi 0, %s229
      %s246 = sphi 0, %s230
    $region4: #{simple_cnn_forward.1} parent=1 // loop_header_branch
      %25 = sbr.rel (%p23) target = $region8
    $region5: #{simple_cnn_forward.1} parent=1 // loop_body
      %s27 = ssub.s32 %s22, 1
      %s28 = ssub.s32 %s22, 2
      %s29 = sadd.s32 %s22, 1
      %s30 = ssub.s32 %s22, %s29
      %p31 = scmp.eq.s32.totalorder %s30, 0
      %s33 = sadd.s32 %s32, 1
      %s34 = scalar_select %p31, %s32, %s33
      %p37 = pneg %p31
      %p38 = scmp.eq.s32.totalorder %s22, 1
      %p39 = por %p37, %p38
      %p40 = scmp.ne.s32.totalorder %s32, %s35
      %p41 = scmp.eq.s32.totalorder %s22, 0
      %p42 = por %p40, %p41
      %p43 = scmp.ne.s32.totalorder %s32, %s35
      %p44 = scmp.eq.s32.totalorder %s27, 1
      %p45 = por %p43, %p44
      %p46 = scmp.ne.s32.totalorder %s35, %s36
      %p47 = scmp.eq.s32.totalorder %s27, 0
      %p48 = por %p46, %p47
      %p49 = scmp.ne.s32.totalorder %s35, %s36
      %p50 = scmp.eq.s32.totalorder %s28, 1
      %p51 = por %p49, %p50
      %p53 = scmp.ne.s32.totalorder %s36, %s52
      %p54 = scmp.eq.s32.totalorder %s28, 0
      %p55 = por %p53, %p54
      %s57 = sadd.s32 %s56, 1
      %p60 = scmp.eq.s32.totalorder %s22, 1
      %p61 = scmp.ne.s32.totalorder %s56, %s58
      %p62 = scmp.eq.s32.totalorder %s22, 0
      %p63 = por %p61, %p62
      %p64 = scmp.ne.s32.totalorder %s56, %s58
      %p65 = scmp.eq.s32.totalorder %s27, 1
      %p66 = por %p64, %p65
      %p67 = scmp.ne.s32.totalorder %s58, %s59
      %p68 = scmp.eq.s32.totalorder %s27, 0
      %p69 = por %p67, %p68
      %p70 = scmp.ne.s32.totalorder %s58, %s59
      %p71 = scmp.eq.s32.totalorder %s28, 1
      %p72 = por %p70, %p71
      %p74 = scmp.ne.s32.totalorder %s59, %s73
      %p75 = scmp.eq.s32.totalorder %s28, 0
      %p76 = por %p74, %p75
      %s78 = sadd.s32 %s77, 1
      %p81 = scmp.eq.s32.totalorder %s22, 1
      %p82 = scmp.ne.s32.totalorder %s77, %s79
      %p83 = scmp.eq.s32.totalorder %s22, 0
      %p84 = por %p82, %p83
      %p85 = scmp.ne.s32.totalorder %s77, %s79
      %p86 = scmp.eq.s32.totalorder %s27, 1
      %p87 = por %p85, %p86
      %p88 = scmp.ne.s32.totalorder %s79, %s80
      %p89 = scmp.eq.s32.totalorder %s27, 0
      %p90 = por %p88, %p89
      %p91 = scmp.ne.s32.totalorder %s79, %s80
      %p92 = scmp.eq.s32.totalorder %s28, 1
      %p93 = por %p91, %p92
      %p95 = scmp.ne.s32.totalorder %s80, %s94
      %p96 = scmp.eq.s32.totalorder %s28, 0
      %p97 = por %p95, %p96
      %s99 = sadd.s32 %s98, 1
      %p102 = scmp.eq.s32.totalorder %s22, 1
      %p103 = scmp.ne.s32.totalorder %s98, %s100
      %p104 = scmp.eq.s32.totalorder %s22, 0
      %p105 = por %p103, %p104
      %p106 = scmp.ne.s32.totalorder %s98, %s100
      %p107 = scmp.eq.s32.totalorder %s27, 1
      %p108 = por %p106, %p107
      %p109 = scmp.ne.s32.totalorder %s100, %s101
      %p110 = scmp.eq.s32.totalorder %s27, 0
      %p111 = por %p109, %p110
      %p112 = scmp.ne.s32.totalorder %s100, %s101
      %p113 = scmp.eq.s32.totalorder %s28, 1
      %p114 = por %p112, %p113
      %p116 = scmp.ne.s32.totalorder %s101, %s115
      %p117 = scmp.eq.s32.totalorder %s28, 0
      %p118 = por %p116, %p117
      %s120 = sadd.s32 %s119, 1
      %p123 = scmp.eq.s32.totalorder %s22, 1
      %p124 = scmp.ne.s32.totalorder %s119, %s121
      %p125 = scmp.eq.s32.totalorder %s22, 0
      %p126 = por %p124, %p125
      %p127 = scmp.ne.s32.totalorder %s119, %s121
      %p128 = scmp.eq.s32.totalorder %s27, 1
      %p129 = por %p127, %p128
      %p130 = scmp.ne.s32.totalorder %s121, %s122
      %p131 = scmp.eq.s32.totalorder %s27, 0
      %p132 = por %p130, %p131
      %p133 = scmp.ne.s32.totalorder %s121, %s122
      %p134 = scmp.eq.s32.totalorder %s28, 1
      %p135 = por %p133, %p134
      %p137 = scmp.ne.s32.totalorder %s122, %s136
      %p138 = scmp.eq.s32.totalorder %s28, 0
      %p139 = por %p137, %p138
      %s141 = sadd.s32 %s140, 1
      %p144 = scmp.eq.s32.totalorder %s22, 1
      %p145 = scmp.ne.s32.totalorder %s140, %s142
      %p146 = scmp.eq.s32.totalorder %s22, 0
      %p147 = por %p145, %p146
      %p148 = scmp.ne.s32.totalorder %s140, %s142
      %p149 = scmp.eq.s32.totalorder %s27, 1
      %p150 = por %p148, %p149
      %p151 = scmp.ne.s32.totalorder %s142, %s143
      %p152 = scmp.eq.s32.totalorder %s27, 0
      %p153 = por %p151, %p152
      %p154 = scmp.ne.s32.totalorder %s142, %s143
      %p155 = scmp.eq.s32.totalorder %s28, 1
      %p156 = por %p154, %p155
      %p158 = scmp.ne.s32.totalorder %s143, %s157
      %p159 = scmp.eq.s32.totalorder %s28, 0
      %p160 = por %p158, %p159
      %s162 = sadd.s32 %s161, 1
      %p165 = scmp.eq.s32.totalorder %s22, 1
      %p166 = scmp.ne.s32.totalorder %s161, %s163
      %p167 = scmp.eq.s32.totalorder %s22, 0
      %p168 = por %p166, %p167
      %p169 = scmp.ne.s32.totalorder %s161, %s163
      %p170 = scmp.eq.s32.totalorder %s27, 1
      %p171 = por %p169, %p170
      %p172 = scmp.ne.s32.totalorder %s163, %s164
      %p173 = scmp.eq.s32.totalorder %s27, 0
      %p174 = por %p172, %p173
      %p175 = scmp.ne.s32.totalorder %s163, %s164
      %p176 = scmp.eq.s32.totalorder %s28, 1
      %p177 = por %p175, %p176
      %p179 = scmp.ne.s32.totalorder %s164, %s178
      %p180 = scmp.eq.s32.totalorder %s28, 0
      %p181 = por %p179, %p180
      %s183 = sadd.s32 %s182, 1
      %p186 = scmp.eq.s32.totalorder %s22, 1
      %p187 = scmp.ne.s32.totalorder %s182, %s184
      %p188 = scmp.eq.s32.totalorder %s22, 0
      %p189 = por %p187, %p188
      %p190 = scmp.ne.s32.totalorder %s182, %s184
      %p191 = scmp.eq.s32.totalorder %s27, 1
      %p192 = por %p190, %p191
      %p193 = scmp.ne.s32.totalorder %s184, %s185
      %p194 = scmp.eq.s32.totalorder %s27, 0
      %p195 = por %p193, %p194
      %p196 = scmp.ne.s32.totalorder %s184, %s185
      %p197 = scmp.eq.s32.totalorder %s28, 1
      %p198 = por %p196, %p197
      %p200 = scmp.ne.s32.totalorder %s185, %s199
      %p201 = scmp.eq.s32.totalorder %s28, 0
      %p202 = por %p200, %p201
      %s204 = sadd.s32 %s203, 1
      %p207 = scmp.eq.s32.totalorder %s22, 1
      %p208 = scmp.ne.s32.totalorder %s203, %s205
      %p209 = scmp.eq.s32.totalorder %s22, 0
      %p210 = por %p208, %p209
      %p211 = scmp.ne.s32.totalorder %s203, %s205
      %p212 = scmp.eq.s32.totalorder %s27, 1
      %p213 = por %p211, %p212
      %p214 = scmp.ne.s32.totalorder %s205, %s206
      %p215 = scmp.eq.s32.totalorder %s27, 0
      %p216 = por %p214, %p215
      %p217 = scmp.ne.s32.totalorder %s205, %s206
      %p218 = scmp.eq.s32.totalorder %s28, 1
      %p219 = por %p217, %p218
      %p221 = scmp.ne.s32.totalorder %s206, %s220
      %p222 = scmp.eq.s32.totalorder %s28, 0
      %p223 = por %p221, %p222
      %s224 = ssub.s32 %s22, %s29
      %p225 = scmp.eq.s32.totalorder %s224, 0
      %s227 = sadd.s32 %s226, 1
      %s228 = scalar_select %p225, %s226, %s227
      %p231 = pneg %p225
      %p232 = scmp.eq.s32.totalorder %s22, 1
      %p233 = por %p231, %p232
      %p234 = scmp.ne.s32.totalorder %s226, %s229
      %p235 = scmp.eq.s32.totalorder %s22, 0
      %p236 = por %p234, %p235
      %p237 = scmp.ne.s32.totalorder %s226, %s229
      %p238 = scmp.eq.s32.totalorder %s27, 1
      %p239 = por %p237, %p238
      %p240 = scmp.ne.s32.totalorder %s229, %s230
      %p241 = scmp.eq.s32.totalorder %s27, 0
      %p242 = por %p240, %p241
      %p243 = scmp.ne.s32.totalorder %s229, %s230
      %p244 = scmp.eq.s32.totalorder %s28, 1
      %p245 = por %p243, %p244
      %p247 = scmp.ne.s32.totalorder %s230, %s246
      %p248 = scmp.eq.s32.totalorder %s28, 0
      %p249 = por %p247, %p248
      %p250 = scmp.le.s32.totalorder 1, %s22
      %p251 = scmp.lt.s32.totalorder %s22, 3
      %p252 = pnand %p250, %p251
      %p253 = pneg %p252
      // Predicated region
      $region9: #{simple_cnn_forward.1} parent=5 // pred_check
        _
      $region10: #{simple_cnn_forward.1} parent=5 // pred_check_branch
        %255 = sbr.rel (%p252) target = $region12
      $region11: #{simple_cnn_forward.1} parent=5 // pred_region
        %s256 = ssub.s32 %s22, 1
        // Predicated region
        $region13: #{simple_cnn_forward.1} parent=11 // pred_check
          %p257 = pneg %p69
        $region14: #{simple_cnn_forward.1} parent=11 // pred_check_branch
          %259 = sbr.rel (%p257) target = $region16
        $region15: #{simple_cnn_forward.1} parent=11 // pred_region
          %261 = vsyncadd [#allocation6], 0
          %s263 = sshll.u32 %s1, 4
          %s264 = int_to_ptr.vmem [resolvable:$true] %s263
          %266 = dma.vmem_to_smem %s264, 16, [#allocation4], [#allocation6]
        $region16: #{simple_cnn_forward.1} parent=11 // pred_fallthru
          _
        // Predicated region
        $region17: #{simple_cnn_forward.1} parent=11 // pred_check
          %p267 = pneg %p90
        $region18: #{simple_cnn_forward.1} parent=11 // pred_check_branch
          %269 = sbr.rel (%p267) target = $region20
        $region19: #{simple_cnn_forward.1} parent=11 // pred_region
          %271 = vsyncadd [#allocation8], 0
          %s273 = sshll.u32 %s2, 4
          %s274 = int_to_ptr.vmem [resolvable:$true] %s273
          %276 = dma.vmem_to_smem %s274, 16, [#allocation7], [#allocation8]
        $region20: #{simple_cnn_forward.1} parent=11 // pred_fallthru
          _
        // Predicated region
        $region21: #{simple_cnn_forward.1} parent=11 // pred_check
          %p277 = pneg %p111
        $region22: #{simple_cnn_forward.1} parent=11 // pred_check_branch
          %279 = sbr.rel (%p277) target = $region24
        $region23: #{simple_cnn_forward.1} parent=11 // pred_region
          %281 = vsyncadd [#allocation8], 0
          %s283 = sshll.u32 %s3, 4
          %s284 = int_to_ptr.vmem [resolvable:$true] %s283
          %286 = dma.vmem_to_smem %s284, 48, [#allocation9], [#allocation8]
        $region24: #{simple_cnn_forward.1} parent=11 // pred_fallthru
          _
        // Predicated region
        $region25: #{simple_cnn_forward.1} parent=11 // pred_check
          %p287 = pneg %p132
        $region26: #{simple_cnn_forward.1} parent=11 // pred_check_branch
          %289 = sbr.rel (%p287) target = $region28
        $region27: #{simple_cnn_forward.1} parent=11 // pred_region
          %291 = vsyncadd [#allocation11], 0
          %s293 = sshll.u32 %s4, 4
          %s294 = int_to_ptr.vmem [resolvable:$true] %s293
          %296 = dma.vmem_to_smem %s294, 16, [#allocation10], [#allocation11]
        $region28: #{simple_cnn_forward.1} parent=11 // pred_fallthru
          _
        // Predicated region
        $region29: #{simple_cnn_forward.1} parent=11 // pred_check
          %p297 = pneg %p153
        $region30: #{simple_cnn_forward.1} parent=11 // pred_check_branch
          %299 = sbr.rel (%p297) target = $region32
        $region31: #{simple_cnn_forward.1} parent=11 // pred_region
          %301 = vsyncadd [#allocation11], 0
          %s303 = sshll.u32 %s5, 4
          %s304 = int_to_ptr.vmem [resolvable:$true] %s303
          %306 = dma.vmem_to_smem %s304, 48, [#allocation12], [#allocation11]
        $region32: #{simple_cnn_forward.1} parent=11 // pred_fallthru
          _
        // Predicated region
        $region33: #{simple_cnn_forward.1} parent=11 // pred_check
          %p307 = pneg %p174
        $region34: #{simple_cnn_forward.1} parent=11 // pred_check_branch
          %309 = sbr.rel (%p307) target = $region36
        $region35: #{simple_cnn_forward.1} parent=11 // pred_region
          %311 = vsyncadd [#allocation14], 0
          %s313 = sshll.u32 %s6, 4
          %s314 = int_to_ptr.vmem [resolvable:$true] %s313
          %316 = dma.vmem_to_smem %s314, 16, [#allocation13], [#allocation14]
        $region36: #{simple_cnn_forward.1} parent=11 // pred_fallthru
          _
        // Predicated region
        $region37: #{simple_cnn_forward.1} parent=11 // pred_check
          %p317 = pneg %p195
        $region38: #{simple_cnn_forward.1} parent=11 // pred_check_branch
          %319 = sbr.rel (%p317) target = $region40
        $region39: #{simple_cnn_forward.1} parent=11 // pred_region
          _
        $region40: #{simple_cnn_forward.1} parent=11 // pred_fallthru
          _
        // Predicated region
        $region41: #{simple_cnn_forward.1} parent=11 // pred_check
          %p320 = pneg %p216
        $region42: #{simple_cnn_forward.1} parent=11 // pred_check_branch
          %322 = sbr.rel (%p320) target = $region44
        $region43: #{simple_cnn_forward.1} parent=11 // pred_region
          _
        $region44: #{simple_cnn_forward.1} parent=11 // pred_fallthru
          _
      $region12: #{simple_cnn_forward.1} parent=5 // pred_fallthru
        _
      %p323 = scmp.lt.s32.totalorder %s22, 2
      // Predicated region
      $region45: #{simple_cnn_forward.1} parent=5 // pred_check
        %p324 = pneg %p323
      $region46: #{simple_cnn_forward.1} parent=5 // pred_check_branch
        %326 = sbr.rel (%p324) target = $region48
      $region47: #{simple_cnn_forward.1} parent=5 // pred_region
        // Predicated region
        $region49: #{simple_cnn_forward.1} parent=47 // pred_check
          %p327 = pneg %p42
        $region50: #{simple_cnn_forward.1} parent=47 // pred_check_branch
          %329 = sbr.rel (%p327) target = $region52
        $region51: #{simple_cnn_forward.1} parent=47 // pred_region
          %p330 = scmp.lt.s32.totalorder %s22, 1
          %s331 = scalar_select %p330, %s22, 1
          %s332 = smul.addr %s331, 30
          %s333 = smul.addr %s332, 8
          %s334 = scalar_lea.vmem %s0, %s333
        $region52: #{simple_cnn_forward.1} parent=47 // pred_fallthru
          _
      $region48: #{simple_cnn_forward.1} parent=5 // pred_fallthru
        _
      %p335 = scmp.le.s32.totalorder 1, %s22
      %p336 = scmp.lt.s32.totalorder %s22, 3
      %p337 = pnand %p335, %p336
      %p338 = pneg %p337
      // Predicated region
      $region53: #{simple_cnn_forward.1} parent=5 // pred_check
        _
      $region54: #{simple_cnn_forward.1} parent=5 // pred_check_branch
        %340 = sbr.rel (%p337) target = $region56
      $region55: #{simple_cnn_forward.1} parent=5 // pred_region
        %s341 = ssub.s32 %s22, 1
        // Predicated region
        $region57: #{simple_cnn_forward.1} parent=55 // pred_check
          %p342 = pneg %p69
        $region58: #{simple_cnn_forward.1} parent=55 // pred_check_branch
          %344 = sbr.rel (%p342) target = $region60
        $region59: #{simple_cnn_forward.1} parent=55 // pred_region
          %346 = dma.done [#allocation6], 16
        $region60: #{simple_cnn_forward.1} parent=55 // pred_fallthru
          _
        // Predicated region
        $region61: #{simple_cnn_forward.1} parent=55 // pred_check
          %p347 = pneg %p90
        $region62: #{simple_cnn_forward.1} parent=55 // pred_check_branch
          %349 = sbr.rel (%p347) target = $region64
        $region63: #{simple_cnn_forward.1} parent=55 // pred_region
          %351 = dma.done [#allocation8], 16
        $region64: #{simple_cnn_forward.1} parent=55 // pred_fallthru
          _
        // Predicated region
        $region65: #{simple_cnn_forward.1} parent=55 // pred_check
          %p352 = pneg %p111
        $region66: #{simple_cnn_forward.1} parent=55 // pred_check_branch
          %354 = sbr.rel (%p352) target = $region68
        $region67: #{simple_cnn_forward.1} parent=55 // pred_region
          %356 = dma.done [#allocation8], 48
        $region68: #{simple_cnn_forward.1} parent=55 // pred_fallthru
          _
        // Predicated region
        $region69: #{simple_cnn_forward.1} parent=55 // pred_check
          %p357 = pneg %p132
        $region70: #{simple_cnn_forward.1} parent=55 // pred_check_branch
          %359 = sbr.rel (%p357) target = $region72
        $region71: #{simple_cnn_forward.1} parent=55 // pred_region
          %361 = dma.done [#allocation11], 16
        $region72: #{simple_cnn_forward.1} parent=55 // pred_fallthru
          _
        // Predicated region
        $region73: #{simple_cnn_forward.1} parent=55 // pred_check
          %p362 = pneg %p153
        $region74: #{simple_cnn_forward.1} parent=55 // pred_check_branch
          %364 = sbr.rel (%p362) target = $region76
        $region75: #{simple_cnn_forward.1} parent=55 // pred_region
          %366 = dma.done [#allocation11], 48
        $region76: #{simple_cnn_forward.1} parent=55 // pred_fallthru
          _
        // Predicated region
        $region77: #{simple_cnn_forward.1} parent=55 // pred_check
          %p367 = pneg %p174
        $region78: #{simple_cnn_forward.1} parent=55 // pred_check_branch
          %369 = sbr.rel (%p367) target = $region80
        $region79: #{simple_cnn_forward.1} parent=55 // pred_region
          %371 = dma.done [#allocation14], 16
        $region80: #{simple_cnn_forward.1} parent=55 // pred_fallthru
          _
        %372 = sfence
        %p373 = scmp.lt.s32.totalorder %s27, 1
        %s374 = scalar_select %p373, %s27, 1
        %s375 = smul.addr %s374, 30
        %s376 = smul.addr %s375, 8
        %s377 = scalar_lea.vmem %s0, %s376
        %p378 = pneg %p48
        %p379 = pneg %p45
        %p380 = pneg %p69
        %p381 = pneg %p66
        %p382 = pneg %p90
        %p383 = pneg %p87
        %p384 = pneg %p111
        %p385 = pneg %p108
        %p386 = pneg %p132
        %p387 = pneg %p129
        %p388 = pneg %p153
        %p389 = pneg %p150
        %p390 = pneg %p174
        %p391 = pneg %p171
        %p392 = pneg %p195
        %p393 = pneg %p192
        %p394 = pneg %p216
        %p395 = pneg %p213
        %p396 = pneg %p242
        %p397 = pneg %p239
        %s398 = sand.u32 %s229, 1
        %s399 = scalar_lea.sflag [#allocation5], %s398
        %s400 = sand.u32 %s229, 1
        %s401 = scalar_lea.vmem [#allocation15], %s400
        %p402 = scmp.lt.s32.totalorder %s27, 1
        %s403 = scalar_select %p402, %s27, 1
        %s404 = smul.addr %s403, 30
        %s405 = smul.addr %s404, 8
        %s406 = scalar_lea.vmem %s0, %s405
        %v407 = vlaneseq
        %v408 = vshrl.u32 %v407, 7
        %v409 = vadd.s32 %v408, 8
        %v410 = vadd.s32 %v408, 16
        %v411 = vadd.s32 %v408, 24
        %v412 = vadd.s32 %v408, 32
        %v413 = vadd.s32 %v408, 40
        %v414 = vadd.s32 %v408, 48
        %v415 = vadd.s32 %v408, 56
        %v416 = vadd.s32 %v408, 64
        %v417 = vadd.s32 %v408, 72
        %v418 = vlaneseq
        %v419 = vand.u32 %v418, 127
        %vm420 = vcmp.ge.s32.totalorder %v408, 2
        %vm421 = vcmp.ge.s32.totalorder %v409, 2
        %vm422 = vcmp.ge.s32.totalorder %v410, 2
        %vm423 = vcmp.ge.s32.totalorder %v411, 2
        %vm424 = vcmp.ge.s32.totalorder %v412, 2
        %vm425 = vcmp.ge.s32.totalorder %v413, 2
        %vm426 = vcmp.ge.s32.totalorder %v414, 2
        %vm427 = vcmp.ge.s32.totalorder %v415, 2
        %vm428 = vcmp.ge.s32.totalorder %v416, 2
        %vm429 = vcmp.ge.s32.totalorder %v417, 2
        %vm430 = vcmp.lt.s32.totalorder %v408, 72
        %vm431 = vcmp.lt.s32.totalorder %v409, 72
        %vm432 = vcmp.lt.s32.totalorder %v410, 72
        %vm433 = vcmp.lt.s32.totalorder %v411, 72
        %vm434 = vcmp.lt.s32.totalorder %v412, 72
        %vm435 = vcmp.lt.s32.totalorder %v413, 72
        %vm436 = vcmp.lt.s32.totalorder %v414, 72
        %vm437 = vcmp.lt.s32.totalorder %v415, 72
        %vm438 = vcmp.lt.s32.totalorder %v416, 72
        %vm439 = vcmp.lt.s32.totalorder %v417, 72
        %vm440 = vmand %vm420, %vm430
        %vm441 = vmand %vm421, %vm431
        %vm442 = vmand %vm422, %vm432
        %vm443 = vmand %vm423, %vm433
        %vm444 = vmand %vm424, %vm434
        %vm445 = vmand %vm425, %vm435
        %vm446 = vmand %vm426, %vm436
        %vm447 = vmand %vm427, %vm437
        %vm448 = vmand %vm428, %vm438
        %vm449 = vmand %vm429, %vm439
        %vm450 = vcmp.ge.s32.totalorder %v419, 2
        %vm451 = vmand %vm440, %vm450
        %vm452 = vmand %vm441, %vm450
        %vm453 = vmand %vm442, %vm450
        %vm454 = vmand %vm443, %vm450
        %vm455 = vmand %vm444, %vm450
        %vm456 = vmand %vm445, %vm450
        %vm457 = vmand %vm446, %vm450
        %vm458 = vmand %vm447, %vm450
        %vm459 = vmand %vm448, %vm450
        %vm460 = vmand %vm449, %vm450
        %vm461 = vcmp.lt.s32.totalorder %v419, 102
        %vm462 = vmand %vm451, %vm461
        %vm463 = vmand %vm452, %vm461
        %vm464 = vmand %vm453, %vm461
        %vm465 = vmand %vm454, %vm461
        %vm466 = vmand %vm455, %vm461
        %vm467 = vmand %vm456, %vm461
        %vm468 = vmand %vm457, %vm461
        %vm469 = vmand %vm458, %vm461
        %vm470 = vmand %vm459, %vm461
        %vm471 = vmand %vm460, %vm461
        loop: start=0, step=1, limit=4
        $region81: #{simple_cnn_forward.1} parent=55 // loop_pre_header
          _
        $region82: #{simple_cnn_forward.1} parent=55 // loop_header
          %s473 = sphi 0, %s477
          %p474 = scmp.ge.s32.totalorder %s473, 4
        $region83: #{simple_cnn_forward.1} parent=55 // loop_header_branch
          %476 = sbr.rel (%p474) target = $region87
        $region84: #{simple_cnn_forward.1} parent=55 // loop_body
          %s478 = sld [smem:[#allocation7 + %s473]]
          %v479 = vstv %s478
          %s480 = smul.u32 %s473, 27
          %s481 = sld [smem:[#allocation4 + %s480]]
          %v482 = vld [vmem:[%s406] sm:$0xff]
          %v483 = vld [vmem:[%s406 + $0x8] sm:$0xff]
          %v484 = vld [vmem:[%s406 + $0x10] sm:$0xff]
          %v485 = vld [vmem:[%s406 + $0x18] sm:$0xff]
          %v486 = vld [vmem:[%s406 + $0x20] sm:$0xff]
          %v487 = vld [vmem:[%s406 + $0x28] sm:$0xff]
          %v488 = vld [vmem:[%s406 + $0x30] sm:$0xff]
          %v489 = vld [vmem:[%s406 + $0x38] sm:$0xff]
          %v490 = vld [vmem:[%s406 + $0x40] sm:$0xff]
          %v491 = vld [vmem:[%s406 + $0x48] sm:$0x3]
          %v492 = vstv %s481
          %v493 = vmul.f32 %v492, %v482
          %v494 = vmul.f32 %v492, %v483
          %v495 = vmul.f32 %v492, %v484
          %v496 = vmul.f32 %v492, %v485
          %v497 = vmul.f32 %v492, %v486
          %v498 = vmul.f32 %v492, %v487
          %v499 = vmul.f32 %v492, %v488
          %v500 = vmul.f32 %v492, %v489
          %v501 = vmul.f32 %v492, %v490
          %v502 = vmul.f32 %v492, %v491
          %v503 = vadd.f32 %v479, %v493
          %v504 = vadd.f32 %v479, %v494
          %v505 = vadd.f32 %v479, %v495
          %v506 = vadd.f32 %v479, %v496
          %v507 = vadd.f32 %v479, %v497
          %v508 = vadd.f32 %v479, %v498
          %v509 = vadd.f32 %v479, %v499
          %v510 = vadd.f32 %v479, %v500
          %v511 = vadd.f32 %v479, %v501
          %v512 = vadd.f32 %v479, %v502
          %s513 = sadd.s32 %s480, 1
          %s514 = sld [smem:[#allocation4 + %s513]]
          %v515 = vstv %s514
          %v516 = vmul.f32 %v515, %v482
          %v517 = vmul.f32 %v515, %v483
          %v518 = vmul.f32 %v515, %v484
          %v519 = vmul.f32 %v515, %v485
          %v520 = vmul.f32 %v515, %v486
          %v521 = vmul.f32 %v515, %v487
          %v522 = vmul.f32 %v515, %v488
          %v523 = vmul.f32 %v515, %v489
          %v524 = vmul.f32 %v515, %v490
          %v525 = vmul.f32 %v515, %v491
          %536 = vrot.lane.b32.xlu0 %v516, 127
          %v537 = vpop.permute.xlu0 %536
          %538 = vrot.lane.b32.xlu0 %v517, 127
          %v539 = vpop.permute.xlu0 %538
          %540 = vrot.lane.b32.xlu0 %v518, 127
          %v541 = vpop.permute.xlu0 %540
          %542 = vrot.lane.b32.xlu0 %v519, 127
          %v543 = vpop.permute.xlu0 %542
          %544 = vrot.lane.b32.xlu0 %v520, 127
          %v545 = vpop.permute.xlu0 %544
          %546 = vrot.lane.b32.xlu0 %v521, 127
          %v547 = vpop.permute.xlu0 %546
          %548 = vrot.lane.b32.xlu0 %v522, 127
          %v549 = vpop.permute.xlu0 %548
          %550 = vrot.lane.b32.xlu0 %v523, 127
          %v551 = vpop.permute.xlu0 %550
          %552 = vrot.lane.b32.xlu0 %v524, 127
          %v553 = vpop.permute.xlu0 %552
          %554 = vrot.lane.b32.xlu0 %v525, 127
          %v555 = vpop.permute.xlu0 %554
          %v566 = vadd.f32 %v503, %v537
          %v567 = vadd.f32 %v504, %v539
          %v568 = vadd.f32 %v505, %v541
          %v569 = vadd.f32 %v506, %v543
          %v570 = vadd.f32 %v507, %v545
          %v571 = vadd.f32 %v508, %v547
          %v572 = vadd.f32 %v509, %v549
          %v573 = vadd.f32 %v510, %v551
          %v574 = vadd.f32 %v511, %v553
          %v575 = vadd.f32 %v512, %v555
          %s576 = sadd.s32 %s480, 2
          %s577 = sld [smem:[#allocation4 + %s576]]
          %v578 = vstv %s577
          %v579 = vmul.f32 %v578, %v482
          %v580 = vmul.f32 %v578, %v483
          %v581 = vmul.f32 %v578, %v484
          %v582 = vmul.f32 %v578, %v485
          %v583 = vmul.f32 %v578, %v486
          %v584 = vmul.f32 %v578, %v487
          %v585 = vmul.f32 %v578, %v488
          %v586 = vmul.f32 %v578, %v489
          %v587 = vmul.f32 %v578, %v490
          %v588 = vmul.f32 %v578, %v491
          %599 = vrot.lane.b32.xlu0 %v579, 126
          %v600 = vpop.permute.xlu0 %599
          %601 = vrot.lane.b32.xlu0 %v580, 126
          %v602 = vpop.permute.xlu0 %601
          %603 = vrot.lane.b32.xlu0 %v581, 126
          %v604 = vpop.permute.xlu0 %603
          %605 = vrot.lane.b32.xlu0 %v582, 126
          %v606 = vpop.permute.xlu0 %605
          %607 = vrot.lane.b32.xlu0 %v583, 126
          %v608 = vpop.permute.xlu0 %607
          %609 = vrot.lane.b32.xlu0 %v584, 126
          %v610 = vpop.permute.xlu0 %609
          %611 = vrot.lane.b32.xlu0 %v585, 126
          %v612 = vpop.permute.xlu0 %611
          %613 = vrot.lane.b32.xlu0 %v586, 126
          %v614 = vpop.permute.xlu0 %613
          %615 = vrot.lane.b32.xlu0 %v587, 126
          %v616 = vpop.permute.xlu0 %615
          %617 = vrot.lane.b32.xlu0 %v588, 126
          %v618 = vpop.permute.xlu0 %617
          %v629 = vadd.f32 %v566, %v600
          %v630 = vadd.f32 %v567, %v602
          %v631 = vadd.f32 %v568, %v604
          %v632 = vadd.f32 %v569, %v606
          %v633 = vadd.f32 %v570, %v608
          %v634 = vadd.f32 %v571, %v610
          %v635 = vadd.f32 %v572, %v612
          %v636 = vadd.f32 %v573, %v614
          %v637 = vadd.f32 %v574, %v616
          %v638 = vadd.f32 %v575, %v618
          %s639 = smul.u32 %s473, 9
          %s640 = sadd.s32 %s639, 1
          %s641 = smul.u32 %s640, 3
          %s642 = sld [smem:[#allocation4 + %s641]]
          %v643 = vld [vmem:[%s406 + $0x1] sm:$0xff]
          %v644 = vld [vmem:[%s406 + $0x9] sm:$0xff]
          %v645 = vld [vmem:[%s406 + $0x11] sm:$0xff]
          %v646 = vld [vmem:[%s406 + $0x19] sm:$0xff]
          %v647 = vld [vmem:[%s406 + $0x21] sm:$0xff]
          %v648 = vld [vmem:[%s406 + $0x29] sm:$0xff]
          %v649 = vld [vmem:[%s406 + $0x31] sm:$0xff]
          %v650 = vld [vmem:[%s406 + $0x39] sm:$0xff]
          %v651 = vld [vmem:[%s406 + $0x41] sm:$0xff]
          %v652 = vld [vmem:[%s406 + $0x49] sm:$0x3]
          %v653 = vstv %s642
          %v654 = vmul.f32 %v653, %v643
          %v655 = vmul.f32 %v653, %v644
          %v656 = vmul.f32 %v653, %v645
          %v657 = vmul.f32 %v653, %v646
          %v658 = vmul.f32 %v653, %v647
          %v659 = vmul.f32 %v653, %v648
          %v660 = vmul.f32 %v653, %v649
          %v661 = vmul.f32 %v653, %v650
          %v662 = vmul.f32 %v653, %v651
          %v663 = vmul.f32 %v653, %v652
          %v664 = vadd.f32 %v629, %v654
          %v665 = vadd.f32 %v630, %v655
          %v666 = vadd.f32 %v631, %v656
          %v667 = vadd.f32 %v632, %v657
          %v668 = vadd.f32 %v633, %v658
          %v669 = vadd.f32 %v634, %v659
          %v670 = vadd.f32 %v635, %v660
          %v671 = vadd.f32 %v636, %v661
          %v672 = vadd.f32 %v637, %v662
          %v673 = vadd.f32 %v638, %v663
          %s674 = sadd.s32 %s641, 1
          %s675 = sld [smem:[#allocation4 + %s674]]
          %v676 = vstv %s675
          %v677 = vmul.f32 %v676, %v643
          %v678 = vmul.f32 %v676, %v644
          %v679 = vmul.f32 %v676, %v645
          %v680 = vmul.f32 %v676, %v646
          %v681 = vmul.f32 %v676, %v647
          %v682 = vmul.f32 %v676, %v648
          %v683 = vmul.f32 %v676, %v649
          %v684 = vmul.f32 %v676, %v650
          %v685 = vmul.f32 %v676, %v651
          %v686 = vmul.f32 %v676, %v652
          %697 = vrot.lane.b32.xlu0 %v677, 127
          %v698 = vpop.permute.xlu0 %697
          %699 = vrot.lane.b32.xlu0 %v678, 127
          %v700 = vpop.permute.xlu0 %699
          %701 = vrot.lane.b32.xlu0 %v679, 127
          %v702 = vpop.permute.xlu0 %701
          %703 = vrot.lane.b32.xlu0 %v680, 127
          %v704 = vpop.permute.xlu0 %703
          %705 = vrot.lane.b32.xlu0 %v681, 127
          %v706 = vpop.permute.xlu0 %705
          %707 = vrot.lane.b32.xlu0 %v682, 127
          %v708 = vpop.permute.xlu0 %707
          %709 = vrot.lane.b32.xlu0 %v683, 127
          %v710 = vpop.permute.xlu0 %709
          %711 = vrot.lane.b32.xlu0 %v684, 127
          %v712 = vpop.permute.xlu0 %711
          %713 = vrot.lane.b32.xlu0 %v685, 127
          %v714 = vpop.permute.xlu0 %713
          %715 = vrot.lane.b32.xlu0 %v686, 127
          %v716 = vpop.permute.xlu0 %715
          %v727 = vadd.f32 %v664, %v698
          %v728 = vadd.f32 %v665, %v700
          %v729 = vadd.f32 %v666, %v702
          %v730 = vadd.f32 %v667, %v704
          %v731 = vadd.f32 %v668, %v706
          %v732 = vadd.f32 %v669, %v708
          %v733 = vadd.f32 %v670, %v710
          %v734 = vadd.f32 %v671, %v712
          %v735 = vadd.f32 %v672, %v714
          %v736 = vadd.f32 %v673, %v716
          %s737 = sadd.s32 %s641, 2
          %s738 = sld [smem:[#allocation4 + %s737]]
          %v739 = vstv %s738
          %v740 = vmul.f32 %v739, %v643
          %v741 = vmul.f32 %v739, %v644
          %v742 = vmul.f32 %v739, %v645
          %v743 = vmul.f32 %v739, %v646
          %v744 = vmul.f32 %v739, %v647
          %v745 = vmul.f32 %v739, %v648
          %v746 = vmul.f32 %v739, %v649
          %v747 = vmul.f32 %v739, %v650
          %v748 = vmul.f32 %v739, %v651
          %v749 = vmul.f32 %v739, %v652
          %760 = vrot.lane.b32.xlu0 %v740, 126
          %v761 = vpop.permute.xlu0 %760
          %762 = vrot.lane.b32.xlu0 %v741, 126
          %v763 = vpop.permute.xlu0 %762
          %764 = vrot.lane.b32.xlu0 %v742, 126
          %v765 = vpop.permute.xlu0 %764
          %766 = vrot.lane.b32.xlu0 %v743, 126
          %v767 = vpop.permute.xlu0 %766
          %768 = vrot.lane.b32.xlu0 %v744, 126
          %v769 = vpop.permute.xlu0 %768
          %770 = vrot.lane.b32.xlu0 %v745, 126
          %v771 = vpop.permute.xlu0 %770
          %772 = vrot.lane.b32.xlu0 %v746, 126
          %v773 = vpop.permute.xlu0 %772
          %774 = vrot.lane.b32.xlu0 %v747, 126
          %v775 = vpop.permute.xlu0 %774
          %776 = vrot.lane.b32.xlu0 %v748, 126
          %v777 = vpop.permute.xlu0 %776
          %778 = vrot.lane.b32.xlu0 %v749, 126
          %v779 = vpop.permute.xlu0 %778
          %v790 = vadd.f32 %v727, %v761
          %v791 = vadd.f32 %v728, %v763
          %v792 = vadd.f32 %v729, %v765
          %v793 = vadd.f32 %v730, %v767
          %v794 = vadd.f32 %v731, %v769
          %v795 = vadd.f32 %v732, %v771
          %v796 = vadd.f32 %v733, %v773
          %v797 = vadd.f32 %v734, %v775
          %v798 = vadd.f32 %v735, %v777
          %v799 = vadd.f32 %v736, %v779
          %s800 = sadd.s32 %s639, 2
          %s801 = smul.u32 %s800, 3
          %s802 = sld [smem:[#allocation4 + %s801]]
          %v803 = vld [vmem:[%s406 + $0x2] sm:$0xff]
          %v804 = vld [vmem:[%s406 + $0xa] sm:$0xff]
          %v805 = vld [vmem:[%s406 + $0x12] sm:$0xff]
          %v806 = vld [vmem:[%s406 + $0x1a] sm:$0xff]
          %v807 = vld [vmem:[%s406 + $0x22] sm:$0xff]
          %v808 = vld [vmem:[%s406 + $0x2a] sm:$0xff]
          %v809 = vld [vmem:[%s406 + $0x32] sm:$0xff]
          %v810 = vld [vmem:[%s406 + $0x3a] sm:$0xff]
          %v811 = vld [vmem:[%s406 + $0x42] sm:$0xff]
          %v812 = vld [vmem:[%s406 + $0x4a] sm:$0x3]
          %v813 = vstv %s802
          %v814 = vmul.f32 %v813, %v803
          %v815 = vmul.f32 %v813, %v804
          %v816 = vmul.f32 %v813, %v805
          %v817 = vmul.f32 %v813, %v806
          %v818 = vmul.f32 %v813, %v807
          %v819 = vmul.f32 %v813, %v808
          %v820 = vmul.f32 %v813, %v809
          %v821 = vmul.f32 %v813, %v810
          %v822 = vmul.f32 %v813, %v811
          %v823 = vmul.f32 %v813, %v812
          %v824 = vadd.f32 %v790, %v814
          %v825 = vadd.f32 %v791, %v815
          %v826 = vadd.f32 %v792, %v816
          %v827 = vadd.f32 %v793, %v817
          %v828 = vadd.f32 %v794, %v818
          %v829 = vadd.f32 %v795, %v819
          %v830 = vadd.f32 %v796, %v820
          %v831 = vadd.f32 %v797, %v821
          %v832 = vadd.f32 %v798, %v822
          %v833 = vadd.f32 %v799, %v823
          %s834 = sadd.s32 %s801, 1
          %s835 = sld [smem:[#allocation4 + %s834]]
          %v836 = vstv %s835
          %v837 = vmul.f32 %v836, %v803
          %v838 = vmul.f32 %v836, %v804
          %v839 = vmul.f32 %v836, %v805
          %v840 = vmul.f32 %v836, %v806
          %v841 = vmul.f32 %v836, %v807
          %v842 = vmul.f32 %v836, %v808
          %v843 = vmul.f32 %v836, %v809
          %v844 = vmul.f32 %v836, %v810
          %v845 = vmul.f32 %v836, %v811
          %v846 = vmul.f32 %v836, %v812
          %857 = vrot.lane.b32.xlu0 %v837, 127
          %v858 = vpop.permute.xlu0 %857
          %859 = vrot.lane.b32.xlu0 %v838, 127
          %v860 = vpop.permute.xlu0 %859
          %861 = vrot.lane.b32.xlu0 %v839, 127
          %v862 = vpop.permute.xlu0 %861
          %863 = vrot.lane.b32.xlu0 %v840, 127
          %v864 = vpop.permute.xlu0 %863
          %865 = vrot.lane.b32.xlu0 %v841, 127
          %v866 = vpop.permute.xlu0 %865
          %867 = vrot.lane.b32.xlu0 %v842, 127
          %v868 = vpop.permute.xlu0 %867
          %869 = vrot.lane.b32.xlu0 %v843, 127
          %v870 = vpop.permute.xlu0 %869
          %871 = vrot.lane.b32.xlu0 %v844, 127
          %v872 = vpop.permute.xlu0 %871
          %873 = vrot.lane.b32.xlu0 %v845, 127
          %v874 = vpop.permute.xlu0 %873
          %875 = vrot.lane.b32.xlu0 %v846, 127
          %v876 = vpop.permute.xlu0 %875
          %v887 = vadd.f32 %v824, %v858
          %v888 = vadd.f32 %v825, %v860
          %v889 = vadd.f32 %v826, %v862
          %v890 = vadd.f32 %v827, %v864
          %v891 = vadd.f32 %v828, %v866
          %v892 = vadd.f32 %v829, %v868
          %v893 = vadd.f32 %v830, %v870
          %v894 = vadd.f32 %v831, %v872
          %v895 = vadd.f32 %v832, %v874
          %v896 = vadd.f32 %v833, %v876
          %s897 = sadd.s32 %s801, 2
          %s898 = sld [smem:[#allocation4 + %s897]]
          %v899 = vstv %s898
          %v900 = vmul.f32 %v899, %v803
          %v901 = vmul.f32 %v899, %v804
          %v902 = vmul.f32 %v899, %v805
          %v903 = vmul.f32 %v899, %v806
          %v904 = vmul.f32 %v899, %v807
          %v905 = vmul.f32 %v899, %v808
          %v906 = vmul.f32 %v899, %v809
          %v907 = vmul.f32 %v899, %v810
          %v908 = vmul.f32 %v899, %v811
          %v909 = vmul.f32 %v899, %v812
          %920 = vrot.lane.b32.xlu0 %v900, 126
          %v921 = vpop.permute.xlu0 %920
          %922 = vrot.lane.b32.xlu0 %v901, 126
          %v923 = vpop.permute.xlu0 %922
          %924 = vrot.lane.b32.xlu0 %v902, 126
          %v925 = vpop.permute.xlu0 %924
          %926 = vrot.lane.b32.xlu0 %v903, 126
          %v927 = vpop.permute.xlu0 %926
          %928 = vrot.lane.b32.xlu0 %v904, 126
          %v929 = vpop.permute.xlu0 %928
          %930 = vrot.lane.b32.xlu0 %v905, 126
          %v931 = vpop.permute.xlu0 %930
          %932 = vrot.lane.b32.xlu0 %v906, 126
          %v933 = vpop.permute.xlu0 %932
          %934 = vrot.lane.b32.xlu0 %v907, 126
          %v935 = vpop.permute.xlu0 %934
          %936 = vrot.lane.b32.xlu0 %v908, 126
          %v937 = vpop.permute.xlu0 %936
          %938 = vrot.lane.b32.xlu0 %v909, 126
          %v939 = vpop.permute.xlu0 %938
          %v950 = vadd.f32 %v887, %v921
          %v951 = vadd.f32 %v888, %v923
          %v952 = vadd.f32 %v889, %v925
          %v953 = vadd.f32 %v890, %v927
          %v954 = vadd.f32 %v891, %v929
          %v955 = vadd.f32 %v892, %v931
          %v956 = vadd.f32 %v893, %v933
          %v957 = vadd.f32 %v894, %v935
          %v958 = vadd.f32 %v895, %v937
          %v959 = vadd.f32 %v896, %v939
          %s960 = smul.u32 %s473, 3
          %s961 = sadd.s32 %s960, 1
          %s962 = smul.u32 %s961, 9
          %s963 = sld [smem:[#allocation4 + %s962]]
          %s964 = scalar_lea.vmem %s406, 80
          %v965 = vld [vmem:[%s964] sm:$0xff]
          %v966 = vld [vmem:[%s964 + $0x8] sm:$0xff]
          %v967 = vld [vmem:[%s964 + $0x10] sm:$0xff]
          %v968 = vld [vmem:[%s964 + $0x18] sm:$0xff]
          %v969 = vld [vmem:[%s964 + $0x20] sm:$0xff]
          %v970 = vld [vmem:[%s964 + $0x28] sm:$0xff]
          %v971 = vld [vmem:[%s964 + $0x30] sm:$0xff]
          %v972 = vld [vmem:[%s964 + $0x38] sm:$0xff]
          %v973 = vld [vmem:[%s964 + $0x40] sm:$0xff]
          %v974 = vld [vmem:[%s964 + $0x48] sm:$0x3]
          %v975 = vstv %s963
          %v976 = vmul.f32 %v975, %v965
          %v977 = vmul.f32 %v975, %v966
          %v978 = vmul.f32 %v975, %v967
          %v979 = vmul.f32 %v975, %v968
          %v980 = vmul.f32 %v975, %v969
          %v981 = vmul.f32 %v975, %v970
          %v982 = vmul.f32 %v975, %v971
          %v983 = vmul.f32 %v975, %v972
          %v984 = vmul.f32 %v975, %v973
          %v985 = vmul.f32 %v975, %v974
          %v986 = vadd.f32 %v950, %v976
          %v987 = vadd.f32 %v951, %v977
          %v988 = vadd.f32 %v952, %v978
          %v989 = vadd.f32 %v953, %v979
          %v990 = vadd.f32 %v954, %v980
          %v991 = vadd.f32 %v955, %v981
          %v992 = vadd.f32 %v956, %v982
          %v993 = vadd.f32 %v957, %v983
          %v994 = vadd.f32 %v958, %v984
          %v995 = vadd.f32 %v959, %v985
          %s996 = sadd.s32 %s962, 1
          %s997 = sld [smem:[#allocation4 + %s996]]
          %v998 = vstv %s997
          %v999 = vmul.f32 %v998, %v965
          %v1000 = vmul.f32 %v998, %v966
          %v1001 = vmul.f32 %v998, %v967
          %v1002 = vmul.f32 %v998, %v968
          %v1003 = vmul.f32 %v998, %v969
          %v1004 = vmul.f32 %v998, %v970
          %v1005 = vmul.f32 %v998, %v971
          %v1006 = vmul.f32 %v998, %v972
          %v1007 = vmul.f32 %v998, %v973
          %v1008 = vmul.f32 %v998, %v974
          %1019 = vrot.lane.b32.xlu0 %v999, 127
          %v1020 = vpop.permute.xlu0 %1019
          %1021 = vrot.lane.b32.xlu0 %v1000, 127
          %v1022 = vpop.permute.xlu0 %1021
          %1023 = vrot.lane.b32.xlu0 %v1001, 127
          %v1024 = vpop.permute.xlu0 %1023
          %1025 = vrot.lane.b32.xlu0 %v1002, 127
          %v1026 = vpop.permute.xlu0 %1025
          %1027 = vrot.lane.b32.xlu0 %v1003, 127
          %v1028 = vpop.permute.xlu0 %1027
          %1029 = vrot.lane.b32.xlu0 %v1004, 127
          %v1030 = vpop.permute.xlu0 %1029
          %1031 = vrot.lane.b32.xlu0 %v1005, 127
          %v1032 = vpop.permute.xlu0 %1031
          %1033 = vrot.lane.b32.xlu0 %v1006, 127
          %v1034 = vpop.permute.xlu0 %1033
          %1035 = vrot.lane.b32.xlu0 %v1007, 127
          %v1036 = vpop.permute.xlu0 %1035
          %1037 = vrot.lane.b32.xlu0 %v1008, 127
          %v1038 = vpop.permute.xlu0 %1037
          %v1049 = vadd.f32 %v986, %v1020
          %v1050 = vadd.f32 %v987, %v1022
          %v1051 = vadd.f32 %v988, %v1024
          %v1052 = vadd.f32 %v989, %v1026
          %v1053 = vadd.f32 %v990, %v1028
          %v1054 = vadd.f32 %v991, %v1030
          %v1055 = vadd.f32 %v992, %v1032
          %v1056 = vadd.f32 %v993, %v1034
          %v1057 = vadd.f32 %v994, %v1036
          %v1058 = vadd.f32 %v995, %v1038
          %s1059 = sadd.s32 %s962, 2
          %s1060 = sld [smem:[#allocation4 + %s1059]]
          %v1061 = vstv %s1060
          %v1062 = vmul.f32 %v1061, %v965
          %v1063 = vmul.f32 %v1061, %v966
          %v1064 = vmul.f32 %v1061, %v967
          %v1065 = vmul.f32 %v1061, %v968
          %v1066 = vmul.f32 %v1061, %v969
          %v1067 = vmul.f32 %v1061, %v970
          %v1068 = vmul.f32 %v1061, %v971
          %v1069 = vmul.f32 %v1061, %v972
          %v1070 = vmul.f32 %v1061, %v973
          %v1071 = vmul.f32 %v1061, %v974
          %1082 = vrot.lane.b32.xlu0 %v1062, 126
          %v1083 = vpop.permute.xlu0 %1082
          %1084 = vrot.lane.b32.xlu0 %v1063, 126
          %v1085 = vpop.permute.xlu0 %1084
          %1086 = vrot.lane.b32.xlu0 %v1064, 126
          %v1087 = vpop.permute.xlu0 %1086
          %1088 = vrot.lane.b32.xlu0 %v1065, 126
          %v1089 = vpop.permute.xlu0 %1088
          %1090 = vrot.lane.b32.xlu0 %v1066, 126
          %v1091 = vpop.permute.xlu0 %1090
          %1092 = vrot.lane.b32.xlu0 %v1067, 126
          %v1093 = vpop.permute.xlu0 %1092
          %1094 = vrot.lane.b32.xlu0 %v1068, 126
          %v1095 = vpop.permute.xlu0 %1094
          %1096 = vrot.lane.b32.xlu0 %v1069, 126
          %v1097 = vpop.permute.xlu0 %1096
          %1098 = vrot.lane.b32.xlu0 %v1070, 126
          %v1099 = vpop.permute.xlu0 %1098
          %1100 = vrot.lane.b32.xlu0 %v1071, 126
          %v1101 = vpop.permute.xlu0 %1100
          %v1112 = vadd.f32 %v1049, %v1083
          %v1113 = vadd.f32 %v1050, %v1085
          %v1114 = vadd.f32 %v1051, %v1087
          %v1115 = vadd.f32 %v1052, %v1089
          %v1116 = vadd.f32 %v1053, %v1091
          %v1117 = vadd.f32 %v1054, %v1093
          %v1118 = vadd.f32 %v1055, %v1095
          %v1119 = vadd.f32 %v1056, %v1097
          %v1120 = vadd.f32 %v1057, %v1099
          %v1121 = vadd.f32 %v1058, %v1101
          %s1122 = smul.u32 %s961, 3
          %s1123 = sadd.s32 %s1122, 1
          %s1124 = smul.u32 %s1123, 3
          %s1125 = sld [smem:[#allocation4 + %s1124]]
          %v1126 = vld [vmem:[%s964 + $0x1] sm:$0xff]
          %v1127 = vld [vmem:[%s964 + $0x9] sm:$0xff]
          %v1128 = vld [vmem:[%s964 + $0x11] sm:$0xff]
          %v1129 = vld [vmem:[%s964 + $0x19] sm:$0xff]
          %v1130 = vld [vmem:[%s964 + $0x21] sm:$0xff]
          %v1131 = vld [vmem:[%s964 + $0x29] sm:$0xff]
          %v1132 = vld [vmem:[%s964 + $0x31] sm:$0xff]
          %v1133 = vld [vmem:[%s964 + $0x39] sm:$0xff]
          %v1134 = vld [vmem:[%s964 + $0x41] sm:$0xff]
          %v1135 = vld [vmem:[%s964 + $0x49] sm:$0x3]
          %v1136 = vstv %s1125
          %v1137 = vmul.f32 %v1136, %v1126
          %v1138 = vmul.f32 %v1136, %v1127
          %v1139 = vmul.f32 %v1136, %v1128
          %v1140 = vmul.f32 %v1136, %v1129
          %v1141 = vmul.f32 %v1136, %v1130
          %v1142 = vmul.f32 %v1136, %v1131
          %v1143 = vmul.f32 %v1136, %v1132
          %v1144 = vmul.f32 %v1136, %v1133
          %v1145 = vmul.f32 %v1136, %v1134
          %v1146 = vmul.f32 %v1136, %v1135
          %v1147 = vadd.f32 %v1112, %v1137
          %v1148 = vadd.f32 %v1113, %v1138
          %v1149 = vadd.f32 %v1114, %v1139
          %v1150 = vadd.f32 %v1115, %v1140
          %v1151 = vadd.f32 %v1116, %v1141
          %v1152 = vadd.f32 %v1117, %v1142
          %v1153 = vadd.f32 %v1118, %v1143
          %v1154 = vadd.f32 %v1119, %v1144
          %v1155 = vadd.f32 %v1120, %v1145
          %v1156 = vadd.f32 %v1121, %v1146
          %s1157 = sadd.s32 %s1124, 1
          %s1158 = sld [smem:[#allocation4 + %s1157]]
          %v1159 = vstv %s1158
          %v1160 = vmul.f32 %v1159, %v1126
          %v1161 = vmul.f32 %v1159, %v1127
          %v1162 = vmul.f32 %v1159, %v1128
          %v1163 = vmul.f32 %v1159, %v1129
          %v1164 = vmul.f32 %v1159, %v1130
          %v1165 = vmul.f32 %v1159, %v1131
          %v1166 = vmul.f32 %v1159, %v1132
          %v1167 = vmul.f32 %v1159, %v1133
          %v1168 = vmul.f32 %v1159, %v1134
          %v1169 = vmul.f32 %v1159, %v1135
          %1180 = vrot.lane.b32.xlu0 %v1160, 127
          %v1181 = vpop.permute.xlu0 %1180
          %1182 = vrot.lane.b32.xlu0 %v1161, 127
          %v1183 = vpop.permute.xlu0 %1182
          %1184 = vrot.lane.b32.xlu0 %v1162, 127
          %v1185 = vpop.permute.xlu0 %1184
          %1186 = vrot.lane.b32.xlu0 %v1163, 127
          %v1187 = vpop.permute.xlu0 %1186
          %1188 = vrot.lane.b32.xlu0 %v1164, 127
          %v1189 = vpop.permute.xlu0 %1188
          %1190 = vrot.lane.b32.xlu0 %v1165, 127
          %v1191 = vpop.permute.xlu0 %1190
          %1192 = vrot.lane.b32.xlu0 %v1166, 127
          %v1193 = vpop.permute.xlu0 %1192
          %1194 = vrot.lane.b32.xlu0 %v1167, 127
          %v1195 = vpop.permute.xlu0 %1194
          %1196 = vrot.lane.b32.xlu0 %v1168, 127
          %v1197 = vpop.permute.xlu0 %1196
          %1198 = vrot.lane.b32.xlu0 %v1169, 127
          %v1199 = vpop.permute.xlu0 %1198
          %v1210 = vadd.f32 %v1147, %v1181
          %v1211 = vadd.f32 %v1148, %v1183
          %v1212 = vadd.f32 %v1149, %v1185
          %v1213 = vadd.f32 %v1150, %v1187
          %v1214 = vadd.f32 %v1151, %v1189
          %v1215 = vadd.f32 %v1152, %v1191
          %v1216 = vadd.f32 %v1153, %v1193
          %v1217 = vadd.f32 %v1154, %v1195
          %v1218 = vadd.f32 %v1155, %v1197
          %v1219 = vadd.f32 %v1156, %v1199
          %s1220 = sadd.s32 %s1124, 2
          %s1221 = sld [smem:[#allocation4 + %s1220]]
          %v1222 = vstv %s1221
          %v1223 = vmul.f32 %v1222, %v1126
          %v1224 = vmul.f32 %v1222, %v1127
          %v1225 = vmul.f32 %v1222, %v1128
          %v1226 = vmul.f32 %v1222, %v1129
          %v1227 = vmul.f32 %v1222, %v1130
          %v1228 = vmul.f32 %v1222, %v1131
          %v1229 = vmul.f32 %v1222, %v1132
          %v1230 = vmul.f32 %v1222, %v1133
          %v1231 = vmul.f32 %v1222, %v1134
          %v1232 = vmul.f32 %v1222, %v1135
          %1243 = vrot.lane.b32.xlu0 %v1223, 126
          %v1244 = vpop.permute.xlu0 %1243
          %1245 = vrot.lane.b32.xlu0 %v1224, 126
          %v1246 = vpop.permute.xlu0 %1245
          %1247 = vrot.lane.b32.xlu0 %v1225, 126
          %v1248 = vpop.permute.xlu0 %1247
          %1249 = vrot.lane.b32.xlu0 %v1226, 126
          %v1250 = vpop.permute.xlu0 %1249
          %1251 = vrot.lane.b32.xlu0 %v1227, 126
          %v1252 = vpop.permute.xlu0 %1251
          %1253 = vrot.lane.b32.xlu0 %v1228, 126
          %v1254 = vpop.permute.xlu0 %1253
          %1255 = vrot.lane.b32.xlu0 %v1229, 126
          %v1256 = vpop.permute.xlu0 %1255
          %1257 = vrot.lane.b32.xlu0 %v1230, 126
          %v1258 = vpop.permute.xlu0 %1257
          %1259 = vrot.lane.b32.xlu0 %v1231, 126
          %v1260 = vpop.permute.xlu0 %1259
          %1261 = vrot.lane.b32.xlu0 %v1232, 126
          %v1262 = vpop.permute.xlu0 %1261
          %v1273 = vadd.f32 %v1210, %v1244
          %v1274 = vadd.f32 %v1211, %v1246
          %v1275 = vadd.f32 %v1212, %v1248
          %v1276 = vadd.f32 %v1213, %v1250
          %v1277 = vadd.f32 %v1214, %v1252
          %v1278 = vadd.f32 %v1215, %v1254
          %v1279 = vadd.f32 %v1216, %v1256
          %v1280 = vadd.f32 %v1217, %v1258
          %v1281 = vadd.f32 %v1218, %v1260
          %v1282 = vadd.f32 %v1219, %v1262
          %s1283 = sadd.s32 %s1122, 2
          %s1284 = smul.u32 %s1283, 3
          %s1285 = sld [smem:[#allocation4 + %s1284]]
          %v1286 = vld [vmem:[%s964 + $0x2] sm:$0xff]
          %v1287 = vld [vmem:[%s964 + $0xa] sm:$0xff]
          %v1288 = vld [vmem:[%s964 + $0x12] sm:$0xff]
          %v1289 = vld [vmem:[%s964 + $0x1a] sm:$0xff]
          %v1290 = vld [vmem:[%s964 + $0x22] sm:$0xff]
          %v1291 = vld [vmem:[%s964 + $0x2a] sm:$0xff]
          %v1292 = vld [vmem:[%s964 + $0x32] sm:$0xff]
          %v1293 = vld [vmem:[%s964 + $0x3a] sm:$0xff]
          %v1294 = vld [vmem:[%s964 + $0x42] sm:$0xff]
          %v1295 = vld [vmem:[%s964 + $0x4a] sm:$0x3]
          %v1296 = vstv %s1285
          %v1297 = vmul.f32 %v1296, %v1286
          %v1298 = vmul.f32 %v1296, %v1287
          %v1299 = vmul.f32 %v1296, %v1288
          %v1300 = vmul.f32 %v1296, %v1289
          %v1301 = vmul.f32 %v1296, %v1290
          %v1302 = vmul.f32 %v1296, %v1291
          %v1303 = vmul.f32 %v1296, %v1292
          %v1304 = vmul.f32 %v1296, %v1293
          %v1305 = vmul.f32 %v1296, %v1294
          %v1306 = vmul.f32 %v1296, %v1295
          %v1307 = vadd.f32 %v1273, %v1297
          %v1308 = vadd.f32 %v1274, %v1298
          %v1309 = vadd.f32 %v1275, %v1299
          %v1310 = vadd.f32 %v1276, %v1300
          %v1311 = vadd.f32 %v1277, %v1301
          %v1312 = vadd.f32 %v1278, %v1302
          %v1313 = vadd.f32 %v1279, %v1303
          %v1314 = vadd.f32 %v1280, %v1304
          %v1315 = vadd.f32 %v1281, %v1305
          %v1316 = vadd.f32 %v1282, %v1306
          %s1317 = sadd.s32 %s1284, 1
          %s1318 = sld [smem:[#allocation4 + %s1317]]
          %v1319 = vstv %s1318
          %v1320 = vmul.f32 %v1319, %v1286
          %v1321 = vmul.f32 %v1319, %v1287
          %v1322 = vmul.f32 %v1319, %v1288
          %v1323 = vmul.f32 %v1319, %v1289
          %v1324 = vmul.f32 %v1319, %v1290
          %v1325 = vmul.f32 %v1319, %v1291
          %v1326 = vmul.f32 %v1319, %v1292
          %v1327 = vmul.f32 %v1319, %v1293
          %v1328 = vmul.f32 %v1319, %v1294
          %v1329 = vmul.f32 %v1319, %v1295
          %1340 = vrot.lane.b32.xlu0 %v1320, 127
          %v1341 = vpop.permute.xlu0 %1340
          %1342 = vrot.lane.b32.xlu0 %v1321, 127
          %v1343 = vpop.permute.xlu0 %1342
          %1344 = vrot.lane.b32.xlu0 %v1322, 127
          %v1345 = vpop.permute.xlu0 %1344
          %1346 = vrot.lane.b32.xlu0 %v1323, 127
          %v1347 = vpop.permute.xlu0 %1346
          %1348 = vrot.lane.b32.xlu0 %v1324, 127
          %v1349 = vpop.permute.xlu0 %1348
          %1350 = vrot.lane.b32.xlu0 %v1325, 127
          %v1351 = vpop.permute.xlu0 %1350
          %1352 = vrot.lane.b32.xlu0 %v1326, 127
          %v1353 = vpop.permute.xlu0 %1352
          %1354 = vrot.lane.b32.xlu0 %v1327, 127
          %v1355 = vpop.permute.xlu0 %1354
          %1356 = vrot.lane.b32.xlu0 %v1328, 127
          %v1357 = vpop.permute.xlu0 %1356
          %1358 = vrot.lane.b32.xlu0 %v1329, 127
          %v1359 = vpop.permute.xlu0 %1358
          %v1370 = vadd.f32 %v1307, %v1341
          %v1371 = vadd.f32 %v1308, %v1343
          %v1372 = vadd.f32 %v1309, %v1345
          %v1373 = vadd.f32 %v1310, %v1347
          %v1374 = vadd.f32 %v1311, %v1349
          %v1375 = vadd.f32 %v1312, %v1351
          %v1376 = vadd.f32 %v1313, %v1353
          %v1377 = vadd.f32 %v1314, %v1355
          %v1378 = vadd.f32 %v1315, %v1357
          %v1379 = vadd.f32 %v1316, %v1359
          %s1380 = sadd.s32 %s1284, 2
          %s1381 = sld [smem:[#allocation4 + %s1380]]
          %v1382 = vstv %s1381
          %v1383 = vmul.f32 %v1382, %v1286
          %v1384 = vmul.f32 %v1382, %v1287
          %v1385 = vmul.f32 %v1382, %v1288
          %v1386 = vmul.f32 %v1382, %v1289
          %v1387 = vmul.f32 %v1382, %v1290
          %v1388 = vmul.f32 %v1382, %v1291
          %v1389 = vmul.f32 %v1382, %v1292
          %v1390 = vmul.f32 %v1382, %v1293
          %v1391 = vmul.f32 %v1382, %v1294
          %v1392 = vmul.f32 %v1382, %v1295
          %1403 = vrot.lane.b32.xlu0 %v1383, 126
          %v1404 = vpop.permute.xlu0 %1403
          %1405 = vrot.lane.b32.xlu0 %v1384, 126
          %v1406 = vpop.permute.xlu0 %1405
          %1407 = vrot.lane.b32.xlu0 %v1385, 126
          %v1408 = vpop.permute.xlu0 %1407
          %1409 = vrot.lane.b32.xlu0 %v1386, 126
          %v1410 = vpop.permute.xlu0 %1409
          %1411 = vrot.lane.b32.xlu0 %v1387, 126
          %v1412 = vpop.permute.xlu0 %1411
          %1413 = vrot.lane.b32.xlu0 %v1388, 126
          %v1414 = vpop.permute.xlu0 %1413
          %1415 = vrot.lane.b32.xlu0 %v1389, 126
          %v1416 = vpop.permute.xlu0 %1415
          %1417 = vrot.lane.b32.xlu0 %v1390, 126
          %v1418 = vpop.permute.xlu0 %1417
          %1419 = vrot.lane.b32.xlu0 %v1391, 126
          %v1420 = vpop.permute.xlu0 %1419
          %1421 = vrot.lane.b32.xlu0 %v1392, 126
          %v1422 = vpop.permute.xlu0 %1421
          %v1433 = vadd.f32 %v1370, %v1404
          %v1434 = vadd.f32 %v1371, %v1406
          %v1435 = vadd.f32 %v1372, %v1408
          %v1436 = vadd.f32 %v1373, %v1410
          %v1437 = vadd.f32 %v1374, %v1412
          %v1438 = vadd.f32 %v1375, %v1414
          %v1439 = vadd.f32 %v1376, %v1416
          %v1440 = vadd.f32 %v1377, %v1418
          %v1441 = vadd.f32 %v1378, %v1420
          %v1442 = vadd.f32 %v1379, %v1422
          %s1443 = sadd.s32 %s960, 2
          %s1444 = smul.u32 %s1443, 9
          %s1445 = sld [smem:[#allocation4 + %s1444]]
          %s1446 = scalar_lea.vmem %s406, 160
          %v1447 = vld [vmem:[%s1446] sm:$0xff]
          %v1448 = vld [vmem:[%s1446 + $0x8] sm:$0xff]
          %v1449 = vld [vmem:[%s1446 + $0x10] sm:$0xff]
          %v1450 = vld [vmem:[%s1446 + $0x18] sm:$0xff]
          %v1451 = vld [vmem:[%s1446 + $0x20] sm:$0xff]
          %v1452 = vld [vmem:[%s1446 + $0x28] sm:$0xff]
          %v1453 = vld [vmem:[%s1446 + $0x30] sm:$0xff]
          %v1454 = vld [vmem:[%s1446 + $0x38] sm:$0xff]
          %v1455 = vld [vmem:[%s1446 + $0x40] sm:$0xff]
          %v1456 = vld [vmem:[%s1446 + $0x48] sm:$0x3]
          %v1457 = vstv %s1445
          %v1458 = vmul.f32 %v1457, %v1447
          %v1459 = vmul.f32 %v1457, %v1448
          %v1460 = vmul.f32 %v1457, %v1449
          %v1461 = vmul.f32 %v1457, %v1450
          %v1462 = vmul.f32 %v1457, %v1451
          %v1463 = vmul.f32 %v1457, %v1452
          %v1464 = vmul.f32 %v1457, %v1453
          %v1465 = vmul.f32 %v1457, %v1454
          %v1466 = vmul.f32 %v1457, %v1455
          %v1467 = vmul.f32 %v1457, %v1456
          %v1468 = vadd.f32 %v1433, %v1458
          %v1469 = vadd.f32 %v1434, %v1459
          %v1470 = vadd.f32 %v1435, %v1460
          %v1471 = vadd.f32 %v1436, %v1461
          %v1472 = vadd.f32 %v1437, %v1462
          %v1473 = vadd.f32 %v1438, %v1463
          %v1474 = vadd.f32 %v1439, %v1464
          %v1475 = vadd.f32 %v1440, %v1465
          %v1476 = vadd.f32 %v1441, %v1466
          %v1477 = vadd.f32 %v1442, %v1467
          %s1478 = sadd.s32 %s1444, 1
          %s1479 = sld [smem:[#allocation4 + %s1478]]
          %v1480 = vstv %s1479
          %v1481 = vmul.f32 %v1480, %v1447
          %v1482 = vmul.f32 %v1480, %v1448
          %v1483 = vmul.f32 %v1480, %v1449
          %v1484 = vmul.f32 %v1480, %v1450
          %v1485 = vmul.f32 %v1480, %v1451
          %v1486 = vmul.f32 %v1480, %v1452
          %v1487 = vmul.f32 %v1480, %v1453
          %v1488 = vmul.f32 %v1480, %v1454
          %v1489 = vmul.f32 %v1480, %v1455
          %v1490 = vmul.f32 %v1480, %v1456
          %1501 = vrot.lane.b32.xlu0 %v1481, 127
          %v1502 = vpop.permute.xlu0 %1501
          %1503 = vrot.lane.b32.xlu0 %v1482, 127
          %v1504 = vpop.permute.xlu0 %1503
          %1505 = vrot.lane.b32.xlu0 %v1483, 127
          %v1506 = vpop.permute.xlu0 %1505
          %1507 = vrot.lane.b32.xlu0 %v1484, 127
          %v1508 = vpop.permute.xlu0 %1507
          %1509 = vrot.lane.b32.xlu0 %v1485, 127
          %v1510 = vpop.permute.xlu0 %1509
          %1511 = vrot.lane.b32.xlu0 %v1486, 127
          %v1512 = vpop.permute.xlu0 %1511
          %1513 = vrot.lane.b32.xlu0 %v1487, 127
          %v1514 = vpop.permute.xlu0 %1513
          %1515 = vrot.lane.b32.xlu0 %v1488, 127
          %v1516 = vpop.permute.xlu0 %1515
          %1517 = vrot.lane.b32.xlu0 %v1489, 127
          %v1518 = vpop.permute.xlu0 %1517
          %1519 = vrot.lane.b32.xlu0 %v1490, 127
          %v1520 = vpop.permute.xlu0 %1519
          %v1531 = vadd.f32 %v1468, %v1502
          %v1532 = vadd.f32 %v1469, %v1504
          %v1533 = vadd.f32 %v1470, %v1506
          %v1534 = vadd.f32 %v1471, %v1508
          %v1535 = vadd.f32 %v1472, %v1510
          %v1536 = vadd.f32 %v1473, %v1512
          %v1537 = vadd.f32 %v1474, %v1514
          %v1538 = vadd.f32 %v1475, %v1516
          %v1539 = vadd.f32 %v1476, %v1518
          %v1540 = vadd.f32 %v1477, %v1520
          %s1541 = sadd.s32 %s1444, 2
          %s1542 = sld [smem:[#allocation4 + %s1541]]
          %v1543 = vstv %s1542
          %v1544 = vmul.f32 %v1543, %v1447
          %v1545 = vmul.f32 %v1543, %v1448
          %v1546 = vmul.f32 %v1543, %v1449
          %v1547 = vmul.f32 %v1543, %v1450
          %v1548 = vmul.f32 %v1543, %v1451
          %v1549 = vmul.f32 %v1543, %v1452
          %v1550 = vmul.f32 %v1543, %v1453
          %v1551 = vmul.f32 %v1543, %v1454
          %v1552 = vmul.f32 %v1543, %v1455
          %v1553 = vmul.f32 %v1543, %v1456
          %1564 = vrot.lane.b32.xlu0 %v1544, 126
          %v1565 = vpop.permute.xlu0 %1564
          %1566 = vrot.lane.b32.xlu0 %v1545, 126
          %v1567 = vpop.permute.xlu0 %1566
          %1568 = vrot.lane.b32.xlu0 %v1546, 126
          %v1569 = vpop.permute.xlu0 %1568
          %1570 = vrot.lane.b32.xlu0 %v1547, 126
          %v1571 = vpop.permute.xlu0 %1570
          %1572 = vrot.lane.b32.xlu0 %v1548, 126
          %v1573 = vpop.permute.xlu0 %1572
          %1574 = vrot.lane.b32.xlu0 %v1549, 126
          %v1575 = vpop.permute.xlu0 %1574
          %1576 = vrot.lane.b32.xlu0 %v1550, 126
          %v1577 = vpop.permute.xlu0 %1576
          %1578 = vrot.lane.b32.xlu0 %v1551, 126
          %v1579 = vpop.permute.xlu0 %1578
          %1580 = vrot.lane.b32.xlu0 %v1552, 126
          %v1581 = vpop.permute.xlu0 %1580
          %1582 = vrot.lane.b32.xlu0 %v1553, 126
          %v1583 = vpop.permute.xlu0 %1582
          %v1594 = vadd.f32 %v1531, %v1565
          %v1595 = vadd.f32 %v1532, %v1567
          %v1596 = vadd.f32 %v1533, %v1569
          %v1597 = vadd.f32 %v1534, %v1571
          %v1598 = vadd.f32 %v1535, %v1573
          %v1599 = vadd.f32 %v1536, %v1575
          %v1600 = vadd.f32 %v1537, %v1577
          %v1601 = vadd.f32 %v1538, %v1579
          %v1602 = vadd.f32 %v1539, %v1581
          %v1603 = vadd.f32 %v1540, %v1583
          %s1604 = smul.u32 %s1443, 3
          %s1605 = sadd.s32 %s1604, 1
          %s1606 = smul.u32 %s1605, 3
          %s1607 = sld [smem:[#allocation4 + %s1606]]
          %v1608 = vld [vmem:[%s1446 + $0x1] sm:$0xff]
          %v1609 = vld [vmem:[%s1446 + $0x9] sm:$0xff]
          %v1610 = vld [vmem:[%s1446 + $0x11] sm:$0xff]
          %v1611 = vld [vmem:[%s1446 + $0x19] sm:$0xff]
          %v1612 = vld [vmem:[%s1446 + $0x21] sm:$0xff]
          %v1613 = vld [vmem:[%s1446 + $0x29] sm:$0xff]
          %v1614 = vld [vmem:[%s1446 + $0x31] sm:$0xff]
          %v1615 = vld [vmem:[%s1446 + $0x39] sm:$0xff]
          %v1616 = vld [vmem:[%s1446 + $0x41] sm:$0xff]
          %v1617 = vld [vmem:[%s1446 + $0x49] sm:$0x3]
          %v1618 = vstv %s1607
          %v1619 = vmul.f32 %v1618, %v1608
          %v1620 = vmul.f32 %v1618, %v1609
          %v1621 = vmul.f32 %v1618, %v1610
          %v1622 = vmul.f32 %v1618, %v1611
          %v1623 = vmul.f32 %v1618, %v1612
          %v1624 = vmul.f32 %v1618, %v1613
          %v1625 = vmul.f32 %v1618, %v1614
          %v1626 = vmul.f32 %v1618, %v1615
          %v1627 = vmul.f32 %v1618, %v1616
          %v1628 = vmul.f32 %v1618, %v1617
          %v1629 = vadd.f32 %v1594, %v1619
          %v1630 = vadd.f32 %v1595, %v1620
          %v1631 = vadd.f32 %v1596, %v1621
          %v1632 = vadd.f32 %v1597, %v1622
          %v1633 = vadd.f32 %v1598, %v1623
          %v1634 = vadd.f32 %v1599, %v1624
          %v1635 = vadd.f32 %v1600, %v1625
          %v1636 = vadd.f32 %v1601, %v1626
          %v1637 = vadd.f32 %v1602, %v1627
          %v1638 = vadd.f32 %v1603, %v1628
          %s1639 = sadd.s32 %s1606, 1
          %s1640 = sld [smem:[#allocation4 + %s1639]]
          %v1641 = vstv %s1640
          %v1642 = vmul.f32 %v1641, %v1608
          %v1643 = vmul.f32 %v1641, %v1609
          %v1644 = vmul.f32 %v1641, %v1610
          %v1645 = vmul.f32 %v1641, %v1611
          %v1646 = vmul.f32 %v1641, %v1612
          %v1647 = vmul.f32 %v1641, %v1613
          %v1648 = vmul.f32 %v1641, %v1614
          %v1649 = vmul.f32 %v1641, %v1615
          %v1650 = vmul.f32 %v1641, %v1616
          %v1651 = vmul.f32 %v1641, %v1617
          %1662 = vrot.lane.b32.xlu0 %v1642, 127
          %v1663 = vpop.permute.xlu0 %1662
          %1664 = vrot.lane.b32.xlu0 %v1643, 127
          %v1665 = vpop.permute.xlu0 %1664
          %1666 = vrot.lane.b32.xlu0 %v1644, 127
          %v1667 = vpop.permute.xlu0 %1666
          %1668 = vrot.lane.b32.xlu0 %v1645, 127
          %v1669 = vpop.permute.xlu0 %1668
          %1670 = vrot.lane.b32.xlu0 %v1646, 127
          %v1671 = vpop.permute.xlu0 %1670
          %1672 = vrot.lane.b32.xlu0 %v1647, 127
          %v1673 = vpop.permute.xlu0 %1672
          %1674 = vrot.lane.b32.xlu0 %v1648, 127
          %v1675 = vpop.permute.xlu0 %1674
          %1676 = vrot.lane.b32.xlu0 %v1649, 127
          %v1677 = vpop.permute.xlu0 %1676
          %1678 = vrot.lane.b32.xlu0 %v1650, 127
          %v1679 = vpop.permute.xlu0 %1678
          %1680 = vrot.lane.b32.xlu0 %v1651, 127
          %v1681 = vpop.permute.xlu0 %1680
          %v1692 = vadd.f32 %v1629, %v1663
          %v1693 = vadd.f32 %v1630, %v1665
          %v1694 = vadd.f32 %v1631, %v1667
          %v1695 = vadd.f32 %v1632, %v1669
          %v1696 = vadd.f32 %v1633, %v1671
          %v1697 = vadd.f32 %v1634, %v1673
          %v1698 = vadd.f32 %v1635, %v1675
          %v1699 = vadd.f32 %v1636, %v1677
          %v1700 = vadd.f32 %v1637, %v1679
          %v1701 = vadd.f32 %v1638, %v1681
          %s1702 = sadd.s32 %s1606, 2
          %s1703 = sld [smem:[#allocation4 + %s1702]]
          %v1704 = vstv %s1703
          %v1705 = vmul.f32 %v1704, %v1608
          %v1706 = vmul.f32 %v1704, %v1609
          %v1707 = vmul.f32 %v1704, %v1610
          %v1708 = vmul.f32 %v1704, %v1611
          %v1709 = vmul.f32 %v1704, %v1612
          %v1710 = vmul.f32 %v1704, %v1613
          %v1711 = vmul.f32 %v1704, %v1614
          %v1712 = vmul.f32 %v1704, %v1615
          %v1713 = vmul.f32 %v1704, %v1616
          %v1714 = vmul.f32 %v1704, %v1617
          %1725 = vrot.lane.b32.xlu0 %v1705, 126
          %v1726 = vpop.permute.xlu0 %1725
          %1727 = vrot.lane.b32.xlu0 %v1706, 126
          %v1728 = vpop.permute.xlu0 %1727
          %1729 = vrot.lane.b32.xlu0 %v1707, 126
          %v1730 = vpop.permute.xlu0 %1729
          %1731 = vrot.lane.b32.xlu0 %v1708, 126
          %v1732 = vpop.permute.xlu0 %1731
          %1733 = vrot.lane.b32.xlu0 %v1709, 126
          %v1734 = vpop.permute.xlu0 %1733
          %1735 = vrot.lane.b32.xlu0 %v1710, 126
          %v1736 = vpop.permute.xlu0 %1735
          %1737 = vrot.lane.b32.xlu0 %v1711, 126
          %v1738 = vpop.permute.xlu0 %1737
          %1739 = vrot.lane.b32.xlu0 %v1712, 126
          %v1740 = vpop.permute.xlu0 %1739
          %1741 = vrot.lane.b32.xlu0 %v1713, 126
          %v1742 = vpop.permute.xlu0 %1741
          %1743 = vrot.lane.b32.xlu0 %v1714, 126
          %v1744 = vpop.permute.xlu0 %1743
          %v1755 = vadd.f32 %v1692, %v1726
          %v1756 = vadd.f32 %v1693, %v1728
          %v1757 = vadd.f32 %v1694, %v1730
          %v1758 = vadd.f32 %v1695, %v1732
          %v1759 = vadd.f32 %v1696, %v1734
          %v1760 = vadd.f32 %v1697, %v1736
          %v1761 = vadd.f32 %v1698, %v1738
          %v1762 = vadd.f32 %v1699, %v1740
          %v1763 = vadd.f32 %v1700, %v1742
          %v1764 = vadd.f32 %v1701, %v1744
          %s1765 = sadd.s32 %s1604, 2
          %s1766 = smul.u32 %s1765, 3
          %s1767 = sld [smem:[#allocation4 + %s1766]]
          %v1768 = vld [vmem:[%s1446 + $0x2] sm:$0xff]
          %v1769 = vld [vmem:[%s1446 + $0xa] sm:$0xff]
          %v1770 = vld [vmem:[%s1446 + $0x12] sm:$0xff]
          %v1771 = vld [vmem:[%s1446 + $0x1a] sm:$0xff]
          %v1772 = vld [vmem:[%s1446 + $0x22] sm:$0xff]
          %v1773 = vld [vmem:[%s1446 + $0x2a] sm:$0xff]
          %v1774 = vld [vmem:[%s1446 + $0x32] sm:$0xff]
          %v1775 = vld [vmem:[%s1446 + $0x3a] sm:$0xff]
          %v1776 = vld [vmem:[%s1446 + $0x42] sm:$0xff]
          %v1777 = vld [vmem:[%s1446 + $0x4a] sm:$0x3]
          %v1778 = vstv %s1767
          %v1779 = vmul.f32 %v1778, %v1768
          %v1780 = vmul.f32 %v1778, %v1769
          %v1781 = vmul.f32 %v1778, %v1770
          %v1782 = vmul.f32 %v1778, %v1771
          %v1783 = vmul.f32 %v1778, %v1772
          %v1784 = vmul.f32 %v1778, %v1773
          %v1785 = vmul.f32 %v1778, %v1774
          %v1786 = vmul.f32 %v1778, %v1775
          %v1787 = vmul.f32 %v1778, %v1776
          %v1788 = vmul.f32 %v1778, %v1777
          %v1789 = vadd.f32 %v1755, %v1779
          %v1790 = vadd.f32 %v1756, %v1780
          %v1791 = vadd.f32 %v1757, %v1781
          %v1792 = vadd.f32 %v1758, %v1782
          %v1793 = vadd.f32 %v1759, %v1783
          %v1794 = vadd.f32 %v1760, %v1784
          %v1795 = vadd.f32 %v1761, %v1785
          %v1796 = vadd.f32 %v1762, %v1786
          %v1797 = vadd.f32 %v1763, %v1787
          %v1798 = vadd.f32 %v1764, %v1788
          %s1799 = sadd.s32 %s1766, 1
          %s1800 = sld [smem:[#allocation4 + %s1799]]
          %v1801 = vstv %s1800
          %v1802 = vmul.f32 %v1801, %v1768
          %v1803 = vmul.f32 %v1801, %v1769
          %v1804 = vmul.f32 %v1801, %v1770
          %v1805 = vmul.f32 %v1801, %v1771
          %v1806 = vmul.f32 %v1801, %v1772
          %v1807 = vmul.f32 %v1801, %v1773
          %v1808 = vmul.f32 %v1801, %v1774
          %v1809 = vmul.f32 %v1801, %v1775
          %v1810 = vmul.f32 %v1801, %v1776
          %v1811 = vmul.f32 %v1801, %v1777
          %1822 = vrot.lane.b32.xlu0 %v1802, 127
          %v1823 = vpop.permute.xlu0 %1822
          %1824 = vrot.lane.b32.xlu0 %v1803, 127
          %v1825 = vpop.permute.xlu0 %1824
          %1826 = vrot.lane.b32.xlu0 %v1804, 127
          %v1827 = vpop.permute.xlu0 %1826
          %1828 = vrot.lane.b32.xlu0 %v1805, 127
          %v1829 = vpop.permute.xlu0 %1828
          %1830 = vrot.lane.b32.xlu0 %v1806, 127
          %v1831 = vpop.permute.xlu0 %1830
          %1832 = vrot.lane.b32.xlu0 %v1807, 127
          %v1833 = vpop.permute.xlu0 %1832
          %1834 = vrot.lane.b32.xlu0 %v1808, 127
          %v1835 = vpop.permute.xlu0 %1834
          %1836 = vrot.lane.b32.xlu0 %v1809, 127
          %v1837 = vpop.permute.xlu0 %1836
          %1838 = vrot.lane.b32.xlu0 %v1810, 127
          %v1839 = vpop.permute.xlu0 %1838
          %1840 = vrot.lane.b32.xlu0 %v1811, 127
          %v1841 = vpop.permute.xlu0 %1840
          %v1852 = vadd.f32 %v1789, %v1823
          %v1853 = vadd.f32 %v1790, %v1825
          %v1854 = vadd.f32 %v1791, %v1827
          %v1855 = vadd.f32 %v1792, %v1829
          %v1856 = vadd.f32 %v1793, %v1831
          %v1857 = vadd.f32 %v1794, %v1833
          %v1858 = vadd.f32 %v1795, %v1835
          %v1859 = vadd.f32 %v1796, %v1837
          %v1860 = vadd.f32 %v1797, %v1839
          %v1861 = vadd.f32 %v1798, %v1841
          %s1862 = sadd.s32 %s1766, 2
          %s1863 = sld [smem:[#allocation4 + %s1862]]
          %v1864 = vstv %s1863
          %v1865 = vmul.f32 %v1864, %v1768
          %v1866 = vmul.f32 %v1864, %v1769
          %v1867 = vmul.f32 %v1864, %v1770
          %v1868 = vmul.f32 %v1864, %v1771
          %v1869 = vmul.f32 %v1864, %v1772
          %v1870 = vmul.f32 %v1864, %v1773
          %v1871 = vmul.f32 %v1864, %v1774
          %v1872 = vmul.f32 %v1864, %v1775
          %v1873 = vmul.f32 %v1864, %v1776
          %v1874 = vmul.f32 %v1864, %v1777
          %1885 = vrot.lane.b32.xlu0 %v1865, 126
          %v1886 = vpop.permute.xlu0 %1885
          %1887 = vrot.lane.b32.xlu0 %v1866, 126
          %v1888 = vpop.permute.xlu0 %1887
          %1889 = vrot.lane.b32.xlu0 %v1867, 126
          %v1890 = vpop.permute.xlu0 %1889
          %1891 = vrot.lane.b32.xlu0 %v1868, 126
          %v1892 = vpop.permute.xlu0 %1891
          %1893 = vrot.lane.b32.xlu0 %v1869, 126
          %v1894 = vpop.permute.xlu0 %1893
          %1895 = vrot.lane.b32.xlu0 %v1870, 126
          %v1896 = vpop.permute.xlu0 %1895
          %1897 = vrot.lane.b32.xlu0 %v1871, 126
          %v1898 = vpop.permute.xlu0 %1897
          %1899 = vrot.lane.b32.xlu0 %v1872, 126
          %v1900 = vpop.permute.xlu0 %1899
          %1901 = vrot.lane.b32.xlu0 %v1873, 126
          %v1902 = vpop.permute.xlu0 %1901
          %1903 = vrot.lane.b32.xlu0 %v1874, 126
          %v1904 = vpop.permute.xlu0 %1903
          %v1915 = vadd.f32 %v1852, %v1886
          %v1916 = vadd.f32 %v1853, %v1888
          %v1917 = vadd.f32 %v1854, %v1890
          %v1918 = vadd.f32 %v1855, %v1892
          %v1919 = vadd.f32 %v1856, %v1894
          %v1920 = vadd.f32 %v1857, %v1896
          %v1921 = vadd.f32 %v1858, %v1898
          %v1922 = vadd.f32 %v1859, %v1900
          %v1923 = vadd.f32 %v1860, %v1902
          %v1924 = vadd.f32 %v1861, %v1904
          %v1925 = vmax.f32 %v1915, 0.0
          %v1926 = vmax.f32 %v1916, 0.0
          %v1927 = vmax.f32 %v1917, 0.0
          %v1928 = vmax.f32 %v1918, 0.0
          %v1929 = vmax.f32 %v1919, 0.0
          %v1930 = vmax.f32 %v1920, 0.0
          %v1931 = vmax.f32 %v1921, 0.0
          %v1932 = vmax.f32 %v1922, 0.0
          %v1933 = vmax.f32 %v1923, 0.0
          %v1934 = vmax.f32 %v1924, 0.0
          %v1935 = vsel %vm462, %v1925, 0.0
          %v1936 = vsel %vm463, %v1926, 0.0
          %v1937 = vsel %vm464, %v1927, 0.0
          %v1938 = vsel %vm465, %v1928, 0.0
          %v1939 = vsel %vm466, %v1929, 0.0
          %v1940 = vsel %vm467, %v1930, 0.0
          %v1941 = vsel %vm468, %v1931, 0.0
          %v1942 = vsel %vm469, %v1932, 0.0
          %v1943 = vsel %vm470, %v1933, 0.0
          %v1944 = vsel %vm471, %v1934, 0.0
          %s1945 = smul.u32 %s473, 80
          %s1946 = scalar_lea.vmem [#allocation2], %s1945
          %vm1947 = vcmask 850944
          %1948 = vst.msk [vmem:[%s1946] sm:$0xff] %vm1947, %v1935
          %1949 = vst.msk [vmem:[%s1946 + $0x8] sm:$0xff] %vm1947, %v1936
          %1950 = vst.msk [vmem:[%s1946 + $0x10] sm:$0xff] %vm1947, %v1937
          %1951 = vst.msk [vmem:[%s1946 + $0x18] sm:$0xff] %vm1947, %v1938
          %1952 = vst.msk [vmem:[%s1946 + $0x20] sm:$0xff] %vm1947, %v1939
          %1953 = vst.msk [vmem:[%s1946 + $0x28] sm:$0xff] %vm1947, %v1940
          %1954 = vst.msk [vmem:[%s1946 + $0x30] sm:$0xff] %vm1947, %v1941
          %1955 = vst.msk [vmem:[%s1946 + $0x38] sm:$0xff] %vm1947, %v1942
          %1956 = vst.msk [vmem:[%s1946 + $0x40] sm:$0xff] %vm1947, %v1943
          %vm1957 = vcmask 844800
          %1958 = vst.msk [vmem:[%s1946 + $0x48] sm:$0x3] %vm1957, %v1944
        $region85: #{simple_cnn_forward.1} parent=55 // loop_footer
          %s477 = sadd.s32 1, %s473
        $region86: #{simple_cnn_forward.1} parent=55 // loop_footer_branch
          %472 = sbr.rel target = $region82
        $region87: #{simple_cnn_forward.1} parent=55 // loop_exit
          _
        %vm1959 = vcmp.ge.s32.totalorder %v408, 1
        %vm1960 = vcmp.ge.s32.totalorder %v409, 1
        %vm1961 = vcmp.ge.s32.totalorder %v410, 1
        %vm1962 = vcmp.ge.s32.totalorder %v411, 1
        %vm1963 = vcmp.ge.s32.totalorder %v412, 1
        %vm1964 = vcmp.ge.s32.totalorder %v413, 1
        %vm1965 = vcmp.ge.s32.totalorder %v414, 1
        %vm1966 = vcmp.ge.s32.totalorder %v415, 1
        %vm1967 = vcmp.ge.s32.totalorder %v416, 1
        %vm1968 = vcmp.lt.s32.totalorder %v408, 71
        %vm1969 = vcmp.lt.s32.totalorder %v409, 71
        %vm1970 = vcmp.lt.s32.totalorder %v410, 71
        %vm1971 = vcmp.lt.s32.totalorder %v411, 71
        %vm1972 = vcmp.lt.s32.totalorder %v412, 71
        %vm1973 = vcmp.lt.s32.totalorder %v413, 71
        %vm1974 = vcmp.lt.s32.totalorder %v414, 71
        %vm1975 = vcmp.lt.s32.totalorder %v415, 71
        %vm1976 = vcmp.lt.s32.totalorder %v416, 71
        %vm1977 = vmand %vm1959, %vm1968
        %vm1978 = vmand %vm1960, %vm1969
        %vm1979 = vmand %vm1961, %vm1970
        %vm1980 = vmand %vm1962, %vm1971
        %vm1981 = vmand %vm1963, %vm1972
        %vm1982 = vmand %vm1964, %vm1973
        %vm1983 = vmand %vm1965, %vm1974
        %vm1984 = vmand %vm1966, %vm1975
        %vm1985 = vmand %vm1967, %vm1976
        %vm1986 = vcmp.ge.s32.totalorder %v419, 1
        %vm1987 = vmand %vm1977, %vm1986
        %vm1988 = vmand %vm1978, %vm1986
        %vm1989 = vmand %vm1979, %vm1986
        %vm1990 = vmand %vm1980, %vm1986
        %vm1991 = vmand %vm1981, %vm1986
        %vm1992 = vmand %vm1982, %vm1986
        %vm1993 = vmand %vm1983, %vm1986
        %vm1994 = vmand %vm1984, %vm1986
        %vm1995 = vmand %vm1985, %vm1986
        %vm1996 = vcmp.lt.s32.totalorder %v419, 101
        %vm1997 = vmand %vm1987, %vm1996
        %vm1998 = vmand %vm1988, %vm1996
        %vm1999 = vmand %vm1989, %vm1996
        %vm2000 = vmand %vm1990, %vm1996
        %vm2001 = vmand %vm1991, %vm1996
        %vm2002 = vmand %vm1992, %vm1996
        %vm2003 = vmand %vm1993, %vm1996
        %vm2004 = vmand %vm1994, %vm1996
        %vm2005 = vmand %vm1995, %vm1996
        loop: start=0, step=1, limit=8
        $region88: #{simple_cnn_forward.1} parent=55 // loop_pre_header
          _
        $region89: #{simple_cnn_forward.1} parent=55 // loop_header
          %s2007 = sphi 0, %s2011
          %p2008 = scmp.ge.s32.totalorder %s2007, 8
        $region90: #{simple_cnn_forward.1} parent=55 // loop_header_branch
          %2010 = sbr.rel (%p2008) target = $region94
        $region91: #{simple_cnn_forward.1} parent=55 // loop_body
          %s2012 = sld [smem:[#allocation10 + %s2007]]
          %v2013 = vstv %s2012
          %s2014 = smul.u32 %s2007, 36
          %s2015 = sld [smem:[#allocation9 + %s2014]]
          %v2016 = vld [vmem:[#allocation2] sm:$0xff]
          %v2017 = vld [vmem:[#allocation2 + $0x8] sm:$0xff]
          %v2018 = vld [vmem:[#allocation2 + $0x10] sm:$0xff]
          %v2019 = vld [vmem:[#allocation2 + $0x18] sm:$0xff]
          %v2020 = vld [vmem:[#allocation2 + $0x20] sm:$0xff]
          %v2021 = vld [vmem:[#allocation2 + $0x28] sm:$0xff]
          %v2022 = vld [vmem:[#allocation2 + $0x30] sm:$0xff]
          %v2023 = vld [vmem:[#allocation2 + $0x38] sm:$0xff]
          %v2024 = vld [vmem:[#allocation2 + $0x40] sm:$0xff]
          %v2025 = vstv %s2015
          %v2026 = vmul.f32 %v2025, %v2016
          %v2027 = vmul.f32 %v2025, %v2017
          %v2028 = vmul.f32 %v2025, %v2018
          %v2029 = vmul.f32 %v2025, %v2019
          %v2030 = vmul.f32 %v2025, %v2020
          %v2031 = vmul.f32 %v2025, %v2021
          %v2032 = vmul.f32 %v2025, %v2022
          %v2033 = vmul.f32 %v2025, %v2023
          %v2034 = vmul.f32 %v2025, %v2024
          %v2035 = vadd.f32 %v2013, %v2026
          %v2036 = vadd.f32 %v2013, %v2027
          %v2037 = vadd.f32 %v2013, %v2028
          %v2038 = vadd.f32 %v2013, %v2029
          %v2039 = vadd.f32 %v2013, %v2030
          %v2040 = vadd.f32 %v2013, %v2031
          %v2041 = vadd.f32 %v2013, %v2032
          %v2042 = vadd.f32 %v2013, %v2033
          %v2043 = vadd.f32 %v2013, %v2034
          %s2044 = sadd.s32 %s2014, 1
          %s2045 = sld [smem:[#allocation9 + %s2044]]
          %v2046 = vstv %s2045
          %v2047 = vmul.f32 %v2046, %v2016
          %v2048 = vmul.f32 %v2046, %v2017
          %v2049 = vmul.f32 %v2046, %v2018
          %v2050 = vmul.f32 %v2046, %v2019
          %v2051 = vmul.f32 %v2046, %v2020
          %v2052 = vmul.f32 %v2046, %v2021
          %v2053 = vmul.f32 %v2046, %v2022
          %v2054 = vmul.f32 %v2046, %v2023
          %v2055 = vmul.f32 %v2046, %v2024
          %2065 = vrot.lane.b32.xlu0 %v2047, 127
          %v2066 = vpop.permute.xlu0 %2065
          %2067 = vrot.lane.b32.xlu0 %v2048, 127
          %v2068 = vpop.permute.xlu0 %2067
          %2069 = vrot.lane.b32.xlu0 %v2049, 127
          %v2070 = vpop.permute.xlu0 %2069
          %2071 = vrot.lane.b32.xlu0 %v2050, 127
          %v2072 = vpop.permute.xlu0 %2071
          %2073 = vrot.lane.b32.xlu0 %v2051, 127
          %v2074 = vpop.permute.xlu0 %2073
          %2075 = vrot.lane.b32.xlu0 %v2052, 127
          %v2076 = vpop.permute.xlu0 %2075
          %2077 = vrot.lane.b32.xlu0 %v2053, 127
          %v2078 = vpop.permute.xlu0 %2077
          %2079 = vrot.lane.b32.xlu0 %v2054, 127
          %v2080 = vpop.permute.xlu0 %2079
          %2081 = vrot.lane.b32.xlu0 %v2055, 127
          %v2082 = vpop.permute.xlu0 %2081
          %v2092 = vadd.f32 %v2035, %v2066
          %v2093 = vadd.f32 %v2036, %v2068
          %v2094 = vadd.f32 %v2037, %v2070
          %v2095 = vadd.f32 %v2038, %v2072
          %v2096 = vadd.f32 %v2039, %v2074
          %v2097 = vadd.f32 %v2040, %v2076
          %v2098 = vadd.f32 %v2041, %v2078
          %v2099 = vadd.f32 %v2042, %v2080
          %v2100 = vadd.f32 %v2043, %v2082
          %s2101 = sadd.s32 %s2014, 2
          %s2102 = sld [smem:[#allocation9 + %s2101]]
          %v2103 = vstv %s2102
          %v2104 = vmul.f32 %v2103, %v2016
          %v2105 = vmul.f32 %v2103, %v2017
          %v2106 = vmul.f32 %v2103, %v2018
          %v2107 = vmul.f32 %v2103, %v2019
          %v2108 = vmul.f32 %v2103, %v2020
          %v2109 = vmul.f32 %v2103, %v2021
          %v2110 = vmul.f32 %v2103, %v2022
          %v2111 = vmul.f32 %v2103, %v2023
          %v2112 = vmul.f32 %v2103, %v2024
          %2122 = vrot.lane.b32.xlu0 %v2104, 126
          %v2123 = vpop.permute.xlu0 %2122
          %2124 = vrot.lane.b32.xlu0 %v2105, 126
          %v2125 = vpop.permute.xlu0 %2124
          %2126 = vrot.lane.b32.xlu0 %v2106, 126
          %v2127 = vpop.permute.xlu0 %2126
          %2128 = vrot.lane.b32.xlu0 %v2107, 126
          %v2129 = vpop.permute.xlu0 %2128
          %2130 = vrot.lane.b32.xlu0 %v2108, 126
          %v2131 = vpop.permute.xlu0 %2130
          %2132 = vrot.lane.b32.xlu0 %v2109, 126
          %v2133 = vpop.permute.xlu0 %2132
          %2134 = vrot.lane.b32.xlu0 %v2110, 126
          %v2135 = vpop.permute.xlu0 %2134
          %2136 = vrot.lane.b32.xlu0 %v2111, 126
          %v2137 = vpop.permute.xlu0 %2136
          %2138 = vrot.lane.b32.xlu0 %v2112, 126
          %v2139 = vpop.permute.xlu0 %2138
          %v2149 = vadd.f32 %v2092, %v2123
          %v2150 = vadd.f32 %v2093, %v2125
          %v2151 = vadd.f32 %v2094, %v2127
          %v2152 = vadd.f32 %v2095, %v2129
          %v2153 = vadd.f32 %v2096, %v2131
          %v2154 = vadd.f32 %v2097, %v2133
          %v2155 = vadd.f32 %v2098, %v2135
          %v2156 = vadd.f32 %v2099, %v2137
          %v2157 = vadd.f32 %v2100, %v2139
          %s2158 = smul.u32 %s2007, 12
          %s2159 = sadd.s32 %s2158, 1
          %s2160 = smul.u32 %s2159, 3
          %s2161 = sld [smem:[#allocation9 + %s2160]]
          %v2162 = vld [vmem:[#allocation2 + $0x1] sm:$0xff]
          %v2163 = vld [vmem:[#allocation2 + $0x9] sm:$0xff]
          %v2164 = vld [vmem:[#allocation2 + $0x11] sm:$0xff]
          %v2165 = vld [vmem:[#allocation2 + $0x19] sm:$0xff]
          %v2166 = vld [vmem:[#allocation2 + $0x21] sm:$0xff]
          %v2167 = vld [vmem:[#allocation2 + $0x29] sm:$0xff]
          %v2168 = vld [vmem:[#allocation2 + $0x31] sm:$0xff]
          %v2169 = vld [vmem:[#allocation2 + $0x39] sm:$0xff]
          %v2170 = vld [vmem:[#allocation2 + $0x41] sm:$0xff]
          %v2171 = vstv %s2161
          %v2172 = vmul.f32 %v2171, %v2162
          %v2173 = vmul.f32 %v2171, %v2163
          %v2174 = vmul.f32 %v2171, %v2164
          %v2175 = vmul.f32 %v2171, %v2165
          %v2176 = vmul.f32 %v2171, %v2166
          %v2177 = vmul.f32 %v2171, %v2167
          %v2178 = vmul.f32 %v2171, %v2168
          %v2179 = vmul.f32 %v2171, %v2169
          %v2180 = vmul.f32 %v2171, %v2170
          %v2181 = vadd.f32 %v2149, %v2172
          %v2182 = vadd.f32 %v2150, %v2173
          %v2183 = vadd.f32 %v2151, %v2174
          %v2184 = vadd.f32 %v2152, %v2175
          %v2185 = vadd.f32 %v2153, %v2176
          %v2186 = vadd.f32 %v2154, %v2177
          %v2187 = vadd.f32 %v2155, %v2178
          %v2188 = vadd.f32 %v2156, %v2179
          %v2189 = vadd.f32 %v2157, %v2180
          %s2190 = sadd.s32 %s2160, 1
          %s2191 = sld [smem:[#allocation9 + %s2190]]
          %v2192 = vstv %s2191
          %v2193 = vmul.f32 %v2192, %v2162
          %v2194 = vmul.f32 %v2192, %v2163
          %v2195 = vmul.f32 %v2192, %v2164
          %v2196 = vmul.f32 %v2192, %v2165
          %v2197 = vmul.f32 %v2192, %v2166
          %v2198 = vmul.f32 %v2192, %v2167
          %v2199 = vmul.f32 %v2192, %v2168
          %v2200 = vmul.f32 %v2192, %v2169
          %v2201 = vmul.f32 %v2192, %v2170
          %2211 = vrot.lane.b32.xlu0 %v2193, 127
          %v2212 = vpop.permute.xlu0 %2211
          %2213 = vrot.lane.b32.xlu0 %v2194, 127
          %v2214 = vpop.permute.xlu0 %2213
          %2215 = vrot.lane.b32.xlu0 %v2195, 127
          %v2216 = vpop.permute.xlu0 %2215
          %2217 = vrot.lane.b32.xlu0 %v2196, 127
          %v2218 = vpop.permute.xlu0 %2217
          %2219 = vrot.lane.b32.xlu0 %v2197, 127
          %v2220 = vpop.permute.xlu0 %2219
          %2221 = vrot.lane.b32.xlu0 %v2198, 127
          %v2222 = vpop.permute.xlu0 %2221
          %2223 = vrot.lane.b32.xlu0 %v2199, 127
          %v2224 = vpop.permute.xlu0 %2223
          %2225 = vrot.lane.b32.xlu0 %v2200, 127
          %v2226 = vpop.permute.xlu0 %2225
          %2227 = vrot.lane.b32.xlu0 %v2201, 127
          %v2228 = vpop.permute.xlu0 %2227
          %v2238 = vadd.f32 %v2181, %v2212
          %v2239 = vadd.f32 %v2182, %v2214
          %v2240 = vadd.f32 %v2183, %v2216
          %v2241 = vadd.f32 %v2184, %v2218
          %v2242 = vadd.f32 %v2185, %v2220
          %v2243 = vadd.f32 %v2186, %v2222
          %v2244 = vadd.f32 %v2187, %v2224
          %v2245 = vadd.f32 %v2188, %v2226
          %v2246 = vadd.f32 %v2189, %v2228
          %s2247 = sadd.s32 %s2160, 2
          %s2248 = sld [smem:[#allocation9 + %s2247]]
          %v2249 = vstv %s2248
          %v2250 = vmul.f32 %v2249, %v2162
          %v2251 = vmul.f32 %v2249, %v2163
          %v2252 = vmul.f32 %v2249, %v2164
          %v2253 = vmul.f32 %v2249, %v2165
          %v2254 = vmul.f32 %v2249, %v2166
          %v2255 = vmul.f32 %v2249, %v2167
          %v2256 = vmul.f32 %v2249, %v2168
          %v2257 = vmul.f32 %v2249, %v2169
          %v2258 = vmul.f32 %v2249, %v2170
          %2268 = vrot.lane.b32.xlu0 %v2250, 126
          %v2269 = vpop.permute.xlu0 %2268
          %2270 = vrot.lane.b32.xlu0 %v2251, 126
          %v2271 = vpop.permute.xlu0 %2270
          %2272 = vrot.lane.b32.xlu0 %v2252, 126
          %v2273 = vpop.permute.xlu0 %2272
          %2274 = vrot.lane.b32.xlu0 %v2253, 126
          %v2275 = vpop.permute.xlu0 %2274
          %2276 = vrot.lane.b32.xlu0 %v2254, 126
          %v2277 = vpop.permute.xlu0 %2276
          %2278 = vrot.lane.b32.xlu0 %v2255, 126
          %v2279 = vpop.permute.xlu0 %2278
          %2280 = vrot.lane.b32.xlu0 %v2256, 126
          %v2281 = vpop.permute.xlu0 %2280
          %2282 = vrot.lane.b32.xlu0 %v2257, 126
          %v2283 = vpop.permute.xlu0 %2282
          %2284 = vrot.lane.b32.xlu0 %v2258, 126
          %v2285 = vpop.permute.xlu0 %2284
          %v2295 = vadd.f32 %v2238, %v2269
          %v2296 = vadd.f32 %v2239, %v2271
          %v2297 = vadd.f32 %v2240, %v2273
          %v2298 = vadd.f32 %v2241, %v2275
          %v2299 = vadd.f32 %v2242, %v2277
          %v2300 = vadd.f32 %v2243, %v2279
          %v2301 = vadd.f32 %v2244, %v2281
          %v2302 = vadd.f32 %v2245, %v2283
          %v2303 = vadd.f32 %v2246, %v2285
          %s2304 = sadd.s32 %s2158, 2
          %s2305 = smul.u32 %s2304, 3
          %s2306 = sld [smem:[#allocation9 + %s2305]]
          %v2307 = vld [vmem:[#allocation2 + $0x2] sm:$0xff]
          %v2308 = vld [vmem:[#allocation2 + $0xa] sm:$0xff]
          %v2309 = vld [vmem:[#allocation2 + $0x12] sm:$0xff]
          %v2310 = vld [vmem:[#allocation2 + $0x1a] sm:$0xff]
          %v2311 = vld [vmem:[#allocation2 + $0x22] sm:$0xff]
          %v2312 = vld [vmem:[#allocation2 + $0x2a] sm:$0xff]
          %v2313 = vld [vmem:[#allocation2 + $0x32] sm:$0xff]
          %v2314 = vld [vmem:[#allocation2 + $0x3a] sm:$0xff]
          %v2315 = vld [vmem:[#allocation2 + $0x42] sm:$0xff]
          %v2316 = vstv %s2306
          %v2317 = vmul.f32 %v2316, %v2307
          %v2318 = vmul.f32 %v2316, %v2308
          %v2319 = vmul.f32 %v2316, %v2309
          %v2320 = vmul.f32 %v2316, %v2310
          %v2321 = vmul.f32 %v2316, %v2311
          %v2322 = vmul.f32 %v2316, %v2312
          %v2323 = vmul.f32 %v2316, %v2313
          %v2324 = vmul.f32 %v2316, %v2314
          %v2325 = vmul.f32 %v2316, %v2315
          %v2326 = vadd.f32 %v2295, %v2317
          %v2327 = vadd.f32 %v2296, %v2318
          %v2328 = vadd.f32 %v2297, %v2319
          %v2329 = vadd.f32 %v2298, %v2320
          %v2330 = vadd.f32 %v2299, %v2321
          %v2331 = vadd.f32 %v2300, %v2322
          %v2332 = vadd.f32 %v2301, %v2323
          %v2333 = vadd.f32 %v2302, %v2324
          %v2334 = vadd.f32 %v2303, %v2325
          %s2335 = sadd.s32 %s2305, 1
          %s2336 = sld [smem:[#allocation9 + %s2335]]
          %v2337 = vstv %s2336
          %v2338 = vmul.f32 %v2337, %v2307
          %v2339 = vmul.f32 %v2337, %v2308
          %v2340 = vmul.f32 %v2337, %v2309
          %v2341 = vmul.f32 %v2337, %v2310
          %v2342 = vmul.f32 %v2337, %v2311
          %v2343 = vmul.f32 %v2337, %v2312
          %v2344 = vmul.f32 %v2337, %v2313
          %v2345 = vmul.f32 %v2337, %v2314
          %v2346 = vmul.f32 %v2337, %v2315
          %2356 = vrot.lane.b32.xlu0 %v2338, 127
          %v2357 = vpop.permute.xlu0 %2356
          %2358 = vrot.lane.b32.xlu0 %v2339, 127
          %v2359 = vpop.permute.xlu0 %2358
          %2360 = vrot.lane.b32.xlu0 %v2340, 127
          %v2361 = vpop.permute.xlu0 %2360
          %2362 = vrot.lane.b32.xlu0 %v2341, 127
          %v2363 = vpop.permute.xlu0 %2362
          %2364 = vrot.lane.b32.xlu0 %v2342, 127
          %v2365 = vpop.permute.xlu0 %2364
          %2366 = vrot.lane.b32.xlu0 %v2343, 127
          %v2367 = vpop.permute.xlu0 %2366
          %2368 = vrot.lane.b32.xlu0 %v2344, 127
          %v2369 = vpop.permute.xlu0 %2368
          %2370 = vrot.lane.b32.xlu0 %v2345, 127
          %v2371 = vpop.permute.xlu0 %2370
          %2372 = vrot.lane.b32.xlu0 %v2346, 127
          %v2373 = vpop.permute.xlu0 %2372
          %v2383 = vadd.f32 %v2326, %v2357
          %v2384 = vadd.f32 %v2327, %v2359
          %v2385 = vadd.f32 %v2328, %v2361
          %v2386 = vadd.f32 %v2329, %v2363
          %v2387 = vadd.f32 %v2330, %v2365
          %v2388 = vadd.f32 %v2331, %v2367
          %v2389 = vadd.f32 %v2332, %v2369
          %v2390 = vadd.f32 %v2333, %v2371
          %v2391 = vadd.f32 %v2334, %v2373
          %s2392 = sadd.s32 %s2305, 2
          %s2393 = sld [smem:[#allocation9 + %s2392]]
          %v2394 = vstv %s2393
          %v2395 = vmul.f32 %v2394, %v2307
          %v2396 = vmul.f32 %v2394, %v2308
          %v2397 = vmul.f32 %v2394, %v2309
          %v2398 = vmul.f32 %v2394, %v2310
          %v2399 = vmul.f32 %v2394, %v2311
          %v2400 = vmul.f32 %v2394, %v2312
          %v2401 = vmul.f32 %v2394, %v2313
          %v2402 = vmul.f32 %v2394, %v2314
          %v2403 = vmul.f32 %v2394, %v2315
          %2413 = vrot.lane.b32.xlu0 %v2395, 126
          %v2414 = vpop.permute.xlu0 %2413
          %2415 = vrot.lane.b32.xlu0 %v2396, 126
          %v2416 = vpop.permute.xlu0 %2415
          %2417 = vrot.lane.b32.xlu0 %v2397, 126
          %v2418 = vpop.permute.xlu0 %2417
          %2419 = vrot.lane.b32.xlu0 %v2398, 126
          %v2420 = vpop.permute.xlu0 %2419
          %2421 = vrot.lane.b32.xlu0 %v2399, 126
          %v2422 = vpop.permute.xlu0 %2421
          %2423 = vrot.lane.b32.xlu0 %v2400, 126
          %v2424 = vpop.permute.xlu0 %2423
          %2425 = vrot.lane.b32.xlu0 %v2401, 126
          %v2426 = vpop.permute.xlu0 %2425
          %2427 = vrot.lane.b32.xlu0 %v2402, 126
          %v2428 = vpop.permute.xlu0 %2427
          %2429 = vrot.lane.b32.xlu0 %v2403, 126
          %v2430 = vpop.permute.xlu0 %2429
          %v2440 = vadd.f32 %v2383, %v2414
          %v2441 = vadd.f32 %v2384, %v2416
          %v2442 = vadd.f32 %v2385, %v2418
          %v2443 = vadd.f32 %v2386, %v2420
          %v2444 = vadd.f32 %v2387, %v2422
          %v2445 = vadd.f32 %v2388, %v2424
          %v2446 = vadd.f32 %v2389, %v2426
          %v2447 = vadd.f32 %v2390, %v2428
          %v2448 = vadd.f32 %v2391, %v2430
          %s2449 = smul.u32 %s2007, 4
          %s2450 = sadd.s32 %s2449, 1
          %s2451 = smul.u32 %s2450, 9
          %s2452 = sld [smem:[#allocation9 + %s2451]]
          %s2453 = scalar_lea.vmem [#allocation2], 80
          %v2454 = vld [vmem:[%s2453] sm:$0xff]
          %v2455 = vld [vmem:[%s2453 + $0x8] sm:$0xff]
          %v2456 = vld [vmem:[%s2453 + $0x10] sm:$0xff]
          %v2457 = vld [vmem:[%s2453 + $0x18] sm:$0xff]
          %v2458 = vld [vmem:[%s2453 + $0x20] sm:$0xff]
          %v2459 = vld [vmem:[%s2453 + $0x28] sm:$0xff]
          %v2460 = vld [vmem:[%s2453 + $0x30] sm:$0xff]
          %v2461 = vld [vmem:[%s2453 + $0x38] sm:$0xff]
          %v2462 = vld [vmem:[%s2453 + $0x40] sm:$0xff]
          %v2463 = vstv %s2452
          %v2464 = vmul.f32 %v2463, %v2454
          %v2465 = vmul.f32 %v2463, %v2455
          %v2466 = vmul.f32 %v2463, %v2456
          %v2467 = vmul.f32 %v2463, %v2457
          %v2468 = vmul.f32 %v2463, %v2458
          %v2469 = vmul.f32 %v2463, %v2459
          %v2470 = vmul.f32 %v2463, %v2460
          %v2471 = vmul.f32 %v2463, %v2461
          %v2472 = vmul.f32 %v2463, %v2462
          %v2473 = vadd.f32 %v2440, %v2464
          %v2474 = vadd.f32 %v2441, %v2465
          %v2475 = vadd.f32 %v2442, %v2466
          %v2476 = vadd.f32 %v2443, %v2467
          %v2477 = vadd.f32 %v2444, %v2468
          %v2478 = vadd.f32 %v2445, %v2469
          %v2479 = vadd.f32 %v2446, %v2470
          %v2480 = vadd.f32 %v2447, %v2471
          %v2481 = vadd.f32 %v2448, %v2472
          %s2482 = sadd.s32 %s2451, 1
          %s2483 = sld [smem:[#allocation9 + %s2482]]
          %v2484 = vstv %s2483
          %v2485 = vmul.f32 %v2484, %v2454
          %v2486 = vmul.f32 %v2484, %v2455
          %v2487 = vmul.f32 %v2484, %v2456
          %v2488 = vmul.f32 %v2484, %v2457
          %v2489 = vmul.f32 %v2484, %v2458
          %v2490 = vmul.f32 %v2484, %v2459
          %v2491 = vmul.f32 %v2484, %v2460
          %v2492 = vmul.f32 %v2484, %v2461
          %v2493 = vmul.f32 %v2484, %v2462
          %2503 = vrot.lane.b32.xlu0 %v2485, 127
          %v2504 = vpop.permute.xlu0 %2503
          %2505 = vrot.lane.b32.xlu0 %v2486, 127
          %v2506 = vpop.permute.xlu0 %2505
          %2507 = vrot.lane.b32.xlu0 %v2487, 127
          %v2508 = vpop.permute.xlu0 %2507
          %2509 = vrot.lane.b32.xlu0 %v2488, 127
          %v2510 = vpop.permute.xlu0 %2509
          %2511 = vrot.lane.b32.xlu0 %v2489, 127
          %v2512 = vpop.permute.xlu0 %2511
          %2513 = vrot.lane.b32.xlu0 %v2490, 127
          %v2514 = vpop.permute.xlu0 %2513
          %2515 = vrot.lane.b32.xlu0 %v2491, 127
          %v2516 = vpop.permute.xlu0 %2515
          %2517 = vrot.lane.b32.xlu0 %v2492, 127
          %v2518 = vpop.permute.xlu0 %2517
          %2519 = vrot.lane.b32.xlu0 %v2493, 127
          %v2520 = vpop.permute.xlu0 %2519
          %v2530 = vadd.f32 %v2473, %v2504
          %v2531 = vadd.f32 %v2474, %v2506
          %v2532 = vadd.f32 %v2475, %v2508
          %v2533 = vadd.f32 %v2476, %v2510
          %v2534 = vadd.f32 %v2477, %v2512
          %v2535 = vadd.f32 %v2478, %v2514
          %v2536 = vadd.f32 %v2479, %v2516
          %v2537 = vadd.f32 %v2480, %v2518
          %v2538 = vadd.f32 %v2481, %v2520
          %s2539 = sadd.s32 %s2451, 2
          %s2540 = sld [smem:[#allocation9 + %s2539]]
          %v2541 = vstv %s2540
          %v2542 = vmul.f32 %v2541, %v2454
          %v2543 = vmul.f32 %v2541, %v2455
          %v2544 = vmul.f32 %v2541, %v2456
          %v2545 = vmul.f32 %v2541, %v2457
          %v2546 = vmul.f32 %v2541, %v2458
          %v2547 = vmul.f32 %v2541, %v2459
          %v2548 = vmul.f32 %v2541, %v2460
          %v2549 = vmul.f32 %v2541, %v2461
          %v2550 = vmul.f32 %v2541, %v2462
          %2560 = vrot.lane.b32.xlu0 %v2542, 126
          %v2561 = vpop.permute.xlu0 %2560
          %2562 = vrot.lane.b32.xlu0 %v2543, 126
          %v2563 = vpop.permute.xlu0 %2562
          %2564 = vrot.lane.b32.xlu0 %v2544, 126
          %v2565 = vpop.permute.xlu0 %2564
          %2566 = vrot.lane.b32.xlu0 %v2545, 126
          %v2567 = vpop.permute.xlu0 %2566
          %2568 = vrot.lane.b32.xlu0 %v2546, 126
          %v2569 = vpop.permute.xlu0 %2568
          %2570 = vrot.lane.b32.xlu0 %v2547, 126
          %v2571 = vpop.permute.xlu0 %2570
          %2572 = vrot.lane.b32.xlu0 %v2548, 126
          %v2573 = vpop.permute.xlu0 %2572
          %2574 = vrot.lane.b32.xlu0 %v2549, 126
          %v2575 = vpop.permute.xlu0 %2574
          %2576 = vrot.lane.b32.xlu0 %v2550, 126
          %v2577 = vpop.permute.xlu0 %2576
          %v2587 = vadd.f32 %v2530, %v2561
          %v2588 = vadd.f32 %v2531, %v2563
          %v2589 = vadd.f32 %v2532, %v2565
          %v2590 = vadd.f32 %v2533, %v2567
          %v2591 = vadd.f32 %v2534, %v2569
          %v2592 = vadd.f32 %v2535, %v2571
          %v2593 = vadd.f32 %v2536, %v2573
          %v2594 = vadd.f32 %v2537, %v2575
          %v2595 = vadd.f32 %v2538, %v2577
          %s2596 = smul.u32 %s2450, 3
          %s2597 = sadd.s32 %s2596, 1
          %s2598 = smul.u32 %s2597, 3
          %s2599 = sld [smem:[#allocation9 + %s2598]]
          %v2600 = vld [vmem:[%s2453 + $0x1] sm:$0xff]
          %v2601 = vld [vmem:[%s2453 + $0x9] sm:$0xff]
          %v2602 = vld [vmem:[%s2453 + $0x11] sm:$0xff]
          %v2603 = vld [vmem:[%s2453 + $0x19] sm:$0xff]
          %v2604 = vld [vmem:[%s2453 + $0x21] sm:$0xff]
          %v2605 = vld [vmem:[%s2453 + $0x29] sm:$0xff]
          %v2606 = vld [vmem:[%s2453 + $0x31] sm:$0xff]
          %v2607 = vld [vmem:[%s2453 + $0x39] sm:$0xff]
          %v2608 = vld [vmem:[%s2453 + $0x41] sm:$0xff]
          %v2609 = vstv %s2599
          %v2610 = vmul.f32 %v2609, %v2600
          %v2611 = vmul.f32 %v2609, %v2601
          %v2612 = vmul.f32 %v2609, %v2602
          %v2613 = vmul.f32 %v2609, %v2603
          %v2614 = vmul.f32 %v2609, %v2604
          %v2615 = vmul.f32 %v2609, %v2605
          %v2616 = vmul.f32 %v2609, %v2606
          %v2617 = vmul.f32 %v2609, %v2607
          %v2618 = vmul.f32 %v2609, %v2608
          %v2619 = vadd.f32 %v2587, %v2610
          %v2620 = vadd.f32 %v2588, %v2611
          %v2621 = vadd.f32 %v2589, %v2612
          %v2622 = vadd.f32 %v2590, %v2613
          %v2623 = vadd.f32 %v2591, %v2614
          %v2624 = vadd.f32 %v2592, %v2615
          %v2625 = vadd.f32 %v2593, %v2616
          %v2626 = vadd.f32 %v2594, %v2617
          %v2627 = vadd.f32 %v2595, %v2618
          %s2628 = sadd.s32 %s2598, 1
          %s2629 = sld [smem:[#allocation9 + %s2628]]
          %v2630 = vstv %s2629
          %v2631 = vmul.f32 %v2630, %v2600
          %v2632 = vmul.f32 %v2630, %v2601
          %v2633 = vmul.f32 %v2630, %v2602
          %v2634 = vmul.f32 %v2630, %v2603
          %v2635 = vmul.f32 %v2630, %v2604
          %v2636 = vmul.f32 %v2630, %v2605
          %v2637 = vmul.f32 %v2630, %v2606
          %v2638 = vmul.f32 %v2630, %v2607
          %v2639 = vmul.f32 %v2630, %v2608
          %2649 = vrot.lane.b32.xlu0 %v2631, 127
          %v2650 = vpop.permute.xlu0 %2649
          %2651 = vrot.lane.b32.xlu0 %v2632, 127
          %v2652 = vpop.permute.xlu0 %2651
          %2653 = vrot.lane.b32.xlu0 %v2633, 127
          %v2654 = vpop.permute.xlu0 %2653
          %2655 = vrot.lane.b32.xlu0 %v2634, 127
          %v2656 = vpop.permute.xlu0 %2655
          %2657 = vrot.lane.b32.xlu0 %v2635, 127
          %v2658 = vpop.permute.xlu0 %2657
          %2659 = vrot.lane.b32.xlu0 %v2636, 127
          %v2660 = vpop.permute.xlu0 %2659
          %2661 = vrot.lane.b32.xlu0 %v2637, 127
          %v2662 = vpop.permute.xlu0 %2661
          %2663 = vrot.lane.b32.xlu0 %v2638, 127
          %v2664 = vpop.permute.xlu0 %2663
          %2665 = vrot.lane.b32.xlu0 %v2639, 127
          %v2666 = vpop.permute.xlu0 %2665
          %v2676 = vadd.f32 %v2619, %v2650
          %v2677 = vadd.f32 %v2620, %v2652
          %v2678 = vadd.f32 %v2621, %v2654
          %v2679 = vadd.f32 %v2622, %v2656
          %v2680 = vadd.f32 %v2623, %v2658
          %v2681 = vadd.f32 %v2624, %v2660
          %v2682 = vadd.f32 %v2625, %v2662
          %v2683 = vadd.f32 %v2626, %v2664
          %v2684 = vadd.f32 %v2627, %v2666
          %s2685 = sadd.s32 %s2598, 2
          %s2686 = sld [smem:[#allocation9 + %s2685]]
          %v2687 = vstv %s2686
          %v2688 = vmul.f32 %v2687, %v2600
          %v2689 = vmul.f32 %v2687, %v2601
          %v2690 = vmul.f32 %v2687, %v2602
          %v2691 = vmul.f32 %v2687, %v2603
          %v2692 = vmul.f32 %v2687, %v2604
          %v2693 = vmul.f32 %v2687, %v2605
          %v2694 = vmul.f32 %v2687, %v2606
          %v2695 = vmul.f32 %v2687, %v2607
          %v2696 = vmul.f32 %v2687, %v2608
          %2706 = vrot.lane.b32.xlu0 %v2688, 126
          %v2707 = vpop.permute.xlu0 %2706
          %2708 = vrot.lane.b32.xlu0 %v2689, 126
          %v2709 = vpop.permute.xlu0 %2708
          %2710 = vrot.lane.b32.xlu0 %v2690, 126
          %v2711 = vpop.permute.xlu0 %2710
          %2712 = vrot.lane.b32.xlu0 %v2691, 126
          %v2713 = vpop.permute.xlu0 %2712
          %2714 = vrot.lane.b32.xlu0 %v2692, 126
          %v2715 = vpop.permute.xlu0 %2714
          %2716 = vrot.lane.b32.xlu0 %v2693, 126
          %v2717 = vpop.permute.xlu0 %2716
          %2718 = vrot.lane.b32.xlu0 %v2694, 126
          %v2719 = vpop.permute.xlu0 %2718
          %2720 = vrot.lane.b32.xlu0 %v2695, 126
          %v2721 = vpop.permute.xlu0 %2720
          %2722 = vrot.lane.b32.xlu0 %v2696, 126
          %v2723 = vpop.permute.xlu0 %2722
          %v2733 = vadd.f32 %v2676, %v2707
          %v2734 = vadd.f32 %v2677, %v2709
          %v2735 = vadd.f32 %v2678, %v2711
          %v2736 = vadd.f32 %v2679, %v2713
          %v2737 = vadd.f32 %v2680, %v2715
          %v2738 = vadd.f32 %v2681, %v2717
          %v2739 = vadd.f32 %v2682, %v2719
          %v2740 = vadd.f32 %v2683, %v2721
          %v2741 = vadd.f32 %v2684, %v2723
          %s2742 = sadd.s32 %s2596, 2
          %s2743 = smul.u32 %s2742, 3
          %s2744 = sld [smem:[#allocation9 + %s2743]]
          %v2745 = vld [vmem:[%s2453 + $0x2] sm:$0xff]
          %v2746 = vld [vmem:[%s2453 + $0xa] sm:$0xff]
          %v2747 = vld [vmem:[%s2453 + $0x12] sm:$0xff]
          %v2748 = vld [vmem:[%s2453 + $0x1a] sm:$0xff]
          %v2749 = vld [vmem:[%s2453 + $0x22] sm:$0xff]
          %v2750 = vld [vmem:[%s2453 + $0x2a] sm:$0xff]
          %v2751 = vld [vmem:[%s2453 + $0x32] sm:$0xff]
          %v2752 = vld [vmem:[%s2453 + $0x3a] sm:$0xff]
          %v2753 = vld [vmem:[%s2453 + $0x42] sm:$0xff]
          %v2754 = vstv %s2744
          %v2755 = vmul.f32 %v2754, %v2745
          %v2756 = vmul.f32 %v2754, %v2746
          %v2757 = vmul.f32 %v2754, %v2747
          %v2758 = vmul.f32 %v2754, %v2748
          %v2759 = vmul.f32 %v2754, %v2749
          %v2760 = vmul.f32 %v2754, %v2750
          %v2761 = vmul.f32 %v2754, %v2751
          %v2762 = vmul.f32 %v2754, %v2752
          %v2763 = vmul.f32 %v2754, %v2753
          %v2764 = vadd.f32 %v2733, %v2755
          %v2765 = vadd.f32 %v2734, %v2756
          %v2766 = vadd.f32 %v2735, %v2757
          %v2767 = vadd.f32 %v2736, %v2758
          %v2768 = vadd.f32 %v2737, %v2759
          %v2769 = vadd.f32 %v2738, %v2760
          %v2770 = vadd.f32 %v2739, %v2761
          %v2771 = vadd.f32 %v2740, %v2762
          %v2772 = vadd.f32 %v2741, %v2763
          %s2773 = sadd.s32 %s2743, 1
          %s2774 = sld [smem:[#allocation9 + %s2773]]
          %v2775 = vstv %s2774
          %v2776 = vmul.f32 %v2775, %v2745
          %v2777 = vmul.f32 %v2775, %v2746
          %v2778 = vmul.f32 %v2775, %v2747
          %v2779 = vmul.f32 %v2775, %v2748
          %v2780 = vmul.f32 %v2775, %v2749
          %v2781 = vmul.f32 %v2775, %v2750
          %v2782 = vmul.f32 %v2775, %v2751
          %v2783 = vmul.f32 %v2775, %v2752
          %v2784 = vmul.f32 %v2775, %v2753
          %2794 = vrot.lane.b32.xlu0 %v2776, 127
          %v2795 = vpop.permute.xlu0 %2794
          %2796 = vrot.lane.b32.xlu0 %v2777, 127
          %v2797 = vpop.permute.xlu0 %2796
          %2798 = vrot.lane.b32.xlu0 %v2778, 127
          %v2799 = vpop.permute.xlu0 %2798
          %2800 = vrot.lane.b32.xlu0 %v2779, 127
          %v2801 = vpop.permute.xlu0 %2800
          %2802 = vrot.lane.b32.xlu0 %v2780, 127
          %v2803 = vpop.permute.xlu0 %2802
          %2804 = vrot.lane.b32.xlu0 %v2781, 127
          %v2805 = vpop.permute.xlu0 %2804
          %2806 = vrot.lane.b32.xlu0 %v2782, 127
          %v2807 = vpop.permute.xlu0 %2806
          %2808 = vrot.lane.b32.xlu0 %v2783, 127
          %v2809 = vpop.permute.xlu0 %2808
          %2810 = vrot.lane.b32.xlu0 %v2784, 127
          %v2811 = vpop.permute.xlu0 %2810
          %v2821 = vadd.f32 %v2764, %v2795
          %v2822 = vadd.f32 %v2765, %v2797
          %v2823 = vadd.f32 %v2766, %v2799
          %v2824 = vadd.f32 %v2767, %v2801
          %v2825 = vadd.f32 %v2768, %v2803
          %v2826 = vadd.f32 %v2769, %v2805
          %v2827 = vadd.f32 %v2770, %v2807
          %v2828 = vadd.f32 %v2771, %v2809
          %v2829 = vadd.f32 %v2772, %v2811
          %s2830 = sadd.s32 %s2743, 2
          %s2831 = sld [smem:[#allocation9 + %s2830]]
          %v2832 = vstv %s2831
          %v2833 = vmul.f32 %v2832, %v2745
          %v2834 = vmul.f32 %v2832, %v2746
          %v2835 = vmul.f32 %v2832, %v2747
          %v2836 = vmul.f32 %v2832, %v2748
          %v2837 = vmul.f32 %v2832, %v2749
          %v2838 = vmul.f32 %v2832, %v2750
          %v2839 = vmul.f32 %v2832, %v2751
          %v2840 = vmul.f32 %v2832, %v2752
          %v2841 = vmul.f32 %v2832, %v2753
          %2851 = vrot.lane.b32.xlu0 %v2833, 126
          %v2852 = vpop.permute.xlu0 %2851
          %2853 = vrot.lane.b32.xlu0 %v2834, 126
          %v2854 = vpop.permute.xlu0 %2853
          %2855 = vrot.lane.b32.xlu0 %v2835, 126
          %v2856 = vpop.permute.xlu0 %2855
          %2857 = vrot.lane.b32.xlu0 %v2836, 126
          %v2858 = vpop.permute.xlu0 %2857
          %2859 = vrot.lane.b32.xlu0 %v2837, 126
          %v2860 = vpop.permute.xlu0 %2859
          %2861 = vrot.lane.b32.xlu0 %v2838, 126
          %v2862 = vpop.permute.xlu0 %2861
          %2863 = vrot.lane.b32.xlu0 %v2839, 126
          %v2864 = vpop.permute.xlu0 %2863
          %2865 = vrot.lane.b32.xlu0 %v2840, 126
          %v2866 = vpop.permute.xlu0 %2865
          %2867 = vrot.lane.b32.xlu0 %v2841, 126
          %v2868 = vpop.permute.xlu0 %2867
          %v2878 = vadd.f32 %v2821, %v2852
          %v2879 = vadd.f32 %v2822, %v2854
          %v2880 = vadd.f32 %v2823, %v2856
          %v2881 = vadd.f32 %v2824, %v2858
          %v2882 = vadd.f32 %v2825, %v2860
          %v2883 = vadd.f32 %v2826, %v2862
          %v2884 = vadd.f32 %v2827, %v2864
          %v2885 = vadd.f32 %v2828, %v2866
          %v2886 = vadd.f32 %v2829, %v2868
          %s2887 = sadd.s32 %s2449, 2
          %s2888 = smul.u32 %s2887, 9
          %s2889 = sld [smem:[#allocation9 + %s2888]]
          %s2890 = scalar_lea.vmem [#allocation2], 160
          %v2891 = vld [vmem:[%s2890] sm:$0xff]
          %v2892 = vld [vmem:[%s2890 + $0x8] sm:$0xff]
          %v2893 = vld [vmem:[%s2890 + $0x10] sm:$0xff]
          %v2894 = vld [vmem:[%s2890 + $0x18] sm:$0xff]
          %v2895 = vld [vmem:[%s2890 + $0x20] sm:$0xff]
          %v2896 = vld [vmem:[%s2890 + $0x28] sm:$0xff]
          %v2897 = vld [vmem:[%s2890 + $0x30] sm:$0xff]
          %v2898 = vld [vmem:[%s2890 + $0x38] sm:$0xff]
          %v2899 = vld [vmem:[%s2890 + $0x40] sm:$0xff]
          %v2900 = vstv %s2889
          %v2901 = vmul.f32 %v2900, %v2891
          %v2902 = vmul.f32 %v2900, %v2892
          %v2903 = vmul.f32 %v2900, %v2893
          %v2904 = vmul.f32 %v2900, %v2894
          %v2905 = vmul.f32 %v2900, %v2895
          %v2906 = vmul.f32 %v2900, %v2896
          %v2907 = vmul.f32 %v2900, %v2897
          %v2908 = vmul.f32 %v2900, %v2898
          %v2909 = vmul.f32 %v2900, %v2899
          %v2910 = vadd.f32 %v2878, %v2901
          %v2911 = vadd.f32 %v2879, %v2902
          %v2912 = vadd.f32 %v2880, %v2903
          %v2913 = vadd.f32 %v2881, %v2904
          %v2914 = vadd.f32 %v2882, %v2905
          %v2915 = vadd.f32 %v2883, %v2906
          %v2916 = vadd.f32 %v2884, %v2907
          %v2917 = vadd.f32 %v2885, %v2908
          %v2918 = vadd.f32 %v2886, %v2909
          %s2919 = sadd.s32 %s2888, 1
          %s2920 = sld [smem:[#allocation9 + %s2919]]
          %v2921 = vstv %s2920
          %v2922 = vmul.f32 %v2921, %v2891
          %v2923 = vmul.f32 %v2921, %v2892
          %v2924 = vmul.f32 %v2921, %v2893
          %v2925 = vmul.f32 %v2921, %v2894
          %v2926 = vmul.f32 %v2921, %v2895
          %v2927 = vmul.f32 %v2921, %v2896
          %v2928 = vmul.f32 %v2921, %v2897
          %v2929 = vmul.f32 %v2921, %v2898
          %v2930 = vmul.f32 %v2921, %v2899
          %2940 = vrot.lane.b32.xlu0 %v2922, 127
          %v2941 = vpop.permute.xlu0 %2940
          %2942 = vrot.lane.b32.xlu0 %v2923, 127
          %v2943 = vpop.permute.xlu0 %2942
          %2944 = vrot.lane.b32.xlu0 %v2924, 127
          %v2945 = vpop.permute.xlu0 %2944
          %2946 = vrot.lane.b32.xlu0 %v2925, 127
          %v2947 = vpop.permute.xlu0 %2946
          %2948 = vrot.lane.b32.xlu0 %v2926, 127
          %v2949 = vpop.permute.xlu0 %2948
          %2950 = vrot.lane.b32.xlu0 %v2927, 127
          %v2951 = vpop.permute.xlu0 %2950
          %2952 = vrot.lane.b32.xlu0 %v2928, 127
          %v2953 = vpop.permute.xlu0 %2952
          %2954 = vrot.lane.b32.xlu0 %v2929, 127
          %v2955 = vpop.permute.xlu0 %2954
          %2956 = vrot.lane.b32.xlu0 %v2930, 127
          %v2957 = vpop.permute.xlu0 %2956
          %v2967 = vadd.f32 %v2910, %v2941
          %v2968 = vadd.f32 %v2911, %v2943
          %v2969 = vadd.f32 %v2912, %v2945
          %v2970 = vadd.f32 %v2913, %v2947
          %v2971 = vadd.f32 %v2914, %v2949
          %v2972 = vadd.f32 %v2915, %v2951
          %v2973 = vadd.f32 %v2916, %v2953
          %v2974 = vadd.f32 %v2917, %v2955
          %v2975 = vadd.f32 %v2918, %v2957
          %s2976 = sadd.s32 %s2888, 2
          %s2977 = sld [smem:[#allocation9 + %s2976]]
          %v2978 = vstv %s2977
          %v2979 = vmul.f32 %v2978, %v2891
          %v2980 = vmul.f32 %v2978, %v2892
          %v2981 = vmul.f32 %v2978, %v2893
          %v2982 = vmul.f32 %v2978, %v2894
          %v2983 = vmul.f32 %v2978, %v2895
          %v2984 = vmul.f32 %v2978, %v2896
          %v2985 = vmul.f32 %v2978, %v2897
          %v2986 = vmul.f32 %v2978, %v2898
          %v2987 = vmul.f32 %v2978, %v2899
          %2997 = vrot.lane.b32.xlu0 %v2979, 126
          %v2998 = vpop.permute.xlu0 %2997
          %2999 = vrot.lane.b32.xlu0 %v2980, 126
          %v3000 = vpop.permute.xlu0 %2999
          %3001 = vrot.lane.b32.xlu0 %v2981, 126
          %v3002 = vpop.permute.xlu0 %3001
          %3003 = vrot.lane.b32.xlu0 %v2982, 126
          %v3004 = vpop.permute.xlu0 %3003
          %3005 = vrot.lane.b32.xlu0 %v2983, 126
          %v3006 = vpop.permute.xlu0 %3005
          %3007 = vrot.lane.b32.xlu0 %v2984, 126
          %v3008 = vpop.permute.xlu0 %3007
          %3009 = vrot.lane.b32.xlu0 %v2985, 126
          %v3010 = vpop.permute.xlu0 %3009
          %3011 = vrot.lane.b32.xlu0 %v2986, 126
          %v3012 = vpop.permute.xlu0 %3011
          %3013 = vrot.lane.b32.xlu0 %v2987, 126
          %v3014 = vpop.permute.xlu0 %3013
          %v3024 = vadd.f32 %v2967, %v2998
          %v3025 = vadd.f32 %v2968, %v3000
          %v3026 = vadd.f32 %v2969, %v3002
          %v3027 = vadd.f32 %v2970, %v3004
          %v3028 = vadd.f32 %v2971, %v3006
          %v3029 = vadd.f32 %v2972, %v3008
          %v3030 = vadd.f32 %v2973, %v3010
          %v3031 = vadd.f32 %v2974, %v3012
          %v3032 = vadd.f32 %v2975, %v3014
          %s3033 = smul.u32 %s2887, 3
          %s3034 = sadd.s32 %s3033, 1
          %s3035 = smul.u32 %s3034, 3
          %s3036 = sld [smem:[#allocation9 + %s3035]]
          %v3037 = vld [vmem:[%s2890 + $0x1] sm:$0xff]
          %v3038 = vld [vmem:[%s2890 + $0x9] sm:$0xff]
          %v3039 = vld [vmem:[%s2890 + $0x11] sm:$0xff]
          %v3040 = vld [vmem:[%s2890 + $0x19] sm:$0xff]
          %v3041 = vld [vmem:[%s2890 + $0x21] sm:$0xff]
          %v3042 = vld [vmem:[%s2890 + $0x29] sm:$0xff]
          %v3043 = vld [vmem:[%s2890 + $0x31] sm:$0xff]
          %v3044 = vld [vmem:[%s2890 + $0x39] sm:$0xff]
          %v3045 = vld [vmem:[%s2890 + $0x41] sm:$0xff]
          %v3046 = vstv %s3036
          %v3047 = vmul.f32 %v3046, %v3037
          %v3048 = vmul.f32 %v3046, %v3038
          %v3049 = vmul.f32 %v3046, %v3039
          %v3050 = vmul.f32 %v3046, %v3040
          %v3051 = vmul.f32 %v3046, %v3041
          %v3052 = vmul.f32 %v3046, %v3042
          %v3053 = vmul.f32 %v3046, %v3043
          %v3054 = vmul.f32 %v3046, %v3044
          %v3055 = vmul.f32 %v3046, %v3045
          %v3056 = vadd.f32 %v3024, %v3047
          %v3057 = vadd.f32 %v3025, %v3048
          %v3058 = vadd.f32 %v3026, %v3049
          %v3059 = vadd.f32 %v3027, %v3050
          %v3060 = vadd.f32 %v3028, %v3051
          %v3061 = vadd.f32 %v3029, %v3052
          %v3062 = vadd.f32 %v3030, %v3053
          %v3063 = vadd.f32 %v3031, %v3054
          %v3064 = vadd.f32 %v3032, %v3055
          %s3065 = sadd.s32 %s3035, 1
          %s3066 = sld [smem:[#allocation9 + %s3065]]
          %v3067 = vstv %s3066
          %v3068 = vmul.f32 %v3067, %v3037
          %v3069 = vmul.f32 %v3067, %v3038
          %v3070 = vmul.f32 %v3067, %v3039
          %v3071 = vmul.f32 %v3067, %v3040
          %v3072 = vmul.f32 %v3067, %v3041
          %v3073 = vmul.f32 %v3067, %v3042
          %v3074 = vmul.f32 %v3067, %v3043
          %v3075 = vmul.f32 %v3067, %v3044
          %v3076 = vmul.f32 %v3067, %v3045
          %3086 = vrot.lane.b32.xlu0 %v3068, 127
          %v3087 = vpop.permute.xlu0 %3086
          %3088 = vrot.lane.b32.xlu0 %v3069, 127
          %v3089 = vpop.permute.xlu0 %3088
          %3090 = vrot.lane.b32.xlu0 %v3070, 127
          %v3091 = vpop.permute.xlu0 %3090
          %3092 = vrot.lane.b32.xlu0 %v3071, 127
          %v3093 = vpop.permute.xlu0 %3092
          %3094 = vrot.lane.b32.xlu0 %v3072, 127
          %v3095 = vpop.permute.xlu0 %3094
          %3096 = vrot.lane.b32.xlu0 %v3073, 127
          %v3097 = vpop.permute.xlu0 %3096
          %3098 = vrot.lane.b32.xlu0 %v3074, 127
          %v3099 = vpop.permute.xlu0 %3098
          %3100 = vrot.lane.b32.xlu0 %v3075, 127
          %v3101 = vpop.permute.xlu0 %3100
          %3102 = vrot.lane.b32.xlu0 %v3076, 127
          %v3103 = vpop.permute.xlu0 %3102
          %v3113 = vadd.f32 %v3056, %v3087
          %v3114 = vadd.f32 %v3057, %v3089
          %v3115 = vadd.f32 %v3058, %v3091
          %v3116 = vadd.f32 %v3059, %v3093
          %v3117 = vadd.f32 %v3060, %v3095
          %v3118 = vadd.f32 %v3061, %v3097
          %v3119 = vadd.f32 %v3062, %v3099
          %v3120 = vadd.f32 %v3063, %v3101
          %v3121 = vadd.f32 %v3064, %v3103
          %s3122 = sadd.s32 %s3035, 2
          %s3123 = sld [smem:[#allocation9 + %s3122]]
          %v3124 = vstv %s3123
          %v3125 = vmul.f32 %v3124, %v3037
          %v3126 = vmul.f32 %v3124, %v3038
          %v3127 = vmul.f32 %v3124, %v3039
          %v3128 = vmul.f32 %v3124, %v3040
          %v3129 = vmul.f32 %v3124, %v3041
          %v3130 = vmul.f32 %v3124, %v3042
          %v3131 = vmul.f32 %v3124, %v3043
          %v3132 = vmul.f32 %v3124, %v3044
          %v3133 = vmul.f32 %v3124, %v3045
          %3143 = vrot.lane.b32.xlu0 %v3125, 126
          %v3144 = vpop.permute.xlu0 %3143
          %3145 = vrot.lane.b32.xlu0 %v3126, 126
          %v3146 = vpop.permute.xlu0 %3145
          %3147 = vrot.lane.b32.xlu0 %v3127, 126
          %v3148 = vpop.permute.xlu0 %3147
          %3149 = vrot.lane.b32.xlu0 %v3128, 126
          %v3150 = vpop.permute.xlu0 %3149
          %3151 = vrot.lane.b32.xlu0 %v3129, 126
          %v3152 = vpop.permute.xlu0 %3151
          %3153 = vrot.lane.b32.xlu0 %v3130, 126
          %v3154 = vpop.permute.xlu0 %3153
          %3155 = vrot.lane.b32.xlu0 %v3131, 126
          %v3156 = vpop.permute.xlu0 %3155
          %3157 = vrot.lane.b32.xlu0 %v3132, 126
          %v3158 = vpop.permute.xlu0 %3157
          %3159 = vrot.lane.b32.xlu0 %v3133, 126
          %v3160 = vpop.permute.xlu0 %3159
          %v3170 = vadd.f32 %v3113, %v3144
          %v3171 = vadd.f32 %v3114, %v3146
          %v3172 = vadd.f32 %v3115, %v3148
          %v3173 = vadd.f32 %v3116, %v3150
          %v3174 = vadd.f32 %v3117, %v3152
          %v3175 = vadd.f32 %v3118, %v3154
          %v3176 = vadd.f32 %v3119, %v3156
          %v3177 = vadd.f32 %v3120, %v3158
          %v3178 = vadd.f32 %v3121, %v3160
          %s3179 = sadd.s32 %s3033, 2
          %s3180 = smul.u32 %s3179, 3
          %s3181 = sld [smem:[#allocation9 + %s3180]]
          %v3182 = vld [vmem:[%s2890 + $0x2] sm:$0xff]
          %v3183 = vld [vmem:[%s2890 + $0xa] sm:$0xff]
          %v3184 = vld [vmem:[%s2890 + $0x12] sm:$0xff]
          %v3185 = vld [vmem:[%s2890 + $0x1a] sm:$0xff]
          %v3186 = vld [vmem:[%s2890 + $0x22] sm:$0xff]
          %v3187 = vld [vmem:[%s2890 + $0x2a] sm:$0xff]
          %v3188 = vld [vmem:[%s2890 + $0x32] sm:$0xff]
          %v3189 = vld [vmem:[%s2890 + $0x3a] sm:$0xff]
          %v3190 = vld [vmem:[%s2890 + $0x42] sm:$0xff]
          %v3191 = vstv %s3181
          %v3192 = vmul.f32 %v3191, %v3182
          %v3193 = vmul.f32 %v3191, %v3183
          %v3194 = vmul.f32 %v3191, %v3184
          %v3195 = vmul.f32 %v3191, %v3185
          %v3196 = vmul.f32 %v3191, %v3186
          %v3197 = vmul.f32 %v3191, %v3187
          %v3198 = vmul.f32 %v3191, %v3188
          %v3199 = vmul.f32 %v3191, %v3189
          %v3200 = vmul.f32 %v3191, %v3190
          %v3201 = vadd.f32 %v3170, %v3192
          %v3202 = vadd.f32 %v3171, %v3193
          %v3203 = vadd.f32 %v3172, %v3194
          %v3204 = vadd.f32 %v3173, %v3195
          %v3205 = vadd.f32 %v3174, %v3196
          %v3206 = vadd.f32 %v3175, %v3197
          %v3207 = vadd.f32 %v3176, %v3198
          %v3208 = vadd.f32 %v3177, %v3199
          %v3209 = vadd.f32 %v3178, %v3200
          %s3210 = sadd.s32 %s3180, 1
          %s3211 = sld [smem:[#allocation9 + %s3210]]
          %v3212 = vstv %s3211
          %v3213 = vmul.f32 %v3212, %v3182
          %v3214 = vmul.f32 %v3212, %v3183
          %v3215 = vmul.f32 %v3212, %v3184
          %v3216 = vmul.f32 %v3212, %v3185
          %v3217 = vmul.f32 %v3212, %v3186
          %v3218 = vmul.f32 %v3212, %v3187
          %v3219 = vmul.f32 %v3212, %v3188
          %v3220 = vmul.f32 %v3212, %v3189
          %v3221 = vmul.f32 %v3212, %v3190
          %3231 = vrot.lane.b32.xlu0 %v3213, 127
          %v3232 = vpop.permute.xlu0 %3231
          %3233 = vrot.lane.b32.xlu0 %v3214, 127
          %v3234 = vpop.permute.xlu0 %3233
          %3235 = vrot.lane.b32.xlu0 %v3215, 127
          %v3236 = vpop.permute.xlu0 %3235
          %3237 = vrot.lane.b32.xlu0 %v3216, 127
          %v3238 = vpop.permute.xlu0 %3237
          %3239 = vrot.lane.b32.xlu0 %v3217, 127
          %v3240 = vpop.permute.xlu0 %3239
          %3241 = vrot.lane.b32.xlu0 %v3218, 127
          %v3242 = vpop.permute.xlu0 %3241
          %3243 = vrot.lane.b32.xlu0 %v3219, 127
          %v3244 = vpop.permute.xlu0 %3243
          %3245 = vrot.lane.b32.xlu0 %v3220, 127
          %v3246 = vpop.permute.xlu0 %3245
          %3247 = vrot.lane.b32.xlu0 %v3221, 127
          %v3248 = vpop.permute.xlu0 %3247
          %v3258 = vadd.f32 %v3201, %v3232
          %v3259 = vadd.f32 %v3202, %v3234
          %v3260 = vadd.f32 %v3203, %v3236
          %v3261 = vadd.f32 %v3204, %v3238
          %v3262 = vadd.f32 %v3205, %v3240
          %v3263 = vadd.f32 %v3206, %v3242
          %v3264 = vadd.f32 %v3207, %v3244
          %v3265 = vadd.f32 %v3208, %v3246
          %v3266 = vadd.f32 %v3209, %v3248
          %s3267 = sadd.s32 %s3180, 2
          %s3268 = sld [smem:[#allocation9 + %s3267]]
          %v3269 = vstv %s3268
          %v3270 = vmul.f32 %v3269, %v3182
          %v3271 = vmul.f32 %v3269, %v3183
          %v3272 = vmul.f32 %v3269, %v3184
          %v3273 = vmul.f32 %v3269, %v3185
          %v3274 = vmul.f32 %v3269, %v3186
          %v3275 = vmul.f32 %v3269, %v3187
          %v3276 = vmul.f32 %v3269, %v3188
          %v3277 = vmul.f32 %v3269, %v3189
          %v3278 = vmul.f32 %v3269, %v3190
          %3288 = vrot.lane.b32.xlu0 %v3270, 126
          %v3289 = vpop.permute.xlu0 %3288
          %3290 = vrot.lane.b32.xlu0 %v3271, 126
          %v3291 = vpop.permute.xlu0 %3290
          %3292 = vrot.lane.b32.xlu0 %v3272, 126
          %v3293 = vpop.permute.xlu0 %3292
          %3294 = vrot.lane.b32.xlu0 %v3273, 126
          %v3295 = vpop.permute.xlu0 %3294
          %3296 = vrot.lane.b32.xlu0 %v3274, 126
          %v3297 = vpop.permute.xlu0 %3296
          %3298 = vrot.lane.b32.xlu0 %v3275, 126
          %v3299 = vpop.permute.xlu0 %3298
          %3300 = vrot.lane.b32.xlu0 %v3276, 126
          %v3301 = vpop.permute.xlu0 %3300
          %3302 = vrot.lane.b32.xlu0 %v3277, 126
          %v3303 = vpop.permute.xlu0 %3302
          %3304 = vrot.lane.b32.xlu0 %v3278, 126
          %v3305 = vpop.permute.xlu0 %3304
          %v3315 = vadd.f32 %v3258, %v3289
          %v3316 = vadd.f32 %v3259, %v3291
          %v3317 = vadd.f32 %v3260, %v3293
          %v3318 = vadd.f32 %v3261, %v3295
          %v3319 = vadd.f32 %v3262, %v3297
          %v3320 = vadd.f32 %v3263, %v3299
          %v3321 = vadd.f32 %v3264, %v3301
          %v3322 = vadd.f32 %v3265, %v3303
          %v3323 = vadd.f32 %v3266, %v3305
          %s3324 = sadd.s32 %s2449, 3
          %s3325 = smul.u32 %s3324, 9
          %s3326 = sld [smem:[#allocation9 + %s3325]]
          %s3327 = scalar_lea.vmem [#allocation2], 240
          %v3328 = vld [vmem:[%s3327] sm:$0xff]
          %v3329 = vld [vmem:[%s3327 + $0x8] sm:$0xff]
          %v3330 = vld [vmem:[%s3327 + $0x10] sm:$0xff]
          %v3331 = vld [vmem:[%s3327 + $0x18] sm:$0xff]
          %v3332 = vld [vmem:[%s3327 + $0x20] sm:$0xff]
          %v3333 = vld [vmem:[%s3327 + $0x28] sm:$0xff]
          %v3334 = vld [vmem:[%s3327 + $0x30] sm:$0xff]
          %v3335 = vld [vmem:[%s3327 + $0x38] sm:$0xff]
          %v3336 = vld [vmem:[%s3327 + $0x40] sm:$0xff]
          %v3337 = vstv %s3326
          %v3338 = vmul.f32 %v3337, %v3328
          %v3339 = vmul.f32 %v3337, %v3329
          %v3340 = vmul.f32 %v3337, %v3330
          %v3341 = vmul.f32 %v3337, %v3331
          %v3342 = vmul.f32 %v3337, %v3332
          %v3343 = vmul.f32 %v3337, %v3333
          %v3344 = vmul.f32 %v3337, %v3334
          %v3345 = vmul.f32 %v3337, %v3335
          %v3346 = vmul.f32 %v3337, %v3336
          %v3347 = vadd.f32 %v3315, %v3338
          %v3348 = vadd.f32 %v3316, %v3339
          %v3349 = vadd.f32 %v3317, %v3340
          %v3350 = vadd.f32 %v3318, %v3341
          %v3351 = vadd.f32 %v3319, %v3342
          %v3352 = vadd.f32 %v3320, %v3343
          %v3353 = vadd.f32 %v3321, %v3344
          %v3354 = vadd.f32 %v3322, %v3345
          %v3355 = vadd.f32 %v3323, %v3346
          %s3356 = sadd.s32 %s3325, 1
          %s3357 = sld [smem:[#allocation9 + %s3356]]
          %v3358 = vstv %s3357
          %v3359 = vmul.f32 %v3358, %v3328
          %v3360 = vmul.f32 %v3358, %v3329
          %v3361 = vmul.f32 %v3358, %v3330
          %v3362 = vmul.f32 %v3358, %v3331
          %v3363 = vmul.f32 %v3358, %v3332
          %v3364 = vmul.f32 %v3358, %v3333
          %v3365 = vmul.f32 %v3358, %v3334
          %v3366 = vmul.f32 %v3358, %v3335
          %v3367 = vmul.f32 %v3358, %v3336
          %3377 = vrot.lane.b32.xlu0 %v3359, 127
          %v3378 = vpop.permute.xlu0 %3377
          %3379 = vrot.lane.b32.xlu0 %v3360, 127
          %v3380 = vpop.permute.xlu0 %3379
          %3381 = vrot.lane.b32.xlu0 %v3361, 127
          %v3382 = vpop.permute.xlu0 %3381
          %3383 = vrot.lane.b32.xlu0 %v3362, 127
          %v3384 = vpop.permute.xlu0 %3383
          %3385 = vrot.lane.b32.xlu0 %v3363, 127
          %v3386 = vpop.permute.xlu0 %3385
          %3387 = vrot.lane.b32.xlu0 %v3364, 127
          %v3388 = vpop.permute.xlu0 %3387
          %3389 = vrot.lane.b32.xlu0 %v3365, 127
          %v3390 = vpop.permute.xlu0 %3389
          %3391 = vrot.lane.b32.xlu0 %v3366, 127
          %v3392 = vpop.permute.xlu0 %3391
          %3393 = vrot.lane.b32.xlu0 %v3367, 127
          %v3394 = vpop.permute.xlu0 %3393
          %v3404 = vadd.f32 %v3347, %v3378
          %v3405 = vadd.f32 %v3348, %v3380
          %v3406 = vadd.f32 %v3349, %v3382
          %v3407 = vadd.f32 %v3350, %v3384
          %v3408 = vadd.f32 %v3351, %v3386
          %v3409 = vadd.f32 %v3352, %v3388
          %v3410 = vadd.f32 %v3353, %v3390
          %v3411 = vadd.f32 %v3354, %v3392
          %v3412 = vadd.f32 %v3355, %v3394
          %s3413 = sadd.s32 %s3325, 2
          %s3414 = sld [smem:[#allocation9 + %s3413]]
          %v3415 = vstv %s3414
          %v3416 = vmul.f32 %v3415, %v3328
          %v3417 = vmul.f32 %v3415, %v3329
          %v3418 = vmul.f32 %v3415, %v3330
          %v3419 = vmul.f32 %v3415, %v3331
          %v3420 = vmul.f32 %v3415, %v3332
          %v3421 = vmul.f32 %v3415, %v3333
          %v3422 = vmul.f32 %v3415, %v3334
          %v3423 = vmul.f32 %v3415, %v3335
          %v3424 = vmul.f32 %v3415, %v3336
          %3434 = vrot.lane.b32.xlu0 %v3416, 126
          %v3435 = vpop.permute.xlu0 %3434
          %3436 = vrot.lane.b32.xlu0 %v3417, 126
          %v3437 = vpop.permute.xlu0 %3436
          %3438 = vrot.lane.b32.xlu0 %v3418, 126
          %v3439 = vpop.permute.xlu0 %3438
          %3440 = vrot.lane.b32.xlu0 %v3419, 126
          %v3441 = vpop.permute.xlu0 %3440
          %3442 = vrot.lane.b32.xlu0 %v3420, 126
          %v3443 = vpop.permute.xlu0 %3442
          %3444 = vrot.lane.b32.xlu0 %v3421, 126
          %v3445 = vpop.permute.xlu0 %3444
          %3446 = vrot.lane.b32.xlu0 %v3422, 126
          %v3447 = vpop.permute.xlu0 %3446
          %3448 = vrot.lane.b32.xlu0 %v3423, 126
          %v3449 = vpop.permute.xlu0 %3448
          %3450 = vrot.lane.b32.xlu0 %v3424, 126
          %v3451 = vpop.permute.xlu0 %3450
          %v3461 = vadd.f32 %v3404, %v3435
          %v3462 = vadd.f32 %v3405, %v3437
          %v3463 = vadd.f32 %v3406, %v3439
          %v3464 = vadd.f32 %v3407, %v3441
          %v3465 = vadd.f32 %v3408, %v3443
          %v3466 = vadd.f32 %v3409, %v3445
          %v3467 = vadd.f32 %v3410, %v3447
          %v3468 = vadd.f32 %v3411, %v3449
          %v3469 = vadd.f32 %v3412, %v3451
          %s3470 = smul.u32 %s3324, 3
          %s3471 = sadd.s32 %s3470, 1
          %s3472 = smul.u32 %s3471, 3
          %s3473 = sld [smem:[#allocation9 + %s3472]]
          %v3474 = vld [vmem:[%s3327 + $0x1] sm:$0xff]
          %v3475 = vld [vmem:[%s3327 + $0x9] sm:$0xff]
          %v3476 = vld [vmem:[%s3327 + $0x11] sm:$0xff]
          %v3477 = vld [vmem:[%s3327 + $0x19] sm:$0xff]
          %v3478 = vld [vmem:[%s3327 + $0x21] sm:$0xff]
          %v3479 = vld [vmem:[%s3327 + $0x29] sm:$0xff]
          %v3480 = vld [vmem:[%s3327 + $0x31] sm:$0xff]
          %v3481 = vld [vmem:[%s3327 + $0x39] sm:$0xff]
          %v3482 = vld [vmem:[%s3327 + $0x41] sm:$0xff]
          %v3483 = vstv %s3473
          %v3484 = vmul.f32 %v3483, %v3474
          %v3485 = vmul.f32 %v3483, %v3475
          %v3486 = vmul.f32 %v3483, %v3476
          %v3487 = vmul.f32 %v3483, %v3477
          %v3488 = vmul.f32 %v3483, %v3478
          %v3489 = vmul.f32 %v3483, %v3479
          %v3490 = vmul.f32 %v3483, %v3480
          %v3491 = vmul.f32 %v3483, %v3481
          %v3492 = vmul.f32 %v3483, %v3482
          %v3493 = vadd.f32 %v3461, %v3484
          %v3494 = vadd.f32 %v3462, %v3485
          %v3495 = vadd.f32 %v3463, %v3486
          %v3496 = vadd.f32 %v3464, %v3487
          %v3497 = vadd.f32 %v3465, %v3488
          %v3498 = vadd.f32 %v3466, %v3489
          %v3499 = vadd.f32 %v3467, %v3490
          %v3500 = vadd.f32 %v3468, %v3491
          %v3501 = vadd.f32 %v3469, %v3492
          %s3502 = sadd.s32 %s3472, 1
          %s3503 = sld [smem:[#allocation9 + %s3502]]
          %v3504 = vstv %s3503
          %v3505 = vmul.f32 %v3504, %v3474
          %v3506 = vmul.f32 %v3504, %v3475
          %v3507 = vmul.f32 %v3504, %v3476
          %v3508 = vmul.f32 %v3504, %v3477
          %v3509 = vmul.f32 %v3504, %v3478
          %v3510 = vmul.f32 %v3504, %v3479
          %v3511 = vmul.f32 %v3504, %v3480
          %v3512 = vmul.f32 %v3504, %v3481
          %v3513 = vmul.f32 %v3504, %v3482
          %3523 = vrot.lane.b32.xlu0 %v3505, 127
          %v3524 = vpop.permute.xlu0 %3523
          %3525 = vrot.lane.b32.xlu0 %v3506, 127
          %v3526 = vpop.permute.xlu0 %3525
          %3527 = vrot.lane.b32.xlu0 %v3507, 127
          %v3528 = vpop.permute.xlu0 %3527
          %3529 = vrot.lane.b32.xlu0 %v3508, 127
          %v3530 = vpop.permute.xlu0 %3529
          %3531 = vrot.lane.b32.xlu0 %v3509, 127
          %v3532 = vpop.permute.xlu0 %3531
          %3533 = vrot.lane.b32.xlu0 %v3510, 127
          %v3534 = vpop.permute.xlu0 %3533
          %3535 = vrot.lane.b32.xlu0 %v3511, 127
          %v3536 = vpop.permute.xlu0 %3535
          %3537 = vrot.lane.b32.xlu0 %v3512, 127
          %v3538 = vpop.permute.xlu0 %3537
          %3539 = vrot.lane.b32.xlu0 %v3513, 127
          %v3540 = vpop.permute.xlu0 %3539
          %v3550 = vadd.f32 %v3493, %v3524
          %v3551 = vadd.f32 %v3494, %v3526
          %v3552 = vadd.f32 %v3495, %v3528
          %v3553 = vadd.f32 %v3496, %v3530
          %v3554 = vadd.f32 %v3497, %v3532
          %v3555 = vadd.f32 %v3498, %v3534
          %v3556 = vadd.f32 %v3499, %v3536
          %v3557 = vadd.f32 %v3500, %v3538
          %v3558 = vadd.f32 %v3501, %v3540
          %s3559 = sadd.s32 %s3472, 2
          %s3560 = sld [smem:[#allocation9 + %s3559]]
          %v3561 = vstv %s3560
          %v3562 = vmul.f32 %v3561, %v3474
          %v3563 = vmul.f32 %v3561, %v3475
          %v3564 = vmul.f32 %v3561, %v3476
          %v3565 = vmul.f32 %v3561, %v3477
          %v3566 = vmul.f32 %v3561, %v3478
          %v3567 = vmul.f32 %v3561, %v3479
          %v3568 = vmul.f32 %v3561, %v3480
          %v3569 = vmul.f32 %v3561, %v3481
          %v3570 = vmul.f32 %v3561, %v3482
          %3580 = vrot.lane.b32.xlu0 %v3562, 126
          %v3581 = vpop.permute.xlu0 %3580
          %3582 = vrot.lane.b32.xlu0 %v3563, 126
          %v3583 = vpop.permute.xlu0 %3582
          %3584 = vrot.lane.b32.xlu0 %v3564, 126
          %v3585 = vpop.permute.xlu0 %3584
          %3586 = vrot.lane.b32.xlu0 %v3565, 126
          %v3587 = vpop.permute.xlu0 %3586
          %3588 = vrot.lane.b32.xlu0 %v3566, 126
          %v3589 = vpop.permute.xlu0 %3588
          %3590 = vrot.lane.b32.xlu0 %v3567, 126
          %v3591 = vpop.permute.xlu0 %3590
          %3592 = vrot.lane.b32.xlu0 %v3568, 126
          %v3593 = vpop.permute.xlu0 %3592
          %3594 = vrot.lane.b32.xlu0 %v3569, 126
          %v3595 = vpop.permute.xlu0 %3594
          %3596 = vrot.lane.b32.xlu0 %v3570, 126
          %v3597 = vpop.permute.xlu0 %3596
          %v3607 = vadd.f32 %v3550, %v3581
          %v3608 = vadd.f32 %v3551, %v3583
          %v3609 = vadd.f32 %v3552, %v3585
          %v3610 = vadd.f32 %v3553, %v3587
          %v3611 = vadd.f32 %v3554, %v3589
          %v3612 = vadd.f32 %v3555, %v3591
          %v3613 = vadd.f32 %v3556, %v3593
          %v3614 = vadd.f32 %v3557, %v3595
          %v3615 = vadd.f32 %v3558, %v3597
          %s3616 = sadd.s32 %s3470, 2
          %s3617 = smul.u32 %s3616, 3
          %s3618 = sld [smem:[#allocation9 + %s3617]]
          %v3619 = vld [vmem:[%s3327 + $0x2] sm:$0xff]
          %v3620 = vld [vmem:[%s3327 + $0xa] sm:$0xff]
          %v3621 = vld [vmem:[%s3327 + $0x12] sm:$0xff]
          %v3622 = vld [vmem:[%s3327 + $0x1a] sm:$0xff]
          %v3623 = vld [vmem:[%s3327 + $0x22] sm:$0xff]
          %v3624 = vld [vmem:[%s3327 + $0x2a] sm:$0xff]
          %v3625 = vld [vmem:[%s3327 + $0x32] sm:$0xff]
          %v3626 = vld [vmem:[%s3327 + $0x3a] sm:$0xff]
          %v3627 = vld [vmem:[%s3327 + $0x42] sm:$0xff]
          %v3628 = vstv %s3618
          %v3629 = vmul.f32 %v3628, %v3619
          %v3630 = vmul.f32 %v3628, %v3620
          %v3631 = vmul.f32 %v3628, %v3621
          %v3632 = vmul.f32 %v3628, %v3622
          %v3633 = vmul.f32 %v3628, %v3623
          %v3634 = vmul.f32 %v3628, %v3624
          %v3635 = vmul.f32 %v3628, %v3625
          %v3636 = vmul.f32 %v3628, %v3626
          %v3637 = vmul.f32 %v3628, %v3627
          %v3638 = vadd.f32 %v3607, %v3629
          %v3639 = vadd.f32 %v3608, %v3630
          %v3640 = vadd.f32 %v3609, %v3631
          %v3641 = vadd.f32 %v3610, %v3632
          %v3642 = vadd.f32 %v3611, %v3633
          %v3643 = vadd.f32 %v3612, %v3634
          %v3644 = vadd.f32 %v3613, %v3635
          %v3645 = vadd.f32 %v3614, %v3636
          %v3646 = vadd.f32 %v3615, %v3637
          %s3647 = sadd.s32 %s3617, 1
          %s3648 = sld [smem:[#allocation9 + %s3647]]
          %v3649 = vstv %s3648
          %v3650 = vmul.f32 %v3649, %v3619
          %v3651 = vmul.f32 %v3649, %v3620
          %v3652 = vmul.f32 %v3649, %v3621
          %v3653 = vmul.f32 %v3649, %v3622
          %v3654 = vmul.f32 %v3649, %v3623
          %v3655 = vmul.f32 %v3649, %v3624
          %v3656 = vmul.f32 %v3649, %v3625
          %v3657 = vmul.f32 %v3649, %v3626
          %v3658 = vmul.f32 %v3649, %v3627
          %3668 = vrot.lane.b32.xlu0 %v3650, 127
          %v3669 = vpop.permute.xlu0 %3668
          %3670 = vrot.lane.b32.xlu0 %v3651, 127
          %v3671 = vpop.permute.xlu0 %3670
          %3672 = vrot.lane.b32.xlu0 %v3652, 127
          %v3673 = vpop.permute.xlu0 %3672
          %3674 = vrot.lane.b32.xlu0 %v3653, 127
          %v3675 = vpop.permute.xlu0 %3674
          %3676 = vrot.lane.b32.xlu0 %v3654, 127
          %v3677 = vpop.permute.xlu0 %3676
          %3678 = vrot.lane.b32.xlu0 %v3655, 127
          %v3679 = vpop.permute.xlu0 %3678
          %3680 = vrot.lane.b32.xlu0 %v3656, 127
          %v3681 = vpop.permute.xlu0 %3680
          %3682 = vrot.lane.b32.xlu0 %v3657, 127
          %v3683 = vpop.permute.xlu0 %3682
          %3684 = vrot.lane.b32.xlu0 %v3658, 127
          %v3685 = vpop.permute.xlu0 %3684
          %v3695 = vadd.f32 %v3638, %v3669
          %v3696 = vadd.f32 %v3639, %v3671
          %v3697 = vadd.f32 %v3640, %v3673
          %v3698 = vadd.f32 %v3641, %v3675
          %v3699 = vadd.f32 %v3642, %v3677
          %v3700 = vadd.f32 %v3643, %v3679
          %v3701 = vadd.f32 %v3644, %v3681
          %v3702 = vadd.f32 %v3645, %v3683
          %v3703 = vadd.f32 %v3646, %v3685
          %s3704 = sadd.s32 %s3617, 2
          %s3705 = sld [smem:[#allocation9 + %s3704]]
          %v3706 = vstv %s3705
          %v3707 = vmul.f32 %v3706, %v3619
          %v3708 = vmul.f32 %v3706, %v3620
          %v3709 = vmul.f32 %v3706, %v3621
          %v3710 = vmul.f32 %v3706, %v3622
          %v3711 = vmul.f32 %v3706, %v3623
          %v3712 = vmul.f32 %v3706, %v3624
          %v3713 = vmul.f32 %v3706, %v3625
          %v3714 = vmul.f32 %v3706, %v3626
          %v3715 = vmul.f32 %v3706, %v3627
          %3725 = vrot.lane.b32.xlu0 %v3707, 126
          %v3726 = vpop.permute.xlu0 %3725
          %3727 = vrot.lane.b32.xlu0 %v3708, 126
          %v3728 = vpop.permute.xlu0 %3727
          %3729 = vrot.lane.b32.xlu0 %v3709, 126
          %v3730 = vpop.permute.xlu0 %3729
          %3731 = vrot.lane.b32.xlu0 %v3710, 126
          %v3732 = vpop.permute.xlu0 %3731
          %3733 = vrot.lane.b32.xlu0 %v3711, 126
          %v3734 = vpop.permute.xlu0 %3733
          %3735 = vrot.lane.b32.xlu0 %v3712, 126
          %v3736 = vpop.permute.xlu0 %3735
          %3737 = vrot.lane.b32.xlu0 %v3713, 126
          %v3738 = vpop.permute.xlu0 %3737
          %3739 = vrot.lane.b32.xlu0 %v3714, 126
          %v3740 = vpop.permute.xlu0 %3739
          %3741 = vrot.lane.b32.xlu0 %v3715, 126
          %v3742 = vpop.permute.xlu0 %3741
          %v3752 = vadd.f32 %v3695, %v3726
          %v3753 = vadd.f32 %v3696, %v3728
          %v3754 = vadd.f32 %v3697, %v3730
          %v3755 = vadd.f32 %v3698, %v3732
          %v3756 = vadd.f32 %v3699, %v3734
          %v3757 = vadd.f32 %v3700, %v3736
          %v3758 = vadd.f32 %v3701, %v3738
          %v3759 = vadd.f32 %v3702, %v3740
          %v3760 = vadd.f32 %v3703, %v3742
          %v3761 = vmax.f32 %v3752, 0.0
          %v3762 = vmax.f32 %v3753, 0.0
          %v3763 = vmax.f32 %v3754, 0.0
          %v3764 = vmax.f32 %v3755, 0.0
          %v3765 = vmax.f32 %v3756, 0.0
          %v3766 = vmax.f32 %v3757, 0.0
          %v3767 = vmax.f32 %v3758, 0.0
          %v3768 = vmax.f32 %v3759, 0.0
          %v3769 = vmax.f32 %v3760, 0.0
          %v3770 = vsel %vm1997, %v3761, 0.0
          %v3771 = vsel %vm1998, %v3762, 0.0
          %v3772 = vsel %vm1999, %v3763, 0.0
          %v3773 = vsel %vm2000, %v3764, 0.0
          %v3774 = vsel %vm2001, %v3765, 0.0
          %v3775 = vsel %vm2002, %v3766, 0.0
          %v3776 = vsel %vm2003, %v3767, 0.0
          %v3777 = vsel %vm2004, %v3768, 0.0
          %v3778 = vsel %vm2005, %v3769, 0.0
          %s3779 = smul.u32 %s2007, 72
          %s3780 = scalar_lea.vmem [#allocation3], %s3779
          %vm3781 = vcmask 834560
          %3782 = vst.msk [vmem:[%s3780] sm:$0xff] %vm3781, %v3770
          %3783 = vst.msk [vmem:[%s3780 + $0x8] sm:$0xff] %vm3781, %v3771
          %3784 = vst.msk [vmem:[%s3780 + $0x10] sm:$0xff] %vm3781, %v3772
          %3785 = vst.msk [vmem:[%s3780 + $0x18] sm:$0xff] %vm3781, %v3773
          %3786 = vst.msk [vmem:[%s3780 + $0x20] sm:$0xff] %vm3781, %v3774
          %3787 = vst.msk [vmem:[%s3780 + $0x28] sm:$0xff] %vm3781, %v3775
          %3788 = vst.msk [vmem:[%s3780 + $0x30] sm:$0xff] %vm3781, %v3776
          %3789 = vst.msk [vmem:[%s3780 + $0x38] sm:$0xff] %vm3781, %v3777
          %3790 = vst.msk [vmem:[%s3780 + $0x40] sm:$0xff] %vm3781, %v3778
        $region92: #{simple_cnn_forward.1} parent=55 // loop_footer
          %s2011 = sadd.s32 1, %s2007
        $region93: #{simple_cnn_forward.1} parent=55 // loop_footer_branch
          %2006 = sbr.rel target = $region89
        $region94: #{simple_cnn_forward.1} parent=55 // loop_exit
          _
        %v3791 = vld [vmem:[%s8] sm:$0x1]
        loop: start=0, step=1, limit=4
        $region95: #{simple_cnn_forward.1} parent=55 // loop_pre_header
          _
        $region96: #{simple_cnn_forward.1} parent=55 // loop_header
          %s3793 = sphi 0, %s3797
          %p3794 = scmp.ge.s32.totalorder %s3793, 4
          %v3798 = vphi %v3791, %v7956
        $region97: #{simple_cnn_forward.1} parent=55 // loop_header_branch
          %3796 = sbr.rel (%p3794) target = $region101
        $region98: #{simple_cnn_forward.1} parent=55 // loop_body
          %s3799 = sld [smem:[#allocation13 + %s3793]]
          %v3800 = vstv %s3799
          %s3801 = smul.u32 %s3793, 72
          %s3802 = sld [smem:[#allocation12 + %s3801]]
          %v3803 = vld [vmem:[#allocation3] sm:$0xff]
          %v3804 = vld [vmem:[#allocation3 + $0x8] sm:$0xff]
          %v3805 = vld [vmem:[#allocation3 + $0x10] sm:$0xff]
          %v3806 = vld [vmem:[#allocation3 + $0x18] sm:$0xff]
          %v3807 = vld [vmem:[#allocation3 + $0x20] sm:$0xff]
          %v3808 = vld [vmem:[#allocation3 + $0x28] sm:$0xff]
          %v3809 = vld [vmem:[#allocation3 + $0x30] sm:$0xff]
          %v3810 = vld [vmem:[#allocation3 + $0x38] sm:$0xff]
          %v3811 = vld [vmem:[#allocation3 + $0x40] sm:$0x3f]
          %v3812 = vstv %s3802
          %v3813 = vmul.f32 %v3812, %v3803
          %v3814 = vmul.f32 %v3812, %v3804
          %v3815 = vmul.f32 %v3812, %v3805
          %v3816 = vmul.f32 %v3812, %v3806
          %v3817 = vmul.f32 %v3812, %v3807
          %v3818 = vmul.f32 %v3812, %v3808
          %v3819 = vmul.f32 %v3812, %v3809
          %v3820 = vmul.f32 %v3812, %v3810
          %v3821 = vmul.f32 %v3812, %v3811
          %v3822 = vadd.f32 %v3800, %v3813
          %v3823 = vadd.f32 %v3800, %v3814
          %v3824 = vadd.f32 %v3800, %v3815
          %v3825 = vadd.f32 %v3800, %v3816
          %v3826 = vadd.f32 %v3800, %v3817
          %v3827 = vadd.f32 %v3800, %v3818
          %v3828 = vadd.f32 %v3800, %v3819
          %v3829 = vadd.f32 %v3800, %v3820
          %v3830 = vadd.f32 %v3800, %v3821
          %s3831 = sadd.s32 %s3801, 1
          %s3832 = sld [smem:[#allocation12 + %s3831]]
          %v3833 = vstv %s3832
          %v3834 = vmul.f32 %v3833, %v3803
          %v3835 = vmul.f32 %v3833, %v3804
          %v3836 = vmul.f32 %v3833, %v3805
          %v3837 = vmul.f32 %v3833, %v3806
          %v3838 = vmul.f32 %v3833, %v3807
          %v3839 = vmul.f32 %v3833, %v3808
          %v3840 = vmul.f32 %v3833, %v3809
          %v3841 = vmul.f32 %v3833, %v3810
          %v3842 = vmul.f32 %v3833, %v3811
          %3852 = vrot.lane.b32.xlu0 %v3834, 127
          %v3853 = vpop.permute.xlu0 %3852
          %3854 = vrot.lane.b32.xlu0 %v3835, 127
          %v3855 = vpop.permute.xlu0 %3854
          %3856 = vrot.lane.b32.xlu0 %v3836, 127
          %v3857 = vpop.permute.xlu0 %3856
          %3858 = vrot.lane.b32.xlu0 %v3837, 127
          %v3859 = vpop.permute.xlu0 %3858
          %3860 = vrot.lane.b32.xlu0 %v3838, 127
          %v3861 = vpop.permute.xlu0 %3860
          %3862 = vrot.lane.b32.xlu0 %v3839, 127
          %v3863 = vpop.permute.xlu0 %3862
          %3864 = vrot.lane.b32.xlu0 %v3840, 127
          %v3865 = vpop.permute.xlu0 %3864
          %3866 = vrot.lane.b32.xlu0 %v3841, 127
          %v3867 = vpop.permute.xlu0 %3866
          %3868 = vrot.lane.b32.xlu0 %v3842, 127
          %v3869 = vpop.permute.xlu0 %3868
          %v3879 = vadd.f32 %v3822, %v3853
          %v3880 = vadd.f32 %v3823, %v3855
          %v3881 = vadd.f32 %v3824, %v3857
          %v3882 = vadd.f32 %v3825, %v3859
          %v3883 = vadd.f32 %v3826, %v3861
          %v3884 = vadd.f32 %v3827, %v3863
          %v3885 = vadd.f32 %v3828, %v3865
          %v3886 = vadd.f32 %v3829, %v3867
          %v3887 = vadd.f32 %v3830, %v3869
          %s3888 = sadd.s32 %s3801, 2
          %s3889 = sld [smem:[#allocation12 + %s3888]]
          %v3890 = vstv %s3889
          %v3891 = vmul.f32 %v3890, %v3803
          %v3892 = vmul.f32 %v3890, %v3804
          %v3893 = vmul.f32 %v3890, %v3805
          %v3894 = vmul.f32 %v3890, %v3806
          %v3895 = vmul.f32 %v3890, %v3807
          %v3896 = vmul.f32 %v3890, %v3808
          %v3897 = vmul.f32 %v3890, %v3809
          %v3898 = vmul.f32 %v3890, %v3810
          %v3899 = vmul.f32 %v3890, %v3811
          %3909 = vrot.lane.b32.xlu0 %v3891, 126
          %v3910 = vpop.permute.xlu0 %3909
          %3911 = vrot.lane.b32.xlu0 %v3892, 126
          %v3912 = vpop.permute.xlu0 %3911
          %3913 = vrot.lane.b32.xlu0 %v3893, 126
          %v3914 = vpop.permute.xlu0 %3913
          %3915 = vrot.lane.b32.xlu0 %v3894, 126
          %v3916 = vpop.permute.xlu0 %3915
          %3917 = vrot.lane.b32.xlu0 %v3895, 126
          %v3918 = vpop.permute.xlu0 %3917
          %3919 = vrot.lane.b32.xlu0 %v3896, 126
          %v3920 = vpop.permute.xlu0 %3919
          %3921 = vrot.lane.b32.xlu0 %v3897, 126
          %v3922 = vpop.permute.xlu0 %3921
          %3923 = vrot.lane.b32.xlu0 %v3898, 126
          %v3924 = vpop.permute.xlu0 %3923
          %3925 = vrot.lane.b32.xlu0 %v3899, 126
          %v3926 = vpop.permute.xlu0 %3925
          %v3936 = vadd.f32 %v3879, %v3910
          %v3937 = vadd.f32 %v3880, %v3912
          %v3938 = vadd.f32 %v3881, %v3914
          %v3939 = vadd.f32 %v3882, %v3916
          %v3940 = vadd.f32 %v3883, %v3918
          %v3941 = vadd.f32 %v3884, %v3920
          %v3942 = vadd.f32 %v3885, %v3922
          %v3943 = vadd.f32 %v3886, %v3924
          %v3944 = vadd.f32 %v3887, %v3926
          %s3945 = smul.u32 %s3793, 24
          %s3946 = sadd.s32 %s3945, 1
          %s3947 = smul.u32 %s3946, 3
          %s3948 = sld [smem:[#allocation12 + %s3947]]
          %v3949 = vld [vmem:[#allocation3 + $0x1] sm:$0xff]
          %v3950 = vld [vmem:[#allocation3 + $0x9] sm:$0xff]
          %v3951 = vld [vmem:[#allocation3 + $0x11] sm:$0xff]
          %v3952 = vld [vmem:[#allocation3 + $0x19] sm:$0xff]
          %v3953 = vld [vmem:[#allocation3 + $0x21] sm:$0xff]
          %v3954 = vld [vmem:[#allocation3 + $0x29] sm:$0xff]
          %v3955 = vld [vmem:[#allocation3 + $0x31] sm:$0xff]
          %v3956 = vld [vmem:[#allocation3 + $0x39] sm:$0xff]
          %v3957 = vld [vmem:[#allocation3 + $0x41] sm:$0x3f]
          %v3958 = vstv %s3948
          %v3959 = vmul.f32 %v3958, %v3949
          %v3960 = vmul.f32 %v3958, %v3950
          %v3961 = vmul.f32 %v3958, %v3951
          %v3962 = vmul.f32 %v3958, %v3952
          %v3963 = vmul.f32 %v3958, %v3953
          %v3964 = vmul.f32 %v3958, %v3954
          %v3965 = vmul.f32 %v3958, %v3955
          %v3966 = vmul.f32 %v3958, %v3956
          %v3967 = vmul.f32 %v3958, %v3957
          %v3968 = vadd.f32 %v3936, %v3959
          %v3969 = vadd.f32 %v3937, %v3960
          %v3970 = vadd.f32 %v3938, %v3961
          %v3971 = vadd.f32 %v3939, %v3962
          %v3972 = vadd.f32 %v3940, %v3963
          %v3973 = vadd.f32 %v3941, %v3964
          %v3974 = vadd.f32 %v3942, %v3965
          %v3975 = vadd.f32 %v3943, %v3966
          %v3976 = vadd.f32 %v3944, %v3967
          %s3977 = sadd.s32 %s3947, 1
          %s3978 = sld [smem:[#allocation12 + %s3977]]
          %v3979 = vstv %s3978
          %v3980 = vmul.f32 %v3979, %v3949
          %v3981 = vmul.f32 %v3979, %v3950
          %v3982 = vmul.f32 %v3979, %v3951
          %v3983 = vmul.f32 %v3979, %v3952
          %v3984 = vmul.f32 %v3979, %v3953
          %v3985 = vmul.f32 %v3979, %v3954
          %v3986 = vmul.f32 %v3979, %v3955
          %v3987 = vmul.f32 %v3979, %v3956
          %v3988 = vmul.f32 %v3979, %v3957
          %3998 = vrot.lane.b32.xlu0 %v3980, 127
          %v3999 = vpop.permute.xlu0 %3998
          %4000 = vrot.lane.b32.xlu0 %v3981, 127
          %v4001 = vpop.permute.xlu0 %4000
          %4002 = vrot.lane.b32.xlu0 %v3982, 127
          %v4003 = vpop.permute.xlu0 %4002
          %4004 = vrot.lane.b32.xlu0 %v3983, 127
          %v4005 = vpop.permute.xlu0 %4004
          %4006 = vrot.lane.b32.xlu0 %v3984, 127
          %v4007 = vpop.permute.xlu0 %4006
          %4008 = vrot.lane.b32.xlu0 %v3985, 127
          %v4009 = vpop.permute.xlu0 %4008
          %4010 = vrot.lane.b32.xlu0 %v3986, 127
          %v4011 = vpop.permute.xlu0 %4010
          %4012 = vrot.lane.b32.xlu0 %v3987, 127
          %v4013 = vpop.permute.xlu0 %4012
          %4014 = vrot.lane.b32.xlu0 %v3988, 127
          %v4015 = vpop.permute.xlu0 %4014
          %v4025 = vadd.f32 %v3968, %v3999
          %v4026 = vadd.f32 %v3969, %v4001
          %v4027 = vadd.f32 %v3970, %v4003
          %v4028 = vadd.f32 %v3971, %v4005
          %v4029 = vadd.f32 %v3972, %v4007
          %v4030 = vadd.f32 %v3973, %v4009
          %v4031 = vadd.f32 %v3974, %v4011
          %v4032 = vadd.f32 %v3975, %v4013
          %v4033 = vadd.f32 %v3976, %v4015
          %s4034 = sadd.s32 %s3947, 2
          %s4035 = sld [smem:[#allocation12 + %s4034]]
          %v4036 = vstv %s4035
          %v4037 = vmul.f32 %v4036, %v3949
          %v4038 = vmul.f32 %v4036, %v3950
          %v4039 = vmul.f32 %v4036, %v3951
          %v4040 = vmul.f32 %v4036, %v3952
          %v4041 = vmul.f32 %v4036, %v3953
          %v4042 = vmul.f32 %v4036, %v3954
          %v4043 = vmul.f32 %v4036, %v3955
          %v4044 = vmul.f32 %v4036, %v3956
          %v4045 = vmul.f32 %v4036, %v3957
          %4055 = vrot.lane.b32.xlu0 %v4037, 126
          %v4056 = vpop.permute.xlu0 %4055
          %4057 = vrot.lane.b32.xlu0 %v4038, 126
          %v4058 = vpop.permute.xlu0 %4057
          %4059 = vrot.lane.b32.xlu0 %v4039, 126
          %v4060 = vpop.permute.xlu0 %4059
          %4061 = vrot.lane.b32.xlu0 %v4040, 126
          %v4062 = vpop.permute.xlu0 %4061
          %4063 = vrot.lane.b32.xlu0 %v4041, 126
          %v4064 = vpop.permute.xlu0 %4063
          %4065 = vrot.lane.b32.xlu0 %v4042, 126
          %v4066 = vpop.permute.xlu0 %4065
          %4067 = vrot.lane.b32.xlu0 %v4043, 126
          %v4068 = vpop.permute.xlu0 %4067
          %4069 = vrot.lane.b32.xlu0 %v4044, 126
          %v4070 = vpop.permute.xlu0 %4069
          %4071 = vrot.lane.b32.xlu0 %v4045, 126
          %v4072 = vpop.permute.xlu0 %4071
          %v4082 = vadd.f32 %v4025, %v4056
          %v4083 = vadd.f32 %v4026, %v4058
          %v4084 = vadd.f32 %v4027, %v4060
          %v4085 = vadd.f32 %v4028, %v4062
          %v4086 = vadd.f32 %v4029, %v4064
          %v4087 = vadd.f32 %v4030, %v4066
          %v4088 = vadd.f32 %v4031, %v4068
          %v4089 = vadd.f32 %v4032, %v4070
          %v4090 = vadd.f32 %v4033, %v4072
          %s4091 = sadd.s32 %s3945, 2
          %s4092 = smul.u32 %s4091, 3
          %s4093 = sld [smem:[#allocation12 + %s4092]]
          %v4094 = vld [vmem:[#allocation3 + $0x2] sm:$0xff]
          %v4095 = vld [vmem:[#allocation3 + $0xa] sm:$0xff]
          %v4096 = vld [vmem:[#allocation3 + $0x12] sm:$0xff]
          %v4097 = vld [vmem:[#allocation3 + $0x1a] sm:$0xff]
          %v4098 = vld [vmem:[#allocation3 + $0x22] sm:$0xff]
          %v4099 = vld [vmem:[#allocation3 + $0x2a] sm:$0xff]
          %v4100 = vld [vmem:[#allocation3 + $0x32] sm:$0xff]
          %v4101 = vld [vmem:[#allocation3 + $0x3a] sm:$0xff]
          %v4102 = vld [vmem:[#allocation3 + $0x42] sm:$0x3f]
          %v4103 = vstv %s4093
          %v4104 = vmul.f32 %v4103, %v4094
          %v4105 = vmul.f32 %v4103, %v4095
          %v4106 = vmul.f32 %v4103, %v4096
          %v4107 = vmul.f32 %v4103, %v4097
          %v4108 = vmul.f32 %v4103, %v4098
          %v4109 = vmul.f32 %v4103, %v4099
          %v4110 = vmul.f32 %v4103, %v4100
          %v4111 = vmul.f32 %v4103, %v4101
          %v4112 = vmul.f32 %v4103, %v4102
          %v4113 = vadd.f32 %v4082, %v4104
          %v4114 = vadd.f32 %v4083, %v4105
          %v4115 = vadd.f32 %v4084, %v4106
          %v4116 = vadd.f32 %v4085, %v4107
          %v4117 = vadd.f32 %v4086, %v4108
          %v4118 = vadd.f32 %v4087, %v4109
          %v4119 = vadd.f32 %v4088, %v4110
          %v4120 = vadd.f32 %v4089, %v4111
          %v4121 = vadd.f32 %v4090, %v4112
          %s4122 = sadd.s32 %s4092, 1
          %s4123 = sld [smem:[#allocation12 + %s4122]]
          %v4124 = vstv %s4123
          %v4125 = vmul.f32 %v4124, %v4094
          %v4126 = vmul.f32 %v4124, %v4095
          %v4127 = vmul.f32 %v4124, %v4096
          %v4128 = vmul.f32 %v4124, %v4097
          %v4129 = vmul.f32 %v4124, %v4098
          %v4130 = vmul.f32 %v4124, %v4099
          %v4131 = vmul.f32 %v4124, %v4100
          %v4132 = vmul.f32 %v4124, %v4101
          %v4133 = vmul.f32 %v4124, %v4102
          %4143 = vrot.lane.b32.xlu0 %v4125, 127
          %v4144 = vpop.permute.xlu0 %4143
          %4145 = vrot.lane.b32.xlu0 %v4126, 127
          %v4146 = vpop.permute.xlu0 %4145
          %4147 = vrot.lane.b32.xlu0 %v4127, 127
          %v4148 = vpop.permute.xlu0 %4147
          %4149 = vrot.lane.b32.xlu0 %v4128, 127
          %v4150 = vpop.permute.xlu0 %4149
          %4151 = vrot.lane.b32.xlu0 %v4129, 127
          %v4152 = vpop.permute.xlu0 %4151
          %4153 = vrot.lane.b32.xlu0 %v4130, 127
          %v4154 = vpop.permute.xlu0 %4153
          %4155 = vrot.lane.b32.xlu0 %v4131, 127
          %v4156 = vpop.permute.xlu0 %4155
          %4157 = vrot.lane.b32.xlu0 %v4132, 127
          %v4158 = vpop.permute.xlu0 %4157
          %4159 = vrot.lane.b32.xlu0 %v4133, 127
          %v4160 = vpop.permute.xlu0 %4159
          %v4170 = vadd.f32 %v4113, %v4144
          %v4171 = vadd.f32 %v4114, %v4146
          %v4172 = vadd.f32 %v4115, %v4148
          %v4173 = vadd.f32 %v4116, %v4150
          %v4174 = vadd.f32 %v4117, %v4152
          %v4175 = vadd.f32 %v4118, %v4154
          %v4176 = vadd.f32 %v4119, %v4156
          %v4177 = vadd.f32 %v4120, %v4158
          %v4178 = vadd.f32 %v4121, %v4160
          %s4179 = sadd.s32 %s4092, 2
          %s4180 = sld [smem:[#allocation12 + %s4179]]
          %v4181 = vstv %s4180
          %v4182 = vmul.f32 %v4181, %v4094
          %v4183 = vmul.f32 %v4181, %v4095
          %v4184 = vmul.f32 %v4181, %v4096
          %v4185 = vmul.f32 %v4181, %v4097
          %v4186 = vmul.f32 %v4181, %v4098
          %v4187 = vmul.f32 %v4181, %v4099
          %v4188 = vmul.f32 %v4181, %v4100
          %v4189 = vmul.f32 %v4181, %v4101
          %v4190 = vmul.f32 %v4181, %v4102
          %4200 = vrot.lane.b32.xlu0 %v4182, 126
          %v4201 = vpop.permute.xlu0 %4200
          %4202 = vrot.lane.b32.xlu0 %v4183, 126
          %v4203 = vpop.permute.xlu0 %4202
          %4204 = vrot.lane.b32.xlu0 %v4184, 126
          %v4205 = vpop.permute.xlu0 %4204
          %4206 = vrot.lane.b32.xlu0 %v4185, 126
          %v4207 = vpop.permute.xlu0 %4206
          %4208 = vrot.lane.b32.xlu0 %v4186, 126
          %v4209 = vpop.permute.xlu0 %4208
          %4210 = vrot.lane.b32.xlu0 %v4187, 126
          %v4211 = vpop.permute.xlu0 %4210
          %4212 = vrot.lane.b32.xlu0 %v4188, 126
          %v4213 = vpop.permute.xlu0 %4212
          %4214 = vrot.lane.b32.xlu0 %v4189, 126
          %v4215 = vpop.permute.xlu0 %4214
          %4216 = vrot.lane.b32.xlu0 %v4190, 126
          %v4217 = vpop.permute.xlu0 %4216
          %v4227 = vadd.f32 %v4170, %v4201
          %v4228 = vadd.f32 %v4171, %v4203
          %v4229 = vadd.f32 %v4172, %v4205
          %v4230 = vadd.f32 %v4173, %v4207
          %v4231 = vadd.f32 %v4174, %v4209
          %v4232 = vadd.f32 %v4175, %v4211
          %v4233 = vadd.f32 %v4176, %v4213
          %v4234 = vadd.f32 %v4177, %v4215
          %v4235 = vadd.f32 %v4178, %v4217
          %s4236 = smul.u32 %s3793, 8
          %s4237 = sadd.s32 %s4236, 1
          %s4238 = smul.u32 %s4237, 9
          %s4239 = sld [smem:[#allocation12 + %s4238]]
          %s4240 = scalar_lea.vmem [#allocation3], 72
          %v4241 = vld [vmem:[%s4240] sm:$0xff]
          %v4242 = vld [vmem:[%s4240 + $0x8] sm:$0xff]
          %v4243 = vld [vmem:[%s4240 + $0x10] sm:$0xff]
          %v4244 = vld [vmem:[%s4240 + $0x18] sm:$0xff]
          %v4245 = vld [vmem:[%s4240 + $0x20] sm:$0xff]
          %v4246 = vld [vmem:[%s4240 + $0x28] sm:$0xff]
          %v4247 = vld [vmem:[%s4240 + $0x30] sm:$0xff]
          %v4248 = vld [vmem:[%s4240 + $0x38] sm:$0xff]
          %v4249 = vld [vmem:[%s4240 + $0x40] sm:$0x3f]
          %v4250 = vstv %s4239
          %v4251 = vmul.f32 %v4250, %v4241
          %v4252 = vmul.f32 %v4250, %v4242
          %v4253 = vmul.f32 %v4250, %v4243
          %v4254 = vmul.f32 %v4250, %v4244
          %v4255 = vmul.f32 %v4250, %v4245
          %v4256 = vmul.f32 %v4250, %v4246
          %v4257 = vmul.f32 %v4250, %v4247
          %v4258 = vmul.f32 %v4250, %v4248
          %v4259 = vmul.f32 %v4250, %v4249
          %v4260 = vadd.f32 %v4227, %v4251
          %v4261 = vadd.f32 %v4228, %v4252
          %v4262 = vadd.f32 %v4229, %v4253
          %v4263 = vadd.f32 %v4230, %v4254
          %v4264 = vadd.f32 %v4231, %v4255
          %v4265 = vadd.f32 %v4232, %v4256
          %v4266 = vadd.f32 %v4233, %v4257
          %v4267 = vadd.f32 %v4234, %v4258
          %v4268 = vadd.f32 %v4235, %v4259
          %s4269 = sadd.s32 %s4238, 1
          %s4270 = sld [smem:[#allocation12 + %s4269]]
          %v4271 = vstv %s4270
          %v4272 = vmul.f32 %v4271, %v4241
          %v4273 = vmul.f32 %v4271, %v4242
          %v4274 = vmul.f32 %v4271, %v4243
          %v4275 = vmul.f32 %v4271, %v4244
          %v4276 = vmul.f32 %v4271, %v4245
          %v4277 = vmul.f32 %v4271, %v4246
          %v4278 = vmul.f32 %v4271, %v4247
          %v4279 = vmul.f32 %v4271, %v4248
          %v4280 = vmul.f32 %v4271, %v4249
          %4290 = vrot.lane.b32.xlu0 %v4272, 127
          %v4291 = vpop.permute.xlu0 %4290
          %4292 = vrot.lane.b32.xlu0 %v4273, 127
          %v4293 = vpop.permute.xlu0 %4292
          %4294 = vrot.lane.b32.xlu0 %v4274, 127
          %v4295 = vpop.permute.xlu0 %4294
          %4296 = vrot.lane.b32.xlu0 %v4275, 127
          %v4297 = vpop.permute.xlu0 %4296
          %4298 = vrot.lane.b32.xlu0 %v4276, 127
          %v4299 = vpop.permute.xlu0 %4298
          %4300 = vrot.lane.b32.xlu0 %v4277, 127
          %v4301 = vpop.permute.xlu0 %4300
          %4302 = vrot.lane.b32.xlu0 %v4278, 127
          %v4303 = vpop.permute.xlu0 %4302
          %4304 = vrot.lane.b32.xlu0 %v4279, 127
          %v4305 = vpop.permute.xlu0 %4304
          %4306 = vrot.lane.b32.xlu0 %v4280, 127
          %v4307 = vpop.permute.xlu0 %4306
          %v4317 = vadd.f32 %v4260, %v4291
          %v4318 = vadd.f32 %v4261, %v4293
          %v4319 = vadd.f32 %v4262, %v4295
          %v4320 = vadd.f32 %v4263, %v4297
          %v4321 = vadd.f32 %v4264, %v4299
          %v4322 = vadd.f32 %v4265, %v4301
          %v4323 = vadd.f32 %v4266, %v4303
          %v4324 = vadd.f32 %v4267, %v4305
          %v4325 = vadd.f32 %v4268, %v4307
          %s4326 = sadd.s32 %s4238, 2
          %s4327 = sld [smem:[#allocation12 + %s4326]]
          %v4328 = vstv %s4327
          %v4329 = vmul.f32 %v4328, %v4241
          %v4330 = vmul.f32 %v4328, %v4242
          %v4331 = vmul.f32 %v4328, %v4243
          %v4332 = vmul.f32 %v4328, %v4244
          %v4333 = vmul.f32 %v4328, %v4245
          %v4334 = vmul.f32 %v4328, %v4246
          %v4335 = vmul.f32 %v4328, %v4247
          %v4336 = vmul.f32 %v4328, %v4248
          %v4337 = vmul.f32 %v4328, %v4249
          %4347 = vrot.lane.b32.xlu0 %v4329, 126
          %v4348 = vpop.permute.xlu0 %4347
          %4349 = vrot.lane.b32.xlu0 %v4330, 126
          %v4350 = vpop.permute.xlu0 %4349
          %4351 = vrot.lane.b32.xlu0 %v4331, 126
          %v4352 = vpop.permute.xlu0 %4351
          %4353 = vrot.lane.b32.xlu0 %v4332, 126
          %v4354 = vpop.permute.xlu0 %4353
          %4355 = vrot.lane.b32.xlu0 %v4333, 126
          %v4356 = vpop.permute.xlu0 %4355
          %4357 = vrot.lane.b32.xlu0 %v4334, 126
          %v4358 = vpop.permute.xlu0 %4357
          %4359 = vrot.lane.b32.xlu0 %v4335, 126
          %v4360 = vpop.permute.xlu0 %4359
          %4361 = vrot.lane.b32.xlu0 %v4336, 126
          %v4362 = vpop.permute.xlu0 %4361
          %4363 = vrot.lane.b32.xlu0 %v4337, 126
          %v4364 = vpop.permute.xlu0 %4363
          %v4374 = vadd.f32 %v4317, %v4348
          %v4375 = vadd.f32 %v4318, %v4350
          %v4376 = vadd.f32 %v4319, %v4352
          %v4377 = vadd.f32 %v4320, %v4354
          %v4378 = vadd.f32 %v4321, %v4356
          %v4379 = vadd.f32 %v4322, %v4358
          %v4380 = vadd.f32 %v4323, %v4360
          %v4381 = vadd.f32 %v4324, %v4362
          %v4382 = vadd.f32 %v4325, %v4364
          %s4383 = smul.u32 %s4237, 3
          %s4384 = sadd.s32 %s4383, 1
          %s4385 = smul.u32 %s4384, 3
          %s4386 = sld [smem:[#allocation12 + %s4385]]
          %v4387 = vld [vmem:[%s4240 + $0x1] sm:$0xff]
          %v4388 = vld [vmem:[%s4240 + $0x9] sm:$0xff]
          %v4389 = vld [vmem:[%s4240 + $0x11] sm:$0xff]
          %v4390 = vld [vmem:[%s4240 + $0x19] sm:$0xff]
          %v4391 = vld [vmem:[%s4240 + $0x21] sm:$0xff]
          %v4392 = vld [vmem:[%s4240 + $0x29] sm:$0xff]
          %v4393 = vld [vmem:[%s4240 + $0x31] sm:$0xff]
          %v4394 = vld [vmem:[%s4240 + $0x39] sm:$0xff]
          %v4395 = vld [vmem:[%s4240 + $0x41] sm:$0x3f]
          %v4396 = vstv %s4386
          %v4397 = vmul.f32 %v4396, %v4387
          %v4398 = vmul.f32 %v4396, %v4388
          %v4399 = vmul.f32 %v4396, %v4389
          %v4400 = vmul.f32 %v4396, %v4390
          %v4401 = vmul.f32 %v4396, %v4391
          %v4402 = vmul.f32 %v4396, %v4392
          %v4403 = vmul.f32 %v4396, %v4393
          %v4404 = vmul.f32 %v4396, %v4394
          %v4405 = vmul.f32 %v4396, %v4395
          %v4406 = vadd.f32 %v4374, %v4397
          %v4407 = vadd.f32 %v4375, %v4398
          %v4408 = vadd.f32 %v4376, %v4399
          %v4409 = vadd.f32 %v4377, %v4400
          %v4410 = vadd.f32 %v4378, %v4401
          %v4411 = vadd.f32 %v4379, %v4402
          %v4412 = vadd.f32 %v4380, %v4403
          %v4413 = vadd.f32 %v4381, %v4404
          %v4414 = vadd.f32 %v4382, %v4405
          %s4415 = sadd.s32 %s4385, 1
          %s4416 = sld [smem:[#allocation12 + %s4415]]
          %v4417 = vstv %s4416
          %v4418 = vmul.f32 %v4417, %v4387
          %v4419 = vmul.f32 %v4417, %v4388
          %v4420 = vmul.f32 %v4417, %v4389
          %v4421 = vmul.f32 %v4417, %v4390
          %v4422 = vmul.f32 %v4417, %v4391
          %v4423 = vmul.f32 %v4417, %v4392
          %v4424 = vmul.f32 %v4417, %v4393
          %v4425 = vmul.f32 %v4417, %v4394
          %v4426 = vmul.f32 %v4417, %v4395
          %4436 = vrot.lane.b32.xlu0 %v4418, 127
          %v4437 = vpop.permute.xlu0 %4436
          %4438 = vrot.lane.b32.xlu0 %v4419, 127
          %v4439 = vpop.permute.xlu0 %4438
          %4440 = vrot.lane.b32.xlu0 %v4420, 127
          %v4441 = vpop.permute.xlu0 %4440
          %4442 = vrot.lane.b32.xlu0 %v4421, 127
          %v4443 = vpop.permute.xlu0 %4442
          %4444 = vrot.lane.b32.xlu0 %v4422, 127
          %v4445 = vpop.permute.xlu0 %4444
          %4446 = vrot.lane.b32.xlu0 %v4423, 127
          %v4447 = vpop.permute.xlu0 %4446
          %4448 = vrot.lane.b32.xlu0 %v4424, 127
          %v4449 = vpop.permute.xlu0 %4448
          %4450 = vrot.lane.b32.xlu0 %v4425, 127
          %v4451 = vpop.permute.xlu0 %4450
          %4452 = vrot.lane.b32.xlu0 %v4426, 127
          %v4453 = vpop.permute.xlu0 %4452
          %v4463 = vadd.f32 %v4406, %v4437
          %v4464 = vadd.f32 %v4407, %v4439
          %v4465 = vadd.f32 %v4408, %v4441
          %v4466 = vadd.f32 %v4409, %v4443
          %v4467 = vadd.f32 %v4410, %v4445
          %v4468 = vadd.f32 %v4411, %v4447
          %v4469 = vadd.f32 %v4412, %v4449
          %v4470 = vadd.f32 %v4413, %v4451
          %v4471 = vadd.f32 %v4414, %v4453
          %s4472 = sadd.s32 %s4385, 2
          %s4473 = sld [smem:[#allocation12 + %s4472]]
          %v4474 = vstv %s4473
          %v4475 = vmul.f32 %v4474, %v4387
          %v4476 = vmul.f32 %v4474, %v4388
          %v4477 = vmul.f32 %v4474, %v4389
          %v4478 = vmul.f32 %v4474, %v4390
          %v4479 = vmul.f32 %v4474, %v4391
          %v4480 = vmul.f32 %v4474, %v4392
          %v4481 = vmul.f32 %v4474, %v4393
          %v4482 = vmul.f32 %v4474, %v4394
          %v4483 = vmul.f32 %v4474, %v4395
          %4493 = vrot.lane.b32.xlu0 %v4475, 126
          %v4494 = vpop.permute.xlu0 %4493
          %4495 = vrot.lane.b32.xlu0 %v4476, 126
          %v4496 = vpop.permute.xlu0 %4495
          %4497 = vrot.lane.b32.xlu0 %v4477, 126
          %v4498 = vpop.permute.xlu0 %4497
          %4499 = vrot.lane.b32.xlu0 %v4478, 126
          %v4500 = vpop.permute.xlu0 %4499
          %4501 = vrot.lane.b32.xlu0 %v4479, 126
          %v4502 = vpop.permute.xlu0 %4501
          %4503 = vrot.lane.b32.xlu0 %v4480, 126
          %v4504 = vpop.permute.xlu0 %4503
          %4505 = vrot.lane.b32.xlu0 %v4481, 126
          %v4506 = vpop.permute.xlu0 %4505
          %4507 = vrot.lane.b32.xlu0 %v4482, 126
          %v4508 = vpop.permute.xlu0 %4507
          %4509 = vrot.lane.b32.xlu0 %v4483, 126
          %v4510 = vpop.permute.xlu0 %4509
          %v4520 = vadd.f32 %v4463, %v4494
          %v4521 = vadd.f32 %v4464, %v4496
          %v4522 = vadd.f32 %v4465, %v4498
          %v4523 = vadd.f32 %v4466, %v4500
          %v4524 = vadd.f32 %v4467, %v4502
          %v4525 = vadd.f32 %v4468, %v4504
          %v4526 = vadd.f32 %v4469, %v4506
          %v4527 = vadd.f32 %v4470, %v4508
          %v4528 = vadd.f32 %v4471, %v4510
          %s4529 = sadd.s32 %s4383, 2
          %s4530 = smul.u32 %s4529, 3
          %s4531 = sld [smem:[#allocation12 + %s4530]]
          %v4532 = vld [vmem:[%s4240 + $0x2] sm:$0xff]
          %v4533 = vld [vmem:[%s4240 + $0xa] sm:$0xff]
          %v4534 = vld [vmem:[%s4240 + $0x12] sm:$0xff]
          %v4535 = vld [vmem:[%s4240 + $0x1a] sm:$0xff]
          %v4536 = vld [vmem:[%s4240 + $0x22] sm:$0xff]
          %v4537 = vld [vmem:[%s4240 + $0x2a] sm:$0xff]
          %v4538 = vld [vmem:[%s4240 + $0x32] sm:$0xff]
          %v4539 = vld [vmem:[%s4240 + $0x3a] sm:$0xff]
          %v4540 = vld [vmem:[%s4240 + $0x42] sm:$0x3f]
          %v4541 = vstv %s4531
          %v4542 = vmul.f32 %v4541, %v4532
          %v4543 = vmul.f32 %v4541, %v4533
          %v4544 = vmul.f32 %v4541, %v4534
          %v4545 = vmul.f32 %v4541, %v4535
          %v4546 = vmul.f32 %v4541, %v4536
          %v4547 = vmul.f32 %v4541, %v4537
          %v4548 = vmul.f32 %v4541, %v4538
          %v4549 = vmul.f32 %v4541, %v4539
          %v4550 = vmul.f32 %v4541, %v4540
          %v4551 = vadd.f32 %v4520, %v4542
          %v4552 = vadd.f32 %v4521, %v4543
          %v4553 = vadd.f32 %v4522, %v4544
          %v4554 = vadd.f32 %v4523, %v4545
          %v4555 = vadd.f32 %v4524, %v4546
          %v4556 = vadd.f32 %v4525, %v4547
          %v4557 = vadd.f32 %v4526, %v4548
          %v4558 = vadd.f32 %v4527, %v4549
          %v4559 = vadd.f32 %v4528, %v4550
          %s4560 = sadd.s32 %s4530, 1
          %s4561 = sld [smem:[#allocation12 + %s4560]]
          %v4562 = vstv %s4561
          %v4563 = vmul.f32 %v4562, %v4532
          %v4564 = vmul.f32 %v4562, %v4533
          %v4565 = vmul.f32 %v4562, %v4534
          %v4566 = vmul.f32 %v4562, %v4535
          %v4567 = vmul.f32 %v4562, %v4536
          %v4568 = vmul.f32 %v4562, %v4537
          %v4569 = vmul.f32 %v4562, %v4538
          %v4570 = vmul.f32 %v4562, %v4539
          %v4571 = vmul.f32 %v4562, %v4540
          %4581 = vrot.lane.b32.xlu0 %v4563, 127
          %v4582 = vpop.permute.xlu0 %4581
          %4583 = vrot.lane.b32.xlu0 %v4564, 127
          %v4584 = vpop.permute.xlu0 %4583
          %4585 = vrot.lane.b32.xlu0 %v4565, 127
          %v4586 = vpop.permute.xlu0 %4585
          %4587 = vrot.lane.b32.xlu0 %v4566, 127
          %v4588 = vpop.permute.xlu0 %4587
          %4589 = vrot.lane.b32.xlu0 %v4567, 127
          %v4590 = vpop.permute.xlu0 %4589
          %4591 = vrot.lane.b32.xlu0 %v4568, 127
          %v4592 = vpop.permute.xlu0 %4591
          %4593 = vrot.lane.b32.xlu0 %v4569, 127
          %v4594 = vpop.permute.xlu0 %4593
          %4595 = vrot.lane.b32.xlu0 %v4570, 127
          %v4596 = vpop.permute.xlu0 %4595
          %4597 = vrot.lane.b32.xlu0 %v4571, 127
          %v4598 = vpop.permute.xlu0 %4597
          %v4608 = vadd.f32 %v4551, %v4582
          %v4609 = vadd.f32 %v4552, %v4584
          %v4610 = vadd.f32 %v4553, %v4586
          %v4611 = vadd.f32 %v4554, %v4588
          %v4612 = vadd.f32 %v4555, %v4590
          %v4613 = vadd.f32 %v4556, %v4592
          %v4614 = vadd.f32 %v4557, %v4594
          %v4615 = vadd.f32 %v4558, %v4596
          %v4616 = vadd.f32 %v4559, %v4598
          %s4617 = sadd.s32 %s4530, 2
          %s4618 = sld [smem:[#allocation12 + %s4617]]
          %v4619 = vstv %s4618
          %v4620 = vmul.f32 %v4619, %v4532
          %v4621 = vmul.f32 %v4619, %v4533
          %v4622 = vmul.f32 %v4619, %v4534
          %v4623 = vmul.f32 %v4619, %v4535
          %v4624 = vmul.f32 %v4619, %v4536
          %v4625 = vmul.f32 %v4619, %v4537
          %v4626 = vmul.f32 %v4619, %v4538
          %v4627 = vmul.f32 %v4619, %v4539
          %v4628 = vmul.f32 %v4619, %v4540
          %4638 = vrot.lane.b32.xlu0 %v4620, 126
          %v4639 = vpop.permute.xlu0 %4638
          %4640 = vrot.lane.b32.xlu0 %v4621, 126
          %v4641 = vpop.permute.xlu0 %4640
          %4642 = vrot.lane.b32.xlu0 %v4622, 126
          %v4643 = vpop.permute.xlu0 %4642
          %4644 = vrot.lane.b32.xlu0 %v4623, 126
          %v4645 = vpop.permute.xlu0 %4644
          %4646 = vrot.lane.b32.xlu0 %v4624, 126
          %v4647 = vpop.permute.xlu0 %4646
          %4648 = vrot.lane.b32.xlu0 %v4625, 126
          %v4649 = vpop.permute.xlu0 %4648
          %4650 = vrot.lane.b32.xlu0 %v4626, 126
          %v4651 = vpop.permute.xlu0 %4650
          %4652 = vrot.lane.b32.xlu0 %v4627, 126
          %v4653 = vpop.permute.xlu0 %4652
          %4654 = vrot.lane.b32.xlu0 %v4628, 126
          %v4655 = vpop.permute.xlu0 %4654
          %v4665 = vadd.f32 %v4608, %v4639
          %v4666 = vadd.f32 %v4609, %v4641
          %v4667 = vadd.f32 %v4610, %v4643
          %v4668 = vadd.f32 %v4611, %v4645
          %v4669 = vadd.f32 %v4612, %v4647
          %v4670 = vadd.f32 %v4613, %v4649
          %v4671 = vadd.f32 %v4614, %v4651
          %v4672 = vadd.f32 %v4615, %v4653
          %v4673 = vadd.f32 %v4616, %v4655
          %s4674 = sadd.s32 %s4236, 2
          %s4675 = smul.u32 %s4674, 9
          %s4676 = sld [smem:[#allocation12 + %s4675]]
          %s4677 = scalar_lea.vmem [#allocation3], 144
          %v4678 = vld [vmem:[%s4677] sm:$0xff]
          %v4679 = vld [vmem:[%s4677 + $0x8] sm:$0xff]
          %v4680 = vld [vmem:[%s4677 + $0x10] sm:$0xff]
          %v4681 = vld [vmem:[%s4677 + $0x18] sm:$0xff]
          %v4682 = vld [vmem:[%s4677 + $0x20] sm:$0xff]
          %v4683 = vld [vmem:[%s4677 + $0x28] sm:$0xff]
          %v4684 = vld [vmem:[%s4677 + $0x30] sm:$0xff]
          %v4685 = vld [vmem:[%s4677 + $0x38] sm:$0xff]
          %v4686 = vld [vmem:[%s4677 + $0x40] sm:$0x3f]
          %v4687 = vstv %s4676
          %v4688 = vmul.f32 %v4687, %v4678
          %v4689 = vmul.f32 %v4687, %v4679
          %v4690 = vmul.f32 %v4687, %v4680
          %v4691 = vmul.f32 %v4687, %v4681
          %v4692 = vmul.f32 %v4687, %v4682
          %v4693 = vmul.f32 %v4687, %v4683
          %v4694 = vmul.f32 %v4687, %v4684
          %v4695 = vmul.f32 %v4687, %v4685
          %v4696 = vmul.f32 %v4687, %v4686
          %v4697 = vadd.f32 %v4665, %v4688
          %v4698 = vadd.f32 %v4666, %v4689
          %v4699 = vadd.f32 %v4667, %v4690
          %v4700 = vadd.f32 %v4668, %v4691
          %v4701 = vadd.f32 %v4669, %v4692
          %v4702 = vadd.f32 %v4670, %v4693
          %v4703 = vadd.f32 %v4671, %v4694
          %v4704 = vadd.f32 %v4672, %v4695
          %v4705 = vadd.f32 %v4673, %v4696
          %s4706 = sadd.s32 %s4675, 1
          %s4707 = sld [smem:[#allocation12 + %s4706]]
          %v4708 = vstv %s4707
          %v4709 = vmul.f32 %v4708, %v4678
          %v4710 = vmul.f32 %v4708, %v4679
          %v4711 = vmul.f32 %v4708, %v4680
          %v4712 = vmul.f32 %v4708, %v4681
          %v4713 = vmul.f32 %v4708, %v4682
          %v4714 = vmul.f32 %v4708, %v4683
          %v4715 = vmul.f32 %v4708, %v4684
          %v4716 = vmul.f32 %v4708, %v4685
          %v4717 = vmul.f32 %v4708, %v4686
          %4727 = vrot.lane.b32.xlu0 %v4709, 127
          %v4728 = vpop.permute.xlu0 %4727
          %4729 = vrot.lane.b32.xlu0 %v4710, 127
          %v4730 = vpop.permute.xlu0 %4729
          %4731 = vrot.lane.b32.xlu0 %v4711, 127
          %v4732 = vpop.permute.xlu0 %4731
          %4733 = vrot.lane.b32.xlu0 %v4712, 127
          %v4734 = vpop.permute.xlu0 %4733
          %4735 = vrot.lane.b32.xlu0 %v4713, 127
          %v4736 = vpop.permute.xlu0 %4735
          %4737 = vrot.lane.b32.xlu0 %v4714, 127
          %v4738 = vpop.permute.xlu0 %4737
          %4739 = vrot.lane.b32.xlu0 %v4715, 127
          %v4740 = vpop.permute.xlu0 %4739
          %4741 = vrot.lane.b32.xlu0 %v4716, 127
          %v4742 = vpop.permute.xlu0 %4741
          %4743 = vrot.lane.b32.xlu0 %v4717, 127
          %v4744 = vpop.permute.xlu0 %4743
          %v4754 = vadd.f32 %v4697, %v4728
          %v4755 = vadd.f32 %v4698, %v4730
          %v4756 = vadd.f32 %v4699, %v4732
          %v4757 = vadd.f32 %v4700, %v4734
          %v4758 = vadd.f32 %v4701, %v4736
          %v4759 = vadd.f32 %v4702, %v4738
          %v4760 = vadd.f32 %v4703, %v4740
          %v4761 = vadd.f32 %v4704, %v4742
          %v4762 = vadd.f32 %v4705, %v4744
          %s4763 = sadd.s32 %s4675, 2
          %s4764 = sld [smem:[#allocation12 + %s4763]]
          %v4765 = vstv %s4764
          %v4766 = vmul.f32 %v4765, %v4678
          %v4767 = vmul.f32 %v4765, %v4679
          %v4768 = vmul.f32 %v4765, %v4680
          %v4769 = vmul.f32 %v4765, %v4681
          %v4770 = vmul.f32 %v4765, %v4682
          %v4771 = vmul.f32 %v4765, %v4683
          %v4772 = vmul.f32 %v4765, %v4684
          %v4773 = vmul.f32 %v4765, %v4685
          %v4774 = vmul.f32 %v4765, %v4686
          %4784 = vrot.lane.b32.xlu0 %v4766, 126
          %v4785 = vpop.permute.xlu0 %4784
          %4786 = vrot.lane.b32.xlu0 %v4767, 126
          %v4787 = vpop.permute.xlu0 %4786
          %4788 = vrot.lane.b32.xlu0 %v4768, 126
          %v4789 = vpop.permute.xlu0 %4788
          %4790 = vrot.lane.b32.xlu0 %v4769, 126
          %v4791 = vpop.permute.xlu0 %4790
          %4792 = vrot.lane.b32.xlu0 %v4770, 126
          %v4793 = vpop.permute.xlu0 %4792
          %4794 = vrot.lane.b32.xlu0 %v4771, 126
          %v4795 = vpop.permute.xlu0 %4794
          %4796 = vrot.lane.b32.xlu0 %v4772, 126
          %v4797 = vpop.permute.xlu0 %4796
          %4798 = vrot.lane.b32.xlu0 %v4773, 126
          %v4799 = vpop.permute.xlu0 %4798
          %4800 = vrot.lane.b32.xlu0 %v4774, 126
          %v4801 = vpop.permute.xlu0 %4800
          %v4811 = vadd.f32 %v4754, %v4785
          %v4812 = vadd.f32 %v4755, %v4787
          %v4813 = vadd.f32 %v4756, %v4789
          %v4814 = vadd.f32 %v4757, %v4791
          %v4815 = vadd.f32 %v4758, %v4793
          %v4816 = vadd.f32 %v4759, %v4795
          %v4817 = vadd.f32 %v4760, %v4797
          %v4818 = vadd.f32 %v4761, %v4799
          %v4819 = vadd.f32 %v4762, %v4801
          %s4820 = smul.u32 %s4674, 3
          %s4821 = sadd.s32 %s4820, 1
          %s4822 = smul.u32 %s4821, 3
          %s4823 = sld [smem:[#allocation12 + %s4822]]
          %v4824 = vld [vmem:[%s4677 + $0x1] sm:$0xff]
          %v4825 = vld [vmem:[%s4677 + $0x9] sm:$0xff]
          %v4826 = vld [vmem:[%s4677 + $0x11] sm:$0xff]
          %v4827 = vld [vmem:[%s4677 + $0x19] sm:$0xff]
          %v4828 = vld [vmem:[%s4677 + $0x21] sm:$0xff]
          %v4829 = vld [vmem:[%s4677 + $0x29] sm:$0xff]
          %v4830 = vld [vmem:[%s4677 + $0x31] sm:$0xff]
          %v4831 = vld [vmem:[%s4677 + $0x39] sm:$0xff]
          %v4832 = vld [vmem:[%s4677 + $0x41] sm:$0x3f]
          %v4833 = vstv %s4823
          %v4834 = vmul.f32 %v4833, %v4824
          %v4835 = vmul.f32 %v4833, %v4825
          %v4836 = vmul.f32 %v4833, %v4826
          %v4837 = vmul.f32 %v4833, %v4827
          %v4838 = vmul.f32 %v4833, %v4828
          %v4839 = vmul.f32 %v4833, %v4829
          %v4840 = vmul.f32 %v4833, %v4830
          %v4841 = vmul.f32 %v4833, %v4831
          %v4842 = vmul.f32 %v4833, %v4832
          %v4843 = vadd.f32 %v4811, %v4834
          %v4844 = vadd.f32 %v4812, %v4835
          %v4845 = vadd.f32 %v4813, %v4836
          %v4846 = vadd.f32 %v4814, %v4837
          %v4847 = vadd.f32 %v4815, %v4838
          %v4848 = vadd.f32 %v4816, %v4839
          %v4849 = vadd.f32 %v4817, %v4840
          %v4850 = vadd.f32 %v4818, %v4841
          %v4851 = vadd.f32 %v4819, %v4842
          %s4852 = sadd.s32 %s4822, 1
          %s4853 = sld [smem:[#allocation12 + %s4852]]
          %v4854 = vstv %s4853
          %v4855 = vmul.f32 %v4854, %v4824
          %v4856 = vmul.f32 %v4854, %v4825
          %v4857 = vmul.f32 %v4854, %v4826
          %v4858 = vmul.f32 %v4854, %v4827
          %v4859 = vmul.f32 %v4854, %v4828
          %v4860 = vmul.f32 %v4854, %v4829
          %v4861 = vmul.f32 %v4854, %v4830
          %v4862 = vmul.f32 %v4854, %v4831
          %v4863 = vmul.f32 %v4854, %v4832
          %4873 = vrot.lane.b32.xlu0 %v4855, 127
          %v4874 = vpop.permute.xlu0 %4873
          %4875 = vrot.lane.b32.xlu0 %v4856, 127
          %v4876 = vpop.permute.xlu0 %4875
          %4877 = vrot.lane.b32.xlu0 %v4857, 127
          %v4878 = vpop.permute.xlu0 %4877
          %4879 = vrot.lane.b32.xlu0 %v4858, 127
          %v4880 = vpop.permute.xlu0 %4879
          %4881 = vrot.lane.b32.xlu0 %v4859, 127
          %v4882 = vpop.permute.xlu0 %4881
          %4883 = vrot.lane.b32.xlu0 %v4860, 127
          %v4884 = vpop.permute.xlu0 %4883
          %4885 = vrot.lane.b32.xlu0 %v4861, 127
          %v4886 = vpop.permute.xlu0 %4885
          %4887 = vrot.lane.b32.xlu0 %v4862, 127
          %v4888 = vpop.permute.xlu0 %4887
          %4889 = vrot.lane.b32.xlu0 %v4863, 127
          %v4890 = vpop.permute.xlu0 %4889
          %v4900 = vadd.f32 %v4843, %v4874
          %v4901 = vadd.f32 %v4844, %v4876
          %v4902 = vadd.f32 %v4845, %v4878
          %v4903 = vadd.f32 %v4846, %v4880
          %v4904 = vadd.f32 %v4847, %v4882
          %v4905 = vadd.f32 %v4848, %v4884
          %v4906 = vadd.f32 %v4849, %v4886
          %v4907 = vadd.f32 %v4850, %v4888
          %v4908 = vadd.f32 %v4851, %v4890
          %s4909 = sadd.s32 %s4822, 2
          %s4910 = sld [smem:[#allocation12 + %s4909]]
          %v4911 = vstv %s4910
          %v4912 = vmul.f32 %v4911, %v4824
          %v4913 = vmul.f32 %v4911, %v4825
          %v4914 = vmul.f32 %v4911, %v4826
          %v4915 = vmul.f32 %v4911, %v4827
          %v4916 = vmul.f32 %v4911, %v4828
          %v4917 = vmul.f32 %v4911, %v4829
          %v4918 = vmul.f32 %v4911, %v4830
          %v4919 = vmul.f32 %v4911, %v4831
          %v4920 = vmul.f32 %v4911, %v4832
          %4930 = vrot.lane.b32.xlu0 %v4912, 126
          %v4931 = vpop.permute.xlu0 %4930
          %4932 = vrot.lane.b32.xlu0 %v4913, 126
          %v4933 = vpop.permute.xlu0 %4932
          %4934 = vrot.lane.b32.xlu0 %v4914, 126
          %v4935 = vpop.permute.xlu0 %4934
          %4936 = vrot.lane.b32.xlu0 %v4915, 126
          %v4937 = vpop.permute.xlu0 %4936
          %4938 = vrot.lane.b32.xlu0 %v4916, 126
          %v4939 = vpop.permute.xlu0 %4938
          %4940 = vrot.lane.b32.xlu0 %v4917, 126
          %v4941 = vpop.permute.xlu0 %4940
          %4942 = vrot.lane.b32.xlu0 %v4918, 126
          %v4943 = vpop.permute.xlu0 %4942
          %4944 = vrot.lane.b32.xlu0 %v4919, 126
          %v4945 = vpop.permute.xlu0 %4944
          %4946 = vrot.lane.b32.xlu0 %v4920, 126
          %v4947 = vpop.permute.xlu0 %4946
          %v4957 = vadd.f32 %v4900, %v4931
          %v4958 = vadd.f32 %v4901, %v4933
          %v4959 = vadd.f32 %v4902, %v4935
          %v4960 = vadd.f32 %v4903, %v4937
          %v4961 = vadd.f32 %v4904, %v4939
          %v4962 = vadd.f32 %v4905, %v4941
          %v4963 = vadd.f32 %v4906, %v4943
          %v4964 = vadd.f32 %v4907, %v4945
          %v4965 = vadd.f32 %v4908, %v4947
          %s4966 = sadd.s32 %s4820, 2
          %s4967 = smul.u32 %s4966, 3
          %s4968 = sld [smem:[#allocation12 + %s4967]]
          %v4969 = vld [vmem:[%s4677 + $0x2] sm:$0xff]
          %v4970 = vld [vmem:[%s4677 + $0xa] sm:$0xff]
          %v4971 = vld [vmem:[%s4677 + $0x12] sm:$0xff]
          %v4972 = vld [vmem:[%s4677 + $0x1a] sm:$0xff]
          %v4973 = vld [vmem:[%s4677 + $0x22] sm:$0xff]
          %v4974 = vld [vmem:[%s4677 + $0x2a] sm:$0xff]
          %v4975 = vld [vmem:[%s4677 + $0x32] sm:$0xff]
          %v4976 = vld [vmem:[%s4677 + $0x3a] sm:$0xff]
          %v4977 = vld [vmem:[%s4677 + $0x42] sm:$0x3f]
          %v4978 = vstv %s4968
          %v4979 = vmul.f32 %v4978, %v4969
          %v4980 = vmul.f32 %v4978, %v4970
          %v4981 = vmul.f32 %v4978, %v4971
          %v4982 = vmul.f32 %v4978, %v4972
          %v4983 = vmul.f32 %v4978, %v4973
          %v4984 = vmul.f32 %v4978, %v4974
          %v4985 = vmul.f32 %v4978, %v4975
          %v4986 = vmul.f32 %v4978, %v4976
          %v4987 = vmul.f32 %v4978, %v4977
          %v4988 = vadd.f32 %v4957, %v4979
          %v4989 = vadd.f32 %v4958, %v4980
          %v4990 = vadd.f32 %v4959, %v4981
          %v4991 = vadd.f32 %v4960, %v4982
          %v4992 = vadd.f32 %v4961, %v4983
          %v4993 = vadd.f32 %v4962, %v4984
          %v4994 = vadd.f32 %v4963, %v4985
          %v4995 = vadd.f32 %v4964, %v4986
          %v4996 = vadd.f32 %v4965, %v4987
          %s4997 = sadd.s32 %s4967, 1
          %s4998 = sld [smem:[#allocation12 + %s4997]]
          %v4999 = vstv %s4998
          %v5000 = vmul.f32 %v4999, %v4969
          %v5001 = vmul.f32 %v4999, %v4970
          %v5002 = vmul.f32 %v4999, %v4971
          %v5003 = vmul.f32 %v4999, %v4972
          %v5004 = vmul.f32 %v4999, %v4973
          %v5005 = vmul.f32 %v4999, %v4974
          %v5006 = vmul.f32 %v4999, %v4975
          %v5007 = vmul.f32 %v4999, %v4976
          %v5008 = vmul.f32 %v4999, %v4977
          %5018 = vrot.lane.b32.xlu0 %v5000, 127
          %v5019 = vpop.permute.xlu0 %5018
          %5020 = vrot.lane.b32.xlu0 %v5001, 127
          %v5021 = vpop.permute.xlu0 %5020
          %5022 = vrot.lane.b32.xlu0 %v5002, 127
          %v5023 = vpop.permute.xlu0 %5022
          %5024 = vrot.lane.b32.xlu0 %v5003, 127
          %v5025 = vpop.permute.xlu0 %5024
          %5026 = vrot.lane.b32.xlu0 %v5004, 127
          %v5027 = vpop.permute.xlu0 %5026
          %5028 = vrot.lane.b32.xlu0 %v5005, 127
          %v5029 = vpop.permute.xlu0 %5028
          %5030 = vrot.lane.b32.xlu0 %v5006, 127
          %v5031 = vpop.permute.xlu0 %5030
          %5032 = vrot.lane.b32.xlu0 %v5007, 127
          %v5033 = vpop.permute.xlu0 %5032
          %5034 = vrot.lane.b32.xlu0 %v5008, 127
          %v5035 = vpop.permute.xlu0 %5034
          %v5045 = vadd.f32 %v4988, %v5019
          %v5046 = vadd.f32 %v4989, %v5021
          %v5047 = vadd.f32 %v4990, %v5023
          %v5048 = vadd.f32 %v4991, %v5025
          %v5049 = vadd.f32 %v4992, %v5027
          %v5050 = vadd.f32 %v4993, %v5029
          %v5051 = vadd.f32 %v4994, %v5031
          %v5052 = vadd.f32 %v4995, %v5033
          %v5053 = vadd.f32 %v4996, %v5035
          %s5054 = sadd.s32 %s4967, 2
          %s5055 = sld [smem:[#allocation12 + %s5054]]
          %v5056 = vstv %s5055
          %v5057 = vmul.f32 %v5056, %v4969
          %v5058 = vmul.f32 %v5056, %v4970
          %v5059 = vmul.f32 %v5056, %v4971
          %v5060 = vmul.f32 %v5056, %v4972
          %v5061 = vmul.f32 %v5056, %v4973
          %v5062 = vmul.f32 %v5056, %v4974
          %v5063 = vmul.f32 %v5056, %v4975
          %v5064 = vmul.f32 %v5056, %v4976
          %v5065 = vmul.f32 %v5056, %v4977
          %5075 = vrot.lane.b32.xlu0 %v5057, 126
          %v5076 = vpop.permute.xlu0 %5075
          %5077 = vrot.lane.b32.xlu0 %v5058, 126
          %v5078 = vpop.permute.xlu0 %5077
          %5079 = vrot.lane.b32.xlu0 %v5059, 126
          %v5080 = vpop.permute.xlu0 %5079
          %5081 = vrot.lane.b32.xlu0 %v5060, 126
          %v5082 = vpop.permute.xlu0 %5081
          %5083 = vrot.lane.b32.xlu0 %v5061, 126
          %v5084 = vpop.permute.xlu0 %5083
          %5085 = vrot.lane.b32.xlu0 %v5062, 126
          %v5086 = vpop.permute.xlu0 %5085
          %5087 = vrot.lane.b32.xlu0 %v5063, 126
          %v5088 = vpop.permute.xlu0 %5087
          %5089 = vrot.lane.b32.xlu0 %v5064, 126
          %v5090 = vpop.permute.xlu0 %5089
          %5091 = vrot.lane.b32.xlu0 %v5065, 126
          %v5092 = vpop.permute.xlu0 %5091
          %v5102 = vadd.f32 %v5045, %v5076
          %v5103 = vadd.f32 %v5046, %v5078
          %v5104 = vadd.f32 %v5047, %v5080
          %v5105 = vadd.f32 %v5048, %v5082
          %v5106 = vadd.f32 %v5049, %v5084
          %v5107 = vadd.f32 %v5050, %v5086
          %v5108 = vadd.f32 %v5051, %v5088
          %v5109 = vadd.f32 %v5052, %v5090
          %v5110 = vadd.f32 %v5053, %v5092
          %s5111 = sadd.s32 %s4236, 3
          %s5112 = smul.u32 %s5111, 9
          %s5113 = sld [smem:[#allocation12 + %s5112]]
          %s5114 = scalar_lea.vmem [#allocation3], 216
          %v5115 = vld [vmem:[%s5114] sm:$0xff]
          %v5116 = vld [vmem:[%s5114 + $0x8] sm:$0xff]
          %v5117 = vld [vmem:[%s5114 + $0x10] sm:$0xff]
          %v5118 = vld [vmem:[%s5114 + $0x18] sm:$0xff]
          %v5119 = vld [vmem:[%s5114 + $0x20] sm:$0xff]
          %v5120 = vld [vmem:[%s5114 + $0x28] sm:$0xff]
          %v5121 = vld [vmem:[%s5114 + $0x30] sm:$0xff]
          %v5122 = vld [vmem:[%s5114 + $0x38] sm:$0xff]
          %v5123 = vld [vmem:[%s5114 + $0x40] sm:$0x3f]
          %v5124 = vstv %s5113
          %v5125 = vmul.f32 %v5124, %v5115
          %v5126 = vmul.f32 %v5124, %v5116
          %v5127 = vmul.f32 %v5124, %v5117
          %v5128 = vmul.f32 %v5124, %v5118
          %v5129 = vmul.f32 %v5124, %v5119
          %v5130 = vmul.f32 %v5124, %v5120
          %v5131 = vmul.f32 %v5124, %v5121
          %v5132 = vmul.f32 %v5124, %v5122
          %v5133 = vmul.f32 %v5124, %v5123
          %v5134 = vadd.f32 %v5102, %v5125
          %v5135 = vadd.f32 %v5103, %v5126
          %v5136 = vadd.f32 %v5104, %v5127
          %v5137 = vadd.f32 %v5105, %v5128
          %v5138 = vadd.f32 %v5106, %v5129
          %v5139 = vadd.f32 %v5107, %v5130
          %v5140 = vadd.f32 %v5108, %v5131
          %v5141 = vadd.f32 %v5109, %v5132
          %v5142 = vadd.f32 %v5110, %v5133
          %s5143 = sadd.s32 %s5112, 1
          %s5144 = sld [smem:[#allocation12 + %s5143]]
          %v5145 = vstv %s5144
          %v5146 = vmul.f32 %v5145, %v5115
          %v5147 = vmul.f32 %v5145, %v5116
          %v5148 = vmul.f32 %v5145, %v5117
          %v5149 = vmul.f32 %v5145, %v5118
          %v5150 = vmul.f32 %v5145, %v5119
          %v5151 = vmul.f32 %v5145, %v5120
          %v5152 = vmul.f32 %v5145, %v5121
          %v5153 = vmul.f32 %v5145, %v5122
          %v5154 = vmul.f32 %v5145, %v5123
          %5164 = vrot.lane.b32.xlu0 %v5146, 127
          %v5165 = vpop.permute.xlu0 %5164
          %5166 = vrot.lane.b32.xlu0 %v5147, 127
          %v5167 = vpop.permute.xlu0 %5166
          %5168 = vrot.lane.b32.xlu0 %v5148, 127
          %v5169 = vpop.permute.xlu0 %5168
          %5170 = vrot.lane.b32.xlu0 %v5149, 127
          %v5171 = vpop.permute.xlu0 %5170
          %5172 = vrot.lane.b32.xlu0 %v5150, 127
          %v5173 = vpop.permute.xlu0 %5172
          %5174 = vrot.lane.b32.xlu0 %v5151, 127
          %v5175 = vpop.permute.xlu0 %5174
          %5176 = vrot.lane.b32.xlu0 %v5152, 127
          %v5177 = vpop.permute.xlu0 %5176
          %5178 = vrot.lane.b32.xlu0 %v5153, 127
          %v5179 = vpop.permute.xlu0 %5178
          %5180 = vrot.lane.b32.xlu0 %v5154, 127
          %v5181 = vpop.permute.xlu0 %5180
          %v5191 = vadd.f32 %v5134, %v5165
          %v5192 = vadd.f32 %v5135, %v5167
          %v5193 = vadd.f32 %v5136, %v5169
          %v5194 = vadd.f32 %v5137, %v5171
          %v5195 = vadd.f32 %v5138, %v5173
          %v5196 = vadd.f32 %v5139, %v5175
          %v5197 = vadd.f32 %v5140, %v5177
          %v5198 = vadd.f32 %v5141, %v5179
          %v5199 = vadd.f32 %v5142, %v5181
          %s5200 = sadd.s32 %s5112, 2
          %s5201 = sld [smem:[#allocation12 + %s5200]]
          %v5202 = vstv %s5201
          %v5203 = vmul.f32 %v5202, %v5115
          %v5204 = vmul.f32 %v5202, %v5116
          %v5205 = vmul.f32 %v5202, %v5117
          %v5206 = vmul.f32 %v5202, %v5118
          %v5207 = vmul.f32 %v5202, %v5119
          %v5208 = vmul.f32 %v5202, %v5120
          %v5209 = vmul.f32 %v5202, %v5121
          %v5210 = vmul.f32 %v5202, %v5122
          %v5211 = vmul.f32 %v5202, %v5123
          %5221 = vrot.lane.b32.xlu0 %v5203, 126
          %v5222 = vpop.permute.xlu0 %5221
          %5223 = vrot.lane.b32.xlu0 %v5204, 126
          %v5224 = vpop.permute.xlu0 %5223
          %5225 = vrot.lane.b32.xlu0 %v5205, 126
          %v5226 = vpop.permute.xlu0 %5225
          %5227 = vrot.lane.b32.xlu0 %v5206, 126
          %v5228 = vpop.permute.xlu0 %5227
          %5229 = vrot.lane.b32.xlu0 %v5207, 126
          %v5230 = vpop.permute.xlu0 %5229
          %5231 = vrot.lane.b32.xlu0 %v5208, 126
          %v5232 = vpop.permute.xlu0 %5231
          %5233 = vrot.lane.b32.xlu0 %v5209, 126
          %v5234 = vpop.permute.xlu0 %5233
          %5235 = vrot.lane.b32.xlu0 %v5210, 126
          %v5236 = vpop.permute.xlu0 %5235
          %5237 = vrot.lane.b32.xlu0 %v5211, 126
          %v5238 = vpop.permute.xlu0 %5237
          %v5248 = vadd.f32 %v5191, %v5222
          %v5249 = vadd.f32 %v5192, %v5224
          %v5250 = vadd.f32 %v5193, %v5226
          %v5251 = vadd.f32 %v5194, %v5228
          %v5252 = vadd.f32 %v5195, %v5230
          %v5253 = vadd.f32 %v5196, %v5232
          %v5254 = vadd.f32 %v5197, %v5234
          %v5255 = vadd.f32 %v5198, %v5236
          %v5256 = vadd.f32 %v5199, %v5238
          %s5257 = smul.u32 %s5111, 3
          %s5258 = sadd.s32 %s5257, 1
          %s5259 = smul.u32 %s5258, 3
          %s5260 = sld [smem:[#allocation12 + %s5259]]
          %v5261 = vld [vmem:[%s5114 + $0x1] sm:$0xff]
          %v5262 = vld [vmem:[%s5114 + $0x9] sm:$0xff]
          %v5263 = vld [vmem:[%s5114 + $0x11] sm:$0xff]
          %v5264 = vld [vmem:[%s5114 + $0x19] sm:$0xff]
          %v5265 = vld [vmem:[%s5114 + $0x21] sm:$0xff]
          %v5266 = vld [vmem:[%s5114 + $0x29] sm:$0xff]
          %v5267 = vld [vmem:[%s5114 + $0x31] sm:$0xff]
          %v5268 = vld [vmem:[%s5114 + $0x39] sm:$0xff]
          %v5269 = vld [vmem:[%s5114 + $0x41] sm:$0x3f]
          %v5270 = vstv %s5260
          %v5271 = vmul.f32 %v5270, %v5261
          %v5272 = vmul.f32 %v5270, %v5262
          %v5273 = vmul.f32 %v5270, %v5263
          %v5274 = vmul.f32 %v5270, %v5264
          %v5275 = vmul.f32 %v5270, %v5265
          %v5276 = vmul.f32 %v5270, %v5266
          %v5277 = vmul.f32 %v5270, %v5267
          %v5278 = vmul.f32 %v5270, %v5268
          %v5279 = vmul.f32 %v5270, %v5269
          %v5280 = vadd.f32 %v5248, %v5271
          %v5281 = vadd.f32 %v5249, %v5272
          %v5282 = vadd.f32 %v5250, %v5273
          %v5283 = vadd.f32 %v5251, %v5274
          %v5284 = vadd.f32 %v5252, %v5275
          %v5285 = vadd.f32 %v5253, %v5276
          %v5286 = vadd.f32 %v5254, %v5277
          %v5287 = vadd.f32 %v5255, %v5278
          %v5288 = vadd.f32 %v5256, %v5279
          %s5289 = sadd.s32 %s5259, 1
          %s5290 = sld [smem:[#allocation12 + %s5289]]
          %v5291 = vstv %s5290
          %v5292 = vmul.f32 %v5291, %v5261
          %v5293 = vmul.f32 %v5291, %v5262
          %v5294 = vmul.f32 %v5291, %v5263
          %v5295 = vmul.f32 %v5291, %v5264
          %v5296 = vmul.f32 %v5291, %v5265
          %v5297 = vmul.f32 %v5291, %v5266
          %v5298 = vmul.f32 %v5291, %v5267
          %v5299 = vmul.f32 %v5291, %v5268
          %v5300 = vmul.f32 %v5291, %v5269
          %5310 = vrot.lane.b32.xlu0 %v5292, 127
          %v5311 = vpop.permute.xlu0 %5310
          %5312 = vrot.lane.b32.xlu0 %v5293, 127
          %v5313 = vpop.permute.xlu0 %5312
          %5314 = vrot.lane.b32.xlu0 %v5294, 127
          %v5315 = vpop.permute.xlu0 %5314
          %5316 = vrot.lane.b32.xlu0 %v5295, 127
          %v5317 = vpop.permute.xlu0 %5316
          %5318 = vrot.lane.b32.xlu0 %v5296, 127
          %v5319 = vpop.permute.xlu0 %5318
          %5320 = vrot.lane.b32.xlu0 %v5297, 127
          %v5321 = vpop.permute.xlu0 %5320
          %5322 = vrot.lane.b32.xlu0 %v5298, 127
          %v5323 = vpop.permute.xlu0 %5322
          %5324 = vrot.lane.b32.xlu0 %v5299, 127
          %v5325 = vpop.permute.xlu0 %5324
          %5326 = vrot.lane.b32.xlu0 %v5300, 127
          %v5327 = vpop.permute.xlu0 %5326
          %v5337 = vadd.f32 %v5280, %v5311
          %v5338 = vadd.f32 %v5281, %v5313
          %v5339 = vadd.f32 %v5282, %v5315
          %v5340 = vadd.f32 %v5283, %v5317
          %v5341 = vadd.f32 %v5284, %v5319
          %v5342 = vadd.f32 %v5285, %v5321
          %v5343 = vadd.f32 %v5286, %v5323
          %v5344 = vadd.f32 %v5287, %v5325
          %v5345 = vadd.f32 %v5288, %v5327
          %s5346 = sadd.s32 %s5259, 2
          %s5347 = sld [smem:[#allocation12 + %s5346]]
          %v5348 = vstv %s5347
          %v5349 = vmul.f32 %v5348, %v5261
          %v5350 = vmul.f32 %v5348, %v5262
          %v5351 = vmul.f32 %v5348, %v5263
          %v5352 = vmul.f32 %v5348, %v5264
          %v5353 = vmul.f32 %v5348, %v5265
          %v5354 = vmul.f32 %v5348, %v5266
          %v5355 = vmul.f32 %v5348, %v5267
          %v5356 = vmul.f32 %v5348, %v5268
          %v5357 = vmul.f32 %v5348, %v5269
          %5367 = vrot.lane.b32.xlu0 %v5349, 126
          %v5368 = vpop.permute.xlu0 %5367
          %5369 = vrot.lane.b32.xlu0 %v5350, 126
          %v5370 = vpop.permute.xlu0 %5369
          %5371 = vrot.lane.b32.xlu0 %v5351, 126
          %v5372 = vpop.permute.xlu0 %5371
          %5373 = vrot.lane.b32.xlu0 %v5352, 126
          %v5374 = vpop.permute.xlu0 %5373
          %5375 = vrot.lane.b32.xlu0 %v5353, 126
          %v5376 = vpop.permute.xlu0 %5375
          %5377 = vrot.lane.b32.xlu0 %v5354, 126
          %v5378 = vpop.permute.xlu0 %5377
          %5379 = vrot.lane.b32.xlu0 %v5355, 126
          %v5380 = vpop.permute.xlu0 %5379
          %5381 = vrot.lane.b32.xlu0 %v5356, 126
          %v5382 = vpop.permute.xlu0 %5381
          %5383 = vrot.lane.b32.xlu0 %v5357, 126
          %v5384 = vpop.permute.xlu0 %5383
          %v5394 = vadd.f32 %v5337, %v5368
          %v5395 = vadd.f32 %v5338, %v5370
          %v5396 = vadd.f32 %v5339, %v5372
          %v5397 = vadd.f32 %v5340, %v5374
          %v5398 = vadd.f32 %v5341, %v5376
          %v5399 = vadd.f32 %v5342, %v5378
          %v5400 = vadd.f32 %v5343, %v5380
          %v5401 = vadd.f32 %v5344, %v5382
          %v5402 = vadd.f32 %v5345, %v5384
          %s5403 = sadd.s32 %s5257, 2
          %s5404 = smul.u32 %s5403, 3
          %s5405 = sld [smem:[#allocation12 + %s5404]]
          %v5406 = vld [vmem:[%s5114 + $0x2] sm:$0xff]
          %v5407 = vld [vmem:[%s5114 + $0xa] sm:$0xff]
          %v5408 = vld [vmem:[%s5114 + $0x12] sm:$0xff]
          %v5409 = vld [vmem:[%s5114 + $0x1a] sm:$0xff]
          %v5410 = vld [vmem:[%s5114 + $0x22] sm:$0xff]
          %v5411 = vld [vmem:[%s5114 + $0x2a] sm:$0xff]
          %v5412 = vld [vmem:[%s5114 + $0x32] sm:$0xff]
          %v5413 = vld [vmem:[%s5114 + $0x3a] sm:$0xff]
          %v5414 = vld [vmem:[%s5114 + $0x42] sm:$0x3f]
          %v5415 = vstv %s5405
          %v5416 = vmul.f32 %v5415, %v5406
          %v5417 = vmul.f32 %v5415, %v5407
          %v5418 = vmul.f32 %v5415, %v5408
          %v5419 = vmul.f32 %v5415, %v5409
          %v5420 = vmul.f32 %v5415, %v5410
          %v5421 = vmul.f32 %v5415, %v5411
          %v5422 = vmul.f32 %v5415, %v5412
          %v5423 = vmul.f32 %v5415, %v5413
          %v5424 = vmul.f32 %v5415, %v5414
          %v5425 = vadd.f32 %v5394, %v5416
          %v5426 = vadd.f32 %v5395, %v5417
          %v5427 = vadd.f32 %v5396, %v5418
          %v5428 = vadd.f32 %v5397, %v5419
          %v5429 = vadd.f32 %v5398, %v5420
          %v5430 = vadd.f32 %v5399, %v5421
          %v5431 = vadd.f32 %v5400, %v5422
          %v5432 = vadd.f32 %v5401, %v5423
          %v5433 = vadd.f32 %v5402, %v5424
          %s5434 = sadd.s32 %s5404, 1
          %s5435 = sld [smem:[#allocation12 + %s5434]]
          %v5436 = vstv %s5435
          %v5437 = vmul.f32 %v5436, %v5406
          %v5438 = vmul.f32 %v5436, %v5407
          %v5439 = vmul.f32 %v5436, %v5408
          %v5440 = vmul.f32 %v5436, %v5409
          %v5441 = vmul.f32 %v5436, %v5410
          %v5442 = vmul.f32 %v5436, %v5411
          %v5443 = vmul.f32 %v5436, %v5412
          %v5444 = vmul.f32 %v5436, %v5413
          %v5445 = vmul.f32 %v5436, %v5414
          %5455 = vrot.lane.b32.xlu0 %v5437, 127
          %v5456 = vpop.permute.xlu0 %5455
          %5457 = vrot.lane.b32.xlu0 %v5438, 127
          %v5458 = vpop.permute.xlu0 %5457
          %5459 = vrot.lane.b32.xlu0 %v5439, 127
          %v5460 = vpop.permute.xlu0 %5459
          %5461 = vrot.lane.b32.xlu0 %v5440, 127
          %v5462 = vpop.permute.xlu0 %5461
          %5463 = vrot.lane.b32.xlu0 %v5441, 127
          %v5464 = vpop.permute.xlu0 %5463
          %5465 = vrot.lane.b32.xlu0 %v5442, 127
          %v5466 = vpop.permute.xlu0 %5465
          %5467 = vrot.lane.b32.xlu0 %v5443, 127
          %v5468 = vpop.permute.xlu0 %5467
          %5469 = vrot.lane.b32.xlu0 %v5444, 127
          %v5470 = vpop.permute.xlu0 %5469
          %5471 = vrot.lane.b32.xlu0 %v5445, 127
          %v5472 = vpop.permute.xlu0 %5471
          %v5482 = vadd.f32 %v5425, %v5456
          %v5483 = vadd.f32 %v5426, %v5458
          %v5484 = vadd.f32 %v5427, %v5460
          %v5485 = vadd.f32 %v5428, %v5462
          %v5486 = vadd.f32 %v5429, %v5464
          %v5487 = vadd.f32 %v5430, %v5466
          %v5488 = vadd.f32 %v5431, %v5468
          %v5489 = vadd.f32 %v5432, %v5470
          %v5490 = vadd.f32 %v5433, %v5472
          %s5491 = sadd.s32 %s5404, 2
          %s5492 = sld [smem:[#allocation12 + %s5491]]
          %v5493 = vstv %s5492
          %v5494 = vmul.f32 %v5493, %v5406
          %v5495 = vmul.f32 %v5493, %v5407
          %v5496 = vmul.f32 %v5493, %v5408
          %v5497 = vmul.f32 %v5493, %v5409
          %v5498 = vmul.f32 %v5493, %v5410
          %v5499 = vmul.f32 %v5493, %v5411
          %v5500 = vmul.f32 %v5493, %v5412
          %v5501 = vmul.f32 %v5493, %v5413
          %v5502 = vmul.f32 %v5493, %v5414
          %5512 = vrot.lane.b32.xlu0 %v5494, 126
          %v5513 = vpop.permute.xlu0 %5512
          %5514 = vrot.lane.b32.xlu0 %v5495, 126
          %v5515 = vpop.permute.xlu0 %5514
          %5516 = vrot.lane.b32.xlu0 %v5496, 126
          %v5517 = vpop.permute.xlu0 %5516
          %5518 = vrot.lane.b32.xlu0 %v5497, 126
          %v5519 = vpop.permute.xlu0 %5518
          %5520 = vrot.lane.b32.xlu0 %v5498, 126
          %v5521 = vpop.permute.xlu0 %5520
          %5522 = vrot.lane.b32.xlu0 %v5499, 126
          %v5523 = vpop.permute.xlu0 %5522
          %5524 = vrot.lane.b32.xlu0 %v5500, 126
          %v5525 = vpop.permute.xlu0 %5524
          %5526 = vrot.lane.b32.xlu0 %v5501, 126
          %v5527 = vpop.permute.xlu0 %5526
          %5528 = vrot.lane.b32.xlu0 %v5502, 126
          %v5529 = vpop.permute.xlu0 %5528
          %v5539 = vadd.f32 %v5482, %v5513
          %v5540 = vadd.f32 %v5483, %v5515
          %v5541 = vadd.f32 %v5484, %v5517
          %v5542 = vadd.f32 %v5485, %v5519
          %v5543 = vadd.f32 %v5486, %v5521
          %v5544 = vadd.f32 %v5487, %v5523
          %v5545 = vadd.f32 %v5488, %v5525
          %v5546 = vadd.f32 %v5489, %v5527
          %v5547 = vadd.f32 %v5490, %v5529
          %s5548 = sadd.s32 %s4236, 4
          %s5549 = smul.u32 %s5548, 9
          %s5550 = sld [smem:[#allocation12 + %s5549]]
          %s5551 = scalar_lea.vmem [#allocation3], 288
          %v5552 = vld [vmem:[%s5551] sm:$0xff]
          %v5553 = vld [vmem:[%s5551 + $0x8] sm:$0xff]
          %v5554 = vld [vmem:[%s5551 + $0x10] sm:$0xff]
          %v5555 = vld [vmem:[%s5551 + $0x18] sm:$0xff]
          %v5556 = vld [vmem:[%s5551 + $0x20] sm:$0xff]
          %v5557 = vld [vmem:[%s5551 + $0x28] sm:$0xff]
          %v5558 = vld [vmem:[%s5551 + $0x30] sm:$0xff]
          %v5559 = vld [vmem:[%s5551 + $0x38] sm:$0xff]
          %v5560 = vld [vmem:[%s5551 + $0x40] sm:$0x3f]
          %v5561 = vstv %s5550
          %v5562 = vmul.f32 %v5561, %v5552
          %v5563 = vmul.f32 %v5561, %v5553
          %v5564 = vmul.f32 %v5561, %v5554
          %v5565 = vmul.f32 %v5561, %v5555
          %v5566 = vmul.f32 %v5561, %v5556
          %v5567 = vmul.f32 %v5561, %v5557
          %v5568 = vmul.f32 %v5561, %v5558
          %v5569 = vmul.f32 %v5561, %v5559
          %v5570 = vmul.f32 %v5561, %v5560
          %v5571 = vadd.f32 %v5539, %v5562
          %v5572 = vadd.f32 %v5540, %v5563
          %v5573 = vadd.f32 %v5541, %v5564
          %v5574 = vadd.f32 %v5542, %v5565
          %v5575 = vadd.f32 %v5543, %v5566
          %v5576 = vadd.f32 %v5544, %v5567
          %v5577 = vadd.f32 %v5545, %v5568
          %v5578 = vadd.f32 %v5546, %v5569
          %v5579 = vadd.f32 %v5547, %v5570
          %s5580 = sadd.s32 %s5549, 1
          %s5581 = sld [smem:[#allocation12 + %s5580]]
          %v5582 = vstv %s5581
          %v5583 = vmul.f32 %v5582, %v5552
          %v5584 = vmul.f32 %v5582, %v5553
          %v5585 = vmul.f32 %v5582, %v5554
          %v5586 = vmul.f32 %v5582, %v5555
          %v5587 = vmul.f32 %v5582, %v5556
          %v5588 = vmul.f32 %v5582, %v5557
          %v5589 = vmul.f32 %v5582, %v5558
          %v5590 = vmul.f32 %v5582, %v5559
          %v5591 = vmul.f32 %v5582, %v5560
          %5601 = vrot.lane.b32.xlu0 %v5583, 127
          %v5602 = vpop.permute.xlu0 %5601
          %5603 = vrot.lane.b32.xlu0 %v5584, 127
          %v5604 = vpop.permute.xlu0 %5603
          %5605 = vrot.lane.b32.xlu0 %v5585, 127
          %v5606 = vpop.permute.xlu0 %5605
          %5607 = vrot.lane.b32.xlu0 %v5586, 127
          %v5608 = vpop.permute.xlu0 %5607
          %5609 = vrot.lane.b32.xlu0 %v5587, 127
          %v5610 = vpop.permute.xlu0 %5609
          %5611 = vrot.lane.b32.xlu0 %v5588, 127
          %v5612 = vpop.permute.xlu0 %5611
          %5613 = vrot.lane.b32.xlu0 %v5589, 127
          %v5614 = vpop.permute.xlu0 %5613
          %5615 = vrot.lane.b32.xlu0 %v5590, 127
          %v5616 = vpop.permute.xlu0 %5615
          %5617 = vrot.lane.b32.xlu0 %v5591, 127
          %v5618 = vpop.permute.xlu0 %5617
          %v5628 = vadd.f32 %v5571, %v5602
          %v5629 = vadd.f32 %v5572, %v5604
          %v5630 = vadd.f32 %v5573, %v5606
          %v5631 = vadd.f32 %v5574, %v5608
          %v5632 = vadd.f32 %v5575, %v5610
          %v5633 = vadd.f32 %v5576, %v5612
          %v5634 = vadd.f32 %v5577, %v5614
          %v5635 = vadd.f32 %v5578, %v5616
          %v5636 = vadd.f32 %v5579, %v5618
          %s5637 = sadd.s32 %s5549, 2
          %s5638 = sld [smem:[#allocation12 + %s5637]]
          %v5639 = vstv %s5638
          %v5640 = vmul.f32 %v5639, %v5552
          %v5641 = vmul.f32 %v5639, %v5553
          %v5642 = vmul.f32 %v5639, %v5554
          %v5643 = vmul.f32 %v5639, %v5555
          %v5644 = vmul.f32 %v5639, %v5556
          %v5645 = vmul.f32 %v5639, %v5557
          %v5646 = vmul.f32 %v5639, %v5558
          %v5647 = vmul.f32 %v5639, %v5559
          %v5648 = vmul.f32 %v5639, %v5560
          %5658 = vrot.lane.b32.xlu0 %v5640, 126
          %v5659 = vpop.permute.xlu0 %5658
          %5660 = vrot.lane.b32.xlu0 %v5641, 126
          %v5661 = vpop.permute.xlu0 %5660
          %5662 = vrot.lane.b32.xlu0 %v5642, 126
          %v5663 = vpop.permute.xlu0 %5662
          %5664 = vrot.lane.b32.xlu0 %v5643, 126
          %v5665 = vpop.permute.xlu0 %5664
          %5666 = vrot.lane.b32.xlu0 %v5644, 126
          %v5667 = vpop.permute.xlu0 %5666
          %5668 = vrot.lane.b32.xlu0 %v5645, 126
          %v5669 = vpop.permute.xlu0 %5668
          %5670 = vrot.lane.b32.xlu0 %v5646, 126
          %v5671 = vpop.permute.xlu0 %5670
          %5672 = vrot.lane.b32.xlu0 %v5647, 126
          %v5673 = vpop.permute.xlu0 %5672
          %5674 = vrot.lane.b32.xlu0 %v5648, 126
          %v5675 = vpop.permute.xlu0 %5674
          %v5685 = vadd.f32 %v5628, %v5659
          %v5686 = vadd.f32 %v5629, %v5661
          %v5687 = vadd.f32 %v5630, %v5663
          %v5688 = vadd.f32 %v5631, %v5665
          %v5689 = vadd.f32 %v5632, %v5667
          %v5690 = vadd.f32 %v5633, %v5669
          %v5691 = vadd.f32 %v5634, %v5671
          %v5692 = vadd.f32 %v5635, %v5673
          %v5693 = vadd.f32 %v5636, %v5675
          %s5694 = smul.u32 %s5548, 3
          %s5695 = sadd.s32 %s5694, 1
          %s5696 = smul.u32 %s5695, 3
          %s5697 = sld [smem:[#allocation12 + %s5696]]
          %v5698 = vld [vmem:[%s5551 + $0x1] sm:$0xff]
          %v5699 = vld [vmem:[%s5551 + $0x9] sm:$0xff]
          %v5700 = vld [vmem:[%s5551 + $0x11] sm:$0xff]
          %v5701 = vld [vmem:[%s5551 + $0x19] sm:$0xff]
          %v5702 = vld [vmem:[%s5551 + $0x21] sm:$0xff]
          %v5703 = vld [vmem:[%s5551 + $0x29] sm:$0xff]
          %v5704 = vld [vmem:[%s5551 + $0x31] sm:$0xff]
          %v5705 = vld [vmem:[%s5551 + $0x39] sm:$0xff]
          %v5706 = vld [vmem:[%s5551 + $0x41] sm:$0x3f]
          %v5707 = vstv %s5697
          %v5708 = vmul.f32 %v5707, %v5698
          %v5709 = vmul.f32 %v5707, %v5699
          %v5710 = vmul.f32 %v5707, %v5700
          %v5711 = vmul.f32 %v5707, %v5701
          %v5712 = vmul.f32 %v5707, %v5702
          %v5713 = vmul.f32 %v5707, %v5703
          %v5714 = vmul.f32 %v5707, %v5704
          %v5715 = vmul.f32 %v5707, %v5705
          %v5716 = vmul.f32 %v5707, %v5706
          %v5717 = vadd.f32 %v5685, %v5708
          %v5718 = vadd.f32 %v5686, %v5709
          %v5719 = vadd.f32 %v5687, %v5710
          %v5720 = vadd.f32 %v5688, %v5711
          %v5721 = vadd.f32 %v5689, %v5712
          %v5722 = vadd.f32 %v5690, %v5713
          %v5723 = vadd.f32 %v5691, %v5714
          %v5724 = vadd.f32 %v5692, %v5715
          %v5725 = vadd.f32 %v5693, %v5716
          %s5726 = sadd.s32 %s5696, 1
          %s5727 = sld [smem:[#allocation12 + %s5726]]
          %v5728 = vstv %s5727
          %v5729 = vmul.f32 %v5728, %v5698
          %v5730 = vmul.f32 %v5728, %v5699
          %v5731 = vmul.f32 %v5728, %v5700
          %v5732 = vmul.f32 %v5728, %v5701
          %v5733 = vmul.f32 %v5728, %v5702
          %v5734 = vmul.f32 %v5728, %v5703
          %v5735 = vmul.f32 %v5728, %v5704
          %v5736 = vmul.f32 %v5728, %v5705
          %v5737 = vmul.f32 %v5728, %v5706
          %5747 = vrot.lane.b32.xlu0 %v5729, 127
          %v5748 = vpop.permute.xlu0 %5747
          %5749 = vrot.lane.b32.xlu0 %v5730, 127
          %v5750 = vpop.permute.xlu0 %5749
          %5751 = vrot.lane.b32.xlu0 %v5731, 127
          %v5752 = vpop.permute.xlu0 %5751
          %5753 = vrot.lane.b32.xlu0 %v5732, 127
          %v5754 = vpop.permute.xlu0 %5753
          %5755 = vrot.lane.b32.xlu0 %v5733, 127
          %v5756 = vpop.permute.xlu0 %5755
          %5757 = vrot.lane.b32.xlu0 %v5734, 127
          %v5758 = vpop.permute.xlu0 %5757
          %5759 = vrot.lane.b32.xlu0 %v5735, 127
          %v5760 = vpop.permute.xlu0 %5759
          %5761 = vrot.lane.b32.xlu0 %v5736, 127
          %v5762 = vpop.permute.xlu0 %5761
          %5763 = vrot.lane.b32.xlu0 %v5737, 127
          %v5764 = vpop.permute.xlu0 %5763
          %v5774 = vadd.f32 %v5717, %v5748
          %v5775 = vadd.f32 %v5718, %v5750
          %v5776 = vadd.f32 %v5719, %v5752
          %v5777 = vadd.f32 %v5720, %v5754
          %v5778 = vadd.f32 %v5721, %v5756
          %v5779 = vadd.f32 %v5722, %v5758
          %v5780 = vadd.f32 %v5723, %v5760
          %v5781 = vadd.f32 %v5724, %v5762
          %v5782 = vadd.f32 %v5725, %v5764
          %s5783 = sadd.s32 %s5696, 2
          %s5784 = sld [smem:[#allocation12 + %s5783]]
          %v5785 = vstv %s5784
          %v5786 = vmul.f32 %v5785, %v5698
          %v5787 = vmul.f32 %v5785, %v5699
          %v5788 = vmul.f32 %v5785, %v5700
          %v5789 = vmul.f32 %v5785, %v5701
          %v5790 = vmul.f32 %v5785, %v5702
          %v5791 = vmul.f32 %v5785, %v5703
          %v5792 = vmul.f32 %v5785, %v5704
          %v5793 = vmul.f32 %v5785, %v5705
          %v5794 = vmul.f32 %v5785, %v5706
          %5804 = vrot.lane.b32.xlu0 %v5786, 126
          %v5805 = vpop.permute.xlu0 %5804
          %5806 = vrot.lane.b32.xlu0 %v5787, 126
          %v5807 = vpop.permute.xlu0 %5806
          %5808 = vrot.lane.b32.xlu0 %v5788, 126
          %v5809 = vpop.permute.xlu0 %5808
          %5810 = vrot.lane.b32.xlu0 %v5789, 126
          %v5811 = vpop.permute.xlu0 %5810
          %5812 = vrot.lane.b32.xlu0 %v5790, 126
          %v5813 = vpop.permute.xlu0 %5812
          %5814 = vrot.lane.b32.xlu0 %v5791, 126
          %v5815 = vpop.permute.xlu0 %5814
          %5816 = vrot.lane.b32.xlu0 %v5792, 126
          %v5817 = vpop.permute.xlu0 %5816
          %5818 = vrot.lane.b32.xlu0 %v5793, 126
          %v5819 = vpop.permute.xlu0 %5818
          %5820 = vrot.lane.b32.xlu0 %v5794, 126
          %v5821 = vpop.permute.xlu0 %5820
          %v5831 = vadd.f32 %v5774, %v5805
          %v5832 = vadd.f32 %v5775, %v5807
          %v5833 = vadd.f32 %v5776, %v5809
          %v5834 = vadd.f32 %v5777, %v5811
          %v5835 = vadd.f32 %v5778, %v5813
          %v5836 = vadd.f32 %v5779, %v5815
          %v5837 = vadd.f32 %v5780, %v5817
          %v5838 = vadd.f32 %v5781, %v5819
          %v5839 = vadd.f32 %v5782, %v5821
          %s5840 = sadd.s32 %s5694, 2
          %s5841 = smul.u32 %s5840, 3
          %s5842 = sld [smem:[#allocation12 + %s5841]]
          %v5843 = vld [vmem:[%s5551 + $0x2] sm:$0xff]
          %v5844 = vld [vmem:[%s5551 + $0xa] sm:$0xff]
          %v5845 = vld [vmem:[%s5551 + $0x12] sm:$0xff]
          %v5846 = vld [vmem:[%s5551 + $0x1a] sm:$0xff]
          %v5847 = vld [vmem:[%s5551 + $0x22] sm:$0xff]
          %v5848 = vld [vmem:[%s5551 + $0x2a] sm:$0xff]
          %v5849 = vld [vmem:[%s5551 + $0x32] sm:$0xff]
          %v5850 = vld [vmem:[%s5551 + $0x3a] sm:$0xff]
          %v5851 = vld [vmem:[%s5551 + $0x42] sm:$0x3f]
          %v5852 = vstv %s5842
          %v5853 = vmul.f32 %v5852, %v5843
          %v5854 = vmul.f32 %v5852, %v5844
          %v5855 = vmul.f32 %v5852, %v5845
          %v5856 = vmul.f32 %v5852, %v5846
          %v5857 = vmul.f32 %v5852, %v5847
          %v5858 = vmul.f32 %v5852, %v5848
          %v5859 = vmul.f32 %v5852, %v5849
          %v5860 = vmul.f32 %v5852, %v5850
          %v5861 = vmul.f32 %v5852, %v5851
          %v5862 = vadd.f32 %v5831, %v5853
          %v5863 = vadd.f32 %v5832, %v5854
          %v5864 = vadd.f32 %v5833, %v5855
          %v5865 = vadd.f32 %v5834, %v5856
          %v5866 = vadd.f32 %v5835, %v5857
          %v5867 = vadd.f32 %v5836, %v5858
          %v5868 = vadd.f32 %v5837, %v5859
          %v5869 = vadd.f32 %v5838, %v5860
          %v5870 = vadd.f32 %v5839, %v5861
          %s5871 = sadd.s32 %s5841, 1
          %s5872 = sld [smem:[#allocation12 + %s5871]]
          %v5873 = vstv %s5872
          %v5874 = vmul.f32 %v5873, %v5843
          %v5875 = vmul.f32 %v5873, %v5844
          %v5876 = vmul.f32 %v5873, %v5845
          %v5877 = vmul.f32 %v5873, %v5846
          %v5878 = vmul.f32 %v5873, %v5847
          %v5879 = vmul.f32 %v5873, %v5848
          %v5880 = vmul.f32 %v5873, %v5849
          %v5881 = vmul.f32 %v5873, %v5850
          %v5882 = vmul.f32 %v5873, %v5851
          %5892 = vrot.lane.b32.xlu0 %v5874, 127
          %v5893 = vpop.permute.xlu0 %5892
          %5894 = vrot.lane.b32.xlu0 %v5875, 127
          %v5895 = vpop.permute.xlu0 %5894
          %5896 = vrot.lane.b32.xlu0 %v5876, 127
          %v5897 = vpop.permute.xlu0 %5896
          %5898 = vrot.lane.b32.xlu0 %v5877, 127
          %v5899 = vpop.permute.xlu0 %5898
          %5900 = vrot.lane.b32.xlu0 %v5878, 127
          %v5901 = vpop.permute.xlu0 %5900
          %5902 = vrot.lane.b32.xlu0 %v5879, 127
          %v5903 = vpop.permute.xlu0 %5902
          %5904 = vrot.lane.b32.xlu0 %v5880, 127
          %v5905 = vpop.permute.xlu0 %5904
          %5906 = vrot.lane.b32.xlu0 %v5881, 127
          %v5907 = vpop.permute.xlu0 %5906
          %5908 = vrot.lane.b32.xlu0 %v5882, 127
          %v5909 = vpop.permute.xlu0 %5908
          %v5919 = vadd.f32 %v5862, %v5893
          %v5920 = vadd.f32 %v5863, %v5895
          %v5921 = vadd.f32 %v5864, %v5897
          %v5922 = vadd.f32 %v5865, %v5899
          %v5923 = vadd.f32 %v5866, %v5901
          %v5924 = vadd.f32 %v5867, %v5903
          %v5925 = vadd.f32 %v5868, %v5905
          %v5926 = vadd.f32 %v5869, %v5907
          %v5927 = vadd.f32 %v5870, %v5909
          %s5928 = sadd.s32 %s5841, 2
          %s5929 = sld [smem:[#allocation12 + %s5928]]
          %v5930 = vstv %s5929
          %v5931 = vmul.f32 %v5930, %v5843
          %v5932 = vmul.f32 %v5930, %v5844
          %v5933 = vmul.f32 %v5930, %v5845
          %v5934 = vmul.f32 %v5930, %v5846
          %v5935 = vmul.f32 %v5930, %v5847
          %v5936 = vmul.f32 %v5930, %v5848
          %v5937 = vmul.f32 %v5930, %v5849
          %v5938 = vmul.f32 %v5930, %v5850
          %v5939 = vmul.f32 %v5930, %v5851
          %5949 = vrot.lane.b32.xlu0 %v5931, 126
          %v5950 = vpop.permute.xlu0 %5949
          %5951 = vrot.lane.b32.xlu0 %v5932, 126
          %v5952 = vpop.permute.xlu0 %5951
          %5953 = vrot.lane.b32.xlu0 %v5933, 126
          %v5954 = vpop.permute.xlu0 %5953
          %5955 = vrot.lane.b32.xlu0 %v5934, 126
          %v5956 = vpop.permute.xlu0 %5955
          %5957 = vrot.lane.b32.xlu0 %v5935, 126
          %v5958 = vpop.permute.xlu0 %5957
          %5959 = vrot.lane.b32.xlu0 %v5936, 126
          %v5960 = vpop.permute.xlu0 %5959
          %5961 = vrot.lane.b32.xlu0 %v5937, 126
          %v5962 = vpop.permute.xlu0 %5961
          %5963 = vrot.lane.b32.xlu0 %v5938, 126
          %v5964 = vpop.permute.xlu0 %5963
          %5965 = vrot.lane.b32.xlu0 %v5939, 126
          %v5966 = vpop.permute.xlu0 %5965
          %v5976 = vadd.f32 %v5919, %v5950
          %v5977 = vadd.f32 %v5920, %v5952
          %v5978 = vadd.f32 %v5921, %v5954
          %v5979 = vadd.f32 %v5922, %v5956
          %v5980 = vadd.f32 %v5923, %v5958
          %v5981 = vadd.f32 %v5924, %v5960
          %v5982 = vadd.f32 %v5925, %v5962
          %v5983 = vadd.f32 %v5926, %v5964
          %v5984 = vadd.f32 %v5927, %v5966
          %s5985 = sadd.s32 %s4236, 5
          %s5986 = smul.u32 %s5985, 9
          %s5987 = sld [smem:[#allocation12 + %s5986]]
          %s5988 = scalar_lea.vmem [#allocation3], 360
          %v5989 = vld [vmem:[%s5988] sm:$0xff]
          %v5990 = vld [vmem:[%s5988 + $0x8] sm:$0xff]
          %v5991 = vld [vmem:[%s5988 + $0x10] sm:$0xff]
          %v5992 = vld [vmem:[%s5988 + $0x18] sm:$0xff]
          %v5993 = vld [vmem:[%s5988 + $0x20] sm:$0xff]
          %v5994 = vld [vmem:[%s5988 + $0x28] sm:$0xff]
          %v5995 = vld [vmem:[%s5988 + $0x30] sm:$0xff]
          %v5996 = vld [vmem:[%s5988 + $0x38] sm:$0xff]
          %v5997 = vld [vmem:[%s5988 + $0x40] sm:$0x3f]
          %v5998 = vstv %s5987
          %v5999 = vmul.f32 %v5998, %v5989
          %v6000 = vmul.f32 %v5998, %v5990
          %v6001 = vmul.f32 %v5998, %v5991
          %v6002 = vmul.f32 %v5998, %v5992
          %v6003 = vmul.f32 %v5998, %v5993
          %v6004 = vmul.f32 %v5998, %v5994
          %v6005 = vmul.f32 %v5998, %v5995
          %v6006 = vmul.f32 %v5998, %v5996
          %v6007 = vmul.f32 %v5998, %v5997
          %v6008 = vadd.f32 %v5976, %v5999
          %v6009 = vadd.f32 %v5977, %v6000
          %v6010 = vadd.f32 %v5978, %v6001
          %v6011 = vadd.f32 %v5979, %v6002
          %v6012 = vadd.f32 %v5980, %v6003
          %v6013 = vadd.f32 %v5981, %v6004
          %v6014 = vadd.f32 %v5982, %v6005
          %v6015 = vadd.f32 %v5983, %v6006
          %v6016 = vadd.f32 %v5984, %v6007
          %s6017 = sadd.s32 %s5986, 1
          %s6018 = sld [smem:[#allocation12 + %s6017]]
          %v6019 = vstv %s6018
          %v6020 = vmul.f32 %v6019, %v5989
          %v6021 = vmul.f32 %v6019, %v5990
          %v6022 = vmul.f32 %v6019, %v5991
          %v6023 = vmul.f32 %v6019, %v5992
          %v6024 = vmul.f32 %v6019, %v5993
          %v6025 = vmul.f32 %v6019, %v5994
          %v6026 = vmul.f32 %v6019, %v5995
          %v6027 = vmul.f32 %v6019, %v5996
          %v6028 = vmul.f32 %v6019, %v5997
          %6038 = vrot.lane.b32.xlu0 %v6020, 127
          %v6039 = vpop.permute.xlu0 %6038
          %6040 = vrot.lane.b32.xlu0 %v6021, 127
          %v6041 = vpop.permute.xlu0 %6040
          %6042 = vrot.lane.b32.xlu0 %v6022, 127
          %v6043 = vpop.permute.xlu0 %6042
          %6044 = vrot.lane.b32.xlu0 %v6023, 127
          %v6045 = vpop.permute.xlu0 %6044
          %6046 = vrot.lane.b32.xlu0 %v6024, 127
          %v6047 = vpop.permute.xlu0 %6046
          %6048 = vrot.lane.b32.xlu0 %v6025, 127
          %v6049 = vpop.permute.xlu0 %6048
          %6050 = vrot.lane.b32.xlu0 %v6026, 127
          %v6051 = vpop.permute.xlu0 %6050
          %6052 = vrot.lane.b32.xlu0 %v6027, 127
          %v6053 = vpop.permute.xlu0 %6052
          %6054 = vrot.lane.b32.xlu0 %v6028, 127
          %v6055 = vpop.permute.xlu0 %6054
          %v6065 = vadd.f32 %v6008, %v6039
          %v6066 = vadd.f32 %v6009, %v6041
          %v6067 = vadd.f32 %v6010, %v6043
          %v6068 = vadd.f32 %v6011, %v6045
          %v6069 = vadd.f32 %v6012, %v6047
          %v6070 = vadd.f32 %v6013, %v6049
          %v6071 = vadd.f32 %v6014, %v6051
          %v6072 = vadd.f32 %v6015, %v6053
          %v6073 = vadd.f32 %v6016, %v6055
          %s6074 = sadd.s32 %s5986, 2
          %s6075 = sld [smem:[#allocation12 + %s6074]]
          %v6076 = vstv %s6075
          %v6077 = vmul.f32 %v6076, %v5989
          %v6078 = vmul.f32 %v6076, %v5990
          %v6079 = vmul.f32 %v6076, %v5991
          %v6080 = vmul.f32 %v6076, %v5992
          %v6081 = vmul.f32 %v6076, %v5993
          %v6082 = vmul.f32 %v6076, %v5994
          %v6083 = vmul.f32 %v6076, %v5995
          %v6084 = vmul.f32 %v6076, %v5996
          %v6085 = vmul.f32 %v6076, %v5997
          %6095 = vrot.lane.b32.xlu0 %v6077, 126
          %v6096 = vpop.permute.xlu0 %6095
          %6097 = vrot.lane.b32.xlu0 %v6078, 126
          %v6098 = vpop.permute.xlu0 %6097
          %6099 = vrot.lane.b32.xlu0 %v6079, 126
          %v6100 = vpop.permute.xlu0 %6099
          %6101 = vrot.lane.b32.xlu0 %v6080, 126
          %v6102 = vpop.permute.xlu0 %6101
          %6103 = vrot.lane.b32.xlu0 %v6081, 126
          %v6104 = vpop.permute.xlu0 %6103
          %6105 = vrot.lane.b32.xlu0 %v6082, 126
          %v6106 = vpop.permute.xlu0 %6105
          %6107 = vrot.lane.b32.xlu0 %v6083, 126
          %v6108 = vpop.permute.xlu0 %6107
          %6109 = vrot.lane.b32.xlu0 %v6084, 126
          %v6110 = vpop.permute.xlu0 %6109
          %6111 = vrot.lane.b32.xlu0 %v6085, 126
          %v6112 = vpop.permute.xlu0 %6111
          %v6122 = vadd.f32 %v6065, %v6096
          %v6123 = vadd.f32 %v6066, %v6098
          %v6124 = vadd.f32 %v6067, %v6100
          %v6125 = vadd.f32 %v6068, %v6102
          %v6126 = vadd.f32 %v6069, %v6104
          %v6127 = vadd.f32 %v6070, %v6106
          %v6128 = vadd.f32 %v6071, %v6108
          %v6129 = vadd.f32 %v6072, %v6110
          %v6130 = vadd.f32 %v6073, %v6112
          %s6131 = smul.u32 %s5985, 3
          %s6132 = sadd.s32 %s6131, 1
          %s6133 = smul.u32 %s6132, 3
          %s6134 = sld [smem:[#allocation12 + %s6133]]
          %v6135 = vld [vmem:[%s5988 + $0x1] sm:$0xff]
          %v6136 = vld [vmem:[%s5988 + $0x9] sm:$0xff]
          %v6137 = vld [vmem:[%s5988 + $0x11] sm:$0xff]
          %v6138 = vld [vmem:[%s5988 + $0x19] sm:$0xff]
          %v6139 = vld [vmem:[%s5988 + $0x21] sm:$0xff]
          %v6140 = vld [vmem:[%s5988 + $0x29] sm:$0xff]
          %v6141 = vld [vmem:[%s5988 + $0x31] sm:$0xff]
          %v6142 = vld [vmem:[%s5988 + $0x39] sm:$0xff]
          %v6143 = vld [vmem:[%s5988 + $0x41] sm:$0x3f]
          %v6144 = vstv %s6134
          %v6145 = vmul.f32 %v6144, %v6135
          %v6146 = vmul.f32 %v6144, %v6136
          %v6147 = vmul.f32 %v6144, %v6137
          %v6148 = vmul.f32 %v6144, %v6138
          %v6149 = vmul.f32 %v6144, %v6139
          %v6150 = vmul.f32 %v6144, %v6140
          %v6151 = vmul.f32 %v6144, %v6141
          %v6152 = vmul.f32 %v6144, %v6142
          %v6153 = vmul.f32 %v6144, %v6143
          %v6154 = vadd.f32 %v6122, %v6145
          %v6155 = vadd.f32 %v6123, %v6146
          %v6156 = vadd.f32 %v6124, %v6147
          %v6157 = vadd.f32 %v6125, %v6148
          %v6158 = vadd.f32 %v6126, %v6149
          %v6159 = vadd.f32 %v6127, %v6150
          %v6160 = vadd.f32 %v6128, %v6151
          %v6161 = vadd.f32 %v6129, %v6152
          %v6162 = vadd.f32 %v6130, %v6153
          %s6163 = sadd.s32 %s6133, 1
          %s6164 = sld [smem:[#allocation12 + %s6163]]
          %v6165 = vstv %s6164
          %v6166 = vmul.f32 %v6165, %v6135
          %v6167 = vmul.f32 %v6165, %v6136
          %v6168 = vmul.f32 %v6165, %v6137
          %v6169 = vmul.f32 %v6165, %v6138
          %v6170 = vmul.f32 %v6165, %v6139
          %v6171 = vmul.f32 %v6165, %v6140
          %v6172 = vmul.f32 %v6165, %v6141
          %v6173 = vmul.f32 %v6165, %v6142
          %v6174 = vmul.f32 %v6165, %v6143
          %6184 = vrot.lane.b32.xlu0 %v6166, 127
          %v6185 = vpop.permute.xlu0 %6184
          %6186 = vrot.lane.b32.xlu0 %v6167, 127
          %v6187 = vpop.permute.xlu0 %6186
          %6188 = vrot.lane.b32.xlu0 %v6168, 127
          %v6189 = vpop.permute.xlu0 %6188
          %6190 = vrot.lane.b32.xlu0 %v6169, 127
          %v6191 = vpop.permute.xlu0 %6190
          %6192 = vrot.lane.b32.xlu0 %v6170, 127
          %v6193 = vpop.permute.xlu0 %6192
          %6194 = vrot.lane.b32.xlu0 %v6171, 127
          %v6195 = vpop.permute.xlu0 %6194
          %6196 = vrot.lane.b32.xlu0 %v6172, 127
          %v6197 = vpop.permute.xlu0 %6196
          %6198 = vrot.lane.b32.xlu0 %v6173, 127
          %v6199 = vpop.permute.xlu0 %6198
          %6200 = vrot.lane.b32.xlu0 %v6174, 127
          %v6201 = vpop.permute.xlu0 %6200
          %v6211 = vadd.f32 %v6154, %v6185
          %v6212 = vadd.f32 %v6155, %v6187
          %v6213 = vadd.f32 %v6156, %v6189
          %v6214 = vadd.f32 %v6157, %v6191
          %v6215 = vadd.f32 %v6158, %v6193
          %v6216 = vadd.f32 %v6159, %v6195
          %v6217 = vadd.f32 %v6160, %v6197
          %v6218 = vadd.f32 %v6161, %v6199
          %v6219 = vadd.f32 %v6162, %v6201
          %s6220 = sadd.s32 %s6133, 2
          %s6221 = sld [smem:[#allocation12 + %s6220]]
          %v6222 = vstv %s6221
          %v6223 = vmul.f32 %v6222, %v6135
          %v6224 = vmul.f32 %v6222, %v6136
          %v6225 = vmul.f32 %v6222, %v6137
          %v6226 = vmul.f32 %v6222, %v6138
          %v6227 = vmul.f32 %v6222, %v6139
          %v6228 = vmul.f32 %v6222, %v6140
          %v6229 = vmul.f32 %v6222, %v6141
          %v6230 = vmul.f32 %v6222, %v6142
          %v6231 = vmul.f32 %v6222, %v6143
          %6241 = vrot.lane.b32.xlu0 %v6223, 126
          %v6242 = vpop.permute.xlu0 %6241
          %6243 = vrot.lane.b32.xlu0 %v6224, 126
          %v6244 = vpop.permute.xlu0 %6243
          %6245 = vrot.lane.b32.xlu0 %v6225, 126
          %v6246 = vpop.permute.xlu0 %6245
          %6247 = vrot.lane.b32.xlu0 %v6226, 126
          %v6248 = vpop.permute.xlu0 %6247
          %6249 = vrot.lane.b32.xlu0 %v6227, 126
          %v6250 = vpop.permute.xlu0 %6249
          %6251 = vrot.lane.b32.xlu0 %v6228, 126
          %v6252 = vpop.permute.xlu0 %6251
          %6253 = vrot.lane.b32.xlu0 %v6229, 126
          %v6254 = vpop.permute.xlu0 %6253
          %6255 = vrot.lane.b32.xlu0 %v6230, 126
          %v6256 = vpop.permute.xlu0 %6255
          %6257 = vrot.lane.b32.xlu0 %v6231, 126
          %v6258 = vpop.permute.xlu0 %6257
          %v6268 = vadd.f32 %v6211, %v6242
          %v6269 = vadd.f32 %v6212, %v6244
          %v6270 = vadd.f32 %v6213, %v6246
          %v6271 = vadd.f32 %v6214, %v6248
          %v6272 = vadd.f32 %v6215, %v6250
          %v6273 = vadd.f32 %v6216, %v6252
          %v6274 = vadd.f32 %v6217, %v6254
          %v6275 = vadd.f32 %v6218, %v6256
          %v6276 = vadd.f32 %v6219, %v6258
          %s6277 = sadd.s32 %s6131, 2
          %s6278 = smul.u32 %s6277, 3
          %s6279 = sld [smem:[#allocation12 + %s6278]]
          %v6280 = vld [vmem:[%s5988 + $0x2] sm:$0xff]
          %v6281 = vld [vmem:[%s5988 + $0xa] sm:$0xff]
          %v6282 = vld [vmem:[%s5988 + $0x12] sm:$0xff]
          %v6283 = vld [vmem:[%s5988 + $0x1a] sm:$0xff]
          %v6284 = vld [vmem:[%s5988 + $0x22] sm:$0xff]
          %v6285 = vld [vmem:[%s5988 + $0x2a] sm:$0xff]
          %v6286 = vld [vmem:[%s5988 + $0x32] sm:$0xff]
          %v6287 = vld [vmem:[%s5988 + $0x3a] sm:$0xff]
          %v6288 = vld [vmem:[%s5988 + $0x42] sm:$0x3f]
          %v6289 = vstv %s6279
          %v6290 = vmul.f32 %v6289, %v6280
          %v6291 = vmul.f32 %v6289, %v6281
          %v6292 = vmul.f32 %v6289, %v6282
          %v6293 = vmul.f32 %v6289, %v6283
          %v6294 = vmul.f32 %v6289, %v6284
          %v6295 = vmul.f32 %v6289, %v6285
          %v6296 = vmul.f32 %v6289, %v6286
          %v6297 = vmul.f32 %v6289, %v6287
          %v6298 = vmul.f32 %v6289, %v6288
          %v6299 = vadd.f32 %v6268, %v6290
          %v6300 = vadd.f32 %v6269, %v6291
          %v6301 = vadd.f32 %v6270, %v6292
          %v6302 = vadd.f32 %v6271, %v6293
          %v6303 = vadd.f32 %v6272, %v6294
          %v6304 = vadd.f32 %v6273, %v6295
          %v6305 = vadd.f32 %v6274, %v6296
          %v6306 = vadd.f32 %v6275, %v6297
          %v6307 = vadd.f32 %v6276, %v6298
          %s6308 = sadd.s32 %s6278, 1
          %s6309 = sld [smem:[#allocation12 + %s6308]]
          %v6310 = vstv %s6309
          %v6311 = vmul.f32 %v6310, %v6280
          %v6312 = vmul.f32 %v6310, %v6281
          %v6313 = vmul.f32 %v6310, %v6282
          %v6314 = vmul.f32 %v6310, %v6283
          %v6315 = vmul.f32 %v6310, %v6284
          %v6316 = vmul.f32 %v6310, %v6285
          %v6317 = vmul.f32 %v6310, %v6286
          %v6318 = vmul.f32 %v6310, %v6287
          %v6319 = vmul.f32 %v6310, %v6288
          %6329 = vrot.lane.b32.xlu0 %v6311, 127
          %v6330 = vpop.permute.xlu0 %6329
          %6331 = vrot.lane.b32.xlu0 %v6312, 127
          %v6332 = vpop.permute.xlu0 %6331
          %6333 = vrot.lane.b32.xlu0 %v6313, 127
          %v6334 = vpop.permute.xlu0 %6333
          %6335 = vrot.lane.b32.xlu0 %v6314, 127
          %v6336 = vpop.permute.xlu0 %6335
          %6337 = vrot.lane.b32.xlu0 %v6315, 127
          %v6338 = vpop.permute.xlu0 %6337
          %6339 = vrot.lane.b32.xlu0 %v6316, 127
          %v6340 = vpop.permute.xlu0 %6339
          %6341 = vrot.lane.b32.xlu0 %v6317, 127
          %v6342 = vpop.permute.xlu0 %6341
          %6343 = vrot.lane.b32.xlu0 %v6318, 127
          %v6344 = vpop.permute.xlu0 %6343
          %6345 = vrot.lane.b32.xlu0 %v6319, 127
          %v6346 = vpop.permute.xlu0 %6345
          %v6356 = vadd.f32 %v6299, %v6330
          %v6357 = vadd.f32 %v6300, %v6332
          %v6358 = vadd.f32 %v6301, %v6334
          %v6359 = vadd.f32 %v6302, %v6336
          %v6360 = vadd.f32 %v6303, %v6338
          %v6361 = vadd.f32 %v6304, %v6340
          %v6362 = vadd.f32 %v6305, %v6342
          %v6363 = vadd.f32 %v6306, %v6344
          %v6364 = vadd.f32 %v6307, %v6346
          %s6365 = sadd.s32 %s6278, 2
          %s6366 = sld [smem:[#allocation12 + %s6365]]
          %v6367 = vstv %s6366
          %v6368 = vmul.f32 %v6367, %v6280
          %v6369 = vmul.f32 %v6367, %v6281
          %v6370 = vmul.f32 %v6367, %v6282
          %v6371 = vmul.f32 %v6367, %v6283
          %v6372 = vmul.f32 %v6367, %v6284
          %v6373 = vmul.f32 %v6367, %v6285
          %v6374 = vmul.f32 %v6367, %v6286
          %v6375 = vmul.f32 %v6367, %v6287
          %v6376 = vmul.f32 %v6367, %v6288
          %6386 = vrot.lane.b32.xlu0 %v6368, 126
          %v6387 = vpop.permute.xlu0 %6386
          %6388 = vrot.lane.b32.xlu0 %v6369, 126
          %v6389 = vpop.permute.xlu0 %6388
          %6390 = vrot.lane.b32.xlu0 %v6370, 126
          %v6391 = vpop.permute.xlu0 %6390
          %6392 = vrot.lane.b32.xlu0 %v6371, 126
          %v6393 = vpop.permute.xlu0 %6392
          %6394 = vrot.lane.b32.xlu0 %v6372, 126
          %v6395 = vpop.permute.xlu0 %6394
          %6396 = vrot.lane.b32.xlu0 %v6373, 126
          %v6397 = vpop.permute.xlu0 %6396
          %6398 = vrot.lane.b32.xlu0 %v6374, 126
          %v6399 = vpop.permute.xlu0 %6398
          %6400 = vrot.lane.b32.xlu0 %v6375, 126
          %v6401 = vpop.permute.xlu0 %6400
          %6402 = vrot.lane.b32.xlu0 %v6376, 126
          %v6403 = vpop.permute.xlu0 %6402
          %v6413 = vadd.f32 %v6356, %v6387
          %v6414 = vadd.f32 %v6357, %v6389
          %v6415 = vadd.f32 %v6358, %v6391
          %v6416 = vadd.f32 %v6359, %v6393
          %v6417 = vadd.f32 %v6360, %v6395
          %v6418 = vadd.f32 %v6361, %v6397
          %v6419 = vadd.f32 %v6362, %v6399
          %v6420 = vadd.f32 %v6363, %v6401
          %v6421 = vadd.f32 %v6364, %v6403
          %s6422 = sadd.s32 %s4236, 6
          %s6423 = smul.u32 %s6422, 9
          %s6424 = sld [smem:[#allocation12 + %s6423]]
          %s6425 = scalar_lea.vmem [#allocation3], 432
          %v6426 = vld [vmem:[%s6425] sm:$0xff]
          %v6427 = vld [vmem:[%s6425 + $0x8] sm:$0xff]
          %v6428 = vld [vmem:[%s6425 + $0x10] sm:$0xff]
          %v6429 = vld [vmem:[%s6425 + $0x18] sm:$0xff]
          %v6430 = vld [vmem:[%s6425 + $0x20] sm:$0xff]
          %v6431 = vld [vmem:[%s6425 + $0x28] sm:$0xff]
          %v6432 = vld [vmem:[%s6425 + $0x30] sm:$0xff]
          %v6433 = vld [vmem:[%s6425 + $0x38] sm:$0xff]
          %v6434 = vld [vmem:[%s6425 + $0x40] sm:$0x3f]
          %v6435 = vstv %s6424
          %v6436 = vmul.f32 %v6435, %v6426
          %v6437 = vmul.f32 %v6435, %v6427
          %v6438 = vmul.f32 %v6435, %v6428
          %v6439 = vmul.f32 %v6435, %v6429
          %v6440 = vmul.f32 %v6435, %v6430
          %v6441 = vmul.f32 %v6435, %v6431
          %v6442 = vmul.f32 %v6435, %v6432
          %v6443 = vmul.f32 %v6435, %v6433
          %v6444 = vmul.f32 %v6435, %v6434
          %v6445 = vadd.f32 %v6413, %v6436
          %v6446 = vadd.f32 %v6414, %v6437
          %v6447 = vadd.f32 %v6415, %v6438
          %v6448 = vadd.f32 %v6416, %v6439
          %v6449 = vadd.f32 %v6417, %v6440
          %v6450 = vadd.f32 %v6418, %v6441
          %v6451 = vadd.f32 %v6419, %v6442
          %v6452 = vadd.f32 %v6420, %v6443
          %v6453 = vadd.f32 %v6421, %v6444
          %s6454 = sadd.s32 %s6423, 1
          %s6455 = sld [smem:[#allocation12 + %s6454]]
          %v6456 = vstv %s6455
          %v6457 = vmul.f32 %v6456, %v6426
          %v6458 = vmul.f32 %v6456, %v6427
          %v6459 = vmul.f32 %v6456, %v6428
          %v6460 = vmul.f32 %v6456, %v6429
          %v6461 = vmul.f32 %v6456, %v6430
          %v6462 = vmul.f32 %v6456, %v6431
          %v6463 = vmul.f32 %v6456, %v6432
          %v6464 = vmul.f32 %v6456, %v6433
          %v6465 = vmul.f32 %v6456, %v6434
          %6475 = vrot.lane.b32.xlu0 %v6457, 127
          %v6476 = vpop.permute.xlu0 %6475
          %6477 = vrot.lane.b32.xlu0 %v6458, 127
          %v6478 = vpop.permute.xlu0 %6477
          %6479 = vrot.lane.b32.xlu0 %v6459, 127
          %v6480 = vpop.permute.xlu0 %6479
          %6481 = vrot.lane.b32.xlu0 %v6460, 127
          %v6482 = vpop.permute.xlu0 %6481
          %6483 = vrot.lane.b32.xlu0 %v6461, 127
          %v6484 = vpop.permute.xlu0 %6483
          %6485 = vrot.lane.b32.xlu0 %v6462, 127
          %v6486 = vpop.permute.xlu0 %6485
          %6487 = vrot.lane.b32.xlu0 %v6463, 127
          %v6488 = vpop.permute.xlu0 %6487
          %6489 = vrot.lane.b32.xlu0 %v6464, 127
          %v6490 = vpop.permute.xlu0 %6489
          %6491 = vrot.lane.b32.xlu0 %v6465, 127
          %v6492 = vpop.permute.xlu0 %6491
          %v6502 = vadd.f32 %v6445, %v6476
          %v6503 = vadd.f32 %v6446, %v6478
          %v6504 = vadd.f32 %v6447, %v6480
          %v6505 = vadd.f32 %v6448, %v6482
          %v6506 = vadd.f32 %v6449, %v6484
          %v6507 = vadd.f32 %v6450, %v6486
          %v6508 = vadd.f32 %v6451, %v6488
          %v6509 = vadd.f32 %v6452, %v6490
          %v6510 = vadd.f32 %v6453, %v6492
          %s6511 = sadd.s32 %s6423, 2
          %s6512 = sld [smem:[#allocation12 + %s6511]]
          %v6513 = vstv %s6512
          %v6514 = vmul.f32 %v6513, %v6426
          %v6515 = vmul.f32 %v6513, %v6427
          %v6516 = vmul.f32 %v6513, %v6428
          %v6517 = vmul.f32 %v6513, %v6429
          %v6518 = vmul.f32 %v6513, %v6430
          %v6519 = vmul.f32 %v6513, %v6431
          %v6520 = vmul.f32 %v6513, %v6432
          %v6521 = vmul.f32 %v6513, %v6433
          %v6522 = vmul.f32 %v6513, %v6434
          %6532 = vrot.lane.b32.xlu0 %v6514, 126
          %v6533 = vpop.permute.xlu0 %6532
          %6534 = vrot.lane.b32.xlu0 %v6515, 126
          %v6535 = vpop.permute.xlu0 %6534
          %6536 = vrot.lane.b32.xlu0 %v6516, 126
          %v6537 = vpop.permute.xlu0 %6536
          %6538 = vrot.lane.b32.xlu0 %v6517, 126
          %v6539 = vpop.permute.xlu0 %6538
          %6540 = vrot.lane.b32.xlu0 %v6518, 126
          %v6541 = vpop.permute.xlu0 %6540
          %6542 = vrot.lane.b32.xlu0 %v6519, 126
          %v6543 = vpop.permute.xlu0 %6542
          %6544 = vrot.lane.b32.xlu0 %v6520, 126
          %v6545 = vpop.permute.xlu0 %6544
          %6546 = vrot.lane.b32.xlu0 %v6521, 126
          %v6547 = vpop.permute.xlu0 %6546
          %6548 = vrot.lane.b32.xlu0 %v6522, 126
          %v6549 = vpop.permute.xlu0 %6548
          %v6559 = vadd.f32 %v6502, %v6533
          %v6560 = vadd.f32 %v6503, %v6535
          %v6561 = vadd.f32 %v6504, %v6537
          %v6562 = vadd.f32 %v6505, %v6539
          %v6563 = vadd.f32 %v6506, %v6541
          %v6564 = vadd.f32 %v6507, %v6543
          %v6565 = vadd.f32 %v6508, %v6545
          %v6566 = vadd.f32 %v6509, %v6547
          %v6567 = vadd.f32 %v6510, %v6549
          %s6568 = smul.u32 %s6422, 3
          %s6569 = sadd.s32 %s6568, 1
          %s6570 = smul.u32 %s6569, 3
          %s6571 = sld [smem:[#allocation12 + %s6570]]
          %v6572 = vld [vmem:[%s6425 + $0x1] sm:$0xff]
          %v6573 = vld [vmem:[%s6425 + $0x9] sm:$0xff]
          %v6574 = vld [vmem:[%s6425 + $0x11] sm:$0xff]
          %v6575 = vld [vmem:[%s6425 + $0x19] sm:$0xff]
          %v6576 = vld [vmem:[%s6425 + $0x21] sm:$0xff]
          %v6577 = vld [vmem:[%s6425 + $0x29] sm:$0xff]
          %v6578 = vld [vmem:[%s6425 + $0x31] sm:$0xff]
          %v6579 = vld [vmem:[%s6425 + $0x39] sm:$0xff]
          %v6580 = vld [vmem:[%s6425 + $0x41] sm:$0x3f]
          %v6581 = vstv %s6571
          %v6582 = vmul.f32 %v6581, %v6572
          %v6583 = vmul.f32 %v6581, %v6573
          %v6584 = vmul.f32 %v6581, %v6574
          %v6585 = vmul.f32 %v6581, %v6575
          %v6586 = vmul.f32 %v6581, %v6576
          %v6587 = vmul.f32 %v6581, %v6577
          %v6588 = vmul.f32 %v6581, %v6578
          %v6589 = vmul.f32 %v6581, %v6579
          %v6590 = vmul.f32 %v6581, %v6580
          %v6591 = vadd.f32 %v6559, %v6582
          %v6592 = vadd.f32 %v6560, %v6583
          %v6593 = vadd.f32 %v6561, %v6584
          %v6594 = vadd.f32 %v6562, %v6585
          %v6595 = vadd.f32 %v6563, %v6586
          %v6596 = vadd.f32 %v6564, %v6587
          %v6597 = vadd.f32 %v6565, %v6588
          %v6598 = vadd.f32 %v6566, %v6589
          %v6599 = vadd.f32 %v6567, %v6590
          %s6600 = sadd.s32 %s6570, 1
          %s6601 = sld [smem:[#allocation12 + %s6600]]
          %v6602 = vstv %s6601
          %v6603 = vmul.f32 %v6602, %v6572
          %v6604 = vmul.f32 %v6602, %v6573
          %v6605 = vmul.f32 %v6602, %v6574
          %v6606 = vmul.f32 %v6602, %v6575
          %v6607 = vmul.f32 %v6602, %v6576
          %v6608 = vmul.f32 %v6602, %v6577
          %v6609 = vmul.f32 %v6602, %v6578
          %v6610 = vmul.f32 %v6602, %v6579
          %v6611 = vmul.f32 %v6602, %v6580
          %6621 = vrot.lane.b32.xlu0 %v6603, 127
          %v6622 = vpop.permute.xlu0 %6621
          %6623 = vrot.lane.b32.xlu0 %v6604, 127
          %v6624 = vpop.permute.xlu0 %6623
          %6625 = vrot.lane.b32.xlu0 %v6605, 127
          %v6626 = vpop.permute.xlu0 %6625
          %6627 = vrot.lane.b32.xlu0 %v6606, 127
          %v6628 = vpop.permute.xlu0 %6627
          %6629 = vrot.lane.b32.xlu0 %v6607, 127
          %v6630 = vpop.permute.xlu0 %6629
          %6631 = vrot.lane.b32.xlu0 %v6608, 127
          %v6632 = vpop.permute.xlu0 %6631
          %6633 = vrot.lane.b32.xlu0 %v6609, 127
          %v6634 = vpop.permute.xlu0 %6633
          %6635 = vrot.lane.b32.xlu0 %v6610, 127
          %v6636 = vpop.permute.xlu0 %6635
          %6637 = vrot.lane.b32.xlu0 %v6611, 127
          %v6638 = vpop.permute.xlu0 %6637
          %v6648 = vadd.f32 %v6591, %v6622
          %v6649 = vadd.f32 %v6592, %v6624
          %v6650 = vadd.f32 %v6593, %v6626
          %v6651 = vadd.f32 %v6594, %v6628
          %v6652 = vadd.f32 %v6595, %v6630
          %v6653 = vadd.f32 %v6596, %v6632
          %v6654 = vadd.f32 %v6597, %v6634
          %v6655 = vadd.f32 %v6598, %v6636
          %v6656 = vadd.f32 %v6599, %v6638
          %s6657 = sadd.s32 %s6570, 2
          %s6658 = sld [smem:[#allocation12 + %s6657]]
          %v6659 = vstv %s6658
          %v6660 = vmul.f32 %v6659, %v6572
          %v6661 = vmul.f32 %v6659, %v6573
          %v6662 = vmul.f32 %v6659, %v6574
          %v6663 = vmul.f32 %v6659, %v6575
          %v6664 = vmul.f32 %v6659, %v6576
          %v6665 = vmul.f32 %v6659, %v6577
          %v6666 = vmul.f32 %v6659, %v6578
          %v6667 = vmul.f32 %v6659, %v6579
          %v6668 = vmul.f32 %v6659, %v6580
          %6678 = vrot.lane.b32.xlu0 %v6660, 126
          %v6679 = vpop.permute.xlu0 %6678
          %6680 = vrot.lane.b32.xlu0 %v6661, 126
          %v6681 = vpop.permute.xlu0 %6680
          %6682 = vrot.lane.b32.xlu0 %v6662, 126
          %v6683 = vpop.permute.xlu0 %6682
          %6684 = vrot.lane.b32.xlu0 %v6663, 126
          %v6685 = vpop.permute.xlu0 %6684
          %6686 = vrot.lane.b32.xlu0 %v6664, 126
          %v6687 = vpop.permute.xlu0 %6686
          %6688 = vrot.lane.b32.xlu0 %v6665, 126
          %v6689 = vpop.permute.xlu0 %6688
          %6690 = vrot.lane.b32.xlu0 %v6666, 126
          %v6691 = vpop.permute.xlu0 %6690
          %6692 = vrot.lane.b32.xlu0 %v6667, 126
          %v6693 = vpop.permute.xlu0 %6692
          %6694 = vrot.lane.b32.xlu0 %v6668, 126
          %v6695 = vpop.permute.xlu0 %6694
          %v6705 = vadd.f32 %v6648, %v6679
          %v6706 = vadd.f32 %v6649, %v6681
          %v6707 = vadd.f32 %v6650, %v6683
          %v6708 = vadd.f32 %v6651, %v6685
          %v6709 = vadd.f32 %v6652, %v6687
          %v6710 = vadd.f32 %v6653, %v6689
          %v6711 = vadd.f32 %v6654, %v6691
          %v6712 = vadd.f32 %v6655, %v6693
          %v6713 = vadd.f32 %v6656, %v6695
          %s6714 = sadd.s32 %s6568, 2
          %s6715 = smul.u32 %s6714, 3
          %s6716 = sld [smem:[#allocation12 + %s6715]]
          %v6717 = vld [vmem:[%s6425 + $0x2] sm:$0xff]
          %v6718 = vld [vmem:[%s6425 + $0xa] sm:$0xff]
          %v6719 = vld [vmem:[%s6425 + $0x12] sm:$0xff]
          %v6720 = vld [vmem:[%s6425 + $0x1a] sm:$0xff]
          %v6721 = vld [vmem:[%s6425 + $0x22] sm:$0xff]
          %v6722 = vld [vmem:[%s6425 + $0x2a] sm:$0xff]
          %v6723 = vld [vmem:[%s6425 + $0x32] sm:$0xff]
          %v6724 = vld [vmem:[%s6425 + $0x3a] sm:$0xff]
          %v6725 = vld [vmem:[%s6425 + $0x42] sm:$0x3f]
          %v6726 = vstv %s6716
          %v6727 = vmul.f32 %v6726, %v6717
          %v6728 = vmul.f32 %v6726, %v6718
          %v6729 = vmul.f32 %v6726, %v6719
          %v6730 = vmul.f32 %v6726, %v6720
          %v6731 = vmul.f32 %v6726, %v6721
          %v6732 = vmul.f32 %v6726, %v6722
          %v6733 = vmul.f32 %v6726, %v6723
          %v6734 = vmul.f32 %v6726, %v6724
          %v6735 = vmul.f32 %v6726, %v6725
          %v6736 = vadd.f32 %v6705, %v6727
          %v6737 = vadd.f32 %v6706, %v6728
          %v6738 = vadd.f32 %v6707, %v6729
          %v6739 = vadd.f32 %v6708, %v6730
          %v6740 = vadd.f32 %v6709, %v6731
          %v6741 = vadd.f32 %v6710, %v6732
          %v6742 = vadd.f32 %v6711, %v6733
          %v6743 = vadd.f32 %v6712, %v6734
          %v6744 = vadd.f32 %v6713, %v6735
          %s6745 = sadd.s32 %s6715, 1
          %s6746 = sld [smem:[#allocation12 + %s6745]]
          %v6747 = vstv %s6746
          %v6748 = vmul.f32 %v6747, %v6717
          %v6749 = vmul.f32 %v6747, %v6718
          %v6750 = vmul.f32 %v6747, %v6719
          %v6751 = vmul.f32 %v6747, %v6720
          %v6752 = vmul.f32 %v6747, %v6721
          %v6753 = vmul.f32 %v6747, %v6722
          %v6754 = vmul.f32 %v6747, %v6723
          %v6755 = vmul.f32 %v6747, %v6724
          %v6756 = vmul.f32 %v6747, %v6725
          %6766 = vrot.lane.b32.xlu0 %v6748, 127
          %v6767 = vpop.permute.xlu0 %6766
          %6768 = vrot.lane.b32.xlu0 %v6749, 127
          %v6769 = vpop.permute.xlu0 %6768
          %6770 = vrot.lane.b32.xlu0 %v6750, 127
          %v6771 = vpop.permute.xlu0 %6770
          %6772 = vrot.lane.b32.xlu0 %v6751, 127
          %v6773 = vpop.permute.xlu0 %6772
          %6774 = vrot.lane.b32.xlu0 %v6752, 127
          %v6775 = vpop.permute.xlu0 %6774
          %6776 = vrot.lane.b32.xlu0 %v6753, 127
          %v6777 = vpop.permute.xlu0 %6776
          %6778 = vrot.lane.b32.xlu0 %v6754, 127
          %v6779 = vpop.permute.xlu0 %6778
          %6780 = vrot.lane.b32.xlu0 %v6755, 127
          %v6781 = vpop.permute.xlu0 %6780
          %6782 = vrot.lane.b32.xlu0 %v6756, 127
          %v6783 = vpop.permute.xlu0 %6782
          %v6793 = vadd.f32 %v6736, %v6767
          %v6794 = vadd.f32 %v6737, %v6769
          %v6795 = vadd.f32 %v6738, %v6771
          %v6796 = vadd.f32 %v6739, %v6773
          %v6797 = vadd.f32 %v6740, %v6775
          %v6798 = vadd.f32 %v6741, %v6777
          %v6799 = vadd.f32 %v6742, %v6779
          %v6800 = vadd.f32 %v6743, %v6781
          %v6801 = vadd.f32 %v6744, %v6783
          %s6802 = sadd.s32 %s6715, 2
          %s6803 = sld [smem:[#allocation12 + %s6802]]
          %v6804 = vstv %s6803
          %v6805 = vmul.f32 %v6804, %v6717
          %v6806 = vmul.f32 %v6804, %v6718
          %v6807 = vmul.f32 %v6804, %v6719
          %v6808 = vmul.f32 %v6804, %v6720
          %v6809 = vmul.f32 %v6804, %v6721
          %v6810 = vmul.f32 %v6804, %v6722
          %v6811 = vmul.f32 %v6804, %v6723
          %v6812 = vmul.f32 %v6804, %v6724
          %v6813 = vmul.f32 %v6804, %v6725
          %6823 = vrot.lane.b32.xlu0 %v6805, 126
          %v6824 = vpop.permute.xlu0 %6823
          %6825 = vrot.lane.b32.xlu0 %v6806, 126
          %v6826 = vpop.permute.xlu0 %6825
          %6827 = vrot.lane.b32.xlu0 %v6807, 126
          %v6828 = vpop.permute.xlu0 %6827
          %6829 = vrot.lane.b32.xlu0 %v6808, 126
          %v6830 = vpop.permute.xlu0 %6829
          %6831 = vrot.lane.b32.xlu0 %v6809, 126
          %v6832 = vpop.permute.xlu0 %6831
          %6833 = vrot.lane.b32.xlu0 %v6810, 126
          %v6834 = vpop.permute.xlu0 %6833
          %6835 = vrot.lane.b32.xlu0 %v6811, 126
          %v6836 = vpop.permute.xlu0 %6835
          %6837 = vrot.lane.b32.xlu0 %v6812, 126
          %v6838 = vpop.permute.xlu0 %6837
          %6839 = vrot.lane.b32.xlu0 %v6813, 126
          %v6840 = vpop.permute.xlu0 %6839
          %v6850 = vadd.f32 %v6793, %v6824
          %v6851 = vadd.f32 %v6794, %v6826
          %v6852 = vadd.f32 %v6795, %v6828
          %v6853 = vadd.f32 %v6796, %v6830
          %v6854 = vadd.f32 %v6797, %v6832
          %v6855 = vadd.f32 %v6798, %v6834
          %v6856 = vadd.f32 %v6799, %v6836
          %v6857 = vadd.f32 %v6800, %v6838
          %v6858 = vadd.f32 %v6801, %v6840
          %s6859 = sadd.s32 %s4236, 7
          %s6860 = smul.u32 %s6859, 9
          %s6861 = sld [smem:[#allocation12 + %s6860]]
          %s6862 = scalar_lea.vmem [#allocation3], 504
          %v6863 = vld [vmem:[%s6862] sm:$0xff]
          %v6864 = vld [vmem:[%s6862 + $0x8] sm:$0xff]
          %v6865 = vld [vmem:[%s6862 + $0x10] sm:$0xff]
          %v6866 = vld [vmem:[%s6862 + $0x18] sm:$0xff]
          %v6867 = vld [vmem:[%s6862 + $0x20] sm:$0xff]
          %v6868 = vld [vmem:[%s6862 + $0x28] sm:$0xff]
          %v6869 = vld [vmem:[%s6862 + $0x30] sm:$0xff]
          %v6870 = vld [vmem:[%s6862 + $0x38] sm:$0xff]
          %v6871 = vld [vmem:[%s6862 + $0x40] sm:$0x3f]
          %v6872 = vstv %s6861
          %v6873 = vmul.f32 %v6872, %v6863
          %v6874 = vmul.f32 %v6872, %v6864
          %v6875 = vmul.f32 %v6872, %v6865
          %v6876 = vmul.f32 %v6872, %v6866
          %v6877 = vmul.f32 %v6872, %v6867
          %v6878 = vmul.f32 %v6872, %v6868
          %v6879 = vmul.f32 %v6872, %v6869
          %v6880 = vmul.f32 %v6872, %v6870
          %v6881 = vmul.f32 %v6872, %v6871
          %v6882 = vadd.f32 %v6850, %v6873
          %v6883 = vadd.f32 %v6851, %v6874
          %v6884 = vadd.f32 %v6852, %v6875
          %v6885 = vadd.f32 %v6853, %v6876
          %v6886 = vadd.f32 %v6854, %v6877
          %v6887 = vadd.f32 %v6855, %v6878
          %v6888 = vadd.f32 %v6856, %v6879
          %v6889 = vadd.f32 %v6857, %v6880
          %v6890 = vadd.f32 %v6858, %v6881
          %s6891 = sadd.s32 %s6860, 1
          %s6892 = sld [smem:[#allocation12 + %s6891]]
          %v6893 = vstv %s6892
          %v6894 = vmul.f32 %v6893, %v6863
          %v6895 = vmul.f32 %v6893, %v6864
          %v6896 = vmul.f32 %v6893, %v6865
          %v6897 = vmul.f32 %v6893, %v6866
          %v6898 = vmul.f32 %v6893, %v6867
          %v6899 = vmul.f32 %v6893, %v6868
          %v6900 = vmul.f32 %v6893, %v6869
          %v6901 = vmul.f32 %v6893, %v6870
          %v6902 = vmul.f32 %v6893, %v6871
          %6912 = vrot.lane.b32.xlu0 %v6894, 127
          %v6913 = vpop.permute.xlu0 %6912
          %6914 = vrot.lane.b32.xlu0 %v6895, 127
          %v6915 = vpop.permute.xlu0 %6914
          %6916 = vrot.lane.b32.xlu0 %v6896, 127
          %v6917 = vpop.permute.xlu0 %6916
          %6918 = vrot.lane.b32.xlu0 %v6897, 127
          %v6919 = vpop.permute.xlu0 %6918
          %6920 = vrot.lane.b32.xlu0 %v6898, 127
          %v6921 = vpop.permute.xlu0 %6920
          %6922 = vrot.lane.b32.xlu0 %v6899, 127
          %v6923 = vpop.permute.xlu0 %6922
          %6924 = vrot.lane.b32.xlu0 %v6900, 127
          %v6925 = vpop.permute.xlu0 %6924
          %6926 = vrot.lane.b32.xlu0 %v6901, 127
          %v6927 = vpop.permute.xlu0 %6926
          %6928 = vrot.lane.b32.xlu0 %v6902, 127
          %v6929 = vpop.permute.xlu0 %6928
          %v6939 = vadd.f32 %v6882, %v6913
          %v6940 = vadd.f32 %v6883, %v6915
          %v6941 = vadd.f32 %v6884, %v6917
          %v6942 = vadd.f32 %v6885, %v6919
          %v6943 = vadd.f32 %v6886, %v6921
          %v6944 = vadd.f32 %v6887, %v6923
          %v6945 = vadd.f32 %v6888, %v6925
          %v6946 = vadd.f32 %v6889, %v6927
          %v6947 = vadd.f32 %v6890, %v6929
          %s6948 = sadd.s32 %s6860, 2
          %s6949 = sld [smem:[#allocation12 + %s6948]]
          %v6950 = vstv %s6949
          %v6951 = vmul.f32 %v6950, %v6863
          %v6952 = vmul.f32 %v6950, %v6864
          %v6953 = vmul.f32 %v6950, %v6865
          %v6954 = vmul.f32 %v6950, %v6866
          %v6955 = vmul.f32 %v6950, %v6867
          %v6956 = vmul.f32 %v6950, %v6868
          %v6957 = vmul.f32 %v6950, %v6869
          %v6958 = vmul.f32 %v6950, %v6870
          %v6959 = vmul.f32 %v6950, %v6871
          %6969 = vrot.lane.b32.xlu0 %v6951, 126
          %v6970 = vpop.permute.xlu0 %6969
          %6971 = vrot.lane.b32.xlu0 %v6952, 126
          %v6972 = vpop.permute.xlu0 %6971
          %6973 = vrot.lane.b32.xlu0 %v6953, 126
          %v6974 = vpop.permute.xlu0 %6973
          %6975 = vrot.lane.b32.xlu0 %v6954, 126
          %v6976 = vpop.permute.xlu0 %6975
          %6977 = vrot.lane.b32.xlu0 %v6955, 126
          %v6978 = vpop.permute.xlu0 %6977
          %6979 = vrot.lane.b32.xlu0 %v6956, 126
          %v6980 = vpop.permute.xlu0 %6979
          %6981 = vrot.lane.b32.xlu0 %v6957, 126
          %v6982 = vpop.permute.xlu0 %6981
          %6983 = vrot.lane.b32.xlu0 %v6958, 126
          %v6984 = vpop.permute.xlu0 %6983
          %6985 = vrot.lane.b32.xlu0 %v6959, 126
          %v6986 = vpop.permute.xlu0 %6985
          %v6996 = vadd.f32 %v6939, %v6970
          %v6997 = vadd.f32 %v6940, %v6972
          %v6998 = vadd.f32 %v6941, %v6974
          %v6999 = vadd.f32 %v6942, %v6976
          %v7000 = vadd.f32 %v6943, %v6978
          %v7001 = vadd.f32 %v6944, %v6980
          %v7002 = vadd.f32 %v6945, %v6982
          %v7003 = vadd.f32 %v6946, %v6984
          %v7004 = vadd.f32 %v6947, %v6986
          %s7005 = smul.u32 %s6859, 3
          %s7006 = sadd.s32 %s7005, 1
          %s7007 = smul.u32 %s7006, 3
          %s7008 = sld [smem:[#allocation12 + %s7007]]
          %v7009 = vld [vmem:[%s6862 + $0x1] sm:$0xff]
          %v7010 = vld [vmem:[%s6862 + $0x9] sm:$0xff]
          %v7011 = vld [vmem:[%s6862 + $0x11] sm:$0xff]
          %v7012 = vld [vmem:[%s6862 + $0x19] sm:$0xff]
          %v7013 = vld [vmem:[%s6862 + $0x21] sm:$0xff]
          %v7014 = vld [vmem:[%s6862 + $0x29] sm:$0xff]
          %v7015 = vld [vmem:[%s6862 + $0x31] sm:$0xff]
          %v7016 = vld [vmem:[%s6862 + $0x39] sm:$0xff]
          %v7017 = vld [vmem:[%s6862 + $0x41] sm:$0x3f]
          %v7018 = vstv %s7008
          %v7019 = vmul.f32 %v7018, %v7009
          %v7020 = vmul.f32 %v7018, %v7010
          %v7021 = vmul.f32 %v7018, %v7011
          %v7022 = vmul.f32 %v7018, %v7012
          %v7023 = vmul.f32 %v7018, %v7013
          %v7024 = vmul.f32 %v7018, %v7014
          %v7025 = vmul.f32 %v7018, %v7015
          %v7026 = vmul.f32 %v7018, %v7016
          %v7027 = vmul.f32 %v7018, %v7017
          %v7028 = vadd.f32 %v6996, %v7019
          %v7029 = vadd.f32 %v6997, %v7020
          %v7030 = vadd.f32 %v6998, %v7021
          %v7031 = vadd.f32 %v6999, %v7022
          %v7032 = vadd.f32 %v7000, %v7023
          %v7033 = vadd.f32 %v7001, %v7024
          %v7034 = vadd.f32 %v7002, %v7025
          %v7035 = vadd.f32 %v7003, %v7026
          %v7036 = vadd.f32 %v7004, %v7027
          %s7037 = sadd.s32 %s7007, 1
          %s7038 = sld [smem:[#allocation12 + %s7037]]
          %v7039 = vstv %s7038
          %v7040 = vmul.f32 %v7039, %v7009
          %v7041 = vmul.f32 %v7039, %v7010
          %v7042 = vmul.f32 %v7039, %v7011
          %v7043 = vmul.f32 %v7039, %v7012
          %v7044 = vmul.f32 %v7039, %v7013
          %v7045 = vmul.f32 %v7039, %v7014
          %v7046 = vmul.f32 %v7039, %v7015
          %v7047 = vmul.f32 %v7039, %v7016
          %v7048 = vmul.f32 %v7039, %v7017
          %7058 = vrot.lane.b32.xlu0 %v7040, 127
          %v7059 = vpop.permute.xlu0 %7058
          %7060 = vrot.lane.b32.xlu0 %v7041, 127
          %v7061 = vpop.permute.xlu0 %7060
          %7062 = vrot.lane.b32.xlu0 %v7042, 127
          %v7063 = vpop.permute.xlu0 %7062
          %7064 = vrot.lane.b32.xlu0 %v7043, 127
          %v7065 = vpop.permute.xlu0 %7064
          %7066 = vrot.lane.b32.xlu0 %v7044, 127
          %v7067 = vpop.permute.xlu0 %7066
          %7068 = vrot.lane.b32.xlu0 %v7045, 127
          %v7069 = vpop.permute.xlu0 %7068
          %7070 = vrot.lane.b32.xlu0 %v7046, 127
          %v7071 = vpop.permute.xlu0 %7070
          %7072 = vrot.lane.b32.xlu0 %v7047, 127
          %v7073 = vpop.permute.xlu0 %7072
          %7074 = vrot.lane.b32.xlu0 %v7048, 127
          %v7075 = vpop.permute.xlu0 %7074
          %v7085 = vadd.f32 %v7028, %v7059
          %v7086 = vadd.f32 %v7029, %v7061
          %v7087 = vadd.f32 %v7030, %v7063
          %v7088 = vadd.f32 %v7031, %v7065
          %v7089 = vadd.f32 %v7032, %v7067
          %v7090 = vadd.f32 %v7033, %v7069
          %v7091 = vadd.f32 %v7034, %v7071
          %v7092 = vadd.f32 %v7035, %v7073
          %v7093 = vadd.f32 %v7036, %v7075
          %s7094 = sadd.s32 %s7007, 2
          %s7095 = sld [smem:[#allocation12 + %s7094]]
          %v7096 = vstv %s7095
          %v7097 = vmul.f32 %v7096, %v7009
          %v7098 = vmul.f32 %v7096, %v7010
          %v7099 = vmul.f32 %v7096, %v7011
          %v7100 = vmul.f32 %v7096, %v7012
          %v7101 = vmul.f32 %v7096, %v7013
          %v7102 = vmul.f32 %v7096, %v7014
          %v7103 = vmul.f32 %v7096, %v7015
          %v7104 = vmul.f32 %v7096, %v7016
          %v7105 = vmul.f32 %v7096, %v7017
          %7115 = vrot.lane.b32.xlu0 %v7097, 126
          %v7116 = vpop.permute.xlu0 %7115
          %7117 = vrot.lane.b32.xlu0 %v7098, 126
          %v7118 = vpop.permute.xlu0 %7117
          %7119 = vrot.lane.b32.xlu0 %v7099, 126
          %v7120 = vpop.permute.xlu0 %7119
          %7121 = vrot.lane.b32.xlu0 %v7100, 126
          %v7122 = vpop.permute.xlu0 %7121
          %7123 = vrot.lane.b32.xlu0 %v7101, 126
          %v7124 = vpop.permute.xlu0 %7123
          %7125 = vrot.lane.b32.xlu0 %v7102, 126
          %v7126 = vpop.permute.xlu0 %7125
          %7127 = vrot.lane.b32.xlu0 %v7103, 126
          %v7128 = vpop.permute.xlu0 %7127
          %7129 = vrot.lane.b32.xlu0 %v7104, 126
          %v7130 = vpop.permute.xlu0 %7129
          %7131 = vrot.lane.b32.xlu0 %v7105, 126
          %v7132 = vpop.permute.xlu0 %7131
          %v7142 = vadd.f32 %v7085, %v7116
          %v7143 = vadd.f32 %v7086, %v7118
          %v7144 = vadd.f32 %v7087, %v7120
          %v7145 = vadd.f32 %v7088, %v7122
          %v7146 = vadd.f32 %v7089, %v7124
          %v7147 = vadd.f32 %v7090, %v7126
          %v7148 = vadd.f32 %v7091, %v7128
          %v7149 = vadd.f32 %v7092, %v7130
          %v7150 = vadd.f32 %v7093, %v7132
          %s7151 = sadd.s32 %s7005, 2
          %s7152 = smul.u32 %s7151, 3
          %s7153 = sld [smem:[#allocation12 + %s7152]]
          %v7154 = vld [vmem:[%s6862 + $0x2] sm:$0xff]
          %v7155 = vld [vmem:[%s6862 + $0xa] sm:$0xff]
          %v7156 = vld [vmem:[%s6862 + $0x12] sm:$0xff]
          %v7157 = vld [vmem:[%s6862 + $0x1a] sm:$0xff]
          %v7158 = vld [vmem:[%s6862 + $0x22] sm:$0xff]
          %v7159 = vld [vmem:[%s6862 + $0x2a] sm:$0xff]
          %v7160 = vld [vmem:[%s6862 + $0x32] sm:$0xff]
          %v7161 = vld [vmem:[%s6862 + $0x3a] sm:$0xff]
          %v7162 = vld [vmem:[%s6862 + $0x42] sm:$0x3f]
          %v7163 = vstv %s7153
          %v7164 = vmul.f32 %v7163, %v7154
          %v7165 = vmul.f32 %v7163, %v7155
          %v7166 = vmul.f32 %v7163, %v7156
          %v7167 = vmul.f32 %v7163, %v7157
          %v7168 = vmul.f32 %v7163, %v7158
          %v7169 = vmul.f32 %v7163, %v7159
          %v7170 = vmul.f32 %v7163, %v7160
          %v7171 = vmul.f32 %v7163, %v7161
          %v7172 = vmul.f32 %v7163, %v7162
          %v7173 = vadd.f32 %v7142, %v7164
          %v7174 = vadd.f32 %v7143, %v7165
          %v7175 = vadd.f32 %v7144, %v7166
          %v7176 = vadd.f32 %v7145, %v7167
          %v7177 = vadd.f32 %v7146, %v7168
          %v7178 = vadd.f32 %v7147, %v7169
          %v7179 = vadd.f32 %v7148, %v7170
          %v7180 = vadd.f32 %v7149, %v7171
          %v7181 = vadd.f32 %v7150, %v7172
          %s7182 = sadd.s32 %s7152, 1
          %s7183 = sld [smem:[#allocation12 + %s7182]]
          %v7184 = vstv %s7183
          %v7185 = vmul.f32 %v7184, %v7154
          %v7186 = vmul.f32 %v7184, %v7155
          %v7187 = vmul.f32 %v7184, %v7156
          %v7188 = vmul.f32 %v7184, %v7157
          %v7189 = vmul.f32 %v7184, %v7158
          %v7190 = vmul.f32 %v7184, %v7159
          %v7191 = vmul.f32 %v7184, %v7160
          %v7192 = vmul.f32 %v7184, %v7161
          %v7193 = vmul.f32 %v7184, %v7162
          %7203 = vrot.lane.b32.xlu0 %v7185, 127
          %v7204 = vpop.permute.xlu0 %7203
          %7205 = vrot.lane.b32.xlu0 %v7186, 127
          %v7206 = vpop.permute.xlu0 %7205
          %7207 = vrot.lane.b32.xlu0 %v7187, 127
          %v7208 = vpop.permute.xlu0 %7207
          %7209 = vrot.lane.b32.xlu0 %v7188, 127
          %v7210 = vpop.permute.xlu0 %7209
          %7211 = vrot.lane.b32.xlu0 %v7189, 127
          %v7212 = vpop.permute.xlu0 %7211
          %7213 = vrot.lane.b32.xlu0 %v7190, 127
          %v7214 = vpop.permute.xlu0 %7213
          %7215 = vrot.lane.b32.xlu0 %v7191, 127
          %v7216 = vpop.permute.xlu0 %7215
          %7217 = vrot.lane.b32.xlu0 %v7192, 127
          %v7218 = vpop.permute.xlu0 %7217
          %7219 = vrot.lane.b32.xlu0 %v7193, 127
          %v7220 = vpop.permute.xlu0 %7219
          %v7230 = vadd.f32 %v7173, %v7204
          %v7231 = vadd.f32 %v7174, %v7206
          %v7232 = vadd.f32 %v7175, %v7208
          %v7233 = vadd.f32 %v7176, %v7210
          %v7234 = vadd.f32 %v7177, %v7212
          %v7235 = vadd.f32 %v7178, %v7214
          %v7236 = vadd.f32 %v7179, %v7216
          %v7237 = vadd.f32 %v7180, %v7218
          %v7238 = vadd.f32 %v7181, %v7220
          %s7239 = sadd.s32 %s7152, 2
          %s7240 = sld [smem:[#allocation12 + %s7239]]
          %v7241 = vstv %s7240
          %v7242 = vmul.f32 %v7241, %v7154
          %v7243 = vmul.f32 %v7241, %v7155
          %v7244 = vmul.f32 %v7241, %v7156
          %v7245 = vmul.f32 %v7241, %v7157
          %v7246 = vmul.f32 %v7241, %v7158
          %v7247 = vmul.f32 %v7241, %v7159
          %v7248 = vmul.f32 %v7241, %v7160
          %v7249 = vmul.f32 %v7241, %v7161
          %v7250 = vmul.f32 %v7241, %v7162
          %7260 = vrot.lane.b32.xlu0 %v7242, 126
          %v7261 = vpop.permute.xlu0 %7260
          %7262 = vrot.lane.b32.xlu0 %v7243, 126
          %v7263 = vpop.permute.xlu0 %7262
          %7264 = vrot.lane.b32.xlu0 %v7244, 126
          %v7265 = vpop.permute.xlu0 %7264
          %7266 = vrot.lane.b32.xlu0 %v7245, 126
          %v7267 = vpop.permute.xlu0 %7266
          %7268 = vrot.lane.b32.xlu0 %v7246, 126
          %v7269 = vpop.permute.xlu0 %7268
          %7270 = vrot.lane.b32.xlu0 %v7247, 126
          %v7271 = vpop.permute.xlu0 %7270
          %7272 = vrot.lane.b32.xlu0 %v7248, 126
          %v7273 = vpop.permute.xlu0 %7272
          %7274 = vrot.lane.b32.xlu0 %v7249, 126
          %v7275 = vpop.permute.xlu0 %7274
          %7276 = vrot.lane.b32.xlu0 %v7250, 126
          %v7277 = vpop.permute.xlu0 %7276
          %v7287 = vadd.f32 %v7230, %v7261
          %v7288 = vadd.f32 %v7231, %v7263
          %v7289 = vadd.f32 %v7232, %v7265
          %v7290 = vadd.f32 %v7233, %v7267
          %v7291 = vadd.f32 %v7234, %v7269
          %v7292 = vadd.f32 %v7235, %v7271
          %v7293 = vadd.f32 %v7236, %v7273
          %v7294 = vadd.f32 %v7237, %v7275
          %v7295 = vadd.f32 %v7238, %v7277
          %v7296 = vmax.f32 %v7287, 0.0
          %v7297 = vmax.f32 %v7288, 0.0
          %v7298 = vmax.f32 %v7289, 0.0
          %v7299 = vmax.f32 %v7290, 0.0
          %v7300 = vmax.f32 %v7291, 0.0
          %v7301 = vmax.f32 %v7292, 0.0
          %v7302 = vmax.f32 %v7293, 0.0
          %v7303 = vmax.f32 %v7294, 0.0
          %v7304 = vmax.f32 %v7295, 0.0
          %s7305 = scalar_lea.vmem %s7, %s3801
          %v7306 = vld [vmem:[%s7305] sm:$0xff]
          %v7307 = vld [vmem:[%s7305 + $0x8] sm:$0xff]
          %v7308 = vld [vmem:[%s7305 + $0x10] sm:$0xff]
          %v7309 = vld [vmem:[%s7305 + $0x18] sm:$0xff]
          %v7310 = vld [vmem:[%s7305 + $0x20] sm:$0xff]
          %v7311 = vld [vmem:[%s7305 + $0x28] sm:$0xff]
          %v7312 = vld [vmem:[%s7305 + $0x30] sm:$0xff]
          %v7313 = vld [vmem:[%s7305 + $0x38] sm:$0xff]
          %v7314 = vld [vmem:[%s7305 + $0x40] sm:$0x3f]
          %v7315 = vmul.f32 %v7296, %v7306
          %v7316 = vmul.f32 %v7297, %v7307
          %v7317 = vmul.f32 %v7298, %v7308
          %v7318 = vmul.f32 %v7299, %v7309
          %v7319 = vmul.f32 %v7300, %v7310
          %v7320 = vmul.f32 %v7301, %v7311
          %v7321 = vmul.f32 %v7302, %v7312
          %v7322 = vmul.f32 %v7303, %v7313
          %v7323 = vmul.f32 %v7304, %v7314
          %vm7324 = vcmask 818176
          %v7325 = vsel %vm7324, %v7315, 0.0
          %7326 = vadd.xlane.f32.xlu0 %v7325
          %v7327 = vpop.xlane.xlu0 %7326
          %v7328 = vsel %vm7324, %v7316, 0.0
          %7329 = vadd.xlane.f32.xlu0 %v7328
          %v7330 = vpop.xlane.xlu0 %7329
          %v7331 = vsel %vm7324, %v7317, 0.0
          %7332 = vadd.xlane.f32.xlu0 %v7331
          %v7333 = vpop.xlane.xlu0 %7332
          %v7334 = vsel %vm7324, %v7318, 0.0
          %7335 = vadd.xlane.f32.xlu0 %v7334
          %v7336 = vpop.xlane.xlu0 %7335
          %v7337 = vsel %vm7324, %v7319, 0.0
          %7338 = vadd.xlane.f32.xlu0 %v7337
          %v7339 = vpop.xlane.xlu0 %7338
          %v7340 = vsel %vm7324, %v7320, 0.0
          %7341 = vadd.xlane.f32.xlu0 %v7340
          %v7342 = vpop.xlane.xlu0 %7341
          %v7343 = vsel %vm7324, %v7321, 0.0
          %7344 = vadd.xlane.f32.xlu0 %v7343
          %v7345 = vpop.xlane.xlu0 %7344
          %v7346 = vsel %vm7324, %v7322, 0.0
          %7347 = vadd.xlane.f32.xlu0 %v7346
          %v7348 = vpop.xlane.xlu0 %7347
          %vm7349 = vcmask 816128
          %v7350 = vsel %vm7349, %v7323, 0.0
          %7351 = vadd.xlane.f32.xlu0 %v7350
          %v7352 = vpop.xlane.xlu0 %7351
          %v7353 = vadd.f32 %v7327, %v7330
          %v7354 = vadd.f32 %v7353, %v7333
          %v7355 = vadd.f32 %v7354, %v7336
          %v7356 = vadd.f32 %v7355, %v7339
          %v7357 = vadd.f32 %v7356, %v7342
          %v7358 = vadd.f32 %v7357, %v7345
          %v7359 = vadd.f32 %v7358, %v7348
          %vm7360 = vcmask 1045504
          %v7361 = vsel %vm7360, %v7352, 0.0
          %v7362 = vadd.f32 %v7359, %v7361
          %v7363 = vrot.slane %v7362, 4
          %v7364 = vadd.f32 %v7362, %v7363
          %v7365 = vrot.slane %v7364, 2
          %v7366 = vadd.f32 %v7364, %v7365
          %v7367 = vrot.slane %v7366, 1
          %v7368 = vadd.f32 %v7366, %v7367
          %vm7369 = vcmp.eq.s32.totalorder %v419, 0
          %v7370 = vsel %vm7369, %v7368, 0.0
          %v7371 = vadd.f32 %v3798, %v7370
          %s7372 = sadd.s32 %s3801, 288
          %s7373 = scalar_lea.vmem %s7, %s7372
          %v7374 = vld [vmem:[%s7373] sm:$0xff]
          %v7375 = vld [vmem:[%s7373 + $0x8] sm:$0xff]
          %v7376 = vld [vmem:[%s7373 + $0x10] sm:$0xff]
          %v7377 = vld [vmem:[%s7373 + $0x18] sm:$0xff]
          %v7378 = vld [vmem:[%s7373 + $0x20] sm:$0xff]
          %v7379 = vld [vmem:[%s7373 + $0x28] sm:$0xff]
          %v7380 = vld [vmem:[%s7373 + $0x30] sm:$0xff]
          %v7381 = vld [vmem:[%s7373 + $0x38] sm:$0xff]
          %v7382 = vld [vmem:[%s7373 + $0x40] sm:$0x3f]
          %v7383 = vmul.f32 %v7296, %v7374
          %v7384 = vmul.f32 %v7297, %v7375
          %v7385 = vmul.f32 %v7298, %v7376
          %v7386 = vmul.f32 %v7299, %v7377
          %v7387 = vmul.f32 %v7300, %v7378
          %v7388 = vmul.f32 %v7301, %v7379
          %v7389 = vmul.f32 %v7302, %v7380
          %v7390 = vmul.f32 %v7303, %v7381
          %v7391 = vmul.f32 %v7304, %v7382
          %v7392 = vsel %vm7324, %v7383, 0.0
          %7393 = vadd.xlane.f32.xlu0 %v7392
          %v7394 = vpop.xlane.xlu0 %7393
          %v7395 = vsel %vm7324, %v7384, 0.0
          %7396 = vadd.xlane.f32.xlu0 %v7395
          %v7397 = vpop.xlane.xlu0 %7396
          %v7398 = vsel %vm7324, %v7385, 0.0
          %7399 = vadd.xlane.f32.xlu0 %v7398
          %v7400 = vpop.xlane.xlu0 %7399
          %v7401 = vsel %vm7324, %v7386, 0.0
          %7402 = vadd.xlane.f32.xlu0 %v7401
          %v7403 = vpop.xlane.xlu0 %7402
          %v7404 = vsel %vm7324, %v7387, 0.0
          %7405 = vadd.xlane.f32.xlu0 %v7404
          %v7406 = vpop.xlane.xlu0 %7405
          %v7407 = vsel %vm7324, %v7388, 0.0
          %7408 = vadd.xlane.f32.xlu0 %v7407
          %v7409 = vpop.xlane.xlu0 %7408
          %v7410 = vsel %vm7324, %v7389, 0.0
          %7411 = vadd.xlane.f32.xlu0 %v7410
          %v7412 = vpop.xlane.xlu0 %7411
          %v7413 = vsel %vm7324, %v7390, 0.0
          %7414 = vadd.xlane.f32.xlu0 %v7413
          %v7415 = vpop.xlane.xlu0 %7414
          %v7416 = vsel %vm7349, %v7391, 0.0
          %7417 = vadd.xlane.f32.xlu0 %v7416
          %v7418 = vpop.xlane.xlu0 %7417
          %v7419 = vadd.f32 %v7394, %v7397
          %v7420 = vadd.f32 %v7419, %v7400
          %v7421 = vadd.f32 %v7420, %v7403
          %v7422 = vadd.f32 %v7421, %v7406
          %v7423 = vadd.f32 %v7422, %v7409
          %v7424 = vadd.f32 %v7423, %v7412
          %v7425 = vadd.f32 %v7424, %v7415
          %v7426 = vsel %vm7360, %v7418, 0.0
          %v7427 = vadd.f32 %v7425, %v7426
          %v7428 = vrot.slane %v7427, 4
          %v7429 = vadd.f32 %v7427, %v7428
          %v7430 = vrot.slane %v7429, 2
          %v7431 = vadd.f32 %v7429, %v7430
          %v7432 = vrot.slane %v7431, 1
          %v7433 = vadd.f32 %v7431, %v7432
          %vm7434 = vcmp.eq.s32.totalorder %v419, 1
          %v7435 = vsel %vm7434, %v7433, 0.0
          %v7436 = vadd.f32 %v7371, %v7435
          %s7437 = sadd.s32 %s3801, 576
          %s7438 = scalar_lea.vmem %s7, %s7437
          %v7439 = vld [vmem:[%s7438] sm:$0xff]
          %v7440 = vld [vmem:[%s7438 + $0x8] sm:$0xff]
          %v7441 = vld [vmem:[%s7438 + $0x10] sm:$0xff]
          %v7442 = vld [vmem:[%s7438 + $0x18] sm:$0xff]
          %v7443 = vld [vmem:[%s7438 + $0x20] sm:$0xff]
          %v7444 = vld [vmem:[%s7438 + $0x28] sm:$0xff]
          %v7445 = vld [vmem:[%s7438 + $0x30] sm:$0xff]
          %v7446 = vld [vmem:[%s7438 + $0x38] sm:$0xff]
          %v7447 = vld [vmem:[%s7438 + $0x40] sm:$0x3f]
          %v7448 = vmul.f32 %v7296, %v7439
          %v7449 = vmul.f32 %v7297, %v7440
          %v7450 = vmul.f32 %v7298, %v7441
          %v7451 = vmul.f32 %v7299, %v7442
          %v7452 = vmul.f32 %v7300, %v7443
          %v7453 = vmul.f32 %v7301, %v7444
          %v7454 = vmul.f32 %v7302, %v7445
          %v7455 = vmul.f32 %v7303, %v7446
          %v7456 = vmul.f32 %v7304, %v7447
          %v7457 = vsel %vm7324, %v7448, 0.0
          %7458 = vadd.xlane.f32.xlu0 %v7457
          %v7459 = vpop.xlane.xlu0 %7458
          %v7460 = vsel %vm7324, %v7449, 0.0
          %7461 = vadd.xlane.f32.xlu0 %v7460
          %v7462 = vpop.xlane.xlu0 %7461
          %v7463 = vsel %vm7324, %v7450, 0.0
          %7464 = vadd.xlane.f32.xlu0 %v7463
          %v7465 = vpop.xlane.xlu0 %7464
          %v7466 = vsel %vm7324, %v7451, 0.0
          %7467 = vadd.xlane.f32.xlu0 %v7466
          %v7468 = vpop.xlane.xlu0 %7467
          %v7469 = vsel %vm7324, %v7452, 0.0
          %7470 = vadd.xlane.f32.xlu0 %v7469
          %v7471 = vpop.xlane.xlu0 %7470
          %v7472 = vsel %vm7324, %v7453, 0.0
          %7473 = vadd.xlane.f32.xlu0 %v7472
          %v7474 = vpop.xlane.xlu0 %7473
          %v7475 = vsel %vm7324, %v7454, 0.0
          %7476 = vadd.xlane.f32.xlu0 %v7475
          %v7477 = vpop.xlane.xlu0 %7476
          %v7478 = vsel %vm7324, %v7455, 0.0
          %7479 = vadd.xlane.f32.xlu0 %v7478
          %v7480 = vpop.xlane.xlu0 %7479
          %v7481 = vsel %vm7349, %v7456, 0.0
          %7482 = vadd.xlane.f32.xlu0 %v7481
          %v7483 = vpop.xlane.xlu0 %7482
          %v7484 = vadd.f32 %v7459, %v7462
          %v7485 = vadd.f32 %v7484, %v7465
          %v7486 = vadd.f32 %v7485, %v7468
          %v7487 = vadd.f32 %v7486, %v7471
          %v7488 = vadd.f32 %v7487, %v7474
          %v7489 = vadd.f32 %v7488, %v7477
          %v7490 = vadd.f32 %v7489, %v7480
          %v7491 = vsel %vm7360, %v7483, 0.0
          %v7492 = vadd.f32 %v7490, %v7491
          %v7493 = vrot.slane %v7492, 4
          %v7494 = vadd.f32 %v7492, %v7493
          %v7495 = vrot.slane %v7494, 2
          %v7496 = vadd.f32 %v7494, %v7495
          %v7497 = vrot.slane %v7496, 1
          %v7498 = vadd.f32 %v7496, %v7497
          %vm7499 = vcmp.eq.s32.totalorder %v419, 2
          %v7500 = vsel %vm7499, %v7498, 0.0
          %v7501 = vadd.f32 %v7436, %v7500
          %s7502 = sadd.s32 %s3801, 864
          %s7503 = scalar_lea.vmem %s7, %s7502
          %v7504 = vld [vmem:[%s7503] sm:$0xff]
          %v7505 = vld [vmem:[%s7503 + $0x8] sm:$0xff]
          %v7506 = vld [vmem:[%s7503 + $0x10] sm:$0xff]
          %v7507 = vld [vmem:[%s7503 + $0x18] sm:$0xff]
          %v7508 = vld [vmem:[%s7503 + $0x20] sm:$0xff]
          %v7509 = vld [vmem:[%s7503 + $0x28] sm:$0xff]
          %v7510 = vld [vmem:[%s7503 + $0x30] sm:$0xff]
          %v7511 = vld [vmem:[%s7503 + $0x38] sm:$0xff]
          %v7512 = vld [vmem:[%s7503 + $0x40] sm:$0x3f]
          %v7513 = vmul.f32 %v7296, %v7504
          %v7514 = vmul.f32 %v7297, %v7505
          %v7515 = vmul.f32 %v7298, %v7506
          %v7516 = vmul.f32 %v7299, %v7507
          %v7517 = vmul.f32 %v7300, %v7508
          %v7518 = vmul.f32 %v7301, %v7509
          %v7519 = vmul.f32 %v7302, %v7510
          %v7520 = vmul.f32 %v7303, %v7511
          %v7521 = vmul.f32 %v7304, %v7512
          %v7522 = vsel %vm7324, %v7513, 0.0
          %7523 = vadd.xlane.f32.xlu0 %v7522
          %v7524 = vpop.xlane.xlu0 %7523
          %v7525 = vsel %vm7324, %v7514, 0.0
          %7526 = vadd.xlane.f32.xlu0 %v7525
          %v7527 = vpop.xlane.xlu0 %7526
          %v7528 = vsel %vm7324, %v7515, 0.0
          %7529 = vadd.xlane.f32.xlu0 %v7528
          %v7530 = vpop.xlane.xlu0 %7529
          %v7531 = vsel %vm7324, %v7516, 0.0
          %7532 = vadd.xlane.f32.xlu0 %v7531
          %v7533 = vpop.xlane.xlu0 %7532
          %v7534 = vsel %vm7324, %v7517, 0.0
          %7535 = vadd.xlane.f32.xlu0 %v7534
          %v7536 = vpop.xlane.xlu0 %7535
          %v7537 = vsel %vm7324, %v7518, 0.0
          %7538 = vadd.xlane.f32.xlu0 %v7537
          %v7539 = vpop.xlane.xlu0 %7538
          %v7540 = vsel %vm7324, %v7519, 0.0
          %7541 = vadd.xlane.f32.xlu0 %v7540
          %v7542 = vpop.xlane.xlu0 %7541
          %v7543 = vsel %vm7324, %v7520, 0.0
          %7544 = vadd.xlane.f32.xlu0 %v7543
          %v7545 = vpop.xlane.xlu0 %7544
          %v7546 = vsel %vm7349, %v7521, 0.0
          %7547 = vadd.xlane.f32.xlu0 %v7546
          %v7548 = vpop.xlane.xlu0 %7547
          %v7549 = vadd.f32 %v7524, %v7527
          %v7550 = vadd.f32 %v7549, %v7530
          %v7551 = vadd.f32 %v7550, %v7533
          %v7552 = vadd.f32 %v7551, %v7536
          %v7553 = vadd.f32 %v7552, %v7539
          %v7554 = vadd.f32 %v7553, %v7542
          %v7555 = vadd.f32 %v7554, %v7545
          %v7556 = vsel %vm7360, %v7548, 0.0
          %v7557 = vadd.f32 %v7555, %v7556
          %v7558 = vrot.slane %v7557, 4
          %v7559 = vadd.f32 %v7557, %v7558
          %v7560 = vrot.slane %v7559, 2
          %v7561 = vadd.f32 %v7559, %v7560
          %v7562 = vrot.slane %v7561, 1
          %v7563 = vadd.f32 %v7561, %v7562
          %vm7564 = vcmp.eq.s32.totalorder %v419, 3
          %v7565 = vsel %vm7564, %v7563, 0.0
          %v7566 = vadd.f32 %v7501, %v7565
          %s7567 = sadd.s32 %s3801, 1152
          %s7568 = scalar_lea.vmem %s7, %s7567
          %v7569 = vld [vmem:[%s7568] sm:$0xff]
          %v7570 = vld [vmem:[%s7568 + $0x8] sm:$0xff]
          %v7571 = vld [vmem:[%s7568 + $0x10] sm:$0xff]
          %v7572 = vld [vmem:[%s7568 + $0x18] sm:$0xff]
          %v7573 = vld [vmem:[%s7568 + $0x20] sm:$0xff]
          %v7574 = vld [vmem:[%s7568 + $0x28] sm:$0xff]
          %v7575 = vld [vmem:[%s7568 + $0x30] sm:$0xff]
          %v7576 = vld [vmem:[%s7568 + $0x38] sm:$0xff]
          %v7577 = vld [vmem:[%s7568 + $0x40] sm:$0x3f]
          %v7578 = vmul.f32 %v7296, %v7569
          %v7579 = vmul.f32 %v7297, %v7570
          %v7580 = vmul.f32 %v7298, %v7571
          %v7581 = vmul.f32 %v7299, %v7572
          %v7582 = vmul.f32 %v7300, %v7573
          %v7583 = vmul.f32 %v7301, %v7574
          %v7584 = vmul.f32 %v7302, %v7575
          %v7585 = vmul.f32 %v7303, %v7576
          %v7586 = vmul.f32 %v7304, %v7577
          %v7587 = vsel %vm7324, %v7578, 0.0
          %7588 = vadd.xlane.f32.xlu0 %v7587
          %v7589 = vpop.xlane.xlu0 %7588
          %v7590 = vsel %vm7324, %v7579, 0.0
          %7591 = vadd.xlane.f32.xlu0 %v7590
          %v7592 = vpop.xlane.xlu0 %7591
          %v7593 = vsel %vm7324, %v7580, 0.0
          %7594 = vadd.xlane.f32.xlu0 %v7593
          %v7595 = vpop.xlane.xlu0 %7594
          %v7596 = vsel %vm7324, %v7581, 0.0
          %7597 = vadd.xlane.f32.xlu0 %v7596
          %v7598 = vpop.xlane.xlu0 %7597
          %v7599 = vsel %vm7324, %v7582, 0.0
          %7600 = vadd.xlane.f32.xlu0 %v7599
          %v7601 = vpop.xlane.xlu0 %7600
          %v7602 = vsel %vm7324, %v7583, 0.0
          %7603 = vadd.xlane.f32.xlu0 %v7602
          %v7604 = vpop.xlane.xlu0 %7603
          %v7605 = vsel %vm7324, %v7584, 0.0
          %7606 = vadd.xlane.f32.xlu0 %v7605
          %v7607 = vpop.xlane.xlu0 %7606
          %v7608 = vsel %vm7324, %v7585, 0.0
          %7609 = vadd.xlane.f32.xlu0 %v7608
          %v7610 = vpop.xlane.xlu0 %7609
          %v7611 = vsel %vm7349, %v7586, 0.0
          %7612 = vadd.xlane.f32.xlu0 %v7611
          %v7613 = vpop.xlane.xlu0 %7612
          %v7614 = vadd.f32 %v7589, %v7592
          %v7615 = vadd.f32 %v7614, %v7595
          %v7616 = vadd.f32 %v7615, %v7598
          %v7617 = vadd.f32 %v7616, %v7601
          %v7618 = vadd.f32 %v7617, %v7604
          %v7619 = vadd.f32 %v7618, %v7607
          %v7620 = vadd.f32 %v7619, %v7610
          %v7621 = vsel %vm7360, %v7613, 0.0
          %v7622 = vadd.f32 %v7620, %v7621
          %v7623 = vrot.slane %v7622, 4
          %v7624 = vadd.f32 %v7622, %v7623
          %v7625 = vrot.slane %v7624, 2
          %v7626 = vadd.f32 %v7624, %v7625
          %v7627 = vrot.slane %v7626, 1
          %v7628 = vadd.f32 %v7626, %v7627
          %vm7629 = vcmp.eq.s32.totalorder %v419, 4
          %v7630 = vsel %vm7629, %v7628, 0.0
          %v7631 = vadd.f32 %v7566, %v7630
          %s7632 = sadd.s32 %s3801, 1440
          %s7633 = scalar_lea.vmem %s7, %s7632
          %v7634 = vld [vmem:[%s7633] sm:$0xff]
          %v7635 = vld [vmem:[%s7633 + $0x8] sm:$0xff]
          %v7636 = vld [vmem:[%s7633 + $0x10] sm:$0xff]
          %v7637 = vld [vmem:[%s7633 + $0x18] sm:$0xff]
          %v7638 = vld [vmem:[%s7633 + $0x20] sm:$0xff]
          %v7639 = vld [vmem:[%s7633 + $0x28] sm:$0xff]
          %v7640 = vld [vmem:[%s7633 + $0x30] sm:$0xff]
          %v7641 = vld [vmem:[%s7633 + $0x38] sm:$0xff]
          %v7642 = vld [vmem:[%s7633 + $0x40] sm:$0x3f]
          %v7643 = vmul.f32 %v7296, %v7634
          %v7644 = vmul.f32 %v7297, %v7635
          %v7645 = vmul.f32 %v7298, %v7636
          %v7646 = vmul.f32 %v7299, %v7637
          %v7647 = vmul.f32 %v7300, %v7638
          %v7648 = vmul.f32 %v7301, %v7639
          %v7649 = vmul.f32 %v7302, %v7640
          %v7650 = vmul.f32 %v7303, %v7641
          %v7651 = vmul.f32 %v7304, %v7642
          %v7652 = vsel %vm7324, %v7643, 0.0
          %7653 = vadd.xlane.f32.xlu0 %v7652
          %v7654 = vpop.xlane.xlu0 %7653
          %v7655 = vsel %vm7324, %v7644, 0.0
          %7656 = vadd.xlane.f32.xlu0 %v7655
          %v7657 = vpop.xlane.xlu0 %7656
          %v7658 = vsel %vm7324, %v7645, 0.0
          %7659 = vadd.xlane.f32.xlu0 %v7658
          %v7660 = vpop.xlane.xlu0 %7659
          %v7661 = vsel %vm7324, %v7646, 0.0
          %7662 = vadd.xlane.f32.xlu0 %v7661
          %v7663 = vpop.xlane.xlu0 %7662
          %v7664 = vsel %vm7324, %v7647, 0.0
          %7665 = vadd.xlane.f32.xlu0 %v7664
          %v7666 = vpop.xlane.xlu0 %7665
          %v7667 = vsel %vm7324, %v7648, 0.0
          %7668 = vadd.xlane.f32.xlu0 %v7667
          %v7669 = vpop.xlane.xlu0 %7668
          %v7670 = vsel %vm7324, %v7649, 0.0
          %7671 = vadd.xlane.f32.xlu0 %v7670
          %v7672 = vpop.xlane.xlu0 %7671
          %v7673 = vsel %vm7324, %v7650, 0.0
          %7674 = vadd.xlane.f32.xlu0 %v7673
          %v7675 = vpop.xlane.xlu0 %7674
          %v7676 = vsel %vm7349, %v7651, 0.0
          %7677 = vadd.xlane.f32.xlu0 %v7676
          %v7678 = vpop.xlane.xlu0 %7677
          %v7679 = vadd.f32 %v7654, %v7657
          %v7680 = vadd.f32 %v7679, %v7660
          %v7681 = vadd.f32 %v7680, %v7663
          %v7682 = vadd.f32 %v7681, %v7666
          %v7683 = vadd.f32 %v7682, %v7669
          %v7684 = vadd.f32 %v7683, %v7672
          %v7685 = vadd.f32 %v7684, %v7675
          %v7686 = vsel %vm7360, %v7678, 0.0
          %v7687 = vadd.f32 %v7685, %v7686
          %v7688 = vrot.slane %v7687, 4
          %v7689 = vadd.f32 %v7687, %v7688
          %v7690 = vrot.slane %v7689, 2
          %v7691 = vadd.f32 %v7689, %v7690
          %v7692 = vrot.slane %v7691, 1
          %v7693 = vadd.f32 %v7691, %v7692
          %vm7694 = vcmp.eq.s32.totalorder %v419, 5
          %v7695 = vsel %vm7694, %v7693, 0.0
          %v7696 = vadd.f32 %v7631, %v7695
          %s7697 = sadd.s32 %s3801, 1728
          %s7698 = scalar_lea.vmem %s7, %s7697
          %v7699 = vld [vmem:[%s7698] sm:$0xff]
          %v7700 = vld [vmem:[%s7698 + $0x8] sm:$0xff]
          %v7701 = vld [vmem:[%s7698 + $0x10] sm:$0xff]
          %v7702 = vld [vmem:[%s7698 + $0x18] sm:$0xff]
          %v7703 = vld [vmem:[%s7698 + $0x20] sm:$0xff]
          %v7704 = vld [vmem:[%s7698 + $0x28] sm:$0xff]
          %v7705 = vld [vmem:[%s7698 + $0x30] sm:$0xff]
          %v7706 = vld [vmem:[%s7698 + $0x38] sm:$0xff]
          %v7707 = vld [vmem:[%s7698 + $0x40] sm:$0x3f]
          %v7708 = vmul.f32 %v7296, %v7699
          %v7709 = vmul.f32 %v7297, %v7700
          %v7710 = vmul.f32 %v7298, %v7701
          %v7711 = vmul.f32 %v7299, %v7702
          %v7712 = vmul.f32 %v7300, %v7703
          %v7713 = vmul.f32 %v7301, %v7704
          %v7714 = vmul.f32 %v7302, %v7705
          %v7715 = vmul.f32 %v7303, %v7706
          %v7716 = vmul.f32 %v7304, %v7707
          %v7717 = vsel %vm7324, %v7708, 0.0
          %7718 = vadd.xlane.f32.xlu0 %v7717
          %v7719 = vpop.xlane.xlu0 %7718
          %v7720 = vsel %vm7324, %v7709, 0.0
          %7721 = vadd.xlane.f32.xlu0 %v7720
          %v7722 = vpop.xlane.xlu0 %7721
          %v7723 = vsel %vm7324, %v7710, 0.0
          %7724 = vadd.xlane.f32.xlu0 %v7723
          %v7725 = vpop.xlane.xlu0 %7724
          %v7726 = vsel %vm7324, %v7711, 0.0
          %7727 = vadd.xlane.f32.xlu0 %v7726
          %v7728 = vpop.xlane.xlu0 %7727
          %v7729 = vsel %vm7324, %v7712, 0.0
          %7730 = vadd.xlane.f32.xlu0 %v7729
          %v7731 = vpop.xlane.xlu0 %7730
          %v7732 = vsel %vm7324, %v7713, 0.0
          %7733 = vadd.xlane.f32.xlu0 %v7732
          %v7734 = vpop.xlane.xlu0 %7733
          %v7735 = vsel %vm7324, %v7714, 0.0
          %7736 = vadd.xlane.f32.xlu0 %v7735
          %v7737 = vpop.xlane.xlu0 %7736
          %v7738 = vsel %vm7324, %v7715, 0.0
          %7739 = vadd.xlane.f32.xlu0 %v7738
          %v7740 = vpop.xlane.xlu0 %7739
          %v7741 = vsel %vm7349, %v7716, 0.0
          %7742 = vadd.xlane.f32.xlu0 %v7741
          %v7743 = vpop.xlane.xlu0 %7742
          %v7744 = vadd.f32 %v7719, %v7722
          %v7745 = vadd.f32 %v7744, %v7725
          %v7746 = vadd.f32 %v7745, %v7728
          %v7747 = vadd.f32 %v7746, %v7731
          %v7748 = vadd.f32 %v7747, %v7734
          %v7749 = vadd.f32 %v7748, %v7737
          %v7750 = vadd.f32 %v7749, %v7740
          %v7751 = vsel %vm7360, %v7743, 0.0
          %v7752 = vadd.f32 %v7750, %v7751
          %v7753 = vrot.slane %v7752, 4
          %v7754 = vadd.f32 %v7752, %v7753
          %v7755 = vrot.slane %v7754, 2
          %v7756 = vadd.f32 %v7754, %v7755
          %v7757 = vrot.slane %v7756, 1
          %v7758 = vadd.f32 %v7756, %v7757
          %vm7759 = vcmp.eq.s32.totalorder %v419, 6
          %v7760 = vsel %vm7759, %v7758, 0.0
          %v7761 = vadd.f32 %v7696, %v7760
          %s7762 = sadd.s32 %s3801, 2016
          %s7763 = scalar_lea.vmem %s7, %s7762
          %v7764 = vld [vmem:[%s7763] sm:$0xff]
          %v7765 = vld [vmem:[%s7763 + $0x8] sm:$0xff]
          %v7766 = vld [vmem:[%s7763 + $0x10] sm:$0xff]
          %v7767 = vld [vmem:[%s7763 + $0x18] sm:$0xff]
          %v7768 = vld [vmem:[%s7763 + $0x20] sm:$0xff]
          %v7769 = vld [vmem:[%s7763 + $0x28] sm:$0xff]
          %v7770 = vld [vmem:[%s7763 + $0x30] sm:$0xff]
          %v7771 = vld [vmem:[%s7763 + $0x38] sm:$0xff]
          %v7772 = vld [vmem:[%s7763 + $0x40] sm:$0x3f]
          %v7773 = vmul.f32 %v7296, %v7764
          %v7774 = vmul.f32 %v7297, %v7765
          %v7775 = vmul.f32 %v7298, %v7766
          %v7776 = vmul.f32 %v7299, %v7767
          %v7777 = vmul.f32 %v7300, %v7768
          %v7778 = vmul.f32 %v7301, %v7769
          %v7779 = vmul.f32 %v7302, %v7770
          %v7780 = vmul.f32 %v7303, %v7771
          %v7781 = vmul.f32 %v7304, %v7772
          %v7782 = vsel %vm7324, %v7773, 0.0
          %7783 = vadd.xlane.f32.xlu0 %v7782
          %v7784 = vpop.xlane.xlu0 %7783
          %v7785 = vsel %vm7324, %v7774, 0.0
          %7786 = vadd.xlane.f32.xlu0 %v7785
          %v7787 = vpop.xlane.xlu0 %7786
          %v7788 = vsel %vm7324, %v7775, 0.0
          %7789 = vadd.xlane.f32.xlu0 %v7788
          %v7790 = vpop.xlane.xlu0 %7789
          %v7791 = vsel %vm7324, %v7776, 0.0
          %7792 = vadd.xlane.f32.xlu0 %v7791
          %v7793 = vpop.xlane.xlu0 %7792
          %v7794 = vsel %vm7324, %v7777, 0.0
          %7795 = vadd.xlane.f32.xlu0 %v7794
          %v7796 = vpop.xlane.xlu0 %7795
          %v7797 = vsel %vm7324, %v7778, 0.0
          %7798 = vadd.xlane.f32.xlu0 %v7797
          %v7799 = vpop.xlane.xlu0 %7798
          %v7800 = vsel %vm7324, %v7779, 0.0
          %7801 = vadd.xlane.f32.xlu0 %v7800
          %v7802 = vpop.xlane.xlu0 %7801
          %v7803 = vsel %vm7324, %v7780, 0.0
          %7804 = vadd.xlane.f32.xlu0 %v7803
          %v7805 = vpop.xlane.xlu0 %7804
          %v7806 = vsel %vm7349, %v7781, 0.0
          %7807 = vadd.xlane.f32.xlu0 %v7806
          %v7808 = vpop.xlane.xlu0 %7807
          %v7809 = vadd.f32 %v7784, %v7787
          %v7810 = vadd.f32 %v7809, %v7790
          %v7811 = vadd.f32 %v7810, %v7793
          %v7812 = vadd.f32 %v7811, %v7796
          %v7813 = vadd.f32 %v7812, %v7799
          %v7814 = vadd.f32 %v7813, %v7802
          %v7815 = vadd.f32 %v7814, %v7805
          %v7816 = vsel %vm7360, %v7808, 0.0
          %v7817 = vadd.f32 %v7815, %v7816
          %v7818 = vrot.slane %v7817, 4
          %v7819 = vadd.f32 %v7817, %v7818
          %v7820 = vrot.slane %v7819, 2
          %v7821 = vadd.f32 %v7819, %v7820
          %v7822 = vrot.slane %v7821, 1
          %v7823 = vadd.f32 %v7821, %v7822
          %vm7824 = vcmp.eq.s32.totalorder %v419, 7
          %v7825 = vsel %vm7824, %v7823, 0.0
          %v7826 = vadd.f32 %v7761, %v7825
          %s7827 = sadd.s32 %s3801, 2304
          %s7828 = scalar_lea.vmem %s7, %s7827
          %v7829 = vld [vmem:[%s7828] sm:$0xff]
          %v7830 = vld [vmem:[%s7828 + $0x8] sm:$0xff]
          %v7831 = vld [vmem:[%s7828 + $0x10] sm:$0xff]
          %v7832 = vld [vmem:[%s7828 + $0x18] sm:$0xff]
          %v7833 = vld [vmem:[%s7828 + $0x20] sm:$0xff]
          %v7834 = vld [vmem:[%s7828 + $0x28] sm:$0xff]
          %v7835 = vld [vmem:[%s7828 + $0x30] sm:$0xff]
          %v7836 = vld [vmem:[%s7828 + $0x38] sm:$0xff]
          %v7837 = vld [vmem:[%s7828 + $0x40] sm:$0x3f]
          %v7838 = vmul.f32 %v7296, %v7829
          %v7839 = vmul.f32 %v7297, %v7830
          %v7840 = vmul.f32 %v7298, %v7831
          %v7841 = vmul.f32 %v7299, %v7832
          %v7842 = vmul.f32 %v7300, %v7833
          %v7843 = vmul.f32 %v7301, %v7834
          %v7844 = vmul.f32 %v7302, %v7835
          %v7845 = vmul.f32 %v7303, %v7836
          %v7846 = vmul.f32 %v7304, %v7837
          %v7847 = vsel %vm7324, %v7838, 0.0
          %7848 = vadd.xlane.f32.xlu0 %v7847
          %v7849 = vpop.xlane.xlu0 %7848
          %v7850 = vsel %vm7324, %v7839, 0.0
          %7851 = vadd.xlane.f32.xlu0 %v7850
          %v7852 = vpop.xlane.xlu0 %7851
          %v7853 = vsel %vm7324, %v7840, 0.0
          %7854 = vadd.xlane.f32.xlu0 %v7853
          %v7855 = vpop.xlane.xlu0 %7854
          %v7856 = vsel %vm7324, %v7841, 0.0
          %7857 = vadd.xlane.f32.xlu0 %v7856
          %v7858 = vpop.xlane.xlu0 %7857
          %v7859 = vsel %vm7324, %v7842, 0.0
          %7860 = vadd.xlane.f32.xlu0 %v7859
          %v7861 = vpop.xlane.xlu0 %7860
          %v7862 = vsel %vm7324, %v7843, 0.0
          %7863 = vadd.xlane.f32.xlu0 %v7862
          %v7864 = vpop.xlane.xlu0 %7863
          %v7865 = vsel %vm7324, %v7844, 0.0
          %7866 = vadd.xlane.f32.xlu0 %v7865
          %v7867 = vpop.xlane.xlu0 %7866
          %v7868 = vsel %vm7324, %v7845, 0.0
          %7869 = vadd.xlane.f32.xlu0 %v7868
          %v7870 = vpop.xlane.xlu0 %7869
          %v7871 = vsel %vm7349, %v7846, 0.0
          %7872 = vadd.xlane.f32.xlu0 %v7871
          %v7873 = vpop.xlane.xlu0 %7872
          %v7874 = vadd.f32 %v7849, %v7852
          %v7875 = vadd.f32 %v7874, %v7855
          %v7876 = vadd.f32 %v7875, %v7858
          %v7877 = vadd.f32 %v7876, %v7861
          %v7878 = vadd.f32 %v7877, %v7864
          %v7879 = vadd.f32 %v7878, %v7867
          %v7880 = vadd.f32 %v7879, %v7870
          %v7881 = vsel %vm7360, %v7873, 0.0
          %v7882 = vadd.f32 %v7880, %v7881
          %v7883 = vrot.slane %v7882, 4
          %v7884 = vadd.f32 %v7882, %v7883
          %v7885 = vrot.slane %v7884, 2
          %v7886 = vadd.f32 %v7884, %v7885
          %v7887 = vrot.slane %v7886, 1
          %v7888 = vadd.f32 %v7886, %v7887
          %vm7889 = vcmp.eq.s32.totalorder %v419, 8
          %v7890 = vsel %vm7889, %v7888, 0.0
          %v7891 = vadd.f32 %v7826, %v7890
          %s7892 = sadd.s32 %s3801, 2592
          %s7893 = scalar_lea.vmem %s7, %s7892
          %v7894 = vld [vmem:[%s7893] sm:$0xff]
          %v7895 = vld [vmem:[%s7893 + $0x8] sm:$0xff]
          %v7896 = vld [vmem:[%s7893 + $0x10] sm:$0xff]
          %v7897 = vld [vmem:[%s7893 + $0x18] sm:$0xff]
          %v7898 = vld [vmem:[%s7893 + $0x20] sm:$0xff]
          %v7899 = vld [vmem:[%s7893 + $0x28] sm:$0xff]
          %v7900 = vld [vmem:[%s7893 + $0x30] sm:$0xff]
          %v7901 = vld [vmem:[%s7893 + $0x38] sm:$0xff]
          %v7902 = vld [vmem:[%s7893 + $0x40] sm:$0x3f]
          %v7903 = vmul.f32 %v7296, %v7894
          %v7904 = vmul.f32 %v7297, %v7895
          %v7905 = vmul.f32 %v7298, %v7896
          %v7906 = vmul.f32 %v7299, %v7897
          %v7907 = vmul.f32 %v7300, %v7898
          %v7908 = vmul.f32 %v7301, %v7899
          %v7909 = vmul.f32 %v7302, %v7900
          %v7910 = vmul.f32 %v7303, %v7901
          %v7911 = vmul.f32 %v7304, %v7902
          %v7912 = vsel %vm7324, %v7903, 0.0
          %7913 = vadd.xlane.f32.xlu0 %v7912
          %v7914 = vpop.xlane.xlu0 %7913
          %v7915 = vsel %vm7324, %v7904, 0.0
          %7916 = vadd.xlane.f32.xlu0 %v7915
          %v7917 = vpop.xlane.xlu0 %7916
          %v7918 = vsel %vm7324, %v7905, 0.0
          %7919 = vadd.xlane.f32.xlu0 %v7918
          %v7920 = vpop.xlane.xlu0 %7919
          %v7921 = vsel %vm7324, %v7906, 0.0
          %7922 = vadd.xlane.f32.xlu0 %v7921
          %v7923 = vpop.xlane.xlu0 %7922
          %v7924 = vsel %vm7324, %v7907, 0.0
          %7925 = vadd.xlane.f32.xlu0 %v7924
          %v7926 = vpop.xlane.xlu0 %7925
          %v7927 = vsel %vm7324, %v7908, 0.0
          %7928 = vadd.xlane.f32.xlu0 %v7927
          %v7929 = vpop.xlane.xlu0 %7928
          %v7930 = vsel %vm7324, %v7909, 0.0
          %7931 = vadd.xlane.f32.xlu0 %v7930
          %v7932 = vpop.xlane.xlu0 %7931
          %v7933 = vsel %vm7324, %v7910, 0.0
          %7934 = vadd.xlane.f32.xlu0 %v7933
          %v7935 = vpop.xlane.xlu0 %7934
          %v7936 = vsel %vm7349, %v7911, 0.0
          %7937 = vadd.xlane.f32.xlu0 %v7936
          %v7938 = vpop.xlane.xlu0 %7937
          %v7939 = vadd.f32 %v7914, %v7917
          %v7940 = vadd.f32 %v7939, %v7920
          %v7941 = vadd.f32 %v7940, %v7923
          %v7942 = vadd.f32 %v7941, %v7926
          %v7943 = vadd.f32 %v7942, %v7929
          %v7944 = vadd.f32 %v7943, %v7932
          %v7945 = vadd.f32 %v7944, %v7935
          %v7946 = vsel %vm7360, %v7938, 0.0
          %v7947 = vadd.f32 %v7945, %v7946
          %v7948 = vrot.slane %v7947, 4
          %v7949 = vadd.f32 %v7947, %v7948
          %v7950 = vrot.slane %v7949, 2
          %v7951 = vadd.f32 %v7949, %v7950
          %v7952 = vrot.slane %v7951, 1
          %v7953 = vadd.f32 %v7951, %v7952
          %vm7954 = vcmp.eq.s32.totalorder %v419, 9
          %v7955 = vsel %vm7954, %v7953, 0.0
          %v7956 = vadd.f32 %v7891, %v7955
        $region99: #{simple_cnn_forward.1} parent=55 // loop_footer
          %s3797 = sadd.s32 1, %s3793
        $region100: #{simple_cnn_forward.1} parent=55 // loop_footer_branch
          %3792 = sbr.rel target = $region96
        $region101: #{simple_cnn_forward.1} parent=55 // loop_exit
          _
        %vm7957 = vcmask 73728
        %7958 = vst.msk [vmem:[%s401] sm:$0x1] %vm7957, %v3798
        %s7959 = sand.u32 %s229, 1
        %s7960 = scalar_lea.sflag [#allocation5], %s7959
        %s7961 = sand.u32 %s229, 1
        %s7962 = scalar_lea.vmem [#allocation15], %s7961
        // Predicated region
        $region102: #{simple_cnn_forward.1} parent=55 // pred_check
          %p7963 = pneg %p239
        $region103: #{simple_cnn_forward.1} parent=55 // pred_check_branch
          %7965 = sbr.rel (%p7963) target = $region105
        $region104: #{simple_cnn_forward.1} parent=55 // pred_region
          %7967 = vsyncadd %s7960, 0
          %s7968 = scalar_lea.hbm %s9, %s27
          %s7970 = sshll.u32 %s7962, 4
          %s7971 = int_to_ptr.vmem [resolvable:$true] %s7970
          %s7972 = sshll.u32 %s7968, 4
          %s7973 = int_to_ptr.hbm [resolvable:$true] %s7972
          %7975 = dma.vmem_to_hbm [thread:$0]  %s7971, 16, %s7973, %s7960
        $region105: #{simple_cnn_forward.1} parent=55 // pred_fallthru
          _
      $region56: #{simple_cnn_forward.1} parent=5 // pred_fallthru
        _
      %p7976 = scmp.le.s32.totalorder 2, %s22
      // Predicated region
      $region106: #{simple_cnn_forward.1} parent=5 // pred_check
        %p7977 = pneg %p7976
      $region107: #{simple_cnn_forward.1} parent=5 // pred_check_branch
        %7979 = sbr.rel (%p7977) target = $region109
      $region108: #{simple_cnn_forward.1} parent=5 // pred_region
        %s7980 = ssub.s32 %s22, 2
        // Predicated region
        $region110: #{simple_cnn_forward.1} parent=108 // pred_check
          %p7981 = pneg %p245
        $region111: #{simple_cnn_forward.1} parent=108 // pred_check_branch
          %7983 = sbr.rel (%p7981) target = $region113
        $region112: #{simple_cnn_forward.1} parent=108 // pred_region
          %s7984 = sand.u32 %s230, 1
          %s7985 = scalar_lea.sflag [#allocation5], %s7984
          %s7986 = sand.u32 %s230, 1
          %s7987 = scalar_lea.vmem [#allocation15], %s7986
          %7989 = dma.done %s7985, 16
        $region113: #{simple_cnn_forward.1} parent=108 // pred_fallthru
          _
      $region109: #{simple_cnn_forward.1} parent=5 // pred_fallthru
        _
    $region6: #{simple_cnn_forward.1} parent=1 // loop_footer
      %s26 = sadd.s32 1, %s22
    $region7: #{simple_cnn_forward.1} parent=1 // loop_footer_branch
      %21 = sbr.rel target = $region3
    $region8: #{simple_cnn_forward.1} parent=1 // loop_exit
      _
    %7990 = vsyncpa [#allocation5], 1
    %s7991 = scalar_lea.sflag [#allocation5], 1
    %7992 = vsyncpa %s7991, 1
    %7993 = vsyncpa [#allocation6], 1
    %s7994 = scalar_lea.sflag [#allocation6], 1
    %7995 = vsyncpa %s7994, 1
    %7996 = vsyncpa [#allocation8], 1
    %7997 = vsyncpa [#allocation11], 1
    %7998 = vsyncpa [#allocation14], 1

</llo_original>
